<compile_context>
chip_gen: v7x
topology: tpu7x:2x2x1
jax: 0.10.0
libtpu: 0.0.40
codegen_flags: <defaults>
</compile_context>

<pallas_src>
import jax
import jax.numpy as jnp
from jax import lax
from jax.experimental import pallas as pl
from jax.experimental.pallas import tpu as pltpu

BN_EPS = 1e-5
LANES = 128


def _pick_lane_tile(V, max_tile=2048):
    """Largest multiple of 128 that divides V and is <= max_tile."""
    best = 0
    for cand in range(LANES, min(V, max_tile) + 1, LANES):
        if V % cand == 0:
            best = cand
    if best == 0:
        # TODO(synk): pad V up to a multiple of 128 and mask the tail lanes out of the
        # BN statistics instead of requiring an exact multiple.
        raise ValueError("num_vertices must be a multiple of 128 for the tiled kernel")
    return best


def _make_kernel(inv_n):
    """inv_n = 1 / (B*V): BatchNorm1d training-mode stats over the full batch*vertex axis."""

    def kernel(c1_ref, verts_ref,
               w1b_ref, g1_ref, be1_ref,
               w2a_ref, w2b_ref, b2_ref, g2_ref, be2_ref,
               w3a_ref, w3b_ref, b3_ref, g3_ref, be3_ref,
               w4a_ref, w4b_ref, b4_ref,
               out_ref,
               s1_ref, q1_ref, s2_ref, q2_ref, s3_ref, q3_ref,
               sc1_ref, sh1_ref, sc2_ref, sh2_ref, sc3_ref, sh3_ref):
        phase = pl.program_id(0)
        b = pl.program_id(1)
        t = pl.program_id(2)
        first = (b == 0) & (t == 0)

        v = verts_ref[...]                                   # (3, TILE)
        n_chunks = v.shape[1] // LANES

        def conv1_raw():
            # c1 = z @ W1a^T + b1 precomputed in the wrapper (per-batch, vertex-invariant).
            return c1_ref[...] + jnp.dot(w1b_ref[...], v,
                                         preferred_element_type=jnp.float32)

        def conv_raw(wa_ref, wb_ref, bias_ref, h):
            # Skip-connection ([h ; verts] concat) folded as a second tiny MXU dot.
            return (jnp.dot(wa_ref[...], h, preferred_element_type=jnp.float32)
                    + jnp.dot(wb_ref[...], v, preferred_element_type=jnp.float32)
                    + bias_ref[...])

        def accumulate(x, s_ref, q_ref):
            # Per-lane (C, 128) partial sums: pure VPU adds per step; the single cross-lane
            # XLU reduce is deferred to finalize() (once per phase).
            c = x.shape[0]
            s_part = jnp.zeros((c, LANES), jnp.float32)
            q_part = jnp.zeros((c, LANES), jnp.float32)
            for j in range(n_chunks):                        # static, lane-aligned slices
                chunk = x[:, j * LANES:(j + 1) * LANES]
                s_part = s_part + chunk
                q_part = q_part + chunk * chunk
            s_ref[...] += s_part
            q_ref[...] += q_part

        def finalize(s_ref, q_ref, g_ref, be_ref, sc_ref, sh_ref):
            s = jnp.sum(s_ref[...], axis=1, keepdims=True)   # (C, 1) — one XLU reduce
            q = jnp.sum(q_ref[...], axis=1, keepdims=True)
            mean = s * inv_n
            var = jnp.maximum(q * inv_n - mean * mean, 0.0)  # clamp f32 cancellation
            scale = g_ref[...] * lax.rsqrt(var + BN_EPS)
            sc_ref[...] = scale
            sh_ref[...] = be_ref[...] - mean * scale

        def bn_relu(x, sc_ref, sh_ref):
            # Fused BN affine from the per-phase precomputed scale/shift.
            return jnp.maximum(x * sc_ref[...] + sh_ref[...], 0.0)

        @pl.when((phase == 0) & first)
        def _init():
            for r in (s1_ref, q1_ref, s2_ref, q2_ref, s3_ref, q3_ref):
                r[...] = jnp.zeros_like(r)

        # Per-phase BN finalization (runs before the phase body of the same step).
        @pl.when((phase == 1) & first)
        def _fin1():
            finalize(s1_ref, q1_ref, g1_ref, be1_ref, sc1_ref, sh1_ref)

        @pl.when((phase == 2) & first)
        def _fin2():
            finalize(s2_ref, q2_ref, g2_ref, be2_ref, sc2_ref, sh2_ref)

        @pl.when((phase == 3) & first)
        def _fin3():
            finalize(s3_ref, q3_ref, g3_ref, be3_ref, sc3_ref, sh3_ref)

        @pl.when(phase == 0)
        def _stats1():
            accumulate(conv1_raw(), s1_ref, q1_ref)

        @pl.when(phase == 1)
        def _stats2():
            h1 = bn_relu(conv1_raw(), sc1_ref, sh1_ref)
            accumulate(conv_raw(w2a_ref, w2b_ref, b2_ref, h1), s2_ref, q2_ref)

        @pl.when(phase == 2)
        def _stats3():
            # TODO(synk): stash raw conv2 output per (b, t) (VMEM or HBM side output) to
            # skip re-running conv1/conv2 here and in phase 3 once L is large.
            h1 = bn_relu(conv1_raw(), sc1_ref, sh1_ref)
            h2 = bn_relu(conv_raw(w2a_ref, w2b_ref, b2_ref, h1), sc2_ref, sh2_ref)
            accumulate(conv_raw(w3a_ref, w3b_ref, b3_ref, h2), s3_ref, q3_ref)

        @pl.when(phase == 3)
        def _emit():
            h1 = bn_relu(conv1_raw(), sc1_ref, sh1_ref)
            h2 = bn_relu(conv_raw(w2a_ref, w2b_ref, b2_ref, h1), sc2_ref, sh2_ref)
            h3 = bn_relu(conv_raw(w3a_ref, w3b_ref, b3_ref, h2), sc3_ref, sh3_ref)
            out_ref[...] = jnp.tanh(conv_raw(w4a_ref, w4b_ref, b4_ref, h3))

    return kernel


def point_gen_skipconnected_decoder(z, verts, params, *, max_lane_tile=2048):
    """z: (B, L) float32, verts: (B, 3, V) float32 -> (B, 3, V) float32."""
    B, L = z.shape
    Bv, three, V = verts.shape
    assert Bv == B and three == 3
    assert L % 4 == 0

    tile = _pick_lane_tile(V, max_lane_tile)
    n_tiles = V // tile

    # conv1's latent contribution is constant across vertices: hoist the tiny (B, L)
    # matmul (+ bias fold) out of the per-(phase, batch, tile) grid entirely.
    c1 = (z @ params["w1a"].T + params["b1"][:, 0][None, :])[:, :, None]  # (B, L, 1)

    weight_names = ["w1b", "g1", "be1",
                    "w2a", "w2b", "b2", "g2", "be2",
                    "w3a", "w3b", "b3", "g3", "be3",
                    "w4a", "w4b", "b4"]
    weights = [params[k] for k in weight_names]

    def _resident(arr):
        # Whole-array block with a constant index -> fetched to VMEM once, stays resident.
        nd = arr.ndim
        return pl.BlockSpec(arr.shape, lambda *_: (0,) * nd)

    c1_spec = pl.BlockSpec((None, L, 1), lambda p, b, t: (b, 0, 0))
    verts_spec = pl.BlockSpec((None, 3, tile), lambda p, b, t: (b, 0, t))

    def out_index_map(p, b, t):
        # Pin the output block during the stats phases (0-2, nothing is written there);
        # only phase 3 walks the real (batch, vertex-tile) blocks.
        last = p == 3
        return (jnp.where(last, b, 0), 0, jnp.where(last, t, 0))

    out_spec = pl.BlockSpec((None, 3, tile), out_index_map)

    L2, L4 = L // 2, L // 4
    scratch_shapes = [
        # per-lane sum / sumsq partials (bn1, bn2, bn3)
        pltpu.VMEM((L, LANES), jnp.float32), pltpu.VMEM((L, LANES), jnp.float32),
        pltpu.VMEM((L2, LANES), jnp.float32), pltpu.VMEM((L2, LANES), jnp.float32),
        pltpu.VMEM((L4, LANES), jnp.float32), pltpu.VMEM((L4, LANES), jnp.float32),
        # fused BN scale / shift (bn1, bn2, bn3)
        pltpu.VMEM((L, 1), jnp.float32), pltpu.VMEM((L, 1), jnp.float32),
        pltpu.VMEM((L2, 1), jnp.float32), pltpu.VMEM((L2, 1), jnp.float32),
        pltpu.VMEM((L4, 1), jnp.float32), pltpu.VMEM((L4, 1), jnp.float32),
    ]

    kernel = _make_kernel(1.0 / float(B * V))

    return pl.pallas_call(
        kernel,
        out_shape=jax.ShapeDtypeStruct((B, 3, V), jnp.float32),
        grid_spec=pltpu.PrefetchScalarGridSpec(
            num_scalar_prefetch=0,
            grid=(4, B, n_tiles),                 # (phase, batch, vertex-tile)
            in_specs=[c1_spec, verts_spec] + [_resident(w) for w in weights],
            out_specs=out_spec,
            scratch_shapes=scratch_shapes,
        ),
        # All axes "arbitrary": the BN sum/sumsq accumulators are shared across every
        # (batch, tile) step and phases must run in order, so the grid is sequential.
        # TODO(synk): per-core partial sums + cross-core reduce would let (b, t) shard
        # across v7x's two TensorCores.
        compiler_params=pltpu.CompilerParams(
            dimension_semantics=("arbitrary", "arbitrary", "arbitrary")),
    )(c1, verts, *weights)


def init_params(latent_size, key):
    """Deterministic synthetic parameters; Conv1d weight (C_out, C_in, 1) is kept as
    (C_out, C_in) and split into [feature part | xyz part] (verts are the last 3 inputs)."""
    L = latent_size
    dims = [(L + 3, L), (L + 3, L // 2), (L // 2 + 3, L // 4), (L // 4 + 3, 3)]
    keys = jax.random.split(key, 2 * len(dims))
    params = {}
    for i, (cin, cout) in enumerate(dims):
        scale = 1.0 / jnp.sqrt(cin)
        w = scale * jax.random.normal(keys[2 * i], (cout, cin), jnp.float32)
        b = scale * jax.random.normal(keys[2 * i + 1], (cout, 1), jnp.float32)
        params[f"w{i+1}a"] = w[:, : cin - 3]   # multiplies feature channels
        params[f"w{i+1}b"] = w[:, cin - 3:]    # multiplies xyz channels
        params[f"b{i+1}"] = b
    for i, c in enumerate([L, L // 2, L // 4]):
        params[f"g{i+1}"] = jnp.ones((c, 1), jnp.float32)
        params[f"be{i+1}"] = jnp.zeros((c, 1), jnp.float32)
    return params


def reference_forward(z, verts, params):
    """Pure-JAX reference mirroring the PyTorch forward (training-mode BatchNorm1d)."""
    B, L = z.shape
    V = verts.shape[-1]
    z_rep = jnp.broadcast_to(z[:, :, None], (B, L, V))

    def conv(y, wa, wb, b, v):
        return (jnp.einsum("oc,bcv->bov", wa, y)
                + jnp.einsum("oc,bcv->bov", wb, v) + b[None, :, :])

    def bn_relu(y, g, be):
        mean = jnp.mean(y, axis=(0, 2), keepdims=True)
        var = jnp.mean((y - mean) ** 2, axis=(0, 2), keepdims=True)
        return jnp.maximum((y - mean) / jnp.sqrt(var + BN_EPS)
                           * g[None, :, :] + be[None, :, :], 0.0)

    y = bn_relu(conv(z_rep, params["w1a"], params["w1b"], params["b1"], verts),
                params["g1"], params["be1"])
    y = bn_relu(conv(y, params["w2a"], params["w2b"], params["b2"], verts),
                params["g2"], params["be2"])
    y = bn_relu(conv(y, params["w3a"], params["w3b"], params["b3"], verts),
                params["g3"], params["be3"])
    y = jnp.tanh(conv(y, params["w4a"], params["w4b"], params["b4"], verts))
    return y


if __name__ == "__main__":
    B, L, V = 2, 32, 1024   # batch, latent_size, num vertices (V multiple of 128)
    key = jax.random.PRNGKey(0)
    kz, kv, kp = jax.random.split(key, 3)
    z = jax.random.normal(kz, (B, L), jnp.float32)
    verts = jax.random.normal(kv, (B, 3, V), jnp.float32)
    params = init_params(L, kp)

    out = point_gen_skipconnected_decoder(z, verts, params)
    out = jax.block_until_ready(out)

    ref = reference_forward(z, verts, params)
    assert out.shape == (B, 3, V), out.shape
    max_err = float(jnp.max(jnp.abs(out - ref)))
    assert max_err < 1e-3, max_err
    print("KERNEL_OK")
</pallas_src>

<mosaic_0001>
module attributes {stable_mosaic.version = 11 : i64} {
  func.func @kernel(%arg0: i32, %arg1: i32, %arg2: i32, %arg3: memref<1x32x1xf32, #tpu.memory_space<vmem>>, %arg4: memref<1x3x1024xf32, #tpu.memory_space<vmem>>, %arg5: memref<32x3xf32, #tpu.memory_space<vmem>>, %arg6: memref<32x1xf32, #tpu.memory_space<vmem>>, %arg7: memref<32x1xf32, #tpu.memory_space<vmem>>, %arg8: memref<16x32xf32, #tpu.memory_space<vmem>>, %arg9: memref<16x3xf32, #tpu.memory_space<vmem>>, %arg10: memref<16x1xf32, #tpu.memory_space<vmem>>, %arg11: memref<16x1xf32, #tpu.memory_space<vmem>>, %arg12: memref<16x1xf32, #tpu.memory_space<vmem>>, %arg13: memref<8x16xf32, #tpu.memory_space<vmem>>, %arg14: memref<8x3xf32, #tpu.memory_space<vmem>>, %arg15: memref<8x1xf32, #tpu.memory_space<vmem>>, %arg16: memref<8x1xf32, #tpu.memory_space<vmem>>, %arg17: memref<8x1xf32, #tpu.memory_space<vmem>>, %arg18: memref<3x8xf32, #tpu.memory_space<vmem>>, %arg19: memref<3x3xf32, #tpu.memory_space<vmem>>, %arg20: memref<3x1xf32, #tpu.memory_space<vmem>>, %arg21: memref<1x3x1024xf32, #tpu.memory_space<vmem>>, %arg22: memref<32x128xf32, #tpu.memory_space<vmem>>, %arg23: memref<32x128xf32, #tpu.memory_space<vmem>>, %arg24: memref<16x128xf32, #tpu.memory_space<vmem>>, %arg25: memref<16x128xf32, #tpu.memory_space<vmem>>, %arg26: memref<8x128xf32, #tpu.memory_space<vmem>>, %arg27: memref<8x128xf32, #tpu.memory_space<vmem>>, %arg28: memref<32x1xf32, #tpu.memory_space<vmem>>, %arg29: memref<32x1xf32, #tpu.memory_space<vmem>>, %arg30: memref<16x1xf32, #tpu.memory_space<vmem>>, %arg31: memref<16x1xf32, #tpu.memory_space<vmem>>, %arg32: memref<8x1xf32, #tpu.memory_space<vmem>>, %arg33: memref<8x1xf32, #tpu.memory_space<vmem>>) attributes {dimension_semantics = [#tpu.dimension_semantics<arbitrary>, #tpu.dimension_semantics<arbitrary>, #tpu.dimension_semantics<arbitrary>], iteration_bounds = array<i64: 4, 2, 1>, scalar_prefetch = 0 : i64, scratch_operands = 12 : i64, tpu.core_type = #tpu.core_type<tc>, window_params = [{transform_indices = @transform_0, window_bounds = array<i64: 1, 32, 1>}, {transform_indices = @transform_1, window_bounds = array<i64: 1, 3, 1024>}, {pipeline_mode = #tpu.pipeline_mode<synchronous>, transform_indices = @transform_2, window_bounds = array<i64: 32, 3>}, {pipeline_mode = #tpu.pipeline_mode<synchronous>, transform_indices = @transform_3, window_bounds = array<i64: 32, 1>}, {pipeline_mode = #tpu.pipeline_mode<synchronous>, transform_indices = @transform_4, window_bounds = array<i64: 32, 1>}, {pipeline_mode = #tpu.pipeline_mode<synchronous>, transform_indices = @transform_5, window_bounds = array<i64: 16, 32>}, {pipeline_mode = #tpu.pipeline_mode<synchronous>, transform_indices = @transform_6, window_bounds = array<i64: 16, 3>}, {pipeline_mode = #tpu.pipeline_mode<synchronous>, transform_indices = @transform_7, window_bounds = array<i64: 16, 1>}, {pipeline_mode = #tpu.pipeline_mode<synchronous>, transform_indices = @transform_8, window_bounds = array<i64: 16, 1>}, {pipeline_mode = #tpu.pipeline_mode<synchronous>, transform_indices = @transform_9, window_bounds = array<i64: 16, 1>}, {pipeline_mode = #tpu.pipeline_mode<synchronous>, transform_indices = @transform_10, window_bounds = array<i64: 8, 16>}, {pipeline_mode = #tpu.pipeline_mode<synchronous>, transform_indices = @transform_11, window_bounds = array<i64: 8, 3>}, {pipeline_mode = #tpu.pipeline_mode<synchronous>, transform_indices = @transform_12, window_bounds = array<i64: 8, 1>}, {pipeline_mode = #tpu.pipeline_mode<synchronous>, transform_indices = @transform_13, window_bounds = array<i64: 8, 1>}, {pipeline_mode = #tpu.pipeline_mode<synchronous>, transform_indices = @transform_14, window_bounds = array<i64: 8, 1>}, {pipeline_mode = #tpu.pipeline_mode<synchronous>, transform_indices = @transform_15, window_bounds = array<i64: 3, 8>}, {pipeline_mode = #tpu.pipeline_mode<synchronous>, transform_indices = @transform_16, window_bounds = array<i64: 3, 3>}, {pipeline_mode = #tpu.pipeline_mode<synchronous>, transform_indices = @transform_17, window_bounds = array<i64: 3, 1>}, {transform_indices = @transform_18, window_bounds = array<i64: 1, 3, 1024>}]} {
    %c0_i32 = arith.constant 0 : i32
    %0 = arith.cmpi eq, %arg1, %c0_i32 : i32
    %c0_i32_0 = arith.constant 0 : i32
    %1 = arith.cmpi eq, %arg2, %c0_i32_0 : i32
    %2 = arith.andi %0, %1 : i1
    %c0 = arith.constant 0 : index
    %c0_1 = arith.constant 0 : index
    %c0_2 = arith.constant 0 : index
    %3 = vector.load %arg4[%c0, %c0_1, %c0_2] : memref<1x3x1024xf32, #tpu.memory_space<vmem>>, vector<1x3x1024xf32>
    %4 = vector.shape_cast %3 : vector<1x3x1024xf32> to vector<3x1024xf32>
    %c0_i32_3 = arith.constant 0 : i32
    %5 = arith.cmpi eq, %arg0, %c0_i32_3 : i32
    %6 = arith.andi %5, %2 : i1
    %7 = arith.extui %6 : i1 to i32
    %c0_i32_4 = arith.constant 0 : i32
    %8 = arith.cmpi ne, %7, %c0_i32_4 : i32
    scf.if %8 {
      %cst = arith.constant 0.000000e+00 : f32
      %33 = vector.broadcast %cst : f32 to vector<32x128xf32>
      %c0_16 = arith.constant 0 : index
      %c0_17 = arith.constant 0 : index
      %34 = vector.load %arg22[%c0_16, %c0_17] : memref<32x128xf32, #tpu.memory_space<vmem>>, vector<32x128xf32>
      tpu.vector_store %arg22[%c0_16, %c0_17], %33 {strides = array<i32>} : memref<32x128xf32, #tpu.memory_space<vmem>>, vector<32x128xf32>,
      %cst_18 = arith.constant 0.000000e+00 : f32
      %35 = vector.broadcast %cst_18 : f32 to vector<32x128xf32>
      %c0_19 = arith.constant 0 : index
      %c0_20 = arith.constant 0 : index
      %36 = vector.load %arg23[%c0_19, %c0_20] : memref<32x128xf32, #tpu.memory_space<vmem>>, vector<32x128xf32>
      tpu.vector_store %arg23[%c0_19, %c0_20], %35 {strides = array<i32>} : memref<32x128xf32, #tpu.memory_space<vmem>>, vector<32x128xf32>,
      %cst_21 = arith.constant 0.000000e+00 : f32
      %37 = vector.broadcast %cst_21 : f32 to vector<16x128xf32>
      %c0_22 = arith.constant 0 : index
      %c0_23 = arith.constant 0 : index
      %38 = vector.load %arg24[%c0_22, %c0_23] : memref<16x128xf32, #tpu.memory_space<vmem>>, vector<16x128xf32>
      tpu.vector_store %arg24[%c0_22, %c0_23], %37 {strides = array<i32>} : memref<16x128xf32, #tpu.memory_space<vmem>>, vector<16x128xf32>,
      %cst_24 = arith.constant 0.000000e+00 : f32
      %39 = vector.broadcast %cst_24 : f32 to vector<16x128xf32>
      %c0_25 = arith.constant 0 : index
      %c0_26 = arith.constant 0 : index
      %40 = vector.load %arg25[%c0_25, %c0_26] : memref<16x128xf32, #tpu.memory_space<vmem>>, vector<16x128xf32>
      tpu.vector_store %arg25[%c0_25, %c0_26], %39 {strides = array<i32>} : memref<16x128xf32, #tpu.memory_space<vmem>>, vector<16x128xf32>,
      %cst_27 = arith.constant 0.000000e+00 : f32
      %41 = vector.broadcast %cst_27 : f32 to vector<8x128xf32>
      %c0_28 = arith.constant 0 : index
      %c0_29 = arith.constant 0 : index
      %42 = vector.load %arg26[%c0_28, %c0_29] : memref<8x128xf32, #tpu.memory_space<vmem>>, vector<8x128xf32>
      tpu.vector_store %arg26[%c0_28, %c0_29], %41 {strides = array<i32>} : memref<8x128xf32, #tpu.memory_space<vmem>>, vector<8x128xf32>,
      %cst_30 = arith.constant 0.000000e+00 : f32
      %43 = vector.broadcast %cst_30 : f32 to vector<8x128xf32>
      %c0_31 = arith.constant 0 : index
      %c0_32 = arith.constant 0 : index
      %44 = vector.load %arg27[%c0_31, %c0_32] : memref<8x128xf32, #tpu.memory_space<vmem>>, vector<8x128xf32>
      tpu.vector_store %arg27[%c0_31, %c0_32], %43 {strides = array<i32>} : memref<8x128xf32, #tpu.memory_space<vmem>>, vector<8x128xf32>,
    } else {
    }
    %c1_i32 = arith.constant 1 : i32
    %9 = arith.cmpi eq, %arg0, %c1_i32 : i32
    %10 = arith.andi %9, %2 : i1
    %11 = arith.extui %10 : i1 to i32
    %c0_i32_5 = arith.constant 0 : i32
    %12 = arith.cmpi ne, %11, %c0_i32_5 : i32
    scf.if %12 {
      %c0_16 = arith.constant 0 : index
      %c0_17 = arith.constant 0 : index
      %33 = vector.load %arg22[%c0_16, %c0_17] : memref<32x128xf32, #tpu.memory_space<vmem>>, vector<32x128xf32>
      %cst = arith.constant dense<0.000000e+00> : vector<32xf32>
      %34 = vector.multi_reduction <add>, %33, %cst [1] : vector<32x128xf32> to vector<32xf32>
      %35 = vector.shape_cast %34 : vector<32xf32> to vector<32x1xf32>
      %c0_18 = arith.constant 0 : index
      %c0_19 = arith.constant 0 : index
      %36 = vector.load %arg23[%c0_18, %c0_19] : memref<32x128xf32, #tpu.memory_space<vmem>>, vector<32x128xf32>
      %cst_20 = arith.constant dense<0.000000e+00> : vector<32xf32>
      %37 = vector.multi_reduction <add>, %36, %cst_20 [1] : vector<32x128xf32> to vector<32xf32>
      %38 = vector.shape_cast %37 : vector<32xf32> to vector<32x1xf32>
      %cst_21 = arith.constant 4.8828125E-4 : f32
      %39 = vector.broadcast %cst_21 : f32 to vector<32x1xf32>
      %40 = arith.mulf %35, %39 : vector<32x1xf32>
      %cst_22 = arith.constant 4.8828125E-4 : f32
      %41 = vector.broadcast %cst_22 : f32 to vector<32x1xf32>
      %42 = arith.mulf %38, %41 : vector<32x1xf32>
      %43 = arith.mulf %40, %40 : vector<32x1xf32>
      %44 = arith.subf %42, %43 : vector<32x1xf32>
      %cst_23 = arith.constant 0.000000e+00 : f32
      %45 = vector.broadcast %cst_23 : f32 to vector<32x1xf32>
      %46 = arith.maximumf %44, %45 : vector<32x1xf32>
      %c0_24 = arith.constant 0 : index
      %c0_25 = arith.constant 0 : index
      %47 = vector.load %arg6[%c0_24, %c0_25] : memref<32x1xf32, #tpu.memory_space<vmem>>, vector<32x1xf32>
      %cst_26 = arith.constant 9.99999974E-6 : f32
      %48 = vector.broadcast %cst_26 : f32 to vector<32x1xf32>
      %49 = arith.addf %46, %48 : vector<32x1xf32>
      %50 = math.rsqrt %49 : vector<32x1xf32>
      %51 = arith.mulf %47, %50 : vector<32x1xf32>
      %c0_27 = arith.constant 0 : index
      %c0_28 = arith.constant 0 : index
      %52 = vector.load %arg28[%c0_27, %c0_28] : memref<32x1xf32, #tpu.memory_space<vmem>>, vector<32x1xf32>
      tpu.vector_store %arg28[%c0_27, %c0_28], %51 {strides = array<i32>} : memref<32x1xf32, #tpu.memory_space<vmem>>, vector<32x1xf32>,
      %c0_29 = arith.constant 0 : index
      %c0_30 = arith.constant 0 : index
      %53 = vector.load %arg7[%c0_29, %c0_30] : memref<32x1xf32, #tpu.memory_space<vmem>>, vector<32x1xf32>
      %54 = arith.mulf %40, %51 : vector<32x1xf32>
      %55 = arith.subf %53, %54 : vector<32x1xf32>
      %c0_31 = arith.constant 0 : index
      %c0_32 = arith.constant 0 : index
      %56 = vector.load %arg29[%c0_31, %c0_32] : memref<32x1xf32, #tpu.memory_space<vmem>>, vector<32x1xf32>
      tpu.vector_store %arg29[%c0_31, %c0_32], %55 {strides = array<i32>} : memref<32x1xf32, #tpu.memory_space<vmem>>, vector<32x1xf32>,
    } else {
    }
    %c2_i32 = arith.constant 2 : i32
    %13 = arith.cmpi eq, %arg0, %c2_i32 : i32
    %14 = arith.andi %13, %2 : i1
    %15 = arith.extui %14 : i1 to i32
    %c0_i32_6 = arith.constant 0 : i32
    %16 = arith.cmpi ne, %15, %c0_i32_6 : i32
    scf.if %16 {
      %c0_16 = arith.constant 0 : index
      %c0_17 = arith.constant 0 : index
      %33 = vector.load %arg24[%c0_16, %c0_17] : memref<16x128xf32, #tpu.memory_space<vmem>>, vector<16x128xf32>
      %cst = arith.constant dense<0.000000e+00> : vector<16xf32>
      %34 = vector.multi_reduction <add>, %33, %cst [1] : vector<16x128xf32> to vector<16xf32>
      %35 = vector.shape_cast %34 : vector<16xf32> to vector<16x1xf32>
      %c0_18 = arith.constant 0 : index
      %c0_19 = arith.constant 0 : index
      %36 = vector.load %arg25[%c0_18, %c0_19] : memref<16x128xf32, #tpu.memory_space<vmem>>, vector<16x128xf32>
      %cst_20 = arith.constant dense<0.000000e+00> : vector<16xf32>
      %37 = vector.multi_reduction <add>, %36, %cst_20 [1] : vector<16x128xf32> to vector<16xf32>
      %38 = vector.shape_cast %37 : vector<16xf32> to vector<16x1xf32>
      %cst_21 = arith.constant 4.8828125E-4 : f32
      %39 = vector.broadcast %cst_21 : f32 to vector<16x1xf32>
      %40 = arith.mulf %35, %39 : vector<16x1xf32>
      %cst_22 = arith.constant 4.8828125E-4 : f32
      %41 = vector.broadcast %cst_22 : f32 to vector<16x1xf32>
      %42 = arith.mulf %38, %41 : vector<16x1xf32>
      %43 = arith.mulf %40, %40 : vector<16x1xf32>
      %44 = arith.subf %42, %43 : vector<16x1xf32>
      %cst_23 = arith.constant 0.000000e+00 : f32
      %45 = vector.broadcast %cst_23 : f32 to vector<16x1xf32>
      %46 = arith.maximumf %44, %45 : vector<16x1xf32>
      %c0_24 = arith.constant 0 : index
      %c0_25 = arith.constant 0 : index
      %47 = vector.load %arg11[%c0_24, %c0_25] : memref<16x1xf32, #tpu.memory_space<vmem>>, vector<16x1xf32>
      %cst_26 = arith.constant 9.99999974E-6 : f32
      %48 = vector.broadcast %cst_26 : f32 to vector<16x1xf32>
      %49 = arith.addf %46, %48 : vector<16x1xf32>
      %50 = math.rsqrt %49 : vector<16x1xf32>
      %51 = arith.mulf %47, %50 : vector<16x1xf32>
      %c0_27 = arith.constant 0 : index
      %c0_28 = arith.constant 0 : index
      %52 = vector.load %arg30[%c0_27, %c0_28] : memref<16x1xf32, #tpu.memory_space<vmem>>, vector<16x1xf32>
      tpu.vector_store %arg30[%c0_27, %c0_28], %51 {strides = array<i32>} : memref<16x1xf32, #tpu.memory_space<vmem>>, vector<16x1xf32>,
      %c0_29 = arith.constant 0 : index
      %c0_30 = arith.constant 0 : index
      %53 = vector.load %arg12[%c0_29, %c0_30] : memref<16x1xf32, #tpu.memory_space<vmem>>, vector<16x1xf32>
      %54 = arith.mulf %40, %51 : vector<16x1xf32>
      %55 = arith.subf %53, %54 : vector<16x1xf32>
      %c0_31 = arith.constant 0 : index
      %c0_32 = arith.constant 0 : index
      %56 = vector.load %arg31[%c0_31, %c0_32] : memref<16x1xf32, #tpu.memory_space<vmem>>, vector<16x1xf32>
      tpu.vector_store %arg31[%c0_31, %c0_32], %55 {strides = array<i32>} : memref<16x1xf32, #tpu.memory_space<vmem>>, vector<16x1xf32>,
    } else {
    }
    %c3_i32 = arith.constant 3 : i32
    %17 = arith.cmpi eq, %arg0, %c3_i32 : i32
    %18 = arith.andi %17, %2 : i1
    %19 = arith.extui %18 : i1 to i32
    %c0_i32_7 = arith.constant 0 : i32
    %20 = arith.cmpi ne, %19, %c0_i32_7 : i32
    scf.if %20 {
      %c0_16 = arith.constant 0 : index
      %c0_17 = arith.constant 0 : index
      %33 = vector.load %arg26[%c0_16, %c0_17] : memref<8x128xf32, #tpu.memory_space<vmem>>, vector<8x128xf32>
      %cst = arith.constant dense<0.000000e+00> : vector<8xf32>
      %34 = vector.multi_reduction <add>, %33, %cst [1] : vector<8x128xf32> to vector<8xf32>
      %35 = vector.shape_cast %34 : vector<8xf32> to vector<8x1xf32>
      %c0_18 = arith.constant 0 : index
      %c0_19 = arith.constant 0 : index
      %36 = vector.load %arg27[%c0_18, %c0_19] : memref<8x128xf32, #tpu.memory_space<vmem>>, vector<8x128xf32>
      %cst_20 = arith.constant dense<0.000000e+00> : vector<8xf32>
      %37 = vector.multi_reduction <add>, %36, %cst_20 [1] : vector<8x128xf32> to vector<8xf32>
      %38 = vector.shape_cast %37 : vector<8xf32> to vector<8x1xf32>
      %cst_21 = arith.constant 4.8828125E-4 : f32
      %39 = vector.broadcast %cst_21 : f32 to vector<8x1xf32>
      %40 = arith.mulf %35, %39 : vector<8x1xf32>
      %cst_22 = arith.constant 4.8828125E-4 : f32
      %41 = vector.broadcast %cst_22 : f32 to vector<8x1xf32>
      %42 = arith.mulf %38, %41 : vector<8x1xf32>
      %43 = arith.mulf %40, %40 : vector<8x1xf32>
      %44 = arith.subf %42, %43 : vector<8x1xf32>
      %cst_23 = arith.constant 0.000000e+00 : f32
      %45 = vector.broadcast %cst_23 : f32 to vector<8x1xf32>
      %46 = arith.maximumf %44, %45 : vector<8x1xf32>
      %c0_24 = arith.constant 0 : index
      %c0_25 = arith.constant 0 : index
      %47 = vector.load %arg16[%c0_24, %c0_25] : memref<8x1xf32, #tpu.memory_space<vmem>>, vector<8x1xf32>
      %cst_26 = arith.constant 9.99999974E-6 : f32
      %48 = vector.broadcast %cst_26 : f32 to vector<8x1xf32>
      %49 = arith.addf %46, %48 : vector<8x1xf32>
      %50 = math.rsqrt %49 : vector<8x1xf32>
      %51 = arith.mulf %47, %50 : vector<8x1xf32>
      %c0_27 = arith.constant 0 : index
      %c0_28 = arith.constant 0 : index
      %52 = vector.load %arg32[%c0_27, %c0_28] : memref<8x1xf32, #tpu.memory_space<vmem>>, vector<8x1xf32>
      tpu.vector_store %arg32[%c0_27, %c0_28], %51 {strides = array<i32>} : memref<8x1xf32, #tpu.memory_space<vmem>>, vector<8x1xf32>,
      %c0_29 = arith.constant 0 : index
      %c0_30 = arith.constant 0 : index
      %53 = vector.load %arg17[%c0_29, %c0_30] : memref<8x1xf32, #tpu.memory_space<vmem>>, vector<8x1xf32>
      %54 = arith.mulf %40, %51 : vector<8x1xf32>
      %55 = arith.subf %53, %54 : vector<8x1xf32>
      %c0_31 = arith.constant 0 : index
      %c0_32 = arith.constant 0 : index
      %56 = vector.load %arg33[%c0_31, %c0_32] : memref<8x1xf32, #tpu.memory_space<vmem>>, vector<8x1xf32>
      tpu.vector_store %arg33[%c0_31, %c0_32], %55 {strides = array<i32>} : memref<8x1xf32, #tpu.memory_space<vmem>>, vector<8x1xf32>,
    } else {
    }
    %c0_i32_8 = arith.constant 0 : i32
    %21 = arith.cmpi eq, %arg0, %c0_i32_8 : i32
    %22 = arith.extui %21 : i1 to i32
    %c0_i32_9 = arith.constant 0 : i32
    %23 = arith.cmpi ne, %22, %c0_i32_9 : i32
    scf.if %23 {
      %c0_16 = arith.constant 0 : index
      %c0_17 = arith.constant 0 : index
      %c0_18 = arith.constant 0 : index
      %33 = vector.load %arg3[%c0_16, %c0_17, %c0_18] : memref<1x32x1xf32, #tpu.memory_space<vmem>>, vector<1x32x1xf32>
      %34 = vector.shape_cast %33 : vector<1x32x1xf32> to vector<32x1xf32>
      %c0_19 = arith.constant 0 : index
      %c0_20 = arith.constant 0 : index
      %35 = vector.load %arg5[%c0_19, %c0_20] : memref<32x3xf32, #tpu.memory_space<vmem>>, vector<32x3xf32>
      %cst = arith.constant dense<0.000000e+00> : vector<32x1024xf32>
      %36 = tpu.matmul %35, %4, %cst {dimension_numbers = #tpu.dot_dimension_numbers<[1], [0], [0], [1], [0, 0, 1, 1], [], []>} : vector<32x3xf32>, vector<3x1024xf32>, vector<32x1024xf32> -> vector<32x1024xf32>
      %37 = vector.broadcast %34 : vector<32x1xf32> to vector<32x1024xf32>
      %38 = arith.addf %37, %36 : vector<32x1024xf32>
      %cst_21 = arith.constant 0.000000e+00 : f32
      %39 = vector.broadcast %cst_21 : f32 to vector<32x128xf32>
      %cst_22 = arith.constant 0.000000e+00 : f32
      %40 = vector.broadcast %cst_22 : f32 to vector<32x128xf32>
      %41 = vector.extract_strided_slice %38 {offsets = [0, 0], sizes = [32, 128], strides = [1, 1]} : vector<32x1024xf32> to vector<32x128xf32>
      %42 = arith.addf %39, %41 : vector<32x128xf32>
      %43 = arith.mulf %41, %41 : vector<32x128xf32>
      %44 = arith.addf %40, %43 : vector<32x128xf32>
      %45 = vector.extract_strided_slice %38 {offsets = [0, 128], sizes = [32, 128], strides = [1, 1]} : vector<32x1024xf32> to vector<32x128xf32>
      %46 = arith.addf %42, %45 : vector<32x128xf32>
      %47 = arith.mulf %45, %45 : vector<32x128xf32>
      %48 = arith.addf %44, %47 : vector<32x128xf32>
      %49 = vector.extract_strided_slice %38 {offsets = [0, 256], sizes = [32, 128], strides = [1, 1]} : vector<32x1024xf32> to vector<32x128xf32>
      %50 = arith.addf %46, %49 : vector<32x128xf32>
      %51 = arith.mulf %49, %49 : vector<32x128xf32>
      %52 = arith.addf %48, %51 : vector<32x128xf32>
      %53 = vector.extract_strided_slice %38 {offsets = [0, 384], sizes = [32, 128], strides = [1, 1]} : vector<32x1024xf32> to vector<32x128xf32>
      %54 = arith.addf %50, %53 : vector<32x128xf32>
      %55 = arith.mulf %53, %53 : vector<32x128xf32>
      %56 = arith.addf %52, %55 : vector<32x128xf32>
      %57 = vector.extract_strided_slice %38 {offsets = [0, 512], sizes = [32, 128], strides = [1, 1]} : vector<32x1024xf32> to vector<32x128xf32>
      %58 = arith.addf %54, %57 : vector<32x128xf32>
      %59 = arith.mulf %57, %57 : vector<32x128xf32>
      %60 = arith.addf %56, %59 : vector<32x128xf32>
      %61 = vector.extract_strided_slice %38 {offsets = [0, 640], sizes = [32, 128], strides = [1, 1]} : vector<32x1024xf32> to vector<32x128xf32>
      %62 = arith.addf %58, %61 : vector<32x128xf32>
      %63 = arith.mulf %61, %61 : vector<32x128xf32>
      %64 = arith.addf %60, %63 : vector<32x128xf32>
      %65 = vector.extract_strided_slice %38 {offsets = [0, 768], sizes = [32, 128], strides = [1, 1]} : vector<32x1024xf32> to vector<32x128xf32>
      %66 = arith.addf %62, %65 : vector<32x128xf32>
      %67 = arith.mulf %65, %65 : vector<32x128xf32>
      %68 = arith.addf %64, %67 : vector<32x128xf32>
      %69 = vector.extract_strided_slice %38 {offsets = [0, 896], sizes = [32, 128], strides = [1, 1]} : vector<32x1024xf32> to vector<32x128xf32>
      %70 = arith.addf %66, %69 : vector<32x128xf32>
      %71 = arith.mulf %69, %69 : vector<32x128xf32>
      %72 = arith.addf %68, %71 : vector<32x128xf32>
      %c0_23 = arith.constant 0 : index
      %c0_24 = arith.constant 0 : index
      %73 = vector.load %arg22[%c0_23, %c0_24] : memref<32x128xf32, #tpu.memory_space<vmem>>, vector<32x128xf32>
      %74 = arith.addf %73, %70 : vector<32x128xf32>
      %c0_25 = arith.constant 0 : index
      %c0_26 = arith.constant 0 : index
      %75 = vector.load %arg22[%c0_25, %c0_26] : memref<32x128xf32, #tpu.memory_space<vmem>>, vector<32x128xf32>
      tpu.vector_store %arg22[%c0_25, %c0_26], %74 {strides = array<i32>} : memref<32x128xf32, #tpu.memory_space<vmem>>, vector<32x128xf32>,
      %c0_27 = arith.constant 0 : index
      %c0_28 = arith.constant 0 : index
      %76 = vector.load %arg23[%c0_27, %c0_28] : memref<32x128xf32, #tpu.memory_space<vmem>>, vector<32x128xf32>
      %77 = arith.addf %76, %72 : vector<32x128xf32>
      %c0_29 = arith.constant 0 : index
      %c0_30 = arith.constant 0 : index
      %78 = vector.load %arg23[%c0_29, %c0_30] : memref<32x128xf32, #tpu.memory_space<vmem>>, vector<32x128xf32>
      tpu.vector_store %arg23[%c0_29, %c0_30], %77 {strides = array<i32>} : memref<32x128xf32, #tpu.memory_space<vmem>>, vector<32x128xf32>,
    } else {
    }
    %c1_i32_10 = arith.constant 1 : i32
    %24 = arith.cmpi eq, %arg0, %c1_i32_10 : i32
    %25 = arith.extui %24 : i1 to i32
    %c0_i32_11 = arith.constant 0 : i32
    %26 = arith.cmpi ne, %25, %c0_i32_11 : i32
    scf.if %26 {
      %c0_16 = arith.constant 0 : index
      %c0_17 = arith.constant 0 : index
      %c0_18 = arith.constant 0 : index
      %33 = vector.load %arg3[%c0_16, %c0_17, %c0_18] : memref<1x32x1xf32, #tpu.memory_space<vmem>>, vector<1x32x1xf32>
      %34 = vector.shape_cast %33 : vector<1x32x1xf32> to vector<32x1xf32>
      %c0_19 = arith.constant 0 : index
      %c0_20 = arith.constant 0 : index
      %35 = vector.load %arg5[%c0_19, %c0_20] : memref<32x3xf32, #tpu.memory_space<vmem>>, vector<32x3xf32>
      %cst = arith.constant dense<0.000000e+00> : vector<32x1024xf32>
      %36 = tpu.matmul %35, %4, %cst {dimension_numbers = #tpu.dot_dimension_numbers<[1], [0], [0], [1], [0, 0, 1, 1], [], []>} : vector<32x3xf32>, vector<3x1024xf32>, vector<32x1024xf32> -> vector<32x1024xf32>
      %37 = vector.broadcast %34 : vector<32x1xf32> to vector<32x1024xf32>
      %38 = arith.addf %37, %36 : vector<32x1024xf32>
      %c0_21 = arith.constant 0 : index
      %c0_22 = arith.constant 0 : index
      %39 = vector.load %arg28[%c0_21, %c0_22] : memref<32x1xf32, #tpu.memory_space<vmem>>, vector<32x1xf32>
      %40 = vector.broadcast %39 : vector<32x1xf32> to vector<32x1024xf32>
      %41 = arith.mulf %38, %40 : vector<32x1024xf32>
      %c0_23 = arith.constant 0 : index
      %c0_24 = arith.constant 0 : index
      %42 = vector.load %arg29[%c0_23, %c0_24] : memref<32x1xf32, #tpu.memory_space<vmem>>, vector<32x1xf32>
      %43 = vector.broadcast %42 : vector<32x1xf32> to vector<32x1024xf32>
      %44 = arith.addf %41, %43 : vector<32x1024xf32>
      %cst_25 = arith.constant 0.000000e+00 : f32
      %45 = vector.broadcast %cst_25 : f32 to vector<32x1024xf32>
      %46 = arith.maximumf %44, %45 : vector<32x1024xf32>
      %c0_26 = arith.constant 0 : index
      %c0_27 = arith.constant 0 : index
      %47 = vector.load %arg8[%c0_26, %c0_27] : memref<16x32xf32, #tpu.memory_space<vmem>>, vector<16x32xf32>
      %cst_28 = arith.constant dense<0.000000e+00> : vector<16x1024xf32>
      %48 = tpu.matmul %47, %46, %cst_28 {dimension_numbers = #tpu.dot_dimension_numbers<[1], [0], [0], [1], [0, 0, 1, 1], [], []>} : vector<16x32xf32>, vector<32x1024xf32>, vector<16x1024xf32> -> vector<16x1024xf32>
      %c0_29 = arith.constant 0 : index
      %c0_30 = arith.constant 0 : index
      %49 = vector.load %arg9[%c0_29, %c0_30] : memref<16x3xf32, #tpu.memory_space<vmem>>, vector<16x3xf32>
      %cst_31 = arith.constant dense<0.000000e+00> : vector<16x1024xf32>
      %50 = tpu.matmul %49, %4, %cst_31 {dimension_numbers = #tpu.dot_dimension_numbers<[1], [0], [0], [1], [0, 0, 1, 1], [], []>} : vector<16x3xf32>, vector<3x1024xf32>, vector<16x1024xf32> -> vector<16x1024xf32>
      %51 = arith.addf %48, %50 : vector<16x1024xf32>
      %c0_32 = arith.constant 0 : index
      %c0_33 = arith.constant 0 : index
      %52 = vector.load %arg10[%c0_32, %c0_33] : memref<16x1xf32, #tpu.memory_space<vmem>>, vector<16x1xf32>
      %53 = vector.broadcast %52 : vector<16x1xf32> to vector<16x1024xf32>
      %54 = arith.addf %51, %53 : vector<16x1024xf32>
      %cst_34 = arith.constant 0.000000e+00 : f32
      %55 = vector.broadcast %cst_34 : f32 to vector<16x128xf32>
      %cst_35 = arith.constant 0.000000e+00 : f32
      %56 = vector.broadcast %cst_35 : f32 to vector<16x128xf32>
      %57 = vector.extract_strided_slice %54 {offsets = [0, 0], sizes = [16, 128], strides = [1, 1]} : vector<16x1024xf32> to vector<16x128xf32>
      %58 = arith.addf %55, %57 : vector<16x128xf32>
      %59 = arith.mulf %57, %57 : vector<16x128xf32>
      %60 = arith.addf %56, %59 : vector<16x128xf32>
      %61 = vector.extract_strided_slice %54 {offsets = [0, 128], sizes = [16, 128], strides = [1, 1]} : vector<16x1024xf32> to vector<16x128xf32>
      %62 = arith.addf %58, %61 : vector<16x128xf32>
      %63 = arith.mulf %61, %61 : vector<16x128xf32>
      %64 = arith.addf %60, %63 : vector<16x128xf32>
      %65 = vector.extract_strided_slice %54 {offsets = [0, 256], sizes = [16, 128], strides = [1, 1]} : vector<16x1024xf32> to vector<16x128xf32>
      %66 = arith.addf %62, %65 : vector<16x128xf32>
      %67 = arith.mulf %65, %65 : vector<16x128xf32>
      %68 = arith.addf %64, %67 : vector<16x128xf32>
      %69 = vector.extract_strided_slice %54 {offsets = [0, 384], sizes = [16, 128], strides = [1, 1]} : vector<16x1024xf32> to vector<16x128xf32>
      %70 = arith.addf %66, %69 : vector<16x128xf32>
      %71 = arith.mulf %69, %69 : vector<16x128xf32>
      %72 = arith.addf %68, %71 : vector<16x128xf32>
      %73 = vector.extract_strided_slice %54 {offsets = [0, 512], sizes = [16, 128], strides = [1, 1]} : vector<16x1024xf32> to vector<16x128xf32>
      %74 = arith.addf %70, %73 : vector<16x128xf32>
      %75 = arith.mulf %73, %73 : vector<16x128xf32>
      %76 = arith.addf %72, %75 : vector<16x128xf32>
      %77 = vector.extract_strided_slice %54 {offsets = [0, 640], sizes = [16, 128], strides = [1, 1]} : vector<16x1024xf32> to vector<16x128xf32>
      %78 = arith.addf %74, %77 : vector<16x128xf32>
      %79 = arith.mulf %77, %77 : vector<16x128xf32>
      %80 = arith.addf %76, %79 : vector<16x128xf32>
      %81 = vector.extract_strided_slice %54 {offsets = [0, 768], sizes = [16, 128], strides = [1, 1]} : vector<16x1024xf32> to vector<16x128xf32>
      %82 = arith.addf %78, %81 : vector<16x128xf32>
      %83 = arith.mulf %81, %81 : vector<16x128xf32>
      %84 = arith.addf %80, %83 : vector<16x128xf32>
      %85 = vector.extract_strided_slice %54 {offsets = [0, 896], sizes = [16, 128], strides = [1, 1]} : vector<16x1024xf32> to vector<16x128xf32>
      %86 = arith.addf %82, %85 : vector<16x128xf32>
      %87 = arith.mulf %85, %85 : vector<16x128xf32>
      %88 = arith.addf %84, %87 : vector<16x128xf32>
      %c0_36 = arith.constant 0 : index
      %c0_37 = arith.constant 0 : index
      %89 = vector.load %arg24[%c0_36, %c0_37] : memref<16x128xf32, #tpu.memory_space<vmem>>, vector<16x128xf32>
      %90 = arith.addf %89, %86 : vector<16x128xf32>
      %c0_38 = arith.constant 0 : index
      %c0_39 = arith.constant 0 : index
      %91 = vector.load %arg24[%c0_38, %c0_39] : memref<16x128xf32, #tpu.memory_space<vmem>>, vector<16x128xf32>
      tpu.vector_store %arg24[%c0_38, %c0_39], %90 {strides = array<i32>} : memref<16x128xf32, #tpu.memory_space<vmem>>, vector<16x128xf32>,
      %c0_40 = arith.constant 0 : index
      %c0_41 = arith.constant 0 : index
      %92 = vector.load %arg25[%c0_40, %c0_41] : memref<16x128xf32, #tpu.memory_space<vmem>>, vector<16x128xf32>
      %93 = arith.addf %92, %88 : vector<16x128xf32>
      %c0_42 = arith.constant 0 : index
      %c0_43 = arith.constant 0 : index
      %94 = vector.load %arg25[%c0_42, %c0_43] : memref<16x128xf32, #tpu.memory_space<vmem>>, vector<16x128xf32>
      tpu.vector_store %arg25[%c0_42, %c0_43], %93 {strides = array<i32>} : memref<16x128xf32, #tpu.memory_space<vmem>>, vector<16x128xf32>,
    } else {
    }
    %c2_i32_12 = arith.constant 2 : i32
    %27 = arith.cmpi eq, %arg0, %c2_i32_12 : i32
    %28 = arith.extui %27 : i1 to i32
    %c0_i32_13 = arith.constant 0 : i32
    %29 = arith.cmpi ne, %28, %c0_i32_13 : i32
    scf.if %29 {
      %c0_16 = arith.constant 0 : index
      %c0_17 = arith.constant 0 : index
      %c0_18 = arith.constant 0 : index
      %33 = vector.load %arg3[%c0_16, %c0_17, %c0_18] : memref<1x32x1xf32, #tpu.memory_space<vmem>>, vector<1x32x1xf32>
      %34 = vector.shape_cast %33 : vector<1x32x1xf32> to vector<32x1xf32>
      %c0_19 = arith.constant 0 : index
      %c0_20 = arith.constant 0 : index
      %35 = vector.load %arg5[%c0_19, %c0_20] : memref<32x3xf32, #tpu.memory_space<vmem>>, vector<32x3xf32>
      %cst = arith.constant dense<0.000000e+00> : vector<32x1024xf32>
      %36 = tpu.matmul %35, %4, %cst {dimension_numbers = #tpu.dot_dimension_numbers<[1], [0], [0], [1], [0, 0, 1, 1], [], []>} : vector<32x3xf32>, vector<3x1024xf32>, vector<32x1024xf32> -> vector<32x1024xf32>
      %37 = vector.broadcast %34 : vector<32x1xf32> to vector<32x1024xf32>
      %38 = arith.addf %37, %36 : vector<32x1024xf32>
      %c0_21 = arith.constant 0 : index
      %c0_22 = arith.constant 0 : index
      %39 = vector.load %arg28[%c0_21, %c0_22] : memref<32x1xf32, #tpu.memory_space<vmem>>, vector<32x1xf32>
      %40 = vector.broadcast %39 : vector<32x1xf32> to vector<32x1024xf32>
      %41 = arith.mulf %38, %40 : vector<32x1024xf32>
      %c0_23 = arith.constant 0 : index
      %c0_24 = arith.constant 0 : index
      %42 = vector.load %arg29[%c0_23, %c0_24] : memref<32x1xf32, #tpu.memory_space<vmem>>, vector<32x1xf32>
      %43 = vector.broadcast %42 : vector<32x1xf32> to vector<32x1024xf32>
      %44 = arith.addf %41, %43 : vector<32x1024xf32>
      %cst_25 = arith.constant 0.000000e+00 : f32
      %45 = vector.broadcast %cst_25 : f32 to vector<32x1024xf32>
      %46 = arith.maximumf %44, %45 : vector<32x1024xf32>
      %c0_26 = arith.constant 0 : index
      %c0_27 = arith.constant 0 : index
      %47 = vector.load %arg8[%c0_26, %c0_27] : memref<16x32xf32, #tpu.memory_space<vmem>>, vector<16x32xf32>
      %cst_28 = arith.constant dense<0.000000e+00> : vector<16x1024xf32>
      %48 = tpu.matmul %47, %46, %cst_28 {dimension_numbers = #tpu.dot_dimension_numbers<[1], [0], [0], [1], [0, 0, 1, 1], [], []>} : vector<16x32xf32>, vector<32x1024xf32>, vector<16x1024xf32> -> vector<16x1024xf32>
      %c0_29 = arith.constant 0 : index
      %c0_30 = arith.constant 0 : index
      %49 = vector.load %arg9[%c0_29, %c0_30] : memref<16x3xf32, #tpu.memory_space<vmem>>, vector<16x3xf32>
      %cst_31 = arith.constant dense<0.000000e+00> : vector<16x1024xf32>
      %50 = tpu.matmul %49, %4, %cst_31 {dimension_numbers = #tpu.dot_dimension_numbers<[1], [0], [0], [1], [0, 0, 1, 1], [], []>} : vector<16x3xf32>, vector<3x1024xf32>, vector<16x1024xf32> -> vector<16x1024xf32>
      %51 = arith.addf %48, %50 : vector<16x1024xf32>
      %c0_32 = arith.constant 0 : index
      %c0_33 = arith.constant 0 : index
      %52 = vector.load %arg10[%c0_32, %c0_33] : memref<16x1xf32, #tpu.memory_space<vmem>>, vector<16x1xf32>
      %53 = vector.broadcast %52 : vector<16x1xf32> to vector<16x1024xf32>
      %54 = arith.addf %51, %53 : vector<16x1024xf32>
      %c0_34 = arith.constant 0 : index
      %c0_35 = arith.constant 0 : index
      %55 = vector.load %arg30[%c0_34, %c0_35] : memref<16x1xf32, #tpu.memory_space<vmem>>, vector<16x1xf32>
      %56 = vector.broadcast %55 : vector<16x1xf32> to vector<16x1024xf32>
      %57 = arith.mulf %54, %56 : vector<16x1024xf32>
      %c0_36 = arith.constant 0 : index
      %c0_37 = arith.constant 0 : index
      %58 = vector.load %arg31[%c0_36, %c0_37] : memref<16x1xf32, #tpu.memory_space<vmem>>, vector<16x1xf32>
      %59 = vector.broadcast %58 : vector<16x1xf32> to vector<16x1024xf32>
      %60 = arith.addf %57, %59 : vector<16x1024xf32>
      %cst_38 = arith.constant 0.000000e+00 : f32
      %61 = vector.broadcast %cst_38 : f32 to vector<16x1024xf32>
      %62 = arith.maximumf %60, %61 : vector<16x1024xf32>
      %c0_39 = arith.constant 0 : index
      %c0_40 = arith.constant 0 : index
      %63 = vector.load %arg13[%c0_39, %c0_40] : memref<8x16xf32, #tpu.memory_space<vmem>>, vector<8x16xf32>
      %cst_41 = arith.constant dense<0.000000e+00> : vector<8x1024xf32>
      %64 = tpu.matmul %63, %62, %cst_41 {dimension_numbers = #tpu.dot_dimension_numbers<[1], [0], [0], [1], [0, 0, 1, 1], [], []>} : vector<8x16xf32>, vector<16x1024xf32>, vector<8x1024xf32> -> vector<8x1024xf32>
      %c0_42 = arith.constant 0 : index
      %c0_43 = arith.constant 0 : index
      %65 = vector.load %arg14[%c0_42, %c0_43] : memref<8x3xf32, #tpu.memory_space<vmem>>, vector<8x3xf32>
      %cst_44 = arith.constant dense<0.000000e+00> : vector<8x1024xf32>
      %66 = tpu.matmul %65, %4, %cst_44 {dimension_numbers = #tpu.dot_dimension_numbers<[1], [0], [0], [1], [0, 0, 1, 1], [], []>} : vector<8x3xf32>, vector<3x1024xf32>, vector<8x1024xf32> -> vector<8x1024xf32>
      %67 = arith.addf %64, %66 : vector<8x1024xf32>
      %c0_45 = arith.constant 0 : index
      %c0_46 = arith.constant 0 : index
      %68 = vector.load %arg15[%c0_45, %c0_46] : memref<8x1xf32, #tpu.memory_space<vmem>>, vector<8x1xf32>
      %69 = vector.broadcast %68 : vector<8x1xf32> to vector<8x1024xf32>
      %70 = arith.addf %67, %69 : vector<8x1024xf32>
      %cst_47 = arith.constant 0.000000e+00 : f32
      %71 = vector.broadcast %cst_47 : f32 to vector<8x128xf32>
      %cst_48 = arith.constant 0.000000e+00 : f32
      %72 = vector.broadcast %cst_48 : f32 to vector<8x128xf32>
      %73 = vector.extract_strided_slice %70 {offsets = [0, 0], sizes = [8, 128], strides = [1, 1]} : vector<8x1024xf32> to vector<8x128xf32>
      %74 = arith.addf %71, %73 : vector<8x128xf32>
      %75 = arith.mulf %73, %73 : vector<8x128xf32>
      %76 = arith.addf %72, %75 : vector<8x128xf32>
      %77 = vector.extract_strided_slice %70 {offsets = [0, 128], sizes = [8, 128], strides = [1, 1]} : vector<8x1024xf32> to vector<8x128xf32>
      %78 = arith.addf %74, %77 : vector<8x128xf32>
      %79 = arith.mulf %77, %77 : vector<8x128xf32>
      %80 = arith.addf %76, %79 : vector<8x128xf32>
      %81 = vector.extract_strided_slice %70 {offsets = [0, 256], sizes = [8, 128], strides = [1, 1]} : vector<8x1024xf32> to vector<8x128xf32>
      %82 = arith.addf %78, %81 : vector<8x128xf32>
      %83 = arith.mulf %81, %81 : vector<8x128xf32>
      %84 = arith.addf %80, %83 : vector<8x128xf32>
      %85 = vector.extract_strided_slice %70 {offsets = [0, 384], sizes = [8, 128], strides = [1, 1]} : vector<8x1024xf32> to vector<8x128xf32>
      %86 = arith.addf %82, %85 : vector<8x128xf32>
      %87 = arith.mulf %85, %85 : vector<8x128xf32>
      %88 = arith.addf %84, %87 : vector<8x128xf32>
      %89 = vector.extract_strided_slice %70 {offsets = [0, 512], sizes = [8, 128], strides = [1, 1]} : vector<8x1024xf32> to vector<8x128xf32>
      %90 = arith.addf %86, %89 : vector<8x128xf32>
      %91 = arith.mulf %89, %89 : vector<8x128xf32>
      %92 = arith.addf %88, %91 : vector<8x128xf32>
      %93 = vector.extract_strided_slice %70 {offsets = [0, 640], sizes = [8, 128], strides = [1, 1]} : vector<8x1024xf32> to vector<8x128xf32>
      %94 = arith.addf %90, %93 : vector<8x128xf32>
      %95 = arith.mulf %93, %93 : vector<8x128xf32>
      %96 = arith.addf %92, %95 : vector<8x128xf32>
      %97 = vector.extract_strided_slice %70 {offsets = [0, 768], sizes = [8, 128], strides = [1, 1]} : vector<8x1024xf32> to vector<8x128xf32>
      %98 = arith.addf %94, %97 : vector<8x128xf32>
      %99 = arith.mulf %97, %97 : vector<8x128xf32>
      %100 = arith.addf %96, %99 : vector<8x128xf32>
      %101 = vector.extract_strided_slice %70 {offsets = [0, 896], sizes = [8, 128], strides = [1, 1]} : vector<8x1024xf32> to vector<8x128xf32>
      %102 = arith.addf %98, %101 : vector<8x128xf32>
      %103 = arith.mulf %101, %101 : vector<8x128xf32>
      %104 = arith.addf %100, %103 : vector<8x128xf32>
      %c0_49 = arith.constant 0 : index
      %c0_50 = arith.constant 0 : index
      %105 = vector.load %arg26[%c0_49, %c0_50] : memref<8x128xf32, #tpu.memory_space<vmem>>, vector<8x128xf32>
      %106 = arith.addf %105, %102 : vector<8x128xf32>
      %c0_51 = arith.constant 0 : index
      %c0_52 = arith.constant 0 : index
      %107 = vector.load %arg26[%c0_51, %c0_52] : memref<8x128xf32, #tpu.memory_space<vmem>>, vector<8x128xf32>
      tpu.vector_store %arg26[%c0_51, %c0_52], %106 {strides = array<i32>} : memref<8x128xf32, #tpu.memory_space<vmem>>, vector<8x128xf32>,
      %c0_53 = arith.constant 0 : index
      %c0_54 = arith.constant 0 : index
      %108 = vector.load %arg27[%c0_53, %c0_54] : memref<8x128xf32, #tpu.memory_space<vmem>>, vector<8x128xf32>
      %109 = arith.addf %108, %104 : vector<8x128xf32>
      %c0_55 = arith.constant 0 : index
      %c0_56 = arith.constant 0 : index
      %110 = vector.load %arg27[%c0_55, %c0_56] : memref<8x128xf32, #tpu.memory_space<vmem>>, vector<8x128xf32>
      tpu.vector_store %arg27[%c0_55, %c0_56], %109 {strides = array<i32>} : memref<8x128xf32, #tpu.memory_space<vmem>>, vector<8x128xf32>,
    } else {
    }
    %c3_i32_14 = arith.constant 3 : i32
    %30 = arith.cmpi eq, %arg0, %c3_i32_14 : i32
    %31 = arith.extui %30 : i1 to i32
    %c0_i32_15 = arith.constant 0 : i32
    %32 = arith.cmpi ne, %31, %c0_i32_15 : i32
    scf.if %32 {
      %c0_16 = arith.constant 0 : index
      %c0_17 = arith.constant 0 : index
      %c0_18 = arith.constant 0 : index
      %33 = vector.load %arg3[%c0_16, %c0_17, %c0_18] : memref<1x32x1xf32, #tpu.memory_space<vmem>>, vector<1x32x1xf32>
      %34 = vector.shape_cast %33 : vector<1x32x1xf32> to vector<32x1xf32>
      %c0_19 = arith.constant 0 : index
      %c0_20 = arith.constant 0 : index
      %35 = vector.load %arg5[%c0_19, %c0_20] : memref<32x3xf32, #tpu.memory_space<vmem>>, vector<32x3xf32>
      %cst = arith.constant dense<0.000000e+00> : vector<32x1024xf32>
      %36 = tpu.matmul %35, %4, %cst {dimension_numbers = #tpu.dot_dimension_numbers<[1], [0], [0], [1], [0, 0, 1, 1], [], []>} : vector<32x3xf32>, vector<3x1024xf32>, vector<32x1024xf32> -> vector<32x1024xf32>
      %37 = vector.broadcast %34 : vector<32x1xf32> to vector<32x1024xf32>
      %38 = arith.addf %37, %36 : vector<32x1024xf32>
      %c0_21 = arith.constant 0 : index
      %c0_22 = arith.constant 0 : index
      %39 = vector.load %arg28[%c0_21, %c0_22] : memref<32x1xf32, #tpu.memory_space<vmem>>, vector<32x1xf32>
      %40 = vector.broadcast %39 : vector<32x1xf32> to vector<32x1024xf32>
      %41 = arith.mulf %38, %40 : vector<32x1024xf32>
      %c0_23 = arith.constant 0 : index
      %c0_24 = arith.constant 0 : index
      %42 = vector.load %arg29[%c0_23, %c0_24] : memref<32x1xf32, #tpu.memory_space<vmem>>, vector<32x1xf32>
      %43 = vector.broadcast %42 : vector<32x1xf32> to vector<32x1024xf32>
      %44 = arith.addf %41, %43 : vector<32x1024xf32>
      %cst_25 = arith.constant 0.000000e+00 : f32
      %45 = vector.broadcast %cst_25 : f32 to vector<32x1024xf32>
      %46 = arith.maximumf %44, %45 : vector<32x1024xf32>
      %c0_26 = arith.constant 0 : index
      %c0_27 = arith.constant 0 : index
      %47 = vector.load %arg8[%c0_26, %c0_27] : memref<16x32xf32, #tpu.memory_space<vmem>>, vector<16x32xf32>
      %cst_28 = arith.constant dense<0.000000e+00> : vector<16x1024xf32>
      %48 = tpu.matmul %47, %46, %cst_28 {dimension_numbers = #tpu.dot_dimension_numbers<[1], [0], [0], [1], [0, 0, 1, 1], [], []>} : vector<16x32xf32>, vector<32x1024xf32>, vector<16x1024xf32> -> vector<16x1024xf32>
      %c0_29 = arith.constant 0 : index
      %c0_30 = arith.constant 0 : index
      %49 = vector.load %arg9[%c0_29, %c0_30] : memref<16x3xf32, #tpu.memory_space<vmem>>, vector<16x3xf32>
      %cst_31 = arith.constant dense<0.000000e+00> : vector<16x1024xf32>
      %50 = tpu.matmul %49, %4, %cst_31 {dimension_numbers = #tpu.dot_dimension_numbers<[1], [0], [0], [1], [0, 0, 1, 1], [], []>} : vector<16x3xf32>, vector<3x1024xf32>, vector<16x1024xf32> -> vector<16x1024xf32>
      %51 = arith.addf %48, %50 : vector<16x1024xf32>
      %c0_32 = arith.constant 0 : index
      %c0_33 = arith.constant 0 : index
      %52 = vector.load %arg10[%c0_32, %c0_33] : memref<16x1xf32, #tpu.memory_space<vmem>>, vector<16x1xf32>
      %53 = vector.broadcast %52 : vector<16x1xf32> to vector<16x1024xf32>
      %54 = arith.addf %51, %53 : vector<16x1024xf32>
      %c0_34 = arith.constant 0 : index
      %c0_35 = arith.constant 0 : index
      %55 = vector.load %arg30[%c0_34, %c0_35] : memref<16x1xf32, #tpu.memory_space<vmem>>, vector<16x1xf32>
      %56 = vector.broadcast %55 : vector<16x1xf32> to vector<16x1024xf32>
      %57 = arith.mulf %54, %56 : vector<16x1024xf32>
      %c0_36 = arith.constant 0 : index
      %c0_37 = arith.constant 0 : index
      %58 = vector.load %arg31[%c0_36, %c0_37] : memref<16x1xf32, #tpu.memory_space<vmem>>, vector<16x1xf32>
      %59 = vector.broadcast %58 : vector<16x1xf32> to vector<16x1024xf32>
      %60 = arith.addf %57, %59 : vector<16x1024xf32>
      %cst_38 = arith.constant 0.000000e+00 : f32
      %61 = vector.broadcast %cst_38 : f32 to vector<16x1024xf32>
      %62 = arith.maximumf %60, %61 : vector<16x1024xf32>
      %c0_39 = arith.constant 0 : index
      %c0_40 = arith.constant 0 : index
      %63 = vector.load %arg13[%c0_39, %c0_40] : memref<8x16xf32, #tpu.memory_space<vmem>>, vector<8x16xf32>
      %cst_41 = arith.constant dense<0.000000e+00> : vector<8x1024xf32>
      %64 = tpu.matmul %63, %62, %cst_41 {dimension_numbers = #tpu.dot_dimension_numbers<[1], [0], [0], [1], [0, 0, 1, 1], [], []>} : vector<8x16xf32>, vector<16x1024xf32>, vector<8x1024xf32> -> vector<8x1024xf32>
      %c0_42 = arith.constant 0 : index
      %c0_43 = arith.constant 0 : index
      %65 = vector.load %arg14[%c0_42, %c0_43] : memref<8x3xf32, #tpu.memory_space<vmem>>, vector<8x3xf32>
      %cst_44 = arith.constant dense<0.000000e+00> : vector<8x1024xf32>
      %66 = tpu.matmul %65, %4, %cst_44 {dimension_numbers = #tpu.dot_dimension_numbers<[1], [0], [0], [1], [0, 0, 1, 1], [], []>} : vector<8x3xf32>, vector<3x1024xf32>, vector<8x1024xf32> -> vector<8x1024xf32>
      %67 = arith.addf %64, %66 : vector<8x1024xf32>
      %c0_45 = arith.constant 0 : index
      %c0_46 = arith.constant 0 : index
      %68 = vector.load %arg15[%c0_45, %c0_46] : memref<8x1xf32, #tpu.memory_space<vmem>>, vector<8x1xf32>
      %69 = vector.broadcast %68 : vector<8x1xf32> to vector<8x1024xf32>
      %70 = arith.addf %67, %69 : vector<8x1024xf32>
      %c0_47 = arith.constant 0 : index
      %c0_48 = arith.constant 0 : index
      %71 = vector.load %arg32[%c0_47, %c0_48] : memref<8x1xf32, #tpu.memory_space<vmem>>, vector<8x1xf32>
      %72 = vector.broadcast %71 : vector<8x1xf32> to vector<8x1024xf32>
      %73 = arith.mulf %70, %72 : vector<8x1024xf32>
      %c0_49 = arith.constant 0 : index
      %c0_50 = arith.constant 0 : index
      %74 = vector.load %arg33[%c0_49, %c0_50] : memref<8x1xf32, #tpu.memory_space<vmem>>, vector<8x1xf32>
      %75 = vector.broadcast %74 : vector<8x1xf32> to vector<8x1024xf32>
      %76 = arith.addf %73, %75 : vector<8x1024xf32>
      %cst_51 = arith.constant 0.000000e+00 : f32
      %77 = vector.broadcast %cst_51 : f32 to vector<8x1024xf32>
      %78 = arith.maximumf %76, %77 : vector<8x1024xf32>
      %c0_52 = arith.constant 0 : index
      %c0_53 = arith.constant 0 : index
      %79 = vector.load %arg18[%c0_52, %c0_53] : memref<3x8xf32, #tpu.memory_space<vmem>>, vector<3x8xf32>
      %cst_54 = arith.constant dense<0.000000e+00> : vector<3x1024xf32>
      %80 = tpu.matmul %79, %78, %cst_54 {dimension_numbers = #tpu.dot_dimension_numbers<[1], [0], [0], [1], [0, 0, 1, 1], [], []>} : vector<3x8xf32>, vector<8x1024xf32>, vector<3x1024xf32> -> vector<3x1024xf32>
      %c0_55 = arith.constant 0 : index
      %c0_56 = arith.constant 0 : index
      %81 = vector.load %arg19[%c0_55, %c0_56] : memref<3x3xf32, #tpu.memory_space<vmem>>, vector<3x3xf32>
      %cst_57 = arith.constant dense<0.000000e+00> : vector<3x1024xf32>
      %82 = tpu.matmul %81, %4, %cst_57 {dimension_numbers = #tpu.dot_dimension_numbers<[1], [0], [0], [1], [0, 0, 1, 1], [], []>} : vector<3x3xf32>, vector<3x1024xf32>, vector<3x1024xf32> -> vector<3x1024xf32>
      %83 = arith.addf %80, %82 : vector<3x1024xf32>
      %c0_58 = arith.constant 0 : index
      %c0_59 = arith.constant 0 : index
      %84 = vector.load %arg20[%c0_58, %c0_59] : memref<3x1xf32, #tpu.memory_space<vmem>>, vector<3x1xf32>
      %85 = vector.broadcast %84 : vector<3x1xf32> to vector<3x1024xf32>
      %86 = arith.addf %83, %85 : vector<3x1024xf32>
      %87 = math.tanh %86 : vector<3x1024xf32>
      %c0_60 = arith.constant 0 : index
      %c0_61 = arith.constant 0 : index
      %c0_62 = arith.constant 0 : index
      %88 = vector.load %arg21[%c0_60, %c0_61, %c0_62] : memref<1x3x1024xf32, #tpu.memory_space<vmem>>, vector<1x3x1024xf32>
      %89 = vector.shape_cast %88 : vector<1x3x1024xf32> to vector<3x1024xf32>
      %90 = vector.shape_cast %87 : vector<3x1024xf32> to vector<1x3x1024xf32>
      tpu.vector_store %arg21[%c0_60, %c0_61, %c0_62], %90 {strides = array<i32>} : memref<1x3x1024xf32, #tpu.memory_space<vmem>>, vector<1x3x1024xf32>,
    } else {
    }
    return
  }
  func.func @transform_0(%arg0: i32, %arg1: i32, %arg2: i32) -> (i32, i32, i32) {
    %c0_i32 = arith.constant 0 : i32
    %c0_i32_0 = arith.constant 0 : i32
    %c0_i32_1 = arith.constant 0 : i32
    return %arg1, %c0_i32, %c0_i32_0 : i32, i32, i32
  }
  func.func @transform_1(%arg0: i32, %arg1: i32, %arg2: i32) -> (i32, i32, i32) {
    %c0_i32 = arith.constant 0 : i32
    %c0_i32_0 = arith.constant 0 : i32
    return %arg1, %c0_i32, %arg2 : i32, i32, i32
  }
  func.func @transform_2(%arg0: i32, %arg1: i32, %arg2: i32) -> (i32, i32) {
    %c0_i32 = arith.constant 0 : i32
    %c0_i32_0 = arith.constant 0 : i32
    %c0_i32_1 = arith.constant 0 : i32
    return %c0_i32, %c0_i32_0 : i32, i32
  }
  func.func @transform_3(%arg0: i32, %arg1: i32, %arg2: i32) -> (i32, i32) {
    %c0_i32 = arith.constant 0 : i32
    %c0_i32_0 = arith.constant 0 : i32
    %c0_i32_1 = arith.constant 0 : i32
    return %c0_i32, %c0_i32_0 : i32, i32
  }
  func.func @transform_4(%arg0: i32, %arg1: i32, %arg2: i32) -> (i32, i32) {
    %c0_i32 = arith.constant 0 : i32
    %c0_i32_0 = arith.constant 0 : i32
    %c0_i32_1 = arith.constant 0 : i32
    return %c0_i32, %c0_i32_0 : i32, i32
  }
  func.func @transform_5(%arg0: i32, %arg1: i32, %arg2: i32) -> (i32, i32) {
    %c0_i32 = arith.constant 0 : i32
    %c0_i32_0 = arith.constant 0 : i32
    %c0_i32_1 = arith.constant 0 : i32
    return %c0_i32, %c0_i32_0 : i32, i32
  }
  func.func @transform_6(%arg0: i32, %arg1: i32, %arg2: i32) -> (i32, i32) {
    %c0_i32 = arith.constant 0 : i32
    %c0_i32_0 = arith.constant 0 : i32
    %c0_i32_1 = arith.constant 0 : i32
    return %c0_i32, %c0_i32_0 : i32, i32
  }
  func.func @transform_7(%arg0: i32, %arg1: i32, %arg2: i32) -> (i32, i32) {
    %c0_i32 = arith.constant 0 : i32
    %c0_i32_0 = arith.constant 0 : i32
    %c0_i32_1 = arith.constant 0 : i32
    return %c0_i32, %c0_i32_0 : i32, i32
  }
  func.func @transform_8(%arg0: i32, %arg1: i32, %arg2: i32) -> (i32, i32) {
    %c0_i32 = arith.constant 0 : i32
    %c0_i32_0 = arith.constant 0 : i32
    %c0_i32_1 = arith.constant 0 : i32
    return %c0_i32, %c0_i32_0 : i32, i32
  }
  func.func @transform_9(%arg0: i32, %arg1: i32, %arg2: i32) -> (i32, i32) {
    %c0_i32 = arith.constant 0 : i32
    %c0_i32_0 = arith.constant 0 : i32
    %c0_i32_1 = arith.constant 0 : i32
    return %c0_i32, %c0_i32_0 : i32, i32
  }
  func.func @transform_10(%arg0: i32, %arg1: i32, %arg2: i32) -> (i32, i32) {
    %c0_i32 = arith.constant 0 : i32
    %c0_i32_0 = arith.constant 0 : i32
    %c0_i32_1 = arith.constant 0 : i32
    return %c0_i32, %c0_i32_0 : i32, i32
  }
  func.func @transform_11(%arg0: i32, %arg1: i32, %arg2: i32) -> (i32, i32) {
    %c0_i32 = arith.constant 0 : i32
    %c0_i32_0 = arith.constant 0 : i32
    %c0_i32_1 = arith.constant 0 : i32
    return %c0_i32, %c0_i32_0 : i32, i32
  }
  func.func @transform_12(%arg0: i32, %arg1: i32, %arg2: i32) -> (i32, i32) {
    %c0_i32 = arith.constant 0 : i32
    %c0_i32_0 = arith.constant 0 : i32
    %c0_i32_1 = arith.constant 0 : i32
    return %c0_i32, %c0_i32_0 : i32, i32
  }
  func.func @transform_13(%arg0: i32, %arg1: i32, %arg2: i32) -> (i32, i32) {
    %c0_i32 = arith.constant 0 : i32
    %c0_i32_0 = arith.constant 0 : i32
    %c0_i32_1 = arith.constant 0 : i32
    return %c0_i32, %c0_i32_0 : i32, i32
  }
  func.func @transform_14(%arg0: i32, %arg1: i32, %arg2: i32) -> (i32, i32) {
    %c0_i32 = arith.constant 0 : i32
    %c0_i32_0 = arith.constant 0 : i32
    %c0_i32_1 = arith.constant 0 : i32
    return %c0_i32, %c0_i32_0 : i32, i32
  }
  func.func @transform_15(%arg0: i32, %arg1: i32, %arg2: i32) -> (i32, i32) {
    %c0_i32 = arith.constant 0 : i32
    %c0_i32_0 = arith.constant 0 : i32
    %c0_i32_1 = arith.constant 0 : i32
    return %c0_i32, %c0_i32_0 : i32, i32
  }
  func.func @transform_16(%arg0: i32, %arg1: i32, %arg2: i32) -> (i32, i32) {
    %c0_i32 = arith.constant 0 : i32
    %c0_i32_0 = arith.constant 0 : i32
    %c0_i32_1 = arith.constant 0 : i32
    return %c0_i32, %c0_i32_0 : i32, i32
  }
  func.func @transform_17(%arg0: i32, %arg1: i32, %arg2: i32) -> (i32, i32) {
    %c0_i32 = arith.constant 0 : i32
    %c0_i32_0 = arith.constant 0 : i32
    %c0_i32_1 = arith.constant 0 : i32
    return %c0_i32, %c0_i32_0 : i32, i32
  }
  func.func @transform_18(%arg0: i32, %arg1: i32, %arg2: i32) -> (i32, i32, i32) {
    %c3_i32 = arith.constant 3 : i32
    %0 = arith.cmpi eq, %arg0, %c3_i32 : i32
    %c0_i32 = arith.constant 0 : i32
    %1 = arith.select %0, %arg1, %c0_i32 : i32
    %c0_i32_0 = arith.constant 0 : i32
    %2 = arith.select %0, %arg2, %c0_i32_0 : i32
    %c0_i32_1 = arith.constant 0 : i32
    %c0_i32_2 = arith.constant 0 : i32
    return %1, %c0_i32_1, %2 : i32, i32, i32
  }
}

</mosaic_0001>

<llo_original>
// kernel: tpu_custom_call.1
$region0: #{tpu_custom_call.1}
  #allocation0 [shape = 'u32[]', space=smem, size = 0x4, offset = 0x4, fixed_abs, tag = 'smem constant byte address 0x4 - core index']
  #allocation1 [shape = 'u32[144,128]{1,0:T(1,128)}', space=vmem, size = 0x12000, scoped, tag = 'internal scratch']
  #allocation2 [shape = 'f32[32,128]{1,0:T(8,128)}', space=vmem, size = 0x4000, scoped, tag = 'scratch operand']
  #allocation3 [shape = 'f32[32,128]{1,0:T(8,128)}', space=vmem, size = 0x4000, scoped, tag = 'scratch operand']
  #allocation4 [shape = 'f32[16,128]{1,0:T(8,128)}', space=vmem, size = 0x2000, scoped, tag = 'scratch operand']
  #allocation5 [shape = 'f32[16,128]{1,0:T(8,128)}', space=vmem, size = 0x2000, scoped, tag = 'scratch operand']
  #allocation6 [shape = 'f32[8,128]{1,0:T(8,128)}', space=vmem, size = 0x1000, scoped, tag = 'scratch operand']
  #allocation7 [shape = 'f32[8,128]{1,0:T(8,128)}', space=vmem, size = 0x1000, scoped, tag = 'scratch operand']
  #allocation8 [shape = 'f32[32,1]{1,0:T(8,128)}', space=vmem, size = 0x4000, scoped, tag = 'scratch operand']
  #allocation9 [shape = 'f32[32,1]{1,0:T(8,128)}', space=vmem, size = 0x4000, scoped, tag = 'scratch operand']
  #allocation10 [shape = 'f32[16,1]{1,0:T(8,128)}', space=vmem, size = 0x2000, scoped, tag = 'scratch operand']
  #allocation11 [shape = 'f32[16,1]{1,0:T(8,128)}', space=vmem, size = 0x2000, scoped, tag = 'scratch operand']
  #allocation12 [shape = 'f32[8,1]{1,0:T(8,128)}', space=vmem, size = 0x1000, scoped, tag = 'scratch operand']
  #allocation13 [shape = 'f32[8,1]{1,0:T(8,128)}', space=vmem, size = 0x1000, scoped, tag = 'scratch operand']
  %s0 = inlined_call_operand.vmem [shape: f32[2,32,1], index: 0, kind: input, shape index: {}]
  %s1 = inlined_call_operand.vmem [shape: f32[2,3,1024], index: 1, kind: input, shape index: {}]
  %s2 = inlined_call_operand.vmem [shape: f32[32,3], index: 2, kind: input, shape index: {}]
  %s3 = inlined_call_operand.vmem [shape: f32[32,1], index: 3, kind: input, shape index: {}]
  %s4 = inlined_call_operand.vmem [shape: f32[32,1], index: 4, kind: input, shape index: {}]
  %s5 = inlined_call_operand.vmem [shape: f32[16,32], index: 5, kind: input, shape index: {}]
  %s6 = inlined_call_operand.vmem [shape: f32[16,3], index: 6, kind: input, shape index: {}]
  %s7 = inlined_call_operand.vmem [shape: f32[16,1], index: 7, kind: input, shape index: {}]
  %s8 = inlined_call_operand.vmem [shape: f32[16,1], index: 8, kind: input, shape index: {}]
  %s9 = inlined_call_operand.vmem [shape: f32[16,1], index: 9, kind: input, shape index: {}]
  %s10 = inlined_call_operand.vmem [shape: f32[8,16], index: 10, kind: input, shape index: {}]
  %s11 = inlined_call_operand.vmem [shape: f32[8,3], index: 11, kind: input, shape index: {}]
  %s12 = inlined_call_operand.vmem [shape: f32[8,1], index: 12, kind: input, shape index: {}]
  %s13 = inlined_call_operand.vmem [shape: f32[8,1], index: 13, kind: input, shape index: {}]
  %s14 = inlined_call_operand.vmem [shape: f32[8,1], index: 14, kind: input, shape index: {}]
  %s15 = inlined_call_operand.vmem [shape: f32[3,8], index: 15, kind: input, shape index: {}]
  %s16 = inlined_call_operand.vmem [shape: f32[3,3], index: 16, kind: input, shape index: {}]
  %s17 = inlined_call_operand.vmem [shape: f32[3,1], index: 17, kind: input, shape index: {}]
  %s18 = inlined_call_operand.vmem [shape: f32[2,3,1024], index: 18, kind: output, shape index: {}]
  %s19 = sld [smem:[#allocation0]]
  $region137: #{tpu_custom_call.1} parent=0
    _
  %s21 = ssub.s32 1, %s19
  %s22 = scalar_select 0, %s21, %s19
  loop: start=0, step=1, limit=10
  $region2: #{tpu_custom_call.1} parent=0 // loop_pre_header
    _
  $region3: #{tpu_custom_call.1} parent=0 // loop_header
    %s24 = sphi 0, %s28
    %p25 = scmp.ge.s32.totalorder %s24, 10
    %s31 = sphi 0, %s50
    %s32 = sphi 0, %s46
    %s33 = sphi 0, %s42
    %s34 = sphi 0, %s31
    %s35 = sphi 0, %s32
    %s36 = sphi 0, %s33
    %s37 = sphi 0, %s34
    %s38 = sphi 0, %s35
    %s39 = sphi 0, %s36
    %s53 = sphi 0, %s55
    %s56 = sphi 0, %s53
    %s57 = sphi 0, %s56
    %s73 = sphi 0, %s57
    %s81 = sphi 0, %s83
    %s84 = sphi 0, %s81
    %s85 = sphi 0, %s84
    %s101 = sphi 0, %s85
    %s105 = sphi 0, %s105
    %s107 = sphi 0, %s105
    %s108 = sphi 0, %s107
    %s122 = sphi 0, %s108
    %s126 = sphi 0, %s126
    %s128 = sphi 0, %s126
    %s129 = sphi 0, %s128
    %s143 = sphi 0, %s129
    %s147 = sphi 0, %s147
    %s149 = sphi 0, %s147
    %s150 = sphi 0, %s149
    %s164 = sphi 0, %s150
    %s168 = sphi 0, %s168
    %s170 = sphi 0, %s168
    %s171 = sphi 0, %s170
    %s185 = sphi 0, %s171
    %s189 = sphi 0, %s189
    %s191 = sphi 0, %s189
    %s192 = sphi 0, %s191
    %s206 = sphi 0, %s192
    %s210 = sphi 0, %s210
    %s212 = sphi 0, %s210
    %s213 = sphi 0, %s212
    %s227 = sphi 0, %s213
    %s231 = sphi 0, %s231
    %s233 = sphi 0, %s231
    %s234 = sphi 0, %s233
    %s248 = sphi 0, %s234
    %s252 = sphi 0, %s252
    %s254 = sphi 0, %s252
    %s255 = sphi 0, %s254
    %s269 = sphi 0, %s255
    %s273 = sphi 0, %s273
    %s275 = sphi 0, %s273
    %s276 = sphi 0, %s275
    %s290 = sphi 0, %s276
    %s294 = sphi 0, %s294
    %s296 = sphi 0, %s294
    %s297 = sphi 0, %s296
    %s311 = sphi 0, %s297
    %s315 = sphi 0, %s315
    %s317 = sphi 0, %s315
    %s318 = sphi 0, %s317
    %s332 = sphi 0, %s318
    %s336 = sphi 0, %s336
    %s338 = sphi 0, %s336
    %s339 = sphi 0, %s338
    %s353 = sphi 0, %s339
    %s357 = sphi 0, %s357
    %s359 = sphi 0, %s357
    %s360 = sphi 0, %s359
    %s374 = sphi 0, %s360
    %s378 = sphi 0, %s378
    %s380 = sphi 0, %s378
    %s381 = sphi 0, %s380
    %s395 = sphi 0, %s381
    %s399 = sphi 0, %s399
    %s401 = sphi 0, %s399
    %s402 = sphi 0, %s401
    %s416 = sphi 0, %s402
    %s420 = sphi 0, %s420
    %s422 = sphi 0, %s420
    %s423 = sphi 0, %s422
    %s437 = sphi 0, %s423
    %s451 = sphi 0, %s453
    %s454 = sphi 0, %s451
    %s455 = sphi 0, %s454
    %s471 = sphi 0, %s455
  $region4: #{tpu_custom_call.1} parent=0 // loop_header_branch
    %27 = sbr.rel (%p25) target = $region8
  $region5: #{tpu_custom_call.1} parent=0 // loop_body
    %s29 = ssub.s32 %s24, 1
    %s30 = ssub.s32 %s24, 2
    %s40 = sadd.s32 1, %s33
    %p41 = scmp.ge.s32.totalorder %s40, 1
    %s42 = scalar_select %p41, 0, %s40
    %s43 = sadd.s32 1, %s32
    %s44 = scalar_select %p41, %s43, %s32
    %p45 = scmp.ge.s32.totalorder %s44, 2
    %s46 = scalar_select %p45, 0, %s44
    %s47 = sadd.s32 1, %s31
    %s48 = scalar_select %p45, %s47, %s31
    %p49 = scmp.ge.s32.totalorder %s48, 4
    %s50 = scalar_select %p49, 0, %s48
    %s51 = ssub.s32 %s32, %s46
    %p52 = scmp.eq.s32.totalorder %s51, 0
    %s54 = sadd.s32 %s53, 1
    %s55 = scalar_select %p52, %s53, %s54
    %p58 = pneg %p52
    %p59 = scmp.eq.s32.totalorder %s24, 7
    %p60 = por %p58, %p59
    %p61 = scmp.ne.s32.totalorder %s53, %s56
    %p62 = scmp.eq.s32.totalorder %s24, 0
    %p63 = por %p61, %p62
    %p64 = scmp.ne.s32.totalorder %s53, %s56
    %p65 = scmp.eq.s32.totalorder %s29, 7
    %p66 = por %p64, %p65
    %p67 = scmp.ne.s32.totalorder %s56, %s57
    %p68 = scmp.eq.s32.totalorder %s29, 0
    %p69 = por %p67, %p68
    %p70 = scmp.ne.s32.totalorder %s56, %s57
    %p71 = scmp.eq.s32.totalorder %s30, 7
    %p72 = por %p70, %p71
    %p74 = scmp.ne.s32.totalorder %s57, %s73
    %p75 = scmp.eq.s32.totalorder %s30, 0
    %p76 = por %p74, %p75
    %s77 = ssub.s32 %s32, %s46
    %s78 = ssub.s32 %s33, %s42
    %s79 = sor.u32 %s77, %s78
    %p80 = scmp.eq.s32.totalorder %s79, 0
    %s82 = sadd.s32 %s81, 1
    %s83 = scalar_select %p80, %s81, %s82
    %p86 = pneg %p80
    %p87 = scmp.eq.s32.totalorder %s24, 7
    %p88 = por %p86, %p87
    %p89 = scmp.ne.s32.totalorder %s81, %s84
    %p90 = scmp.eq.s32.totalorder %s24, 0
    %p91 = por %p89, %p90
    %p92 = scmp.ne.s32.totalorder %s81, %s84
    %p93 = scmp.eq.s32.totalorder %s29, 7
    %p94 = por %p92, %p93
    %p95 = scmp.ne.s32.totalorder %s84, %s85
    %p96 = scmp.eq.s32.totalorder %s29, 0
    %p97 = por %p95, %p96
    %p98 = scmp.ne.s32.totalorder %s84, %s85
    %p99 = scmp.eq.s32.totalorder %s30, 7
    %p100 = por %p98, %p99
    %p102 = scmp.ne.s32.totalorder %s85, %s101
    %p103 = scmp.eq.s32.totalorder %s30, 0
    %p104 = por %p102, %p103
    %s106 = sadd.s32 %s105, 1
    %p109 = scmp.eq.s32.totalorder %s24, 7
    %p110 = scmp.ne.s32.totalorder %s105, %s107
    %p111 = scmp.eq.s32.totalorder %s24, 0
    %p112 = por %p110, %p111
    %p113 = scmp.ne.s32.totalorder %s105, %s107
    %p114 = scmp.eq.s32.totalorder %s29, 7
    %p115 = por %p113, %p114
    %p116 = scmp.ne.s32.totalorder %s107, %s108
    %p117 = scmp.eq.s32.totalorder %s29, 0
    %p118 = por %p116, %p117
    %p119 = scmp.ne.s32.totalorder %s107, %s108
    %p120 = scmp.eq.s32.totalorder %s30, 7
    %p121 = por %p119, %p120
    %p123 = scmp.ne.s32.totalorder %s108, %s122
    %p124 = scmp.eq.s32.totalorder %s30, 0
    %p125 = por %p123, %p124
    %s127 = sadd.s32 %s126, 1
    %p130 = scmp.eq.s32.totalorder %s24, 7
    %p131 = scmp.ne.s32.totalorder %s126, %s128
    %p132 = scmp.eq.s32.totalorder %s24, 0
    %p133 = por %p131, %p132
    %p134 = scmp.ne.s32.totalorder %s126, %s128
    %p135 = scmp.eq.s32.totalorder %s29, 7
    %p136 = por %p134, %p135
    %p137 = scmp.ne.s32.totalorder %s128, %s129
    %p138 = scmp.eq.s32.totalorder %s29, 0
    %p139 = por %p137, %p138
    %p140 = scmp.ne.s32.totalorder %s128, %s129
    %p141 = scmp.eq.s32.totalorder %s30, 7
    %p142 = por %p140, %p141
    %p144 = scmp.ne.s32.totalorder %s129, %s143
    %p145 = scmp.eq.s32.totalorder %s30, 0
    %p146 = por %p144, %p145
    %s148 = sadd.s32 %s147, 1
    %p151 = scmp.eq.s32.totalorder %s24, 7
    %p152 = scmp.ne.s32.totalorder %s147, %s149
    %p153 = scmp.eq.s32.totalorder %s24, 0
    %p154 = por %p152, %p153
    %p155 = scmp.ne.s32.totalorder %s147, %s149
    %p156 = scmp.eq.s32.totalorder %s29, 7
    %p157 = por %p155, %p156
    %p158 = scmp.ne.s32.totalorder %s149, %s150
    %p159 = scmp.eq.s32.totalorder %s29, 0
    %p160 = por %p158, %p159
    %p161 = scmp.ne.s32.totalorder %s149, %s150
    %p162 = scmp.eq.s32.totalorder %s30, 7
    %p163 = por %p161, %p162
    %p165 = scmp.ne.s32.totalorder %s150, %s164
    %p166 = scmp.eq.s32.totalorder %s30, 0
    %p167 = por %p165, %p166
    %s169 = sadd.s32 %s168, 1
    %p172 = scmp.eq.s32.totalorder %s24, 7
    %p173 = scmp.ne.s32.totalorder %s168, %s170
    %p174 = scmp.eq.s32.totalorder %s24, 0
    %p175 = por %p173, %p174
    %p176 = scmp.ne.s32.totalorder %s168, %s170
    %p177 = scmp.eq.s32.totalorder %s29, 7
    %p178 = por %p176, %p177
    %p179 = scmp.ne.s32.totalorder %s170, %s171
    %p180 = scmp.eq.s32.totalorder %s29, 0
    %p181 = por %p179, %p180
    %p182 = scmp.ne.s32.totalorder %s170, %s171
    %p183 = scmp.eq.s32.totalorder %s30, 7
    %p184 = por %p182, %p183
    %p186 = scmp.ne.s32.totalorder %s171, %s185
    %p187 = scmp.eq.s32.totalorder %s30, 0
    %p188 = por %p186, %p187
    %s190 = sadd.s32 %s189, 1
    %p193 = scmp.eq.s32.totalorder %s24, 7
    %p194 = scmp.ne.s32.totalorder %s189, %s191
    %p195 = scmp.eq.s32.totalorder %s24, 0
    %p196 = por %p194, %p195
    %p197 = scmp.ne.s32.totalorder %s189, %s191
    %p198 = scmp.eq.s32.totalorder %s29, 7
    %p199 = por %p197, %p198
    %p200 = scmp.ne.s32.totalorder %s191, %s192
    %p201 = scmp.eq.s32.totalorder %s29, 0
    %p202 = por %p200, %p201
    %p203 = scmp.ne.s32.totalorder %s191, %s192
    %p204 = scmp.eq.s32.totalorder %s30, 7
    %p205 = por %p203, %p204
    %p207 = scmp.ne.s32.totalorder %s192, %s206
    %p208 = scmp.eq.s32.totalorder %s30, 0
    %p209 = por %p207, %p208
    %s211 = sadd.s32 %s210, 1
    %p214 = scmp.eq.s32.totalorder %s24, 7
    %p215 = scmp.ne.s32.totalorder %s210, %s212
    %p216 = scmp.eq.s32.totalorder %s24, 0
    %p217 = por %p215, %p216
    %p218 = scmp.ne.s32.totalorder %s210, %s212
    %p219 = scmp.eq.s32.totalorder %s29, 7
    %p220 = por %p218, %p219
    %p221 = scmp.ne.s32.totalorder %s212, %s213
    %p222 = scmp.eq.s32.totalorder %s29, 0
    %p223 = por %p221, %p222
    %p224 = scmp.ne.s32.totalorder %s212, %s213
    %p225 = scmp.eq.s32.totalorder %s30, 7
    %p226 = por %p224, %p225
    %p228 = scmp.ne.s32.totalorder %s213, %s227
    %p229 = scmp.eq.s32.totalorder %s30, 0
    %p230 = por %p228, %p229
    %s232 = sadd.s32 %s231, 1
    %p235 = scmp.eq.s32.totalorder %s24, 7
    %p236 = scmp.ne.s32.totalorder %s231, %s233
    %p237 = scmp.eq.s32.totalorder %s24, 0
    %p238 = por %p236, %p237
    %p239 = scmp.ne.s32.totalorder %s231, %s233
    %p240 = scmp.eq.s32.totalorder %s29, 7
    %p241 = por %p239, %p240
    %p242 = scmp.ne.s32.totalorder %s233, %s234
    %p243 = scmp.eq.s32.totalorder %s29, 0
    %p244 = por %p242, %p243
    %p245 = scmp.ne.s32.totalorder %s233, %s234
    %p246 = scmp.eq.s32.totalorder %s30, 7
    %p247 = por %p245, %p246
    %p249 = scmp.ne.s32.totalorder %s234, %s248
    %p250 = scmp.eq.s32.totalorder %s30, 0
    %p251 = por %p249, %p250
    %s253 = sadd.s32 %s252, 1
    %p256 = scmp.eq.s32.totalorder %s24, 7
    %p257 = scmp.ne.s32.totalorder %s252, %s254
    %p258 = scmp.eq.s32.totalorder %s24, 0
    %p259 = por %p257, %p258
    %p260 = scmp.ne.s32.totalorder %s252, %s254
    %p261 = scmp.eq.s32.totalorder %s29, 7
    %p262 = por %p260, %p261
    %p263 = scmp.ne.s32.totalorder %s254, %s255
    %p264 = scmp.eq.s32.totalorder %s29, 0
    %p265 = por %p263, %p264
    %p266 = scmp.ne.s32.totalorder %s254, %s255
    %p267 = scmp.eq.s32.totalorder %s30, 7
    %p268 = por %p266, %p267
    %p270 = scmp.ne.s32.totalorder %s255, %s269
    %p271 = scmp.eq.s32.totalorder %s30, 0
    %p272 = por %p270, %p271
    %s274 = sadd.s32 %s273, 1
    %p277 = scmp.eq.s32.totalorder %s24, 7
    %p278 = scmp.ne.s32.totalorder %s273, %s275
    %p279 = scmp.eq.s32.totalorder %s24, 0
    %p280 = por %p278, %p279
    %p281 = scmp.ne.s32.totalorder %s273, %s275
    %p282 = scmp.eq.s32.totalorder %s29, 7
    %p283 = por %p281, %p282
    %p284 = scmp.ne.s32.totalorder %s275, %s276
    %p285 = scmp.eq.s32.totalorder %s29, 0
    %p286 = por %p284, %p285
    %p287 = scmp.ne.s32.totalorder %s275, %s276
    %p288 = scmp.eq.s32.totalorder %s30, 7
    %p289 = por %p287, %p288
    %p291 = scmp.ne.s32.totalorder %s276, %s290
    %p292 = scmp.eq.s32.totalorder %s30, 0
    %p293 = por %p291, %p292
    %s295 = sadd.s32 %s294, 1
    %p298 = scmp.eq.s32.totalorder %s24, 7
    %p299 = scmp.ne.s32.totalorder %s294, %s296
    %p300 = scmp.eq.s32.totalorder %s24, 0
    %p301 = por %p299, %p300
    %p302 = scmp.ne.s32.totalorder %s294, %s296
    %p303 = scmp.eq.s32.totalorder %s29, 7
    %p304 = por %p302, %p303
    %p305 = scmp.ne.s32.totalorder %s296, %s297
    %p306 = scmp.eq.s32.totalorder %s29, 0
    %p307 = por %p305, %p306
    %p308 = scmp.ne.s32.totalorder %s296, %s297
    %p309 = scmp.eq.s32.totalorder %s30, 7
    %p310 = por %p308, %p309
    %p312 = scmp.ne.s32.totalorder %s297, %s311
    %p313 = scmp.eq.s32.totalorder %s30, 0
    %p314 = por %p312, %p313
    %s316 = sadd.s32 %s315, 1
    %p319 = scmp.eq.s32.totalorder %s24, 7
    %p320 = scmp.ne.s32.totalorder %s315, %s317
    %p321 = scmp.eq.s32.totalorder %s24, 0
    %p322 = por %p320, %p321
    %p323 = scmp.ne.s32.totalorder %s315, %s317
    %p324 = scmp.eq.s32.totalorder %s29, 7
    %p325 = por %p323, %p324
    %p326 = scmp.ne.s32.totalorder %s317, %s318
    %p327 = scmp.eq.s32.totalorder %s29, 0
    %p328 = por %p326, %p327
    %p329 = scmp.ne.s32.totalorder %s317, %s318
    %p330 = scmp.eq.s32.totalorder %s30, 7
    %p331 = por %p329, %p330
    %p333 = scmp.ne.s32.totalorder %s318, %s332
    %p334 = scmp.eq.s32.totalorder %s30, 0
    %p335 = por %p333, %p334
    %s337 = sadd.s32 %s336, 1
    %p340 = scmp.eq.s32.totalorder %s24, 7
    %p341 = scmp.ne.s32.totalorder %s336, %s338
    %p342 = scmp.eq.s32.totalorder %s24, 0
    %p343 = por %p341, %p342
    %p344 = scmp.ne.s32.totalorder %s336, %s338
    %p345 = scmp.eq.s32.totalorder %s29, 7
    %p346 = por %p344, %p345
    %p347 = scmp.ne.s32.totalorder %s338, %s339
    %p348 = scmp.eq.s32.totalorder %s29, 0
    %p349 = por %p347, %p348
    %p350 = scmp.ne.s32.totalorder %s338, %s339
    %p351 = scmp.eq.s32.totalorder %s30, 7
    %p352 = por %p350, %p351
    %p354 = scmp.ne.s32.totalorder %s339, %s353
    %p355 = scmp.eq.s32.totalorder %s30, 0
    %p356 = por %p354, %p355
    %s358 = sadd.s32 %s357, 1
    %p361 = scmp.eq.s32.totalorder %s24, 7
    %p362 = scmp.ne.s32.totalorder %s357, %s359
    %p363 = scmp.eq.s32.totalorder %s24, 0
    %p364 = por %p362, %p363
    %p365 = scmp.ne.s32.totalorder %s357, %s359
    %p366 = scmp.eq.s32.totalorder %s29, 7
    %p367 = por %p365, %p366
    %p368 = scmp.ne.s32.totalorder %s359, %s360
    %p369 = scmp.eq.s32.totalorder %s29, 0
    %p370 = por %p368, %p369
    %p371 = scmp.ne.s32.totalorder %s359, %s360
    %p372 = scmp.eq.s32.totalorder %s30, 7
    %p373 = por %p371, %p372
    %p375 = scmp.ne.s32.totalorder %s360, %s374
    %p376 = scmp.eq.s32.totalorder %s30, 0
    %p377 = por %p375, %p376
    %s379 = sadd.s32 %s378, 1
    %p382 = scmp.eq.s32.totalorder %s24, 7
    %p383 = scmp.ne.s32.totalorder %s378, %s380
    %p384 = scmp.eq.s32.totalorder %s24, 0
    %p385 = por %p383, %p384
    %p386 = scmp.ne.s32.totalorder %s378, %s380
    %p387 = scmp.eq.s32.totalorder %s29, 7
    %p388 = por %p386, %p387
    %p389 = scmp.ne.s32.totalorder %s380, %s381
    %p390 = scmp.eq.s32.totalorder %s29, 0
    %p391 = por %p389, %p390
    %p392 = scmp.ne.s32.totalorder %s380, %s381
    %p393 = scmp.eq.s32.totalorder %s30, 7
    %p394 = por %p392, %p393
    %p396 = scmp.ne.s32.totalorder %s381, %s395
    %p397 = scmp.eq.s32.totalorder %s30, 0
    %p398 = por %p396, %p397
    %s400 = sadd.s32 %s399, 1
    %p403 = scmp.eq.s32.totalorder %s24, 7
    %p404 = scmp.ne.s32.totalorder %s399, %s401
    %p405 = scmp.eq.s32.totalorder %s24, 0
    %p406 = por %p404, %p405
    %p407 = scmp.ne.s32.totalorder %s399, %s401
    %p408 = scmp.eq.s32.totalorder %s29, 7
    %p409 = por %p407, %p408
    %p410 = scmp.ne.s32.totalorder %s401, %s402
    %p411 = scmp.eq.s32.totalorder %s29, 0
    %p412 = por %p410, %p411
    %p413 = scmp.ne.s32.totalorder %s401, %s402
    %p414 = scmp.eq.s32.totalorder %s30, 7
    %p415 = por %p413, %p414
    %p417 = scmp.ne.s32.totalorder %s402, %s416
    %p418 = scmp.eq.s32.totalorder %s30, 0
    %p419 = por %p417, %p418
    %s421 = sadd.s32 %s420, 1
    %p424 = scmp.eq.s32.totalorder %s24, 7
    %p425 = scmp.ne.s32.totalorder %s420, %s422
    %p426 = scmp.eq.s32.totalorder %s24, 0
    %p427 = por %p425, %p426
    %p428 = scmp.ne.s32.totalorder %s420, %s422
    %p429 = scmp.eq.s32.totalorder %s29, 7
    %p430 = por %p428, %p429
    %p431 = scmp.ne.s32.totalorder %s422, %s423
    %p432 = scmp.eq.s32.totalorder %s29, 0
    %p433 = por %p431, %p432
    %p434 = scmp.ne.s32.totalorder %s422, %s423
    %p435 = scmp.eq.s32.totalorder %s30, 7
    %p436 = por %p434, %p435
    %p438 = scmp.ne.s32.totalorder %s423, %s437
    %p439 = scmp.eq.s32.totalorder %s30, 0
    %p440 = por %p438, %p439
    %p441 = scmp.eq.s32.totalorder %s31, 3
    %s442 = scalar_select %p441, %s32, 0
    %s443 = scalar_select %p441, %s33, 0
    %p444 = scmp.eq.s32.totalorder %s50, 3
    %s445 = scalar_select %p444, %s46, 0
    %s446 = scalar_select %p444, %s42, 0
    %s447 = ssub.s32 %s442, %s445
    %s448 = ssub.s32 %s443, %s446
    %s449 = sor.u32 %s447, %s448
    %p450 = scmp.eq.s32.totalorder %s449, 0
    %s452 = sadd.s32 %s451, 1
    %s453 = scalar_select %p450, %s451, %s452
    %p456 = pneg %p450
    %p457 = scmp.eq.s32.totalorder %s24, 7
    %p458 = por %p456, %p457
    %p459 = scmp.ne.s32.totalorder %s451, %s454
    %p460 = scmp.eq.s32.totalorder %s24, 0
    %p461 = por %p459, %p460
    %p462 = scmp.ne.s32.totalorder %s451, %s454
    %p463 = scmp.eq.s32.totalorder %s29, 7
    %p464 = por %p462, %p463
    %p465 = scmp.ne.s32.totalorder %s454, %s455
    %p466 = scmp.eq.s32.totalorder %s29, 0
    %p467 = por %p465, %p466
    %p468 = scmp.ne.s32.totalorder %s454, %s455
    %p469 = scmp.eq.s32.totalorder %s30, 7
    %p470 = por %p468, %p469
    %p472 = scmp.ne.s32.totalorder %s455, %s471
    %p473 = scmp.eq.s32.totalorder %s30, 0
    %p474 = por %p472, %p473
    %p475 = scmp.le.s32.totalorder 1, %s24
    %p476 = scmp.lt.s32.totalorder %s24, 9
    %p477 = pnand %p475, %p476
    %p478 = pneg %p477
    // Predicated region
    $region9: #{tpu_custom_call.1} parent=5 // pred_check
      _
    $region10: #{tpu_custom_call.1} parent=5 // pred_check_branch
      %480 = sbr.rel (%p477) target = $region12
    $region11: #{tpu_custom_call.1} parent=5 // pred_region
      %s481 = ssub.s32 %s24, 1
      // Predicated region
      $region13: #{tpu_custom_call.1} parent=11 // pred_check
        %p482 = pneg %p118
      $region14: #{tpu_custom_call.1} parent=11 // pred_check_branch
        %484 = sbr.rel (%p482) target = $region16
      $region15: #{tpu_custom_call.1} parent=11 // pred_region
        _
      $region16: #{tpu_custom_call.1} parent=11 // pred_fallthru
        _
      // Predicated region
      $region17: #{tpu_custom_call.1} parent=11 // pred_check
        %p485 = pneg %p139
      $region18: #{tpu_custom_call.1} parent=11 // pred_check_branch
        %487 = sbr.rel (%p485) target = $region20
      $region19: #{tpu_custom_call.1} parent=11 // pred_region
        _
      $region20: #{tpu_custom_call.1} parent=11 // pred_fallthru
        _
      // Predicated region
      $region21: #{tpu_custom_call.1} parent=11 // pred_check
        %p488 = pneg %p160
      $region22: #{tpu_custom_call.1} parent=11 // pred_check_branch
        %490 = sbr.rel (%p488) target = $region24
      $region23: #{tpu_custom_call.1} parent=11 // pred_region
        _
      $region24: #{tpu_custom_call.1} parent=11 // pred_fallthru
        _
      // Predicated region
      $region25: #{tpu_custom_call.1} parent=11 // pred_check
        %p491 = pneg %p181
      $region26: #{tpu_custom_call.1} parent=11 // pred_check_branch
        %493 = sbr.rel (%p491) target = $region28
      $region27: #{tpu_custom_call.1} parent=11 // pred_region
        _
      $region28: #{tpu_custom_call.1} parent=11 // pred_fallthru
        _
      // Predicated region
      $region29: #{tpu_custom_call.1} parent=11 // pred_check
        %p494 = pneg %p202
      $region30: #{tpu_custom_call.1} parent=11 // pred_check_branch
        %496 = sbr.rel (%p494) target = $region32
      $region31: #{tpu_custom_call.1} parent=11 // pred_region
        _
      $region32: #{tpu_custom_call.1} parent=11 // pred_fallthru
        _
      // Predicated region
      $region33: #{tpu_custom_call.1} parent=11 // pred_check
        %p497 = pneg %p223
      $region34: #{tpu_custom_call.1} parent=11 // pred_check_branch
        %499 = sbr.rel (%p497) target = $region36
      $region35: #{tpu_custom_call.1} parent=11 // pred_region
        _
      $region36: #{tpu_custom_call.1} parent=11 // pred_fallthru
        _
      // Predicated region
      $region37: #{tpu_custom_call.1} parent=11 // pred_check
        %p500 = pneg %p244
      $region38: #{tpu_custom_call.1} parent=11 // pred_check_branch
        %502 = sbr.rel (%p500) target = $region40
      $region39: #{tpu_custom_call.1} parent=11 // pred_region
        _
      $region40: #{tpu_custom_call.1} parent=11 // pred_fallthru
        _
      // Predicated region
      $region41: #{tpu_custom_call.1} parent=11 // pred_check
        %p503 = pneg %p265
      $region42: #{tpu_custom_call.1} parent=11 // pred_check_branch
        %505 = sbr.rel (%p503) target = $region44
      $region43: #{tpu_custom_call.1} parent=11 // pred_region
        _
      $region44: #{tpu_custom_call.1} parent=11 // pred_fallthru
        _
      // Predicated region
      $region45: #{tpu_custom_call.1} parent=11 // pred_check
        %p506 = pneg %p286
      $region46: #{tpu_custom_call.1} parent=11 // pred_check_branch
        %508 = sbr.rel (%p506) target = $region48
      $region47: #{tpu_custom_call.1} parent=11 // pred_region
        _
      $region48: #{tpu_custom_call.1} parent=11 // pred_fallthru
        _
      // Predicated region
      $region49: #{tpu_custom_call.1} parent=11 // pred_check
        %p509 = pneg %p307
      $region50: #{tpu_custom_call.1} parent=11 // pred_check_branch
        %511 = sbr.rel (%p509) target = $region52
      $region51: #{tpu_custom_call.1} parent=11 // pred_region
        _
      $region52: #{tpu_custom_call.1} parent=11 // pred_fallthru
        _
      // Predicated region
      $region53: #{tpu_custom_call.1} parent=11 // pred_check
        %p512 = pneg %p328
      $region54: #{tpu_custom_call.1} parent=11 // pred_check_branch
        %514 = sbr.rel (%p512) target = $region56
      $region55: #{tpu_custom_call.1} parent=11 // pred_region
        _
      $region56: #{tpu_custom_call.1} parent=11 // pred_fallthru
        _
      // Predicated region
      $region57: #{tpu_custom_call.1} parent=11 // pred_check
        %p515 = pneg %p349
      $region58: #{tpu_custom_call.1} parent=11 // pred_check_branch
        %517 = sbr.rel (%p515) target = $region60
      $region59: #{tpu_custom_call.1} parent=11 // pred_region
        _
      $region60: #{tpu_custom_call.1} parent=11 // pred_fallthru
        _
      // Predicated region
      $region61: #{tpu_custom_call.1} parent=11 // pred_check
        %p518 = pneg %p370
      $region62: #{tpu_custom_call.1} parent=11 // pred_check_branch
        %520 = sbr.rel (%p518) target = $region64
      $region63: #{tpu_custom_call.1} parent=11 // pred_region
        _
      $region64: #{tpu_custom_call.1} parent=11 // pred_fallthru
        _
      // Predicated region
      $region65: #{tpu_custom_call.1} parent=11 // pred_check
        %p521 = pneg %p391
      $region66: #{tpu_custom_call.1} parent=11 // pred_check_branch
        %523 = sbr.rel (%p521) target = $region68
      $region67: #{tpu_custom_call.1} parent=11 // pred_region
        _
      $region68: #{tpu_custom_call.1} parent=11 // pred_fallthru
        _
      // Predicated region
      $region69: #{tpu_custom_call.1} parent=11 // pred_check
        %p524 = pneg %p412
      $region70: #{tpu_custom_call.1} parent=11 // pred_check_branch
        %526 = sbr.rel (%p524) target = $region72
      $region71: #{tpu_custom_call.1} parent=11 // pred_region
        _
      $region72: #{tpu_custom_call.1} parent=11 // pred_fallthru
        _
      // Predicated region
      $region73: #{tpu_custom_call.1} parent=11 // pred_check
        %p527 = pneg %p433
      $region74: #{tpu_custom_call.1} parent=11 // pred_check_branch
        %529 = sbr.rel (%p527) target = $region76
      $region75: #{tpu_custom_call.1} parent=11 // pred_region
        _
      $region76: #{tpu_custom_call.1} parent=11 // pred_fallthru
        _
    $region12: #{tpu_custom_call.1} parent=5 // pred_fallthru
      _
    %p530 = scmp.lt.s32.totalorder %s24, 8
    // Predicated region
    $region77: #{tpu_custom_call.1} parent=5 // pred_check
      %p531 = pneg %p530
    $region78: #{tpu_custom_call.1} parent=5 // pred_check_branch
      %533 = sbr.rel (%p531) target = $region80
    $region79: #{tpu_custom_call.1} parent=5 // pred_region
      // Predicated region
      $region81: #{tpu_custom_call.1} parent=79 // pred_check
        %p534 = pneg %p63
      $region82: #{tpu_custom_call.1} parent=79 // pred_check_branch
        %536 = sbr.rel (%p534) target = $region84
      $region83: #{tpu_custom_call.1} parent=79 // pred_region
        %p537 = scmp.lt.s32.totalorder %s32, 1
        %s538 = scalar_select %p537, %s32, 1
        %s539 = smul.addr %s538, 4
        %s540 = smul.addr %s539, 8
        %s541 = scalar_lea.vmem %s0, %s540
      $region84: #{tpu_custom_call.1} parent=79 // pred_fallthru
        _
      // Predicated region
      $region85: #{tpu_custom_call.1} parent=79 // pred_check
        %p542 = pneg %p91
      $region86: #{tpu_custom_call.1} parent=79 // pred_check_branch
        %544 = sbr.rel (%p542) target = $region88
      $region87: #{tpu_custom_call.1} parent=79 // pred_region
        %s545 = smul.u32 8, %s33
        %p546 = scmp.lt.s32.totalorder %s32, 1
        %s547 = scalar_select %p546, %s32, 1
        %p548 = scmp.lt.s32.totalorder %s545, 7
        %s549 = scalar_select %p548, %s545, 7
        %s550 = smul.addr %s547, 8
        %s551 = sadd.s32 %s549, %s550
        %s552 = smul.addr %s551, 4
        %s553 = scalar_lea.vmem %s1, %s552
        %s554 = smul.u32 8, %s33
      $region88: #{tpu_custom_call.1} parent=79 // pred_fallthru
        _
    $region80: #{tpu_custom_call.1} parent=5 // pred_fallthru
      _
    %p555 = scmp.le.s32.totalorder 1, %s24
    %p556 = scmp.lt.s32.totalorder %s24, 9
    %p557 = pnand %p555, %p556
    %p558 = pneg %p557
    // Predicated region
    $region89: #{tpu_custom_call.1} parent=5 // pred_check
      _
    $region90: #{tpu_custom_call.1} parent=5 // pred_check_branch
      %560 = sbr.rel (%p557) target = $region92
    $region91: #{tpu_custom_call.1} parent=5 // pred_region
      %s561 = ssub.s32 %s24, 1
      %p562 = scmp.lt.s32.totalorder %s35, 1
      %s563 = scalar_select %p562, %s35, 1
      %s564 = smul.addr %s563, 4
      %s565 = smul.addr %s564, 8
      %s566 = scalar_lea.vmem %s0, %s565
      %p567 = pneg %p69
      %p568 = pneg %p66
      %s569 = smul.u32 8, %s36
      %p570 = scmp.lt.s32.totalorder %s35, 1
      %s571 = scalar_select %p570, %s35, 1
      %p572 = scmp.lt.s32.totalorder %s569, 7
      %s573 = scalar_select %p572, %s569, 7
      %s574 = smul.addr %s571, 8
      %s575 = sadd.s32 %s573, %s574
      %s576 = smul.addr %s575, 4
      %s577 = scalar_lea.vmem %s1, %s576
      %p578 = pneg %p97
      %p579 = pneg %p94
      %p580 = pneg %p118
      %p581 = pneg %p115
      %p582 = pneg %p139
      %p583 = pneg %p136
      %p584 = pneg %p160
      %p585 = pneg %p157
      %p586 = pneg %p181
      %p587 = pneg %p178
      %p588 = pneg %p202
      %p589 = pneg %p199
      %p590 = pneg %p223
      %p591 = pneg %p220
      %p592 = pneg %p244
      %p593 = pneg %p241
      %p594 = pneg %p265
      %p595 = pneg %p262
      %p596 = pneg %p286
      %p597 = pneg %p283
      %p598 = pneg %p307
      %p599 = pneg %p304
      %p600 = pneg %p328
      %p601 = pneg %p325
      %p602 = pneg %p349
      %p603 = pneg %p346
      %p604 = pneg %p370
      %p605 = pneg %p367
      %p606 = pneg %p391
      %p607 = pneg %p388
      %p608 = pneg %p412
      %p609 = pneg %p409
      %p610 = pneg %p433
      %p611 = pneg %p430
      %p612 = pneg %p467
      %p613 = pneg %p464
      %p614 = scmp.eq.s32.totalorder %s34, 3
      %s615 = scalar_select %p614, %s35, 0
      %s616 = scalar_select %p614, %s36, 0
      %s617 = smul.u32 8, %s616
      %p618 = scmp.lt.s32.totalorder %s615, 1
      %s619 = scalar_select %p618, %s615, 1
      %p620 = scmp.lt.s32.totalorder %s617, 7
      %s621 = scalar_select %p620, %s617, 7
      %s622 = smul.addr %s619, 8
      %s623 = sadd.s32 %s621, %s622
      %s624 = smul.addr %s623, 4
      %s625 = scalar_lea.vmem %s18, %s624
      %p626 = scmp.lt.s32.totalorder %s35, 1
      %s627 = scalar_select %p626, %s35, 1
      %s628 = smul.addr %s627, 4
      %s629 = smul.addr %s628, 8
      %s630 = scalar_lea.vmem %s0, %s629
      %s631 = smul.u32 8, %s36
      %p632 = scmp.lt.s32.totalorder %s35, 1
      %s633 = scalar_select %p632, %s35, 1
      %p634 = scmp.lt.s32.totalorder %s631, 7
      %s635 = scalar_select %p634, %s631, 7
      %s636 = smul.addr %s633, 8
      %s637 = sadd.s32 %s635, %s636
      %s638 = smul.addr %s637, 4
      %s639 = scalar_lea.vmem %s1, %s638
      %s640 = smul.u32 8, %s36
      %p641 = scmp.eq.s32.totalorder %s34, 3
      %s642 = scalar_select %p641, %s35, 0
      %s643 = scalar_select %p641, %s36, 0
      %s644 = smul.u32 8, %s643
      %p645 = scmp.lt.s32.totalorder %s642, 1
      %s646 = scalar_select %p645, %s642, 1
      %p647 = scmp.lt.s32.totalorder %s644, 7
      %s648 = scalar_select %p647, %s644, 7
      %s649 = smul.addr %s646, 8
      %s650 = sadd.s32 %s648, %s649
      %s651 = smul.addr %s650, 4
      %s652 = scalar_lea.vmem %s18, %s651
      %p653 = scmp.eq.s32.totalorder %s34, 3
      %s654 = scalar_select %p653, %s35, 0
      %s655 = scalar_select %p653, %s36, 0
      %s656 = smul.u32 8, %s655
      %p657 = scmp.eq.s32.totalorder %s35, 0
      %p658 = scmp.eq.s32.totalorder %s36, 0
      %p659 = pnand %p657, %p658
      %p660 = pneg %p659
      %v661 = vld [vmem:[%s639] sm:$0x77]
      %v662 = vld [vmem:[%s639 + $0x8] sm:$0x77]
      %v663 = vld [vmem:[%s639 + $0x10] sm:$0x77]
      %v664 = vld [vmem:[%s639 + $0x18] sm:$0x77]
      %p665 = scmp.eq.s32.totalorder %s34, 0
      %p666 = pnand %p665, %p660
      %p667 = pneg %p666
      // Predicated region
      $region93: #{tpu_custom_call.1} parent=91 // pred_check
        _
      $region94: #{tpu_custom_call.1} parent=91 // pred_check_branch
        %669 = sbr.rel (%p666) target = $region96
      $region95: #{tpu_custom_call.1} parent=91 // pred_region
        %670 = vst [vmem:[#allocation2] sm:$0xff] 0.0
        %671 = vst [vmem:[#allocation2 + $0x8] sm:$0xff] 0.0
        %672 = vst [vmem:[#allocation2 + $0x10] sm:$0xff] 0.0
        %673 = vst [vmem:[#allocation2 + $0x18] sm:$0xff] 0.0
        %674 = vst [vmem:[#allocation3] sm:$0xff] 0.0
        %675 = vst [vmem:[#allocation3 + $0x8] sm:$0xff] 0.0
        %676 = vst [vmem:[#allocation3 + $0x10] sm:$0xff] 0.0
        %677 = vst [vmem:[#allocation3 + $0x18] sm:$0xff] 0.0
        %678 = vst [vmem:[#allocation4] sm:$0xff] 0.0
        %679 = vst [vmem:[#allocation4 + $0x8] sm:$0xff] 0.0
        %680 = vst [vmem:[#allocation5] sm:$0xff] 0.0
        %681 = vst [vmem:[#allocation5 + $0x8] sm:$0xff] 0.0
        %682 = vst [vmem:[#allocation6] sm:$0xff] 0.0
        %683 = vst [vmem:[#allocation7] sm:$0xff] 0.0
      $region96: #{tpu_custom_call.1} parent=91 // pred_fallthru
        _
      %p684 = scmp.eq.s32.totalorder %s34, 1
      %p685 = pnand %p684, %p660
      %p686 = pneg %p685
      // Predicated region
      $region97: #{tpu_custom_call.1} parent=91 // pred_check
        _
      $region98: #{tpu_custom_call.1} parent=91 // pred_check_branch
        %688 = sbr.rel (%p685) target = $region100
      $region99: #{tpu_custom_call.1} parent=91 // pred_region
        %v689 = vld [vmem:[#allocation2] sm:$0xff]
        %v690 = vld [vmem:[#allocation2 + $0x8] sm:$0xff]
        %v691 = vld [vmem:[#allocation2 + $0x10] sm:$0xff]
        %v692 = vld [vmem:[#allocation2 + $0x18] sm:$0xff]
        %693 = vadd.xlane.f32.xlu0 %v689
        %v694 = vpop.xlane.xlu0 %693
        %695 = vadd.xlane.f32.xlu0 %v690
        %v696 = vpop.xlane.xlu0 %695
        %697 = vadd.xlane.f32.xlu0 %v691
        %v698 = vpop.xlane.xlu0 %697
        %699 = vadd.xlane.f32.xlu0 %v692
        %v700 = vpop.xlane.xlu0 %699
        %v701 = vld [vmem:[#allocation3] sm:$0xff]
        %v702 = vld [vmem:[#allocation3 + $0x8] sm:$0xff]
        %v703 = vld [vmem:[#allocation3 + $0x10] sm:$0xff]
        %v704 = vld [vmem:[#allocation3 + $0x18] sm:$0xff]
        %705 = vadd.xlane.f32.xlu0 %v701
        %v706 = vpop.xlane.xlu0 %705
        %707 = vadd.xlane.f32.xlu0 %v702
        %v708 = vpop.xlane.xlu0 %707
        %709 = vadd.xlane.f32.xlu0 %v703
        %v710 = vpop.xlane.xlu0 %709
        %711 = vadd.xlane.f32.xlu0 %v704
        %v712 = vpop.xlane.xlu0 %711
        %v713 = vmul.f32 %v694, 0.00048828125
        %v714 = vmul.f32 %v696, 0.00048828125
        %v715 = vmul.f32 %v698, 0.00048828125
        %v716 = vmul.f32 %v700, 0.00048828125
        %v717 = vmul.f32 %v706, 0.00048828125
        %v718 = vmul.f32 %v708, 0.00048828125
        %v719 = vmul.f32 %v710, 0.00048828125
        %v720 = vmul.f32 %v712, 0.00048828125
        %v721 = vmul.f32 %v713, %v713
        %v722 = vmul.f32 %v714, %v714
        %v723 = vmul.f32 %v715, %v715
        %v724 = vmul.f32 %v716, %v716
        %v725 = vsub.f32 %v717, %v721
        %v726 = vsub.f32 %v718, %v722
        %v727 = vsub.f32 %v719, %v723
        %v728 = vsub.f32 %v720, %v724
        %v729 = vmax.f32 %v725, 0.0
        %v730 = vmax.f32 %v726, 0.0
        %v731 = vmax.f32 %v727, 0.0
        %v732 = vmax.f32 %v728, 0.0
        %v733 = vld [vmem:[%s3] sm:$0xff]
        %v734 = vld [vmem:[%s3 + $0x8] sm:$0xff]
        %v735 = vld [vmem:[%s3 + $0x10] sm:$0xff]
        %v736 = vld [vmem:[%s3 + $0x18] sm:$0xff]
        %v737 = vadd.f32 %v729, 1e-05
        %v738 = vadd.f32 %v730, 1e-05
        %v739 = vadd.f32 %v731, 1e-05
        %v740 = vadd.f32 %v732, 1e-05
        %v741 = vrsqrt.pop %v737
        %v742 = vrsqrt.pop %v738
        %v743 = vrsqrt.pop %v739
        %v744 = vrsqrt.pop %v740
        %v745 = vmul.f32 %v733, %v741
        %v746 = vmul.f32 %v734, %v742
        %v747 = vmul.f32 %v735, %v743
        %v748 = vmul.f32 %v736, %v744
        %vm749 = vcmask 7168
        %750 = vst.msk [vmem:[#allocation8] sm:$0xff] %vm749, %v745
        %751 = vst.msk [vmem:[#allocation8 + $0x8] sm:$0xff] %vm749, %v746
        %752 = vst.msk [vmem:[#allocation8 + $0x10] sm:$0xff] %vm749, %v747
        %753 = vst.msk [vmem:[#allocation8 + $0x18] sm:$0xff] %vm749, %v748
        %v754 = vld [vmem:[%s4] sm:$0xff]
        %v755 = vld [vmem:[%s4 + $0x8] sm:$0xff]
        %v756 = vld [vmem:[%s4 + $0x10] sm:$0xff]
        %v757 = vld [vmem:[%s4 + $0x18] sm:$0xff]
        %v758 = vmul.f32 %v713, %v745
        %v759 = vmul.f32 %v714, %v746
        %v760 = vmul.f32 %v715, %v747
        %v761 = vmul.f32 %v716, %v748
        %v762 = vsub.f32 %v754, %v758
        %v763 = vsub.f32 %v755, %v759
        %v764 = vsub.f32 %v756, %v760
        %v765 = vsub.f32 %v757, %v761
        %766 = vst.msk [vmem:[#allocation9] sm:$0xff] %vm749, %v762
        %767 = vst.msk [vmem:[#allocation9 + $0x8] sm:$0xff] %vm749, %v763
        %768 = vst.msk [vmem:[#allocation9 + $0x10] sm:$0xff] %vm749, %v764
        %769 = vst.msk [vmem:[#allocation9 + $0x18] sm:$0xff] %vm749, %v765
      $region100: #{tpu_custom_call.1} parent=91 // pred_fallthru
        _
      %p770 = scmp.eq.s32.totalorder %s34, 2
      %p771 = pnand %p770, %p660
      %p772 = pneg %p771
      // Predicated region
      $region101: #{tpu_custom_call.1} parent=91 // pred_check
        _
      $region102: #{tpu_custom_call.1} parent=91 // pred_check_branch
        %774 = sbr.rel (%p771) target = $region104
      $region103: #{tpu_custom_call.1} parent=91 // pred_region
        %v775 = vld [vmem:[#allocation4] sm:$0xff]
        %v776 = vld [vmem:[#allocation4 + $0x8] sm:$0xff]
        %777 = vadd.xlane.f32.xlu0 %v775
        %v778 = vpop.xlane.xlu0 %777
        %779 = vadd.xlane.f32.xlu0 %v776
        %v780 = vpop.xlane.xlu0 %779
        %v781 = vld [vmem:[#allocation5] sm:$0xff]
        %v782 = vld [vmem:[#allocation5 + $0x8] sm:$0xff]
        %783 = vadd.xlane.f32.xlu0 %v781
        %v784 = vpop.xlane.xlu0 %783
        %785 = vadd.xlane.f32.xlu0 %v782
        %v786 = vpop.xlane.xlu0 %785
        %v787 = vmul.f32 %v778, 0.00048828125
        %v788 = vmul.f32 %v780, 0.00048828125
        %v789 = vmul.f32 %v784, 0.00048828125
        %v790 = vmul.f32 %v786, 0.00048828125
        %v791 = vmul.f32 %v787, %v787
        %v792 = vmul.f32 %v788, %v788
        %v793 = vsub.f32 %v789, %v791
        %v794 = vsub.f32 %v790, %v792
        %v795 = vmax.f32 %v793, 0.0
        %v796 = vmax.f32 %v794, 0.0
        %v797 = vld [vmem:[%s8] sm:$0xff]
        %v798 = vld [vmem:[%s8 + $0x8] sm:$0xff]
        %v799 = vadd.f32 %v795, 1e-05
        %v800 = vadd.f32 %v796, 1e-05
        %v801 = vrsqrt.pop %v799
        %v802 = vrsqrt.pop %v800
        %v803 = vmul.f32 %v797, %v801
        %v804 = vmul.f32 %v798, %v802
        %vm805 = vcmask 7168
        %806 = vst.msk [vmem:[#allocation10] sm:$0xff] %vm805, %v803
        %807 = vst.msk [vmem:[#allocation10 + $0x8] sm:$0xff] %vm805, %v804
        %v808 = vld [vmem:[%s9] sm:$0xff]
        %v809 = vld [vmem:[%s9 + $0x8] sm:$0xff]
        %v810 = vmul.f32 %v787, %v803
        %v811 = vmul.f32 %v788, %v804
        %v812 = vsub.f32 %v808, %v810
        %v813 = vsub.f32 %v809, %v811
        %814 = vst.msk [vmem:[#allocation11] sm:$0xff] %vm805, %v812
        %815 = vst.msk [vmem:[#allocation11 + $0x8] sm:$0xff] %vm805, %v813
      $region104: #{tpu_custom_call.1} parent=91 // pred_fallthru
        _
      %p816 = scmp.eq.s32.totalorder %s34, 3
      %p817 = pnand %p816, %p660
      %p818 = pneg %p817
      // Predicated region
      $region105: #{tpu_custom_call.1} parent=91 // pred_check
        _
      $region106: #{tpu_custom_call.1} parent=91 // pred_check_branch
        %820 = sbr.rel (%p817) target = $region108
      $region107: #{tpu_custom_call.1} parent=91 // pred_region
        %v821 = vld [vmem:[#allocation6] sm:$0xff]
        %822 = vadd.xlane.f32.xlu0 %v821
        %v823 = vpop.xlane.xlu0 %822
        %v824 = vld [vmem:[#allocation7] sm:$0xff]
        %825 = vadd.xlane.f32.xlu0 %v824
        %v826 = vpop.xlane.xlu0 %825
        %v827 = vmul.f32 %v823, 0.00048828125
        %v828 = vmul.f32 %v826, 0.00048828125
        %v829 = vmul.f32 %v827, %v827
        %v830 = vsub.f32 %v828, %v829
        %v831 = vmax.f32 %v830, 0.0
        %v832 = vld [vmem:[%s13] sm:$0xff]
        %v833 = vadd.f32 %v831, 1e-05
        %v834 = vrsqrt.pop %v833
        %v835 = vmul.f32 %v832, %v834
        %vm836 = vcmask 7168
        %837 = vst.msk [vmem:[#allocation12] sm:$0xff] %vm836, %v835
        %v838 = vld [vmem:[%s14] sm:$0xff]
        %v839 = vmul.f32 %v827, %v835
        %v840 = vsub.f32 %v838, %v839
        %841 = vst.msk [vmem:[#allocation13] sm:$0xff] %vm836, %v840
      $region108: #{tpu_custom_call.1} parent=91 // pred_fallthru
        _
      // Predicated region
      $region109: #{tpu_custom_call.1} parent=91 // pred_check
        %p842 = pneg %p665
      $region110: #{tpu_custom_call.1} parent=91 // pred_check_branch
        %844 = sbr.rel (%p842) target = $region112
      $region111: #{tpu_custom_call.1} parent=91 // pred_region
        %v845 = vld [vmem:[%s630] sm:$0xff]
        %v846 = vld [vmem:[%s630 + $0x8] sm:$0xff]
        %v847 = vld [vmem:[%s630 + $0x10] sm:$0xff]
        %v848 = vld [vmem:[%s630 + $0x18] sm:$0xff]
        %v849 = vld [vmem:[%s2] sm:$0xff]
        %v850 = vld [vmem:[%s2 + $0x8] sm:$0xff]
        %v851 = vld [vmem:[%s2 + $0x10] sm:$0xff]
        %v852 = vld [vmem:[%s2 + $0x18] sm:$0xff]
        %v857 = vcombine.high %v661, %v661
        %v858 = vcombine.high %v662, %v662
        %v859 = vcombine.high %v663, %v663
        %v860 = vcombine.high %v664, %v664
        %vm861 = vcmask 23552
        %v863 = vsel %vm861, %v849, 0
        %v866 = vsel %vm861, %v850, 0
        %v869 = vsel %vm861, %v851, 0
        %v872 = vsel %vm861, %v852, 0
        %vm874 = vcmask 1042432
        %v875 = vsel %vm874, %v661, 0
        %v877 = vsel %vm874, %v857, 0
        %v879 = vsel %vm874, %v662, 0
        %v881 = vsel %vm874, %v858, 0
        %v883 = vsel %vm874, %v663, 0
        %v885 = vsel %vm874, %v859, 0
        %v887 = vsel %vm874, %v664, 0
        %v889 = vsel %vm874, %v860, 0
        %891 = vmatprep.subr.mxu0 %v877
        %892 = vmatpush1.msra.mxu0 %v875
        %893 = vmatprep.subr.mxu0 0.0
        %894 = vmatpush1.msra.mxu0 0.0
        %895 = vmatprep.subr.mxu0 0.0
        %896 = vmatpush1.msra.mxu0 0.0
        %897 = vmatprep.subr.mxu0 0.0
        %898 = vmatpush1.msra.mxu0 0.0
        %899 = vmatprep.subr.mxu0 0.0
        %900 = vmatpush1.msra.mxu0 0.0
        %901 = vmatprep.subr.mxu0 0.0
        %902 = vmatpush1.msra.mxu0 0.0
        %903 = vmatprep.subr.mxu0 0.0
        %904 = vmatpush1.msra.mxu0 0.0
        %905 = vmatprep.subr.mxu0 0.0
        %906 = vmatpush1.msra.mxu0 0.0
        %907 = vmatprep.subr.mxu0 0.0
        %908 = vmatpush1.msra.mxu0 0.0
        %909 = vmatprep.subr.mxu0 0.0
        %910 = vmatpush1.msra.mxu0 0.0
        %911 = vmatprep.subr.mxu0 0.0
        %912 = vmatpush1.msra.mxu0 0.0
        %913 = vmatprep.subr.mxu0 0.0
        %914 = vmatpush1.msra.mxu0 0.0
        %915 = vmatprep.subr.mxu0 0.0
        %916 = vmatpush1.msra.mxu0 0.0
        %917 = vmatprep.subr.mxu0 0.0
        %918 = vmatpush1.msra.mxu0 0.0
        %919 = vmatprep.subr.mxu0 0.0
        %920 = vmatpush1.msra.mxu0 0.0
        %921 = vmatprep.subr.mxu0 0.0
        %922 = vmatpush1.msra.mxu0 0.0
        %923 = vmatprep.subr.mxu0 0.0
        %924 = vmatpush1.msra.mxu0 0.0
        %925 = vmatprep.subr.mxu0 0.0
        %926 = vmatpush1.msra.mxu0 0.0
        %927 = vmatprep.subr.mxu0 0.0
        %928 = vmatpush1.msra.mxu0 0.0
        %929 = vmatprep.subr.mxu0 0.0
        %930 = vmatpush1.msra.mxu0 0.0
        %931 = vmatprep.subr.mxu0 0.0
        %932 = vmatpush1.msra.mxu0 0.0
        %933 = vmatprep.subr.mxu0 0.0
        %934 = vmatpush1.msra.mxu0 0.0
        %935 = vmatprep.subr.mxu0 0.0
        %936 = vmatpush1.msra.mxu0 0.0
        %937 = vmatprep.subr.mxu0 0.0
        %938 = vmatpush1.msra.mxu0 0.0
        %939 = vmatprep.subr.mxu0 0.0
        %940 = vmatpush1.msra.mxu0 0.0
        %941 = vmatprep.subr.mxu0 0.0
        %942 = vmatpush1.msra.mxu0 0.0
        %943 = vmatprep.subr.mxu0 0.0
        %944 = vmatpush1.msra.mxu0 0.0
        %945 = vmatprep.subr.mxu0 0.0
        %946 = vmatpush1.msra.mxu0 0.0
        %947 = vmatprep.subr.mxu0 0.0
        %948 = vmatpush1.msra.mxu0 0.0
        %949 = vmatprep.subr.mxu0 0.0
        %950 = vmatpush1.msra.mxu0 0.0
        %951 = vmatprep.subr.mxu0 0.0
        %952 = vmatpush1.msra.mxu0 0.0
        %953 = vmatprep.subr.mxu0 0.0
        %954 = vmatpush1.msra.mxu0 0.0
        %955 = vmatprep.mubr.f32.mxu0 0.0
        %956 = vmatmul.mubr.f32.gmra.mrb[0].mxu0 %v863
        %v957 = vpop.f32.mrb[0].mxu0
        %v958 = vadd.f32 0.0, %v957
        %v959 = vpop.f32.mrb[0].mxu0
        %v960 = vadd.f32 0.0, %v959
        %961 = vmatprep.mubr.f32.mxu0 0.0
        %962 = vmatmul.mubr.f32.gmra.mrb[0].mxu0 %v866
        %v963 = vpop.f32.mrb[0].mxu0
        %v964 = vadd.f32 0.0, %v963
        %v965 = vpop.f32.mrb[0].mxu0
        %v966 = vadd.f32 0.0, %v965
        %967 = vmatprep.mubr.f32.mxu0 0.0
        %968 = vmatmul.mubr.f32.gmra.mrb[0].mxu0 %v869
        %v969 = vpop.f32.mrb[0].mxu0
        %v970 = vadd.f32 0.0, %v969
        %v971 = vpop.f32.mrb[0].mxu0
        %v972 = vadd.f32 0.0, %v971
        %973 = vmatprep.mubr.f32.mxu0 0.0
        %974 = vmatmul.mubr.f32.gmra.mrb[0].mxu0 %v872
        %v975 = vpop.f32.mrb[0].mxu0
        %v976 = vadd.f32 0.0, %v975
        %v977 = vpop.f32.mrb[0].mxu0
        %v978 = vadd.f32 0.0, %v977
        %979 = vdwg.mxu0
        %980 = vmatprep.subr.mxu0 %v881
        %981 = vmatpush1.msra.mxu0 %v879
        %982 = vmatprep.subr.mxu0 0.0
        %983 = vmatpush1.msra.mxu0 0.0
        %984 = vmatprep.subr.mxu0 0.0
        %985 = vmatpush1.msra.mxu0 0.0
        %986 = vmatprep.subr.mxu0 0.0
        %987 = vmatpush1.msra.mxu0 0.0
        %988 = vmatprep.subr.mxu0 0.0
        %989 = vmatpush1.msra.mxu0 0.0
        %990 = vmatprep.subr.mxu0 0.0
        %991 = vmatpush1.msra.mxu0 0.0
        %992 = vmatprep.subr.mxu0 0.0
        %993 = vmatpush1.msra.mxu0 0.0
        %994 = vmatprep.subr.mxu0 0.0
        %995 = vmatpush1.msra.mxu0 0.0
        %996 = vmatprep.subr.mxu0 0.0
        %997 = vmatpush1.msra.mxu0 0.0
        %998 = vmatprep.subr.mxu0 0.0
        %999 = vmatpush1.msra.mxu0 0.0
        %1000 = vmatprep.subr.mxu0 0.0
        %1001 = vmatpush1.msra.mxu0 0.0
        %1002 = vmatprep.subr.mxu0 0.0
        %1003 = vmatpush1.msra.mxu0 0.0
        %1004 = vmatprep.subr.mxu0 0.0
        %1005 = vmatpush1.msra.mxu0 0.0
        %1006 = vmatprep.subr.mxu0 0.0
        %1007 = vmatpush1.msra.mxu0 0.0
        %1008 = vmatprep.subr.mxu0 0.0
        %1009 = vmatpush1.msra.mxu0 0.0
        %1010 = vmatprep.subr.mxu0 0.0
        %1011 = vmatpush1.msra.mxu0 0.0
        %1012 = vmatprep.subr.mxu0 0.0
        %1013 = vmatpush1.msra.mxu0 0.0
        %1014 = vmatprep.subr.mxu0 0.0
        %1015 = vmatpush1.msra.mxu0 0.0
        %1016 = vmatprep.subr.mxu0 0.0
        %1017 = vmatpush1.msra.mxu0 0.0
        %1018 = vmatprep.subr.mxu0 0.0
        %1019 = vmatpush1.msra.mxu0 0.0
        %1020 = vmatprep.subr.mxu0 0.0
        %1021 = vmatpush1.msra.mxu0 0.0
        %1022 = vmatprep.subr.mxu0 0.0
        %1023 = vmatpush1.msra.mxu0 0.0
        %1024 = vmatprep.subr.mxu0 0.0
        %1025 = vmatpush1.msra.mxu0 0.0
        %1026 = vmatprep.subr.mxu0 0.0
        %1027 = vmatpush1.msra.mxu0 0.0
        %1028 = vmatprep.subr.mxu0 0.0
        %1029 = vmatpush1.msra.mxu0 0.0
        %1030 = vmatprep.subr.mxu0 0.0
        %1031 = vmatpush1.msra.mxu0 0.0
        %1032 = vmatprep.subr.mxu0 0.0
        %1033 = vmatpush1.msra.mxu0 0.0
        %1034 = vmatprep.subr.mxu0 0.0
        %1035 = vmatpush1.msra.mxu0 0.0
        %1036 = vmatprep.subr.mxu0 0.0
        %1037 = vmatpush1.msra.mxu0 0.0
        %1038 = vmatprep.subr.mxu0 0.0
        %1039 = vmatpush1.msra.mxu0 0.0
        %1040 = vmatprep.subr.mxu0 0.0
        %1041 = vmatpush1.msra.mxu0 0.0
        %1042 = vmatprep.subr.mxu0 0.0
        %1043 = vmatpush1.msra.mxu0 0.0
        %1044 = vmatprep.mubr.f32.mxu0 0.0
        %1045 = vmatmul.mubr.f32.gmra.mrb[0].mxu0 %v863
        %v1046 = vpop.f32.mrb[0].mxu0
        %v1047 = vadd.f32 0.0, %v1046
        %v1048 = vpop.f32.mrb[0].mxu0
        %v1049 = vadd.f32 0.0, %v1048
        %1050 = vmatprep.mubr.f32.mxu0 0.0
        %1051 = vmatmul.mubr.f32.gmra.mrb[0].mxu0 %v866
        %v1052 = vpop.f32.mrb[0].mxu0
        %v1053 = vadd.f32 0.0, %v1052
        %v1054 = vpop.f32.mrb[0].mxu0
        %v1055 = vadd.f32 0.0, %v1054
        %1056 = vmatprep.mubr.f32.mxu0 0.0
        %1057 = vmatmul.mubr.f32.gmra.mrb[0].mxu0 %v869
        %v1058 = vpop.f32.mrb[0].mxu0
        %v1059 = vadd.f32 0.0, %v1058
        %v1060 = vpop.f32.mrb[0].mxu0
        %v1061 = vadd.f32 0.0, %v1060
        %1062 = vmatprep.mubr.f32.mxu0 0.0
        %1063 = vmatmul.mubr.f32.gmra.mrb[0].mxu0 %v872
        %v1064 = vpop.f32.mrb[0].mxu0
        %v1065 = vadd.f32 0.0, %v1064
        %v1066 = vpop.f32.mrb[0].mxu0
        %v1067 = vadd.f32 0.0, %v1066
        %1068 = vdwg.mxu0
        %1069 = vmatprep.subr.mxu0 %v885
        %1070 = vmatpush1.msra.mxu0 %v883
        %1071 = vmatprep.subr.mxu0 0.0
        %1072 = vmatpush1.msra.mxu0 0.0
        %1073 = vmatprep.subr.mxu0 0.0
        %1074 = vmatpush1.msra.mxu0 0.0
        %1075 = vmatprep.subr.mxu0 0.0
        %1076 = vmatpush1.msra.mxu0 0.0
        %1077 = vmatprep.subr.mxu0 0.0
        %1078 = vmatpush1.msra.mxu0 0.0
        %1079 = vmatprep.subr.mxu0 0.0
        %1080 = vmatpush1.msra.mxu0 0.0
        %1081 = vmatprep.subr.mxu0 0.0
        %1082 = vmatpush1.msra.mxu0 0.0
        %1083 = vmatprep.subr.mxu0 0.0
        %1084 = vmatpush1.msra.mxu0 0.0
        %1085 = vmatprep.subr.mxu0 0.0
        %1086 = vmatpush1.msra.mxu0 0.0
        %1087 = vmatprep.subr.mxu0 0.0
        %1088 = vmatpush1.msra.mxu0 0.0
        %1089 = vmatprep.subr.mxu0 0.0
        %1090 = vmatpush1.msra.mxu0 0.0
        %1091 = vmatprep.subr.mxu0 0.0
        %1092 = vmatpush1.msra.mxu0 0.0
        %1093 = vmatprep.subr.mxu0 0.0
        %1094 = vmatpush1.msra.mxu0 0.0
        %1095 = vmatprep.subr.mxu0 0.0
        %1096 = vmatpush1.msra.mxu0 0.0
        %1097 = vmatprep.subr.mxu0 0.0
        %1098 = vmatpush1.msra.mxu0 0.0
        %1099 = vmatprep.subr.mxu0 0.0
        %1100 = vmatpush1.msra.mxu0 0.0
        %1101 = vmatprep.subr.mxu0 0.0
        %1102 = vmatpush1.msra.mxu0 0.0
        %1103 = vmatprep.subr.mxu0 0.0
        %1104 = vmatpush1.msra.mxu0 0.0
        %1105 = vmatprep.subr.mxu0 0.0
        %1106 = vmatpush1.msra.mxu0 0.0
        %1107 = vmatprep.subr.mxu0 0.0
        %1108 = vmatpush1.msra.mxu0 0.0
        %1109 = vmatprep.subr.mxu0 0.0
        %1110 = vmatpush1.msra.mxu0 0.0
        %1111 = vmatprep.subr.mxu0 0.0
        %1112 = vmatpush1.msra.mxu0 0.0
        %1113 = vmatprep.subr.mxu0 0.0
        %1114 = vmatpush1.msra.mxu0 0.0
        %1115 = vmatprep.subr.mxu0 0.0
        %1116 = vmatpush1.msra.mxu0 0.0
        %1117 = vmatprep.subr.mxu0 0.0
        %1118 = vmatpush1.msra.mxu0 0.0
        %1119 = vmatprep.subr.mxu0 0.0
        %1120 = vmatpush1.msra.mxu0 0.0
        %1121 = vmatprep.subr.mxu0 0.0
        %1122 = vmatpush1.msra.mxu0 0.0
        %1123 = vmatprep.subr.mxu0 0.0
        %1124 = vmatpush1.msra.mxu0 0.0
        %1125 = vmatprep.subr.mxu0 0.0
        %1126 = vmatpush1.msra.mxu0 0.0
        %1127 = vmatprep.subr.mxu0 0.0
        %1128 = vmatpush1.msra.mxu0 0.0
        %1129 = vmatprep.subr.mxu0 0.0
        %1130 = vmatpush1.msra.mxu0 0.0
        %1131 = vmatprep.subr.mxu0 0.0
        %1132 = vmatpush1.msra.mxu0 0.0
        %1133 = vmatprep.mubr.f32.mxu0 0.0
        %1134 = vmatmul.mubr.f32.gmra.mrb[0].mxu0 %v863
        %v1135 = vpop.f32.mrb[0].mxu0
        %v1136 = vadd.f32 0.0, %v1135
        %v1137 = vpop.f32.mrb[0].mxu0
        %v1138 = vadd.f32 0.0, %v1137
        %1139 = vmatprep.mubr.f32.mxu0 0.0
        %1140 = vmatmul.mubr.f32.gmra.mrb[0].mxu0 %v866
        %v1141 = vpop.f32.mrb[0].mxu0
        %v1142 = vadd.f32 0.0, %v1141
        %v1143 = vpop.f32.mrb[0].mxu0
        %v1144 = vadd.f32 0.0, %v1143
        %1145 = vmatprep.mubr.f32.mxu0 0.0
        %1146 = vmatmul.mubr.f32.gmra.mrb[0].mxu0 %v869
        %v1147 = vpop.f32.mrb[0].mxu0
        %v1148 = vadd.f32 0.0, %v1147
        %v1149 = vpop.f32.mrb[0].mxu0
        %v1150 = vadd.f32 0.0, %v1149
        %1151 = vmatprep.mubr.f32.mxu0 0.0
        %1152 = vmatmul.mubr.f32.gmra.mrb[0].mxu0 %v872
        %v1153 = vpop.f32.mrb[0].mxu0
        %v1154 = vadd.f32 0.0, %v1153
        %v1155 = vpop.f32.mrb[0].mxu0
        %v1156 = vadd.f32 0.0, %v1155
        %1157 = vdwg.mxu0
        %1158 = vmatprep.subr.mxu0 %v889
        %1159 = vmatpush1.msra.mxu0 %v887
        %1160 = vmatprep.subr.mxu0 0.0
        %1161 = vmatpush1.msra.mxu0 0.0
        %1162 = vmatprep.subr.mxu0 0.0
        %1163 = vmatpush1.msra.mxu0 0.0
        %1164 = vmatprep.subr.mxu0 0.0
        %1165 = vmatpush1.msra.mxu0 0.0
        %1166 = vmatprep.subr.mxu0 0.0
        %1167 = vmatpush1.msra.mxu0 0.0
        %1168 = vmatprep.subr.mxu0 0.0
        %1169 = vmatpush1.msra.mxu0 0.0
        %1170 = vmatprep.subr.mxu0 0.0
        %1171 = vmatpush1.msra.mxu0 0.0
        %1172 = vmatprep.subr.mxu0 0.0
        %1173 = vmatpush1.msra.mxu0 0.0
        %1174 = vmatprep.subr.mxu0 0.0
        %1175 = vmatpush1.msra.mxu0 0.0
        %1176 = vmatprep.subr.mxu0 0.0
        %1177 = vmatpush1.msra.mxu0 0.0
        %1178 = vmatprep.subr.mxu0 0.0
        %1179 = vmatpush1.msra.mxu0 0.0
        %1180 = vmatprep.subr.mxu0 0.0
        %1181 = vmatpush1.msra.mxu0 0.0
        %1182 = vmatprep.subr.mxu0 0.0
        %1183 = vmatpush1.msra.mxu0 0.0
        %1184 = vmatprep.subr.mxu0 0.0
        %1185 = vmatpush1.msra.mxu0 0.0
        %1186 = vmatprep.subr.mxu0 0.0
        %1187 = vmatpush1.msra.mxu0 0.0
        %1188 = vmatprep.subr.mxu0 0.0
        %1189 = vmatpush1.msra.mxu0 0.0
        %1190 = vmatprep.subr.mxu0 0.0
        %1191 = vmatpush1.msra.mxu0 0.0
        %1192 = vmatprep.subr.mxu0 0.0
        %1193 = vmatpush1.msra.mxu0 0.0
        %1194 = vmatprep.subr.mxu0 0.0
        %1195 = vmatpush1.msra.mxu0 0.0
        %1196 = vmatprep.subr.mxu0 0.0
        %1197 = vmatpush1.msra.mxu0 0.0
        %1198 = vmatprep.subr.mxu0 0.0
        %1199 = vmatpush1.msra.mxu0 0.0
        %1200 = vmatprep.subr.mxu0 0.0
        %1201 = vmatpush1.msra.mxu0 0.0
        %1202 = vmatprep.subr.mxu0 0.0
        %1203 = vmatpush1.msra.mxu0 0.0
        %1204 = vmatprep.subr.mxu0 0.0
        %1205 = vmatpush1.msra.mxu0 0.0
        %1206 = vmatprep.subr.mxu0 0.0
        %1207 = vmatpush1.msra.mxu0 0.0
        %1208 = vmatprep.subr.mxu0 0.0
        %1209 = vmatpush1.msra.mxu0 0.0
        %1210 = vmatprep.subr.mxu0 0.0
        %1211 = vmatpush1.msra.mxu0 0.0
        %1212 = vmatprep.subr.mxu0 0.0
        %1213 = vmatpush1.msra.mxu0 0.0
        %1214 = vmatprep.subr.mxu0 0.0
        %1215 = vmatpush1.msra.mxu0 0.0
        %1216 = vmatprep.subr.mxu0 0.0
        %1217 = vmatpush1.msra.mxu0 0.0
        %1218 = vmatprep.subr.mxu0 0.0
        %1219 = vmatpush1.msra.mxu0 0.0
        %1220 = vmatprep.subr.mxu0 0.0
        %1221 = vmatpush1.msra.mxu0 0.0
        %1222 = vmatprep.mubr.f32.mxu0 0.0
        %1223 = vmatmul.mubr.f32.gmra.mrb[0].mxu0 %v863
        %v1224 = vpop.f32.mrb[0].mxu0
        %v1225 = vadd.f32 0.0, %v1224
        %v1226 = vpop.f32.mrb[0].mxu0
        %v1227 = vadd.f32 0.0, %v1226
        %1228 = vmatprep.mubr.f32.mxu0 0.0
        %1229 = vmatmul.mubr.f32.gmra.mrb[0].mxu0 %v866
        %v1230 = vpop.f32.mrb[0].mxu0
        %v1231 = vadd.f32 0.0, %v1230
        %v1232 = vpop.f32.mrb[0].mxu0
        %v1233 = vadd.f32 0.0, %v1232
        %1234 = vmatprep.mubr.f32.mxu0 0.0
        %1235 = vmatmul.mubr.f32.gmra.mrb[0].mxu0 %v869
        %v1236 = vpop.f32.mrb[0].mxu0
        %v1237 = vadd.f32 0.0, %v1236
        %v1238 = vpop.f32.mrb[0].mxu0
        %v1239 = vadd.f32 0.0, %v1238
        %1240 = vmatprep.mubr.f32.mxu0 0.0
        %1241 = vmatmul.mubr.f32.gmra.mrb[0].mxu0 %v872
        %v1242 = vpop.f32.mrb[0].mxu0
        %v1243 = vadd.f32 0.0, %v1242
        %v1244 = vpop.f32.mrb[0].mxu0
        %v1245 = vadd.f32 0.0, %v1244
        %1246 = vdwg.mxu0
        %1248 = vset.pattern.permute.xlu0 0
        %1249 = vperm.xlu0 %1248, %v845
        %v1250 = vpop.permute.xlu0 %1249
        %1253 = vset.pattern.permute.xlu0 0
        %1254 = vperm.xlu0 %1253, %v846
        %v1255 = vpop.permute.xlu0 %1254
        %1258 = vset.pattern.permute.xlu0 0
        %1259 = vperm.xlu0 %1258, %v847
        %v1260 = vpop.permute.xlu0 %1259
        %1263 = vset.pattern.permute.xlu0 0
        %1264 = vperm.xlu0 %1263, %v848
        %v1265 = vpop.permute.xlu0 %1264
        %v1267 = vadd.f32 %v1250, %v958
        %v1268 = vadd.f32 %v1250, %v960
        %v1269 = vadd.f32 %v1250, %v1047
        %v1270 = vadd.f32 %v1250, %v1049
        %v1271 = vadd.f32 %v1250, %v1136
        %v1272 = vadd.f32 %v1250, %v1138
        %v1273 = vadd.f32 %v1250, %v1225
        %v1274 = vadd.f32 %v1250, %v1227
        %v1275 = vadd.f32 %v1255, %v964
        %v1276 = vadd.f32 %v1255, %v966
        %v1277 = vadd.f32 %v1255, %v1053
        %v1278 = vadd.f32 %v1255, %v1055
        %v1279 = vadd.f32 %v1255, %v1142
        %v1280 = vadd.f32 %v1255, %v1144
        %v1281 = vadd.f32 %v1255, %v1231
        %v1282 = vadd.f32 %v1255, %v1233
        %v1283 = vadd.f32 %v1260, %v970
        %v1284 = vadd.f32 %v1260, %v972
        %v1285 = vadd.f32 %v1260, %v1059
        %v1286 = vadd.f32 %v1260, %v1061
        %v1287 = vadd.f32 %v1260, %v1148
        %v1288 = vadd.f32 %v1260, %v1150
        %v1289 = vadd.f32 %v1260, %v1237
        %v1290 = vadd.f32 %v1260, %v1239
        %v1291 = vadd.f32 %v1265, %v976
        %v1292 = vadd.f32 %v1265, %v978
        %v1293 = vadd.f32 %v1265, %v1065
        %v1294 = vadd.f32 %v1265, %v1067
        %v1295 = vadd.f32 %v1265, %v1154
        %v1296 = vadd.f32 %v1265, %v1156
        %v1297 = vadd.f32 %v1265, %v1243
        %v1298 = vadd.f32 %v1265, %v1245
        %v1299 = vadd.f32 %v1267, 0.0
        %v1300 = vadd.f32 %v1275, 0.0
        %v1301 = vadd.f32 %v1283, 0.0
        %v1302 = vadd.f32 %v1291, 0.0
        %v1303 = vmul.f32 %v1267, %v1267
        %v1304 = vmul.f32 %v1275, %v1275
        %v1305 = vmul.f32 %v1283, %v1283
        %v1306 = vmul.f32 %v1291, %v1291
        %v1307 = vadd.f32 %v1303, 0.0
        %v1308 = vadd.f32 %v1304, 0.0
        %v1309 = vadd.f32 %v1305, 0.0
        %v1310 = vadd.f32 %v1306, 0.0
        %v1311 = vadd.f32 %v1299, %v1268
        %v1312 = vadd.f32 %v1300, %v1276
        %v1313 = vadd.f32 %v1301, %v1284
        %v1314 = vadd.f32 %v1302, %v1292
        %v1315 = vmul.f32 %v1268, %v1268
        %v1316 = vmul.f32 %v1276, %v1276
        %v1317 = vmul.f32 %v1284, %v1284
        %v1318 = vmul.f32 %v1292, %v1292
        %v1319 = vadd.f32 %v1307, %v1315
        %v1320 = vadd.f32 %v1308, %v1316
        %v1321 = vadd.f32 %v1309, %v1317
        %v1322 = vadd.f32 %v1310, %v1318
        %v1323 = vadd.f32 %v1311, %v1269
        %v1324 = vadd.f32 %v1312, %v1277
        %v1325 = vadd.f32 %v1313, %v1285
        %v1326 = vadd.f32 %v1314, %v1293
        %v1327 = vmul.f32 %v1269, %v1269
        %v1328 = vmul.f32 %v1277, %v1277
        %v1329 = vmul.f32 %v1285, %v1285
        %v1330 = vmul.f32 %v1293, %v1293
        %v1331 = vadd.f32 %v1319, %v1327
        %v1332 = vadd.f32 %v1320, %v1328
        %v1333 = vadd.f32 %v1321, %v1329
        %v1334 = vadd.f32 %v1322, %v1330
        %v1335 = vadd.f32 %v1323, %v1270
        %v1336 = vadd.f32 %v1324, %v1278
        %v1337 = vadd.f32 %v1325, %v1286
        %v1338 = vadd.f32 %v1326, %v1294
        %v1339 = vmul.f32 %v1270, %v1270
        %v1340 = vmul.f32 %v1278, %v1278
        %v1341 = vmul.f32 %v1286, %v1286
        %v1342 = vmul.f32 %v1294, %v1294
        %v1343 = vadd.f32 %v1331, %v1339
        %v1344 = vadd.f32 %v1332, %v1340
        %v1345 = vadd.f32 %v1333, %v1341
        %v1346 = vadd.f32 %v1334, %v1342
        %v1347 = vadd.f32 %v1335, %v1271
        %v1348 = vadd.f32 %v1336, %v1279
        %v1349 = vadd.f32 %v1337, %v1287
        %v1350 = vadd.f32 %v1338, %v1295
        %v1351 = vmul.f32 %v1271, %v1271
        %v1352 = vmul.f32 %v1279, %v1279
        %v1353 = vmul.f32 %v1287, %v1287
        %v1354 = vmul.f32 %v1295, %v1295
        %v1355 = vadd.f32 %v1343, %v1351
        %v1356 = vadd.f32 %v1344, %v1352
        %v1357 = vadd.f32 %v1345, %v1353
        %v1358 = vadd.f32 %v1346, %v1354
        %v1359 = vadd.f32 %v1347, %v1272
        %v1360 = vadd.f32 %v1348, %v1280
        %v1361 = vadd.f32 %v1349, %v1288
        %v1362 = vadd.f32 %v1350, %v1296
        %v1363 = vmul.f32 %v1272, %v1272
        %v1364 = vmul.f32 %v1280, %v1280
        %v1365 = vmul.f32 %v1288, %v1288
        %v1366 = vmul.f32 %v1296, %v1296
        %v1367 = vadd.f32 %v1355, %v1363
        %v1368 = vadd.f32 %v1356, %v1364
        %v1369 = vadd.f32 %v1357, %v1365
        %v1370 = vadd.f32 %v1358, %v1366
        %v1371 = vadd.f32 %v1359, %v1273
        %v1372 = vadd.f32 %v1360, %v1281
        %v1373 = vadd.f32 %v1361, %v1289
        %v1374 = vadd.f32 %v1362, %v1297
        %v1375 = vmul.f32 %v1273, %v1273
        %v1376 = vmul.f32 %v1281, %v1281
        %v1377 = vmul.f32 %v1289, %v1289
        %v1378 = vmul.f32 %v1297, %v1297
        %v1379 = vadd.f32 %v1367, %v1375
        %v1380 = vadd.f32 %v1368, %v1376
        %v1381 = vadd.f32 %v1369, %v1377
        %v1382 = vadd.f32 %v1370, %v1378
        %v1383 = vadd.f32 %v1371, %v1274
        %v1384 = vadd.f32 %v1372, %v1282
        %v1385 = vadd.f32 %v1373, %v1290
        %v1386 = vadd.f32 %v1374, %v1298
        %v1387 = vmul.f32 %v1274, %v1274
        %v1388 = vmul.f32 %v1282, %v1282
        %v1389 = vmul.f32 %v1290, %v1290
        %v1390 = vmul.f32 %v1298, %v1298
        %v1391 = vadd.f32 %v1379, %v1387
        %v1392 = vadd.f32 %v1380, %v1388
        %v1393 = vadd.f32 %v1381, %v1389
        %v1394 = vadd.f32 %v1382, %v1390
        %v1395 = vld [vmem:[#allocation2] sm:$0xff]
        %v1396 = vld [vmem:[#allocation2 + $0x8] sm:$0xff]
        %v1397 = vld [vmem:[#allocation2 + $0x10] sm:$0xff]
        %v1398 = vld [vmem:[#allocation2 + $0x18] sm:$0xff]
        %v1399 = vadd.f32 %v1395, %v1383
        %v1400 = vadd.f32 %v1396, %v1384
        %v1401 = vadd.f32 %v1397, %v1385
        %v1402 = vadd.f32 %v1398, %v1386
        %1403 = vst [vmem:[#allocation2] sm:$0xff] %v1399
        %1404 = vst [vmem:[#allocation2 + $0x8] sm:$0xff] %v1400
        %1405 = vst [vmem:[#allocation2 + $0x10] sm:$0xff] %v1401
        %1406 = vst [vmem:[#allocation2 + $0x18] sm:$0xff] %v1402
        %v1407 = vld [vmem:[#allocation3] sm:$0xff]
        %v1408 = vld [vmem:[#allocation3 + $0x8] sm:$0xff]
        %v1409 = vld [vmem:[#allocation3 + $0x10] sm:$0xff]
        %v1410 = vld [vmem:[#allocation3 + $0x18] sm:$0xff]
        %v1411 = vadd.f32 %v1407, %v1391
        %v1412 = vadd.f32 %v1408, %v1392
        %v1413 = vadd.f32 %v1409, %v1393
        %v1414 = vadd.f32 %v1410, %v1394
        %1415 = vst [vmem:[#allocation3] sm:$0xff] %v1411
        %1416 = vst [vmem:[#allocation3 + $0x8] sm:$0xff] %v1412
        %1417 = vst [vmem:[#allocation3 + $0x10] sm:$0xff] %v1413
        %1418 = vst [vmem:[#allocation3 + $0x18] sm:$0xff] %v1414
      $region112: #{tpu_custom_call.1} parent=91 // pred_fallthru
        _
      // Predicated region
      $region113: #{tpu_custom_call.1} parent=91 // pred_check
        %p1419 = pneg %p684
      $region114: #{tpu_custom_call.1} parent=91 // pred_check_branch
        %1421 = sbr.rel (%p1419) target = $region116
      $region115: #{tpu_custom_call.1} parent=91 // pred_region
        %v1422 = vld [vmem:[%s630] sm:$0xff]
        %v1423 = vld [vmem:[%s630 + $0x8] sm:$0xff]
        %v1424 = vld [vmem:[%s630 + $0x10] sm:$0xff]
        %v1425 = vld [vmem:[%s630 + $0x18] sm:$0xff]
        %v1426 = vld [vmem:[%s2] sm:$0xff]
        %v1427 = vld [vmem:[%s2 + $0x8] sm:$0xff]
        %v1428 = vld [vmem:[%s2 + $0x10] sm:$0xff]
        %v1429 = vld [vmem:[%s2 + $0x18] sm:$0xff]
        %v1434 = vcombine.high %v661, %v661
        %v1435 = vcombine.high %v662, %v662
        %v1436 = vcombine.high %v663, %v663
        %v1437 = vcombine.high %v664, %v664
        %vm1438 = vcmask 23552
        %v1440 = vsel %vm1438, %v1426, 0
        %v1443 = vsel %vm1438, %v1427, 0
        %v1446 = vsel %vm1438, %v1428, 0
        %v1449 = vsel %vm1438, %v1429, 0
        %vm1451 = vcmask 1042432
        %v1452 = vsel %vm1451, %v661, 0
        %v1454 = vsel %vm1451, %v1434, 0
        %v1456 = vsel %vm1451, %v662, 0
        %v1458 = vsel %vm1451, %v1435, 0
        %v1460 = vsel %vm1451, %v663, 0
        %v1462 = vsel %vm1451, %v1436, 0
        %v1464 = vsel %vm1451, %v664, 0
        %v1466 = vsel %vm1451, %v1437, 0
        %1468 = vmatprep.subr.mxu0 %v1454
        %1469 = vmatpush1.msra.mxu0 %v1452
        %1470 = vmatprep.subr.mxu0 0.0
        %1471 = vmatpush1.msra.mxu0 0.0
        %1472 = vmatprep.subr.mxu0 0.0
        %1473 = vmatpush1.msra.mxu0 0.0
        %1474 = vmatprep.subr.mxu0 0.0
        %1475 = vmatpush1.msra.mxu0 0.0
        %1476 = vmatprep.subr.mxu0 0.0
        %1477 = vmatpush1.msra.mxu0 0.0
        %1478 = vmatprep.subr.mxu0 0.0
        %1479 = vmatpush1.msra.mxu0 0.0
        %1480 = vmatprep.subr.mxu0 0.0
        %1481 = vmatpush1.msra.mxu0 0.0
        %1482 = vmatprep.subr.mxu0 0.0
        %1483 = vmatpush1.msra.mxu0 0.0
        %1484 = vmatprep.subr.mxu0 0.0
        %1485 = vmatpush1.msra.mxu0 0.0
        %1486 = vmatprep.subr.mxu0 0.0
        %1487 = vmatpush1.msra.mxu0 0.0
        %1488 = vmatprep.subr.mxu0 0.0
        %1489 = vmatpush1.msra.mxu0 0.0
        %1490 = vmatprep.subr.mxu0 0.0
        %1491 = vmatpush1.msra.mxu0 0.0
        %1492 = vmatprep.subr.mxu0 0.0
        %1493 = vmatpush1.msra.mxu0 0.0
        %1494 = vmatprep.subr.mxu0 0.0
        %1495 = vmatpush1.msra.mxu0 0.0
        %1496 = vmatprep.subr.mxu0 0.0
        %1497 = vmatpush1.msra.mxu0 0.0
        %1498 = vmatprep.subr.mxu0 0.0
        %1499 = vmatpush1.msra.mxu0 0.0
        %1500 = vmatprep.subr.mxu0 0.0
        %1501 = vmatpush1.msra.mxu0 0.0
        %1502 = vmatprep.subr.mxu0 0.0
        %1503 = vmatpush1.msra.mxu0 0.0
        %1504 = vmatprep.subr.mxu0 0.0
        %1505 = vmatpush1.msra.mxu0 0.0
        %1506 = vmatprep.subr.mxu0 0.0
        %1507 = vmatpush1.msra.mxu0 0.0
        %1508 = vmatprep.subr.mxu0 0.0
        %1509 = vmatpush1.msra.mxu0 0.0
        %1510 = vmatprep.subr.mxu0 0.0
        %1511 = vmatpush1.msra.mxu0 0.0
        %1512 = vmatprep.subr.mxu0 0.0
        %1513 = vmatpush1.msra.mxu0 0.0
        %1514 = vmatprep.subr.mxu0 0.0
        %1515 = vmatpush1.msra.mxu0 0.0
        %1516 = vmatprep.subr.mxu0 0.0
        %1517 = vmatpush1.msra.mxu0 0.0
        %1518 = vmatprep.subr.mxu0 0.0
        %1519 = vmatpush1.msra.mxu0 0.0
        %1520 = vmatprep.subr.mxu0 0.0
        %1521 = vmatpush1.msra.mxu0 0.0
        %1522 = vmatprep.subr.mxu0 0.0
        %1523 = vmatpush1.msra.mxu0 0.0
        %1524 = vmatprep.subr.mxu0 0.0
        %1525 = vmatpush1.msra.mxu0 0.0
        %1526 = vmatprep.subr.mxu0 0.0
        %1527 = vmatpush1.msra.mxu0 0.0
        %1528 = vmatprep.subr.mxu0 0.0
        %1529 = vmatpush1.msra.mxu0 0.0
        %1530 = vmatprep.subr.mxu0 0.0
        %1531 = vmatpush1.msra.mxu0 0.0
        %1532 = vmatprep.mubr.f32.mxu0 0.0
        %1533 = vmatmul.mubr.f32.gmra.mrb[0].mxu0 %v1440
        %v1534 = vpop.f32.mrb[0].mxu0
        %v1535 = vadd.f32 0.0, %v1534
        %v1536 = vpop.f32.mrb[0].mxu0
        %v1537 = vadd.f32 0.0, %v1536
        %1538 = vmatprep.mubr.f32.mxu0 0.0
        %1539 = vmatmul.mubr.f32.gmra.mrb[0].mxu0 %v1443
        %v1540 = vpop.f32.mrb[0].mxu0
        %v1541 = vadd.f32 0.0, %v1540
        %v1542 = vpop.f32.mrb[0].mxu0
        %v1543 = vadd.f32 0.0, %v1542
        %1544 = vmatprep.mubr.f32.mxu0 0.0
        %1545 = vmatmul.mubr.f32.gmra.mrb[0].mxu0 %v1446
        %v1546 = vpop.f32.mrb[0].mxu0
        %v1547 = vadd.f32 0.0, %v1546
        %v1548 = vpop.f32.mrb[0].mxu0
        %v1549 = vadd.f32 0.0, %v1548
        %1550 = vmatprep.mubr.f32.mxu0 0.0
        %1551 = vmatmul.mubr.f32.gmra.mrb[0].mxu0 %v1449
        %v1552 = vpop.f32.mrb[0].mxu0
        %v1553 = vadd.f32 0.0, %v1552
        %v1554 = vpop.f32.mrb[0].mxu0
        %v1555 = vadd.f32 0.0, %v1554
        %1556 = vdwg.mxu0
        %1557 = vmatprep.subr.mxu0 %v1458
        %1558 = vmatpush1.msra.mxu0 %v1456
        %1559 = vmatprep.subr.mxu0 0.0
        %1560 = vmatpush1.msra.mxu0 0.0
        %1561 = vmatprep.subr.mxu0 0.0
        %1562 = vmatpush1.msra.mxu0 0.0
        %1563 = vmatprep.subr.mxu0 0.0
        %1564 = vmatpush1.msra.mxu0 0.0
        %1565 = vmatprep.subr.mxu0 0.0
        %1566 = vmatpush1.msra.mxu0 0.0
        %1567 = vmatprep.subr.mxu0 0.0
        %1568 = vmatpush1.msra.mxu0 0.0
        %1569 = vmatprep.subr.mxu0 0.0
        %1570 = vmatpush1.msra.mxu0 0.0
        %1571 = vmatprep.subr.mxu0 0.0
        %1572 = vmatpush1.msra.mxu0 0.0
        %1573 = vmatprep.subr.mxu0 0.0
        %1574 = vmatpush1.msra.mxu0 0.0
        %1575 = vmatprep.subr.mxu0 0.0
        %1576 = vmatpush1.msra.mxu0 0.0
        %1577 = vmatprep.subr.mxu0 0.0
        %1578 = vmatpush1.msra.mxu0 0.0
        %1579 = vmatprep.subr.mxu0 0.0
        %1580 = vmatpush1.msra.mxu0 0.0
        %1581 = vmatprep.subr.mxu0 0.0
        %1582 = vmatpush1.msra.mxu0 0.0
        %1583 = vmatprep.subr.mxu0 0.0
        %1584 = vmatpush1.msra.mxu0 0.0
        %1585 = vmatprep.subr.mxu0 0.0
        %1586 = vmatpush1.msra.mxu0 0.0
        %1587 = vmatprep.subr.mxu0 0.0
        %1588 = vmatpush1.msra.mxu0 0.0
        %1589 = vmatprep.subr.mxu0 0.0
        %1590 = vmatpush1.msra.mxu0 0.0
        %1591 = vmatprep.subr.mxu0 0.0
        %1592 = vmatpush1.msra.mxu0 0.0
        %1593 = vmatprep.subr.mxu0 0.0
        %1594 = vmatpush1.msra.mxu0 0.0
        %1595 = vmatprep.subr.mxu0 0.0
        %1596 = vmatpush1.msra.mxu0 0.0
        %1597 = vmatprep.subr.mxu0 0.0
        %1598 = vmatpush1.msra.mxu0 0.0
        %1599 = vmatprep.subr.mxu0 0.0
        %1600 = vmatpush1.msra.mxu0 0.0
        %1601 = vmatprep.subr.mxu0 0.0
        %1602 = vmatpush1.msra.mxu0 0.0
        %1603 = vmatprep.subr.mxu0 0.0
        %1604 = vmatpush1.msra.mxu0 0.0
        %1605 = vmatprep.subr.mxu0 0.0
        %1606 = vmatpush1.msra.mxu0 0.0
        %1607 = vmatprep.subr.mxu0 0.0
        %1608 = vmatpush1.msra.mxu0 0.0
        %1609 = vmatprep.subr.mxu0 0.0
        %1610 = vmatpush1.msra.mxu0 0.0
        %1611 = vmatprep.subr.mxu0 0.0
        %1612 = vmatpush1.msra.mxu0 0.0
        %1613 = vmatprep.subr.mxu0 0.0
        %1614 = vmatpush1.msra.mxu0 0.0
        %1615 = vmatprep.subr.mxu0 0.0
        %1616 = vmatpush1.msra.mxu0 0.0
        %1617 = vmatprep.subr.mxu0 0.0
        %1618 = vmatpush1.msra.mxu0 0.0
        %1619 = vmatprep.subr.mxu0 0.0
        %1620 = vmatpush1.msra.mxu0 0.0
        %1621 = vmatprep.mubr.f32.mxu0 0.0
        %1622 = vmatmul.mubr.f32.gmra.mrb[0].mxu0 %v1440
        %v1623 = vpop.f32.mrb[0].mxu0
        %v1624 = vadd.f32 0.0, %v1623
        %v1625 = vpop.f32.mrb[0].mxu0
        %v1626 = vadd.f32 0.0, %v1625
        %1627 = vmatprep.mubr.f32.mxu0 0.0
        %1628 = vmatmul.mubr.f32.gmra.mrb[0].mxu0 %v1443
        %v1629 = vpop.f32.mrb[0].mxu0
        %v1630 = vadd.f32 0.0, %v1629
        %v1631 = vpop.f32.mrb[0].mxu0
        %v1632 = vadd.f32 0.0, %v1631
        %1633 = vmatprep.mubr.f32.mxu0 0.0
        %1634 = vmatmul.mubr.f32.gmra.mrb[0].mxu0 %v1446
        %v1635 = vpop.f32.mrb[0].mxu0
        %v1636 = vadd.f32 0.0, %v1635
        %v1637 = vpop.f32.mrb[0].mxu0
        %v1638 = vadd.f32 0.0, %v1637
        %1639 = vmatprep.mubr.f32.mxu0 0.0
        %1640 = vmatmul.mubr.f32.gmra.mrb[0].mxu0 %v1449
        %v1641 = vpop.f32.mrb[0].mxu0
        %v1642 = vadd.f32 0.0, %v1641
        %v1643 = vpop.f32.mrb[0].mxu0
        %v1644 = vadd.f32 0.0, %v1643
        %1645 = vdwg.mxu0
        %1646 = vmatprep.subr.mxu0 %v1462
        %1647 = vmatpush1.msra.mxu0 %v1460
        %1648 = vmatprep.subr.mxu0 0.0
        %1649 = vmatpush1.msra.mxu0 0.0
        %1650 = vmatprep.subr.mxu0 0.0
        %1651 = vmatpush1.msra.mxu0 0.0
        %1652 = vmatprep.subr.mxu0 0.0
        %1653 = vmatpush1.msra.mxu0 0.0
        %1654 = vmatprep.subr.mxu0 0.0
        %1655 = vmatpush1.msra.mxu0 0.0
        %1656 = vmatprep.subr.mxu0 0.0
        %1657 = vmatpush1.msra.mxu0 0.0
        %1658 = vmatprep.subr.mxu0 0.0
        %1659 = vmatpush1.msra.mxu0 0.0
        %1660 = vmatprep.subr.mxu0 0.0
        %1661 = vmatpush1.msra.mxu0 0.0
        %1662 = vmatprep.subr.mxu0 0.0
        %1663 = vmatpush1.msra.mxu0 0.0
        %1664 = vmatprep.subr.mxu0 0.0
        %1665 = vmatpush1.msra.mxu0 0.0
        %1666 = vmatprep.subr.mxu0 0.0
        %1667 = vmatpush1.msra.mxu0 0.0
        %1668 = vmatprep.subr.mxu0 0.0
        %1669 = vmatpush1.msra.mxu0 0.0
        %1670 = vmatprep.subr.mxu0 0.0
        %1671 = vmatpush1.msra.mxu0 0.0
        %1672 = vmatprep.subr.mxu0 0.0
        %1673 = vmatpush1.msra.mxu0 0.0
        %1674 = vmatprep.subr.mxu0 0.0
        %1675 = vmatpush1.msra.mxu0 0.0
        %1676 = vmatprep.subr.mxu0 0.0
        %1677 = vmatpush1.msra.mxu0 0.0
        %1678 = vmatprep.subr.mxu0 0.0
        %1679 = vmatpush1.msra.mxu0 0.0
        %1680 = vmatprep.subr.mxu0 0.0
        %1681 = vmatpush1.msra.mxu0 0.0
        %1682 = vmatprep.subr.mxu0 0.0
        %1683 = vmatpush1.msra.mxu0 0.0
        %1684 = vmatprep.subr.mxu0 0.0
        %1685 = vmatpush1.msra.mxu0 0.0
        %1686 = vmatprep.subr.mxu0 0.0
        %1687 = vmatpush1.msra.mxu0 0.0
        %1688 = vmatprep.subr.mxu0 0.0
        %1689 = vmatpush1.msra.mxu0 0.0
        %1690 = vmatprep.subr.mxu0 0.0
        %1691 = vmatpush1.msra.mxu0 0.0
        %1692 = vmatprep.subr.mxu0 0.0
        %1693 = vmatpush1.msra.mxu0 0.0
        %1694 = vmatprep.subr.mxu0 0.0
        %1695 = vmatpush1.msra.mxu0 0.0
        %1696 = vmatprep.subr.mxu0 0.0
        %1697 = vmatpush1.msra.mxu0 0.0
        %1698 = vmatprep.subr.mxu0 0.0
        %1699 = vmatpush1.msra.mxu0 0.0
        %1700 = vmatprep.subr.mxu0 0.0
        %1701 = vmatpush1.msra.mxu0 0.0
        %1702 = vmatprep.subr.mxu0 0.0
        %1703 = vmatpush1.msra.mxu0 0.0
        %1704 = vmatprep.subr.mxu0 0.0
        %1705 = vmatpush1.msra.mxu0 0.0
        %1706 = vmatprep.subr.mxu0 0.0
        %1707 = vmatpush1.msra.mxu0 0.0
        %1708 = vmatprep.subr.mxu0 0.0
        %1709 = vmatpush1.msra.mxu0 0.0
        %1710 = vmatprep.mubr.f32.mxu0 0.0
        %1711 = vmatmul.mubr.f32.gmra.mrb[0].mxu0 %v1440
        %v1712 = vpop.f32.mrb[0].mxu0
        %v1713 = vadd.f32 0.0, %v1712
        %v1714 = vpop.f32.mrb[0].mxu0
        %v1715 = vadd.f32 0.0, %v1714
        %1716 = vmatprep.mubr.f32.mxu0 0.0
        %1717 = vmatmul.mubr.f32.gmra.mrb[0].mxu0 %v1443
        %v1718 = vpop.f32.mrb[0].mxu0
        %v1719 = vadd.f32 0.0, %v1718
        %v1720 = vpop.f32.mrb[0].mxu0
        %v1721 = vadd.f32 0.0, %v1720
        %1722 = vmatprep.mubr.f32.mxu0 0.0
        %1723 = vmatmul.mubr.f32.gmra.mrb[0].mxu0 %v1446
        %v1724 = vpop.f32.mrb[0].mxu0
        %v1725 = vadd.f32 0.0, %v1724
        %v1726 = vpop.f32.mrb[0].mxu0
        %v1727 = vadd.f32 0.0, %v1726
        %1728 = vmatprep.mubr.f32.mxu0 0.0
        %1729 = vmatmul.mubr.f32.gmra.mrb[0].mxu0 %v1449
        %v1730 = vpop.f32.mrb[0].mxu0
        %v1731 = vadd.f32 0.0, %v1730
        %v1732 = vpop.f32.mrb[0].mxu0
        %v1733 = vadd.f32 0.0, %v1732
        %1734 = vdwg.mxu0
        %1735 = vmatprep.subr.mxu0 %v1466
        %1736 = vmatpush1.msra.mxu0 %v1464
        %1737 = vmatprep.subr.mxu0 0.0
        %1738 = vmatpush1.msra.mxu0 0.0
        %1739 = vmatprep.subr.mxu0 0.0
        %1740 = vmatpush1.msra.mxu0 0.0
        %1741 = vmatprep.subr.mxu0 0.0
        %1742 = vmatpush1.msra.mxu0 0.0
        %1743 = vmatprep.subr.mxu0 0.0
        %1744 = vmatpush1.msra.mxu0 0.0
        %1745 = vmatprep.subr.mxu0 0.0
        %1746 = vmatpush1.msra.mxu0 0.0
        %1747 = vmatprep.subr.mxu0 0.0
        %1748 = vmatpush1.msra.mxu0 0.0
        %1749 = vmatprep.subr.mxu0 0.0
        %1750 = vmatpush1.msra.mxu0 0.0
        %1751 = vmatprep.subr.mxu0 0.0
        %1752 = vmatpush1.msra.mxu0 0.0
        %1753 = vmatprep.subr.mxu0 0.0
        %1754 = vmatpush1.msra.mxu0 0.0
        %1755 = vmatprep.subr.mxu0 0.0
        %1756 = vmatpush1.msra.mxu0 0.0
        %1757 = vmatprep.subr.mxu0 0.0
        %1758 = vmatpush1.msra.mxu0 0.0
        %1759 = vmatprep.subr.mxu0 0.0
        %1760 = vmatpush1.msra.mxu0 0.0
        %1761 = vmatprep.subr.mxu0 0.0
        %1762 = vmatpush1.msra.mxu0 0.0
        %1763 = vmatprep.subr.mxu0 0.0
        %1764 = vmatpush1.msra.mxu0 0.0
        %1765 = vmatprep.subr.mxu0 0.0
        %1766 = vmatpush1.msra.mxu0 0.0
        %1767 = vmatprep.subr.mxu0 0.0
        %1768 = vmatpush1.msra.mxu0 0.0
        %1769 = vmatprep.subr.mxu0 0.0
        %1770 = vmatpush1.msra.mxu0 0.0
        %1771 = vmatprep.subr.mxu0 0.0
        %1772 = vmatpush1.msra.mxu0 0.0
        %1773 = vmatprep.subr.mxu0 0.0
        %1774 = vmatpush1.msra.mxu0 0.0
        %1775 = vmatprep.subr.mxu0 0.0
        %1776 = vmatpush1.msra.mxu0 0.0
        %1777 = vmatprep.subr.mxu0 0.0
        %1778 = vmatpush1.msra.mxu0 0.0
        %1779 = vmatprep.subr.mxu0 0.0
        %1780 = vmatpush1.msra.mxu0 0.0
        %1781 = vmatprep.subr.mxu0 0.0
        %1782 = vmatpush1.msra.mxu0 0.0
        %1783 = vmatprep.subr.mxu0 0.0
        %1784 = vmatpush1.msra.mxu0 0.0
        %1785 = vmatprep.subr.mxu0 0.0
        %1786 = vmatpush1.msra.mxu0 0.0
        %1787 = vmatprep.subr.mxu0 0.0
        %1788 = vmatpush1.msra.mxu0 0.0
        %1789 = vmatprep.subr.mxu0 0.0
        %1790 = vmatpush1.msra.mxu0 0.0
        %1791 = vmatprep.subr.mxu0 0.0
        %1792 = vmatpush1.msra.mxu0 0.0
        %1793 = vmatprep.subr.mxu0 0.0
        %1794 = vmatpush1.msra.mxu0 0.0
        %1795 = vmatprep.subr.mxu0 0.0
        %1796 = vmatpush1.msra.mxu0 0.0
        %1797 = vmatprep.subr.mxu0 0.0
        %1798 = vmatpush1.msra.mxu0 0.0
        %1799 = vmatprep.mubr.f32.mxu0 0.0
        %1800 = vmatmul.mubr.f32.gmra.mrb[0].mxu0 %v1440
        %v1801 = vpop.f32.mrb[0].mxu0
        %v1802 = vadd.f32 0.0, %v1801
        %v1803 = vpop.f32.mrb[0].mxu0
        %v1804 = vadd.f32 0.0, %v1803
        %1805 = vmatprep.mubr.f32.mxu0 0.0
        %1806 = vmatmul.mubr.f32.gmra.mrb[0].mxu0 %v1443
        %v1807 = vpop.f32.mrb[0].mxu0
        %v1808 = vadd.f32 0.0, %v1807
        %v1809 = vpop.f32.mrb[0].mxu0
        %v1810 = vadd.f32 0.0, %v1809
        %1811 = vmatprep.mubr.f32.mxu0 0.0
        %1812 = vmatmul.mubr.f32.gmra.mrb[0].mxu0 %v1446
        %v1813 = vpop.f32.mrb[0].mxu0
        %v1814 = vadd.f32 0.0, %v1813
        %v1815 = vpop.f32.mrb[0].mxu0
        %v1816 = vadd.f32 0.0, %v1815
        %1817 = vmatprep.mubr.f32.mxu0 0.0
        %1818 = vmatmul.mubr.f32.gmra.mrb[0].mxu0 %v1449
        %v1819 = vpop.f32.mrb[0].mxu0
        %v1820 = vadd.f32 0.0, %v1819
        %v1821 = vpop.f32.mrb[0].mxu0
        %v1822 = vadd.f32 0.0, %v1821
        %1823 = vdwg.mxu0
        %1825 = vset.pattern.permute.xlu0 0
        %1826 = vperm.xlu0 %1825, %v1422
        %v1827 = vpop.permute.xlu0 %1826
        %1830 = vset.pattern.permute.xlu0 0
        %1831 = vperm.xlu0 %1830, %v1423
        %v1832 = vpop.permute.xlu0 %1831
        %1835 = vset.pattern.permute.xlu0 0
        %1836 = vperm.xlu0 %1835, %v1424
        %v1837 = vpop.permute.xlu0 %1836
        %1840 = vset.pattern.permute.xlu0 0
        %1841 = vperm.xlu0 %1840, %v1425
        %v1842 = vpop.permute.xlu0 %1841
        %v1844 = vadd.f32 %v1827, %v1535
        %v1845 = vadd.f32 %v1827, %v1537
        %v1846 = vadd.f32 %v1827, %v1624
        %v1847 = vadd.f32 %v1827, %v1626
        %v1848 = vadd.f32 %v1827, %v1713
        %v1849 = vadd.f32 %v1827, %v1715
        %v1850 = vadd.f32 %v1827, %v1802
        %v1851 = vadd.f32 %v1827, %v1804
        %v1852 = vadd.f32 %v1832, %v1541
        %v1853 = vadd.f32 %v1832, %v1543
        %v1854 = vadd.f32 %v1832, %v1630
        %v1855 = vadd.f32 %v1832, %v1632
        %v1856 = vadd.f32 %v1832, %v1719
        %v1857 = vadd.f32 %v1832, %v1721
        %v1858 = vadd.f32 %v1832, %v1808
        %v1859 = vadd.f32 %v1832, %v1810
        %v1860 = vadd.f32 %v1837, %v1547
        %v1861 = vadd.f32 %v1837, %v1549
        %v1862 = vadd.f32 %v1837, %v1636
        %v1863 = vadd.f32 %v1837, %v1638
        %v1864 = vadd.f32 %v1837, %v1725
        %v1865 = vadd.f32 %v1837, %v1727
        %v1866 = vadd.f32 %v1837, %v1814
        %v1867 = vadd.f32 %v1837, %v1816
        %v1868 = vadd.f32 %v1842, %v1553
        %v1869 = vadd.f32 %v1842, %v1555
        %v1870 = vadd.f32 %v1842, %v1642
        %v1871 = vadd.f32 %v1842, %v1644
        %v1872 = vadd.f32 %v1842, %v1731
        %v1873 = vadd.f32 %v1842, %v1733
        %v1874 = vadd.f32 %v1842, %v1820
        %v1875 = vadd.f32 %v1842, %v1822
        %v1876 = vld [vmem:[#allocation8] sm:$0xff]
        %v1877 = vld [vmem:[#allocation8 + $0x8] sm:$0xff]
        %v1878 = vld [vmem:[#allocation8 + $0x10] sm:$0xff]
        %v1879 = vld [vmem:[#allocation8 + $0x18] sm:$0xff]
        %1881 = vset.pattern.permute.xlu0 0
        %1882 = vperm.xlu0 %1881, %v1876
        %v1883 = vpop.permute.xlu0 %1882
        %1886 = vset.pattern.permute.xlu0 0
        %1887 = vperm.xlu0 %1886, %v1877
        %v1888 = vpop.permute.xlu0 %1887
        %1891 = vset.pattern.permute.xlu0 0
        %1892 = vperm.xlu0 %1891, %v1878
        %v1893 = vpop.permute.xlu0 %1892
        %1896 = vset.pattern.permute.xlu0 0
        %1897 = vperm.xlu0 %1896, %v1879
        %v1898 = vpop.permute.xlu0 %1897
        %v1900 = vmul.f32 %v1844, %v1883
        %v1901 = vmul.f32 %v1845, %v1883
        %v1902 = vmul.f32 %v1846, %v1883
        %v1903 = vmul.f32 %v1847, %v1883
        %v1904 = vmul.f32 %v1848, %v1883
        %v1905 = vmul.f32 %v1849, %v1883
        %v1906 = vmul.f32 %v1850, %v1883
        %v1907 = vmul.f32 %v1851, %v1883
        %v1908 = vmul.f32 %v1852, %v1888
        %v1909 = vmul.f32 %v1853, %v1888
        %v1910 = vmul.f32 %v1854, %v1888
        %v1911 = vmul.f32 %v1855, %v1888
        %v1912 = vmul.f32 %v1856, %v1888
        %v1913 = vmul.f32 %v1857, %v1888
        %v1914 = vmul.f32 %v1858, %v1888
        %v1915 = vmul.f32 %v1859, %v1888
        %v1916 = vmul.f32 %v1860, %v1893
        %v1917 = vmul.f32 %v1861, %v1893
        %v1918 = vmul.f32 %v1862, %v1893
        %v1919 = vmul.f32 %v1863, %v1893
        %v1920 = vmul.f32 %v1864, %v1893
        %v1921 = vmul.f32 %v1865, %v1893
        %v1922 = vmul.f32 %v1866, %v1893
        %v1923 = vmul.f32 %v1867, %v1893
        %v1924 = vmul.f32 %v1868, %v1898
        %v1925 = vmul.f32 %v1869, %v1898
        %v1926 = vmul.f32 %v1870, %v1898
        %v1927 = vmul.f32 %v1871, %v1898
        %v1928 = vmul.f32 %v1872, %v1898
        %v1929 = vmul.f32 %v1873, %v1898
        %v1930 = vmul.f32 %v1874, %v1898
        %v1931 = vmul.f32 %v1875, %v1898
        %v1932 = vld [vmem:[#allocation9] sm:$0xff]
        %v1933 = vld [vmem:[#allocation9 + $0x8] sm:$0xff]
        %v1934 = vld [vmem:[#allocation9 + $0x10] sm:$0xff]
        %v1935 = vld [vmem:[#allocation9 + $0x18] sm:$0xff]
        %1937 = vset.pattern.permute.xlu0 0
        %1938 = vperm.xlu0 %1937, %v1932
        %v1939 = vpop.permute.xlu0 %1938
        %1942 = vset.pattern.permute.xlu0 0
        %1943 = vperm.xlu0 %1942, %v1933
        %v1944 = vpop.permute.xlu0 %1943
        %1947 = vset.pattern.permute.xlu0 0
        %1948 = vperm.xlu0 %1947, %v1934
        %v1949 = vpop.permute.xlu0 %1948
        %1952 = vset.pattern.permute.xlu0 0
        %1953 = vperm.xlu0 %1952, %v1935
        %v1954 = vpop.permute.xlu0 %1953
        %v1956 = vadd.f32 %v1900, %v1939
        %v1957 = vadd.f32 %v1901, %v1939
        %v1958 = vadd.f32 %v1902, %v1939
        %v1959 = vadd.f32 %v1903, %v1939
        %v1960 = vadd.f32 %v1904, %v1939
        %v1961 = vadd.f32 %v1905, %v1939
        %v1962 = vadd.f32 %v1906, %v1939
        %v1963 = vadd.f32 %v1907, %v1939
        %v1964 = vadd.f32 %v1908, %v1944
        %v1965 = vadd.f32 %v1909, %v1944
        %v1966 = vadd.f32 %v1910, %v1944
        %v1967 = vadd.f32 %v1911, %v1944
        %v1968 = vadd.f32 %v1912, %v1944
        %v1969 = vadd.f32 %v1913, %v1944
        %v1970 = vadd.f32 %v1914, %v1944
        %v1971 = vadd.f32 %v1915, %v1944
        %v1972 = vadd.f32 %v1916, %v1949
        %v1973 = vadd.f32 %v1917, %v1949
        %v1974 = vadd.f32 %v1918, %v1949
        %v1975 = vadd.f32 %v1919, %v1949
        %v1976 = vadd.f32 %v1920, %v1949
        %v1977 = vadd.f32 %v1921, %v1949
        %v1978 = vadd.f32 %v1922, %v1949
        %v1979 = vadd.f32 %v1923, %v1949
        %v1980 = vadd.f32 %v1924, %v1954
        %v1981 = vadd.f32 %v1925, %v1954
        %v1982 = vadd.f32 %v1926, %v1954
        %v1983 = vadd.f32 %v1927, %v1954
        %v1984 = vadd.f32 %v1928, %v1954
        %v1985 = vadd.f32 %v1929, %v1954
        %v1986 = vadd.f32 %v1930, %v1954
        %v1987 = vadd.f32 %v1931, %v1954
        %v1988 = vmax.f32 %v1956, 0.0
        %v1989 = vmax.f32 %v1957, 0.0
        %v1990 = vmax.f32 %v1958, 0.0
        %v1991 = vmax.f32 %v1959, 0.0
        %v1992 = vmax.f32 %v1960, 0.0
        %v1993 = vmax.f32 %v1961, 0.0
        %v1994 = vmax.f32 %v1962, 0.0
        %v1995 = vmax.f32 %v1963, 0.0
        %v1996 = vmax.f32 %v1964, 0.0
        %v1997 = vmax.f32 %v1965, 0.0
        %v1998 = vmax.f32 %v1966, 0.0
        %v1999 = vmax.f32 %v1967, 0.0
        %v2000 = vmax.f32 %v1968, 0.0
        %v2001 = vmax.f32 %v1969, 0.0
        %v2002 = vmax.f32 %v1970, 0.0
        %v2003 = vmax.f32 %v1971, 0.0
        %v2004 = vmax.f32 %v1972, 0.0
        %v2005 = vmax.f32 %v1973, 0.0
        %v2006 = vmax.f32 %v1974, 0.0
        %v2007 = vmax.f32 %v1975, 0.0
        %v2008 = vmax.f32 %v1976, 0.0
        %v2009 = vmax.f32 %v1977, 0.0
        %v2010 = vmax.f32 %v1978, 0.0
        %v2011 = vmax.f32 %v1979, 0.0
        %v2012 = vmax.f32 %v1980, 0.0
        %v2013 = vmax.f32 %v1981, 0.0
        %v2014 = vmax.f32 %v1982, 0.0
        %v2015 = vmax.f32 %v1983, 0.0
        %v2016 = vmax.f32 %v1984, 0.0
        %v2017 = vmax.f32 %v1985, 0.0
        %v2018 = vmax.f32 %v1986, 0.0
        %v2019 = vmax.f32 %v1987, 0.0
        %v2020 = vld [vmem:[%s5] sm:$0xff]
        %v2021 = vld [vmem:[%s5 + $0x8] sm:$0xff]
        %v2022 = vld [vmem:[%s6] sm:$0xff]
        %v2023 = vld [vmem:[%s6 + $0x8] sm:$0xff]
        %v2025 = vsel %vm1438, %v2022, 0
        %v2028 = vsel %vm1438, %v2023, 0
        %2030 = vmatprep.subr.mxu0 %v1454
        %2031 = vmatpush1.msra.mxu0 %v1452
        %2032 = vmatprep.subr.mxu0 0.0
        %2033 = vmatpush1.msra.mxu0 0.0
        %2034 = vmatprep.subr.mxu0 0.0
        %2035 = vmatpush1.msra.mxu0 0.0
        %2036 = vmatprep.subr.mxu0 0.0
        %2037 = vmatpush1.msra.mxu0 0.0
        %2038 = vmatprep.subr.mxu0 0.0
        %2039 = vmatpush1.msra.mxu0 0.0
        %2040 = vmatprep.subr.mxu0 0.0
        %2041 = vmatpush1.msra.mxu0 0.0
        %2042 = vmatprep.subr.mxu0 0.0
        %2043 = vmatpush1.msra.mxu0 0.0
        %2044 = vmatprep.subr.mxu0 0.0
        %2045 = vmatpush1.msra.mxu0 0.0
        %2046 = vmatprep.subr.mxu0 0.0
        %2047 = vmatpush1.msra.mxu0 0.0
        %2048 = vmatprep.subr.mxu0 0.0
        %2049 = vmatpush1.msra.mxu0 0.0
        %2050 = vmatprep.subr.mxu0 0.0
        %2051 = vmatpush1.msra.mxu0 0.0
        %2052 = vmatprep.subr.mxu0 0.0
        %2053 = vmatpush1.msra.mxu0 0.0
        %2054 = vmatprep.subr.mxu0 0.0
        %2055 = vmatpush1.msra.mxu0 0.0
        %2056 = vmatprep.subr.mxu0 0.0
        %2057 = vmatpush1.msra.mxu0 0.0
        %2058 = vmatprep.subr.mxu0 0.0
        %2059 = vmatpush1.msra.mxu0 0.0
        %2060 = vmatprep.subr.mxu0 0.0
        %2061 = vmatpush1.msra.mxu0 0.0
        %2062 = vmatprep.subr.mxu0 0.0
        %2063 = vmatpush1.msra.mxu0 0.0
        %2064 = vmatprep.subr.mxu0 0.0
        %2065 = vmatpush1.msra.mxu0 0.0
        %2066 = vmatprep.subr.mxu0 0.0
        %2067 = vmatpush1.msra.mxu0 0.0
        %2068 = vmatprep.subr.mxu0 0.0
        %2069 = vmatpush1.msra.mxu0 0.0
        %2070 = vmatprep.subr.mxu0 0.0
        %2071 = vmatpush1.msra.mxu0 0.0
        %2072 = vmatprep.subr.mxu0 0.0
        %2073 = vmatpush1.msra.mxu0 0.0
        %2074 = vmatprep.subr.mxu0 0.0
        %2075 = vmatpush1.msra.mxu0 0.0
        %2076 = vmatprep.subr.mxu0 0.0
        %2077 = vmatpush1.msra.mxu0 0.0
        %2078 = vmatprep.subr.mxu0 0.0
        %2079 = vmatpush1.msra.mxu0 0.0
        %2080 = vmatprep.subr.mxu0 0.0
        %2081 = vmatpush1.msra.mxu0 0.0
        %2082 = vmatprep.subr.mxu0 0.0
        %2083 = vmatpush1.msra.mxu0 0.0
        %2084 = vmatprep.subr.mxu0 0.0
        %2085 = vmatpush1.msra.mxu0 0.0
        %2086 = vmatprep.subr.mxu0 0.0
        %2087 = vmatpush1.msra.mxu0 0.0
        %2088 = vmatprep.subr.mxu0 0.0
        %2089 = vmatpush1.msra.mxu0 0.0
        %2090 = vmatprep.subr.mxu0 0.0
        %2091 = vmatpush1.msra.mxu0 0.0
        %2092 = vmatprep.subr.mxu0 0.0
        %2093 = vmatpush1.msra.mxu0 0.0
        %2094 = vmatprep.mubr.f32.mxu0 0.0
        %2095 = vmatmul.mubr.f32.gmra.mrb[0].mxu0 %v2025
        %v2096 = vpop.f32.mrb[0].mxu0
        %v2097 = vadd.f32 0.0, %v2096
        %v2098 = vpop.f32.mrb[0].mxu0
        %v2099 = vadd.f32 0.0, %v2098
        %2100 = vmatprep.mubr.f32.mxu0 0.0
        %2101 = vmatmul.mubr.f32.gmra.mrb[0].mxu0 %v2028
        %v2102 = vpop.f32.mrb[0].mxu0
        %v2103 = vadd.f32 0.0, %v2102
        %v2104 = vpop.f32.mrb[0].mxu0
        %v2105 = vadd.f32 0.0, %v2104
        %2106 = vdwg.mxu0
        %2107 = vmatprep.subr.mxu0 %v1458
        %2108 = vmatpush1.msra.mxu0 %v1456
        %2109 = vmatprep.subr.mxu0 0.0
        %2110 = vmatpush1.msra.mxu0 0.0
        %2111 = vmatprep.subr.mxu0 0.0
        %2112 = vmatpush1.msra.mxu0 0.0
        %2113 = vmatprep.subr.mxu0 0.0
        %2114 = vmatpush1.msra.mxu0 0.0
        %2115 = vmatprep.subr.mxu0 0.0
        %2116 = vmatpush1.msra.mxu0 0.0
        %2117 = vmatprep.subr.mxu0 0.0
        %2118 = vmatpush1.msra.mxu0 0.0
        %2119 = vmatprep.subr.mxu0 0.0
        %2120 = vmatpush1.msra.mxu0 0.0
        %2121 = vmatprep.subr.mxu0 0.0
        %2122 = vmatpush1.msra.mxu0 0.0
        %2123 = vmatprep.subr.mxu0 0.0
        %2124 = vmatpush1.msra.mxu0 0.0
        %2125 = vmatprep.subr.mxu0 0.0
        %2126 = vmatpush1.msra.mxu0 0.0
        %2127 = vmatprep.subr.mxu0 0.0
        %2128 = vmatpush1.msra.mxu0 0.0
        %2129 = vmatprep.subr.mxu0 0.0
        %2130 = vmatpush1.msra.mxu0 0.0
        %2131 = vmatprep.subr.mxu0 0.0
        %2132 = vmatpush1.msra.mxu0 0.0
        %2133 = vmatprep.subr.mxu0 0.0
        %2134 = vmatpush1.msra.mxu0 0.0
        %2135 = vmatprep.subr.mxu0 0.0
        %2136 = vmatpush1.msra.mxu0 0.0
        %2137 = vmatprep.subr.mxu0 0.0
        %2138 = vmatpush1.msra.mxu0 0.0
        %2139 = vmatprep.subr.mxu0 0.0
        %2140 = vmatpush1.msra.mxu0 0.0
        %2141 = vmatprep.subr.mxu0 0.0
        %2142 = vmatpush1.msra.mxu0 0.0
        %2143 = vmatprep.subr.mxu0 0.0
        %2144 = vmatpush1.msra.mxu0 0.0
        %2145 = vmatprep.subr.mxu0 0.0
        %2146 = vmatpush1.msra.mxu0 0.0
        %2147 = vmatprep.subr.mxu0 0.0
        %2148 = vmatpush1.msra.mxu0 0.0
        %2149 = vmatprep.subr.mxu0 0.0
        %2150 = vmatpush1.msra.mxu0 0.0
        %2151 = vmatprep.subr.mxu0 0.0
        %2152 = vmatpush1.msra.mxu0 0.0
        %2153 = vmatprep.subr.mxu0 0.0
        %2154 = vmatpush1.msra.mxu0 0.0
        %2155 = vmatprep.subr.mxu0 0.0
        %2156 = vmatpush1.msra.mxu0 0.0
        %2157 = vmatprep.subr.mxu0 0.0
        %2158 = vmatpush1.msra.mxu0 0.0
        %2159 = vmatprep.subr.mxu0 0.0
        %2160 = vmatpush1.msra.mxu0 0.0
        %2161 = vmatprep.subr.mxu0 0.0
        %2162 = vmatpush1.msra.mxu0 0.0
        %2163 = vmatprep.subr.mxu0 0.0
        %2164 = vmatpush1.msra.mxu0 0.0
        %2165 = vmatprep.subr.mxu0 0.0
        %2166 = vmatpush1.msra.mxu0 0.0
        %2167 = vmatprep.subr.mxu0 0.0
        %2168 = vmatpush1.msra.mxu0 0.0
        %2169 = vmatprep.subr.mxu0 0.0
        %2170 = vmatpush1.msra.mxu0 0.0
        %2171 = vmatprep.mubr.f32.mxu0 0.0
        %2172 = vmatmul.mubr.f32.gmra.mrb[0].mxu0 %v2025
        %v2173 = vpop.f32.mrb[0].mxu0
        %v2174 = vadd.f32 0.0, %v2173
        %v2175 = vpop.f32.mrb[0].mxu0
        %v2176 = vadd.f32 0.0, %v2175
        %2177 = vmatprep.mubr.f32.mxu0 0.0
        %2178 = vmatmul.mubr.f32.gmra.mrb[0].mxu0 %v2028
        %v2179 = vpop.f32.mrb[0].mxu0
        %v2180 = vadd.f32 0.0, %v2179
        %v2181 = vpop.f32.mrb[0].mxu0
        %v2182 = vadd.f32 0.0, %v2181
        %2183 = vdwg.mxu0
        %2184 = vmatprep.subr.mxu0 %v1462
        %2185 = vmatpush1.msra.mxu0 %v1460
        %2186 = vmatprep.subr.mxu0 0.0
        %2187 = vmatpush1.msra.mxu0 0.0
        %2188 = vmatprep.subr.mxu0 0.0
        %2189 = vmatpush1.msra.mxu0 0.0
        %2190 = vmatprep.subr.mxu0 0.0
        %2191 = vmatpush1.msra.mxu0 0.0
        %2192 = vmatprep.subr.mxu0 0.0
        %2193 = vmatpush1.msra.mxu0 0.0
        %2194 = vmatprep.subr.mxu0 0.0
        %2195 = vmatpush1.msra.mxu0 0.0
        %2196 = vmatprep.subr.mxu0 0.0
        %2197 = vmatpush1.msra.mxu0 0.0
        %2198 = vmatprep.subr.mxu0 0.0
        %2199 = vmatpush1.msra.mxu0 0.0
        %2200 = vmatprep.subr.mxu0 0.0
        %2201 = vmatpush1.msra.mxu0 0.0
        %2202 = vmatprep.subr.mxu0 0.0
        %2203 = vmatpush1.msra.mxu0 0.0
        %2204 = vmatprep.subr.mxu0 0.0
        %2205 = vmatpush1.msra.mxu0 0.0
        %2206 = vmatprep.subr.mxu0 0.0
        %2207 = vmatpush1.msra.mxu0 0.0
        %2208 = vmatprep.subr.mxu0 0.0
        %2209 = vmatpush1.msra.mxu0 0.0
        %2210 = vmatprep.subr.mxu0 0.0
        %2211 = vmatpush1.msra.mxu0 0.0
        %2212 = vmatprep.subr.mxu0 0.0
        %2213 = vmatpush1.msra.mxu0 0.0
        %2214 = vmatprep.subr.mxu0 0.0
        %2215 = vmatpush1.msra.mxu0 0.0
        %2216 = vmatprep.subr.mxu0 0.0
        %2217 = vmatpush1.msra.mxu0 0.0
        %2218 = vmatprep.subr.mxu0 0.0
        %2219 = vmatpush1.msra.mxu0 0.0
        %2220 = vmatprep.subr.mxu0 0.0
        %2221 = vmatpush1.msra.mxu0 0.0
        %2222 = vmatprep.subr.mxu0 0.0
        %2223 = vmatpush1.msra.mxu0 0.0
        %2224 = vmatprep.subr.mxu0 0.0
        %2225 = vmatpush1.msra.mxu0 0.0
        %2226 = vmatprep.subr.mxu0 0.0
        %2227 = vmatpush1.msra.mxu0 0.0
        %2228 = vmatprep.subr.mxu0 0.0
        %2229 = vmatpush1.msra.mxu0 0.0
        %2230 = vmatprep.subr.mxu0 0.0
        %2231 = vmatpush1.msra.mxu0 0.0
        %2232 = vmatprep.subr.mxu0 0.0
        %2233 = vmatpush1.msra.mxu0 0.0
        %2234 = vmatprep.subr.mxu0 0.0
        %2235 = vmatpush1.msra.mxu0 0.0
        %2236 = vmatprep.subr.mxu0 0.0
        %2237 = vmatpush1.msra.mxu0 0.0
        %2238 = vmatprep.subr.mxu0 0.0
        %2239 = vmatpush1.msra.mxu0 0.0
        %2240 = vmatprep.subr.mxu0 0.0
        %2241 = vmatpush1.msra.mxu0 0.0
        %2242 = vmatprep.subr.mxu0 0.0
        %2243 = vmatpush1.msra.mxu0 0.0
        %2244 = vmatprep.subr.mxu0 0.0
        %2245 = vmatpush1.msra.mxu0 0.0
        %2246 = vmatprep.subr.mxu0 0.0
        %2247 = vmatpush1.msra.mxu0 0.0
        %2248 = vmatprep.mubr.f32.mxu0 0.0
        %2249 = vmatmul.mubr.f32.gmra.mrb[0].mxu0 %v2025
        %v2250 = vpop.f32.mrb[0].mxu0
        %v2251 = vadd.f32 0.0, %v2250
        %v2252 = vpop.f32.mrb[0].mxu0
        %v2253 = vadd.f32 0.0, %v2252
        %2254 = vmatprep.mubr.f32.mxu0 0.0
        %2255 = vmatmul.mubr.f32.gmra.mrb[0].mxu0 %v2028
        %v2256 = vpop.f32.mrb[0].mxu0
        %v2257 = vadd.f32 0.0, %v2256
        %v2258 = vpop.f32.mrb[0].mxu0
        %v2259 = vadd.f32 0.0, %v2258
        %2260 = vdwg.mxu0
        %2261 = vmatprep.subr.mxu0 %v1466
        %2262 = vmatpush1.msra.mxu0 %v1464
        %2263 = vmatprep.subr.mxu0 0.0
        %2264 = vmatpush1.msra.mxu0 0.0
        %2265 = vmatprep.subr.mxu0 0.0
        %2266 = vmatpush1.msra.mxu0 0.0
        %2267 = vmatprep.subr.mxu0 0.0
        %2268 = vmatpush1.msra.mxu0 0.0
        %2269 = vmatprep.subr.mxu0 0.0
        %2270 = vmatpush1.msra.mxu0 0.0
        %2271 = vmatprep.subr.mxu0 0.0
        %2272 = vmatpush1.msra.mxu0 0.0
        %2273 = vmatprep.subr.mxu0 0.0
        %2274 = vmatpush1.msra.mxu0 0.0
        %2275 = vmatprep.subr.mxu0 0.0
        %2276 = vmatpush1.msra.mxu0 0.0
        %2277 = vmatprep.subr.mxu0 0.0
        %2278 = vmatpush1.msra.mxu0 0.0
        %2279 = vmatprep.subr.mxu0 0.0
        %2280 = vmatpush1.msra.mxu0 0.0
        %2281 = vmatprep.subr.mxu0 0.0
        %2282 = vmatpush1.msra.mxu0 0.0
        %2283 = vmatprep.subr.mxu0 0.0
        %2284 = vmatpush1.msra.mxu0 0.0
        %2285 = vmatprep.subr.mxu0 0.0
        %2286 = vmatpush1.msra.mxu0 0.0
        %2287 = vmatprep.subr.mxu0 0.0
        %2288 = vmatpush1.msra.mxu0 0.0
        %2289 = vmatprep.subr.mxu0 0.0
        %2290 = vmatpush1.msra.mxu0 0.0
        %2291 = vmatprep.subr.mxu0 0.0
        %2292 = vmatpush1.msra.mxu0 0.0
        %2293 = vmatprep.subr.mxu0 0.0
        %2294 = vmatpush1.msra.mxu0 0.0
        %2295 = vmatprep.subr.mxu0 0.0
        %2296 = vmatpush1.msra.mxu0 0.0
        %2297 = vmatprep.subr.mxu0 0.0
        %2298 = vmatpush1.msra.mxu0 0.0
        %2299 = vmatprep.subr.mxu0 0.0
        %2300 = vmatpush1.msra.mxu0 0.0
        %2301 = vmatprep.subr.mxu0 0.0
        %2302 = vmatpush1.msra.mxu0 0.0
        %2303 = vmatprep.subr.mxu0 0.0
        %2304 = vmatpush1.msra.mxu0 0.0
        %2305 = vmatprep.subr.mxu0 0.0
        %2306 = vmatpush1.msra.mxu0 0.0
        %2307 = vmatprep.subr.mxu0 0.0
        %2308 = vmatpush1.msra.mxu0 0.0
        %2309 = vmatprep.subr.mxu0 0.0
        %2310 = vmatpush1.msra.mxu0 0.0
        %2311 = vmatprep.subr.mxu0 0.0
        %2312 = vmatpush1.msra.mxu0 0.0
        %2313 = vmatprep.subr.mxu0 0.0
        %2314 = vmatpush1.msra.mxu0 0.0
        %2315 = vmatprep.subr.mxu0 0.0
        %2316 = vmatpush1.msra.mxu0 0.0
        %2317 = vmatprep.subr.mxu0 0.0
        %2318 = vmatpush1.msra.mxu0 0.0
        %2319 = vmatprep.subr.mxu0 0.0
        %2320 = vmatpush1.msra.mxu0 0.0
        %2321 = vmatprep.subr.mxu0 0.0
        %2322 = vmatpush1.msra.mxu0 0.0
        %2323 = vmatprep.subr.mxu0 0.0
        %2324 = vmatpush1.msra.mxu0 0.0
        %2325 = vmatprep.mubr.f32.mxu0 0.0
        %2326 = vmatmul.mubr.f32.gmra.mrb[0].mxu0 %v2025
        %v2327 = vpop.f32.mrb[0].mxu0
        %v2328 = vadd.f32 0.0, %v2327
        %v2329 = vpop.f32.mrb[0].mxu0
        %v2330 = vadd.f32 0.0, %v2329
        %2331 = vmatprep.mubr.f32.mxu0 0.0
        %2332 = vmatmul.mubr.f32.gmra.mrb[0].mxu0 %v2028
        %v2333 = vpop.f32.mrb[0].mxu0
        %v2334 = vadd.f32 0.0, %v2333
        %v2335 = vpop.f32.mrb[0].mxu0
        %v2336 = vadd.f32 0.0, %v2335
        %2337 = vdwg.mxu0
        %vm2338 = vcmask 261120
        %v2340 = vsel %vm2338, %v2020, 0
        %v2343 = vsel %vm2338, %v2021, 0
        %2345 = vmatprep.subr.mxu0 %v1989
        %2346 = vmatpush1.msra.mxu0 %v1988
        %2347 = vmatprep.subr.mxu0 %v1997
        %2348 = vmatpush1.msra.mxu0 %v1996
        %2349 = vmatprep.subr.mxu0 %v2005
        %2350 = vmatpush1.msra.mxu0 %v2004
        %2351 = vmatprep.subr.mxu0 %v2013
        %2352 = vmatpush1.msra.mxu0 %v2012
        %2353 = vmatprep.subr.mxu0 0.0
        %2354 = vmatpush1.msra.mxu0 0.0
        %2355 = vmatprep.subr.mxu0 0.0
        %2356 = vmatpush1.msra.mxu0 0.0
        %2357 = vmatprep.subr.mxu0 0.0
        %2358 = vmatpush1.msra.mxu0 0.0
        %2359 = vmatprep.subr.mxu0 0.0
        %2360 = vmatpush1.msra.mxu0 0.0
        %2361 = vmatprep.subr.mxu0 0.0
        %2362 = vmatpush1.msra.mxu0 0.0
        %2363 = vmatprep.subr.mxu0 0.0
        %2364 = vmatpush1.msra.mxu0 0.0
        %2365 = vmatprep.subr.mxu0 0.0
        %2366 = vmatpush1.msra.mxu0 0.0
        %2367 = vmatprep.subr.mxu0 0.0
        %2368 = vmatpush1.msra.mxu0 0.0
        %2369 = vmatprep.subr.mxu0 0.0
        %2370 = vmatpush1.msra.mxu0 0.0
        %2371 = vmatprep.subr.mxu0 0.0
        %2372 = vmatpush1.msra.mxu0 0.0
        %2373 = vmatprep.subr.mxu0 0.0
        %2374 = vmatpush1.msra.mxu0 0.0
        %2375 = vmatprep.subr.mxu0 0.0
        %2376 = vmatpush1.msra.mxu0 0.0
        %2377 = vmatprep.subr.mxu0 0.0
        %2378 = vmatpush1.msra.mxu0 0.0
        %2379 = vmatprep.subr.mxu0 0.0
        %2380 = vmatpush1.msra.mxu0 0.0
        %2381 = vmatprep.subr.mxu0 0.0
        %2382 = vmatpush1.msra.mxu0 0.0
        %2383 = vmatprep.subr.mxu0 0.0
        %2384 = vmatpush1.msra.mxu0 0.0
        %2385 = vmatprep.subr.mxu0 0.0
        %2386 = vmatpush1.msra.mxu0 0.0
        %2387 = vmatprep.subr.mxu0 0.0
        %2388 = vmatpush1.msra.mxu0 0.0
        %2389 = vmatprep.subr.mxu0 0.0
        %2390 = vmatpush1.msra.mxu0 0.0
        %2391 = vmatprep.subr.mxu0 0.0
        %2392 = vmatpush1.msra.mxu0 0.0
        %2393 = vmatprep.subr.mxu0 0.0
        %2394 = vmatpush1.msra.mxu0 0.0
        %2395 = vmatprep.subr.mxu0 0.0
        %2396 = vmatpush1.msra.mxu0 0.0
        %2397 = vmatprep.subr.mxu0 0.0
        %2398 = vmatpush1.msra.mxu0 0.0
        %2399 = vmatprep.subr.mxu0 0.0
        %2400 = vmatpush1.msra.mxu0 0.0
        %2401 = vmatprep.subr.mxu0 0.0
        %2402 = vmatpush1.msra.mxu0 0.0
        %2403 = vmatprep.subr.mxu0 0.0
        %2404 = vmatpush1.msra.mxu0 0.0
        %2405 = vmatprep.subr.mxu0 0.0
        %2406 = vmatpush1.msra.mxu0 0.0
        %2407 = vmatprep.subr.mxu0 0.0
        %2408 = vmatpush1.msra.mxu0 0.0
        %2409 = vmatprep.mubr.f32.mxu0 0.0
        %2410 = vmatmul.mubr.f32.gmra.mrb[0].mxu0 %v2340
        %v2411 = vpop.f32.mrb[0].mxu0
        %v2412 = vadd.f32 %v2097, %v2411
        %v2413 = vpop.f32.mrb[0].mxu0
        %v2414 = vadd.f32 %v2099, %v2413
        %2415 = vmatprep.mubr.f32.mxu0 0.0
        %2416 = vmatmul.mubr.f32.gmra.mrb[0].mxu0 %v2343
        %v2417 = vpop.f32.mrb[0].mxu0
        %v2418 = vadd.f32 %v2103, %v2417
        %v2419 = vpop.f32.mrb[0].mxu0
        %v2420 = vadd.f32 %v2105, %v2419
        %2421 = vdwg.mxu0
        %2422 = vmatprep.subr.mxu0 %v1991
        %2423 = vmatpush1.msra.mxu0 %v1990
        %2424 = vmatprep.subr.mxu0 %v1999
        %2425 = vmatpush1.msra.mxu0 %v1998
        %2426 = vmatprep.subr.mxu0 %v2007
        %2427 = vmatpush1.msra.mxu0 %v2006
        %2428 = vmatprep.subr.mxu0 %v2015
        %2429 = vmatpush1.msra.mxu0 %v2014
        %2430 = vmatprep.subr.mxu0 0.0
        %2431 = vmatpush1.msra.mxu0 0.0
        %2432 = vmatprep.subr.mxu0 0.0
        %2433 = vmatpush1.msra.mxu0 0.0
        %2434 = vmatprep.subr.mxu0 0.0
        %2435 = vmatpush1.msra.mxu0 0.0
        %2436 = vmatprep.subr.mxu0 0.0
        %2437 = vmatpush1.msra.mxu0 0.0
        %2438 = vmatprep.subr.mxu0 0.0
        %2439 = vmatpush1.msra.mxu0 0.0
        %2440 = vmatprep.subr.mxu0 0.0
        %2441 = vmatpush1.msra.mxu0 0.0
        %2442 = vmatprep.subr.mxu0 0.0
        %2443 = vmatpush1.msra.mxu0 0.0
        %2444 = vmatprep.subr.mxu0 0.0
        %2445 = vmatpush1.msra.mxu0 0.0
        %2446 = vmatprep.subr.mxu0 0.0
        %2447 = vmatpush1.msra.mxu0 0.0
        %2448 = vmatprep.subr.mxu0 0.0
        %2449 = vmatpush1.msra.mxu0 0.0
        %2450 = vmatprep.subr.mxu0 0.0
        %2451 = vmatpush1.msra.mxu0 0.0
        %2452 = vmatprep.subr.mxu0 0.0
        %2453 = vmatpush1.msra.mxu0 0.0
        %2454 = vmatprep.subr.mxu0 0.0
        %2455 = vmatpush1.msra.mxu0 0.0
        %2456 = vmatprep.subr.mxu0 0.0
        %2457 = vmatpush1.msra.mxu0 0.0
        %2458 = vmatprep.subr.mxu0 0.0
        %2459 = vmatpush1.msra.mxu0 0.0
        %2460 = vmatprep.subr.mxu0 0.0
        %2461 = vmatpush1.msra.mxu0 0.0
        %2462 = vmatprep.subr.mxu0 0.0
        %2463 = vmatpush1.msra.mxu0 0.0
        %2464 = vmatprep.subr.mxu0 0.0
        %2465 = vmatpush1.msra.mxu0 0.0
        %2466 = vmatprep.subr.mxu0 0.0
        %2467 = vmatpush1.msra.mxu0 0.0
        %2468 = vmatprep.subr.mxu0 0.0
        %2469 = vmatpush1.msra.mxu0 0.0
        %2470 = vmatprep.subr.mxu0 0.0
        %2471 = vmatpush1.msra.mxu0 0.0
        %2472 = vmatprep.subr.mxu0 0.0
        %2473 = vmatpush1.msra.mxu0 0.0
        %2474 = vmatprep.subr.mxu0 0.0
        %2475 = vmatpush1.msra.mxu0 0.0
        %2476 = vmatprep.subr.mxu0 0.0
        %2477 = vmatpush1.msra.mxu0 0.0
        %2478 = vmatprep.subr.mxu0 0.0
        %2479 = vmatpush1.msra.mxu0 0.0
        %2480 = vmatprep.subr.mxu0 0.0
        %2481 = vmatpush1.msra.mxu0 0.0
        %2482 = vmatprep.subr.mxu0 0.0
        %2483 = vmatpush1.msra.mxu0 0.0
        %2484 = vmatprep.subr.mxu0 0.0
        %2485 = vmatpush1.msra.mxu0 0.0
        %2486 = vmatprep.mubr.f32.mxu0 0.0
        %2487 = vmatmul.mubr.f32.gmra.mrb[0].mxu0 %v2340
        %v2488 = vpop.f32.mrb[0].mxu0
        %v2489 = vadd.f32 %v2174, %v2488
        %v2490 = vpop.f32.mrb[0].mxu0
        %v2491 = vadd.f32 %v2176, %v2490
        %2492 = vmatprep.mubr.f32.mxu0 0.0
        %2493 = vmatmul.mubr.f32.gmra.mrb[0].mxu0 %v2343
        %v2494 = vpop.f32.mrb[0].mxu0
        %v2495 = vadd.f32 %v2180, %v2494
        %v2496 = vpop.f32.mrb[0].mxu0
        %v2497 = vadd.f32 %v2182, %v2496
        %2498 = vdwg.mxu0
        %2499 = vmatprep.subr.mxu0 %v1993
        %2500 = vmatpush1.msra.mxu0 %v1992
        %2501 = vmatprep.subr.mxu0 %v2001
        %2502 = vmatpush1.msra.mxu0 %v2000
        %2503 = vmatprep.subr.mxu0 %v2009
        %2504 = vmatpush1.msra.mxu0 %v2008
        %2505 = vmatprep.subr.mxu0 %v2017
        %2506 = vmatpush1.msra.mxu0 %v2016
        %2507 = vmatprep.subr.mxu0 0.0
        %2508 = vmatpush1.msra.mxu0 0.0
        %2509 = vmatprep.subr.mxu0 0.0
        %2510 = vmatpush1.msra.mxu0 0.0
        %2511 = vmatprep.subr.mxu0 0.0
        %2512 = vmatpush1.msra.mxu0 0.0
        %2513 = vmatprep.subr.mxu0 0.0
        %2514 = vmatpush1.msra.mxu0 0.0
        %2515 = vmatprep.subr.mxu0 0.0
        %2516 = vmatpush1.msra.mxu0 0.0
        %2517 = vmatprep.subr.mxu0 0.0
        %2518 = vmatpush1.msra.mxu0 0.0
        %2519 = vmatprep.subr.mxu0 0.0
        %2520 = vmatpush1.msra.mxu0 0.0
        %2521 = vmatprep.subr.mxu0 0.0
        %2522 = vmatpush1.msra.mxu0 0.0
        %2523 = vmatprep.subr.mxu0 0.0
        %2524 = vmatpush1.msra.mxu0 0.0
        %2525 = vmatprep.subr.mxu0 0.0
        %2526 = vmatpush1.msra.mxu0 0.0
        %2527 = vmatprep.subr.mxu0 0.0
        %2528 = vmatpush1.msra.mxu0 0.0
        %2529 = vmatprep.subr.mxu0 0.0
        %2530 = vmatpush1.msra.mxu0 0.0
        %2531 = vmatprep.subr.mxu0 0.0
        %2532 = vmatpush1.msra.mxu0 0.0
        %2533 = vmatprep.subr.mxu0 0.0
        %2534 = vmatpush1.msra.mxu0 0.0
        %2535 = vmatprep.subr.mxu0 0.0
        %2536 = vmatpush1.msra.mxu0 0.0
        %2537 = vmatprep.subr.mxu0 0.0
        %2538 = vmatpush1.msra.mxu0 0.0
        %2539 = vmatprep.subr.mxu0 0.0
        %2540 = vmatpush1.msra.mxu0 0.0
        %2541 = vmatprep.subr.mxu0 0.0
        %2542 = vmatpush1.msra.mxu0 0.0
        %2543 = vmatprep.subr.mxu0 0.0
        %2544 = vmatpush1.msra.mxu0 0.0
        %2545 = vmatprep.subr.mxu0 0.0
        %2546 = vmatpush1.msra.mxu0 0.0
        %2547 = vmatprep.subr.mxu0 0.0
        %2548 = vmatpush1.msra.mxu0 0.0
        %2549 = vmatprep.subr.mxu0 0.0
        %2550 = vmatpush1.msra.mxu0 0.0
        %2551 = vmatprep.subr.mxu0 0.0
        %2552 = vmatpush1.msra.mxu0 0.0
        %2553 = vmatprep.subr.mxu0 0.0
        %2554 = vmatpush1.msra.mxu0 0.0
        %2555 = vmatprep.subr.mxu0 0.0
        %2556 = vmatpush1.msra.mxu0 0.0
        %2557 = vmatprep.subr.mxu0 0.0
        %2558 = vmatpush1.msra.mxu0 0.0
        %2559 = vmatprep.subr.mxu0 0.0
        %2560 = vmatpush1.msra.mxu0 0.0
        %2561 = vmatprep.subr.mxu0 0.0
        %2562 = vmatpush1.msra.mxu0 0.0
        %2563 = vmatprep.mubr.f32.mxu0 0.0
        %2564 = vmatmul.mubr.f32.gmra.mrb[0].mxu0 %v2340
        %v2565 = vpop.f32.mrb[0].mxu0
        %v2566 = vadd.f32 %v2251, %v2565
        %v2567 = vpop.f32.mrb[0].mxu0
        %v2568 = vadd.f32 %v2253, %v2567
        %2569 = vmatprep.mubr.f32.mxu0 0.0
        %2570 = vmatmul.mubr.f32.gmra.mrb[0].mxu0 %v2343
        %v2571 = vpop.f32.mrb[0].mxu0
        %v2572 = vadd.f32 %v2257, %v2571
        %v2573 = vpop.f32.mrb[0].mxu0
        %v2574 = vadd.f32 %v2259, %v2573
        %2575 = vdwg.mxu0
        %2576 = vmatprep.subr.mxu0 %v1995
        %2577 = vmatpush1.msra.mxu0 %v1994
        %2578 = vmatprep.subr.mxu0 %v2003
        %2579 = vmatpush1.msra.mxu0 %v2002
        %2580 = vmatprep.subr.mxu0 %v2011
        %2581 = vmatpush1.msra.mxu0 %v2010
        %2582 = vmatprep.subr.mxu0 %v2019
        %2583 = vmatpush1.msra.mxu0 %v2018
        %2584 = vmatprep.subr.mxu0 0.0
        %2585 = vmatpush1.msra.mxu0 0.0
        %2586 = vmatprep.subr.mxu0 0.0
        %2587 = vmatpush1.msra.mxu0 0.0
        %2588 = vmatprep.subr.mxu0 0.0
        %2589 = vmatpush1.msra.mxu0 0.0
        %2590 = vmatprep.subr.mxu0 0.0
        %2591 = vmatpush1.msra.mxu0 0.0
        %2592 = vmatprep.subr.mxu0 0.0
        %2593 = vmatpush1.msra.mxu0 0.0
        %2594 = vmatprep.subr.mxu0 0.0
        %2595 = vmatpush1.msra.mxu0 0.0
        %2596 = vmatprep.subr.mxu0 0.0
        %2597 = vmatpush1.msra.mxu0 0.0
        %2598 = vmatprep.subr.mxu0 0.0
        %2599 = vmatpush1.msra.mxu0 0.0
        %2600 = vmatprep.subr.mxu0 0.0
        %2601 = vmatpush1.msra.mxu0 0.0
        %2602 = vmatprep.subr.mxu0 0.0
        %2603 = vmatpush1.msra.mxu0 0.0
        %2604 = vmatprep.subr.mxu0 0.0
        %2605 = vmatpush1.msra.mxu0 0.0
        %2606 = vmatprep.subr.mxu0 0.0
        %2607 = vmatpush1.msra.mxu0 0.0
        %2608 = vmatprep.subr.mxu0 0.0
        %2609 = vmatpush1.msra.mxu0 0.0
        %2610 = vmatprep.subr.mxu0 0.0
        %2611 = vmatpush1.msra.mxu0 0.0
        %2612 = vmatprep.subr.mxu0 0.0
        %2613 = vmatpush1.msra.mxu0 0.0
        %2614 = vmatprep.subr.mxu0 0.0
        %2615 = vmatpush1.msra.mxu0 0.0
        %2616 = vmatprep.subr.mxu0 0.0
        %2617 = vmatpush1.msra.mxu0 0.0
        %2618 = vmatprep.subr.mxu0 0.0
        %2619 = vmatpush1.msra.mxu0 0.0
        %2620 = vmatprep.subr.mxu0 0.0
        %2621 = vmatpush1.msra.mxu0 0.0
        %2622 = vmatprep.subr.mxu0 0.0
        %2623 = vmatpush1.msra.mxu0 0.0
        %2624 = vmatprep.subr.mxu0 0.0
        %2625 = vmatpush1.msra.mxu0 0.0
        %2626 = vmatprep.subr.mxu0 0.0
        %2627 = vmatpush1.msra.mxu0 0.0
        %2628 = vmatprep.subr.mxu0 0.0
        %2629 = vmatpush1.msra.mxu0 0.0
        %2630 = vmatprep.subr.mxu0 0.0
        %2631 = vmatpush1.msra.mxu0 0.0
        %2632 = vmatprep.subr.mxu0 0.0
        %2633 = vmatpush1.msra.mxu0 0.0
        %2634 = vmatprep.subr.mxu0 0.0
        %2635 = vmatpush1.msra.mxu0 0.0
        %2636 = vmatprep.subr.mxu0 0.0
        %2637 = vmatpush1.msra.mxu0 0.0
        %2638 = vmatprep.subr.mxu0 0.0
        %2639 = vmatpush1.msra.mxu0 0.0
        %2640 = vmatprep.mubr.f32.mxu0 0.0
        %2641 = vmatmul.mubr.f32.gmra.mrb[0].mxu0 %v2340
        %v2642 = vpop.f32.mrb[0].mxu0
        %v2643 = vadd.f32 %v2328, %v2642
        %v2644 = vpop.f32.mrb[0].mxu0
        %v2645 = vadd.f32 %v2330, %v2644
        %2646 = vmatprep.mubr.f32.mxu0 0.0
        %2647 = vmatmul.mubr.f32.gmra.mrb[0].mxu0 %v2343
        %v2648 = vpop.f32.mrb[0].mxu0
        %v2649 = vadd.f32 %v2334, %v2648
        %v2650 = vpop.f32.mrb[0].mxu0
        %v2651 = vadd.f32 %v2336, %v2650
        %2652 = vdwg.mxu0
        %v2653 = vld [vmem:[%s7] sm:$0xff]
        %v2654 = vld [vmem:[%s7 + $0x8] sm:$0xff]
        %2656 = vset.pattern.permute.xlu0 0
        %2657 = vperm.xlu0 %2656, %v2653
        %v2658 = vpop.permute.xlu0 %2657
        %2661 = vset.pattern.permute.xlu0 0
        %2662 = vperm.xlu0 %2661, %v2654
        %v2663 = vpop.permute.xlu0 %2662
        %v2665 = vadd.f32 %v2412, %v2658
        %v2666 = vadd.f32 %v2414, %v2658
        %v2667 = vadd.f32 %v2489, %v2658
        %v2668 = vadd.f32 %v2491, %v2658
        %v2669 = vadd.f32 %v2566, %v2658
        %v2670 = vadd.f32 %v2568, %v2658
        %v2671 = vadd.f32 %v2643, %v2658
        %v2672 = vadd.f32 %v2645, %v2658
        %v2673 = vadd.f32 %v2418, %v2663
        %v2674 = vadd.f32 %v2420, %v2663
        %v2675 = vadd.f32 %v2495, %v2663
        %v2676 = vadd.f32 %v2497, %v2663
        %v2677 = vadd.f32 %v2572, %v2663
        %v2678 = vadd.f32 %v2574, %v2663
        %v2679 = vadd.f32 %v2649, %v2663
        %v2680 = vadd.f32 %v2651, %v2663
        %v2681 = vadd.f32 %v2665, 0.0
        %v2682 = vadd.f32 %v2673, 0.0
        %v2683 = vmul.f32 %v2665, %v2665
        %v2684 = vmul.f32 %v2673, %v2673
        %v2685 = vadd.f32 %v2683, 0.0
        %v2686 = vadd.f32 %v2684, 0.0
        %v2687 = vadd.f32 %v2681, %v2666
        %v2688 = vadd.f32 %v2682, %v2674
        %v2689 = vmul.f32 %v2666, %v2666
        %v2690 = vmul.f32 %v2674, %v2674
        %v2691 = vadd.f32 %v2685, %v2689
        %v2692 = vadd.f32 %v2686, %v2690
        %v2693 = vadd.f32 %v2687, %v2667
        %v2694 = vadd.f32 %v2688, %v2675
        %v2695 = vmul.f32 %v2667, %v2667
        %v2696 = vmul.f32 %v2675, %v2675
        %v2697 = vadd.f32 %v2691, %v2695
        %v2698 = vadd.f32 %v2692, %v2696
        %v2699 = vadd.f32 %v2693, %v2668
        %v2700 = vadd.f32 %v2694, %v2676
        %v2701 = vmul.f32 %v2668, %v2668
        %v2702 = vmul.f32 %v2676, %v2676
        %v2703 = vadd.f32 %v2697, %v2701
        %v2704 = vadd.f32 %v2698, %v2702
        %v2705 = vadd.f32 %v2699, %v2669
        %v2706 = vadd.f32 %v2700, %v2677
        %v2707 = vmul.f32 %v2669, %v2669
        %v2708 = vmul.f32 %v2677, %v2677
        %v2709 = vadd.f32 %v2703, %v2707
        %v2710 = vadd.f32 %v2704, %v2708
        %v2711 = vadd.f32 %v2705, %v2670
        %v2712 = vadd.f32 %v2706, %v2678
        %v2713 = vmul.f32 %v2670, %v2670
        %v2714 = vmul.f32 %v2678, %v2678
        %v2715 = vadd.f32 %v2709, %v2713
        %v2716 = vadd.f32 %v2710, %v2714
        %v2717 = vadd.f32 %v2711, %v2671
        %v2718 = vadd.f32 %v2712, %v2679
        %v2719 = vmul.f32 %v2671, %v2671
        %v2720 = vmul.f32 %v2679, %v2679
        %v2721 = vadd.f32 %v2715, %v2719
        %v2722 = vadd.f32 %v2716, %v2720
        %v2723 = vadd.f32 %v2717, %v2672
        %v2724 = vadd.f32 %v2718, %v2680
        %v2725 = vmul.f32 %v2672, %v2672
        %v2726 = vmul.f32 %v2680, %v2680
        %v2727 = vadd.f32 %v2721, %v2725
        %v2728 = vadd.f32 %v2722, %v2726
        %v2729 = vld [vmem:[#allocation4] sm:$0xff]
        %v2730 = vld [vmem:[#allocation4 + $0x8] sm:$0xff]
        %v2731 = vadd.f32 %v2729, %v2723
        %v2732 = vadd.f32 %v2730, %v2724
        %2733 = vst [vmem:[#allocation4] sm:$0xff] %v2731
        %2734 = vst [vmem:[#allocation4 + $0x8] sm:$0xff] %v2732
        %v2735 = vld [vmem:[#allocation5] sm:$0xff]
        %v2736 = vld [vmem:[#allocation5 + $0x8] sm:$0xff]
        %v2737 = vadd.f32 %v2735, %v2727
        %v2738 = vadd.f32 %v2736, %v2728
        %2739 = vst [vmem:[#allocation5] sm:$0xff] %v2737
        %2740 = vst [vmem:[#allocation5 + $0x8] sm:$0xff] %v2738
      $region116: #{tpu_custom_call.1} parent=91 // pred_fallthru
        _
      // Predicated region
      $region117: #{tpu_custom_call.1} parent=91 // pred_check
        %p2741 = pneg %p770
      $region118: #{tpu_custom_call.1} parent=91 // pred_check_branch
        %2743 = sbr.rel (%p2741) target = $region120
      $region119: #{tpu_custom_call.1} parent=91 // pred_region
        %v2744 = vld [vmem:[%s630] sm:$0xff]
        %v2745 = vld [vmem:[%s630 + $0x8] sm:$0xff]
        %v2746 = vld [vmem:[%s630 + $0x10] sm:$0xff]
        %v2747 = vld [vmem:[%s630 + $0x18] sm:$0xff]
        %v2748 = vld [vmem:[%s2] sm:$0xff]
        %v2749 = vld [vmem:[%s2 + $0x8] sm:$0xff]
        %v2750 = vld [vmem:[%s2 + $0x10] sm:$0xff]
        %v2751 = vld [vmem:[%s2 + $0x18] sm:$0xff]
        %v2756 = vcombine.high %v661, %v661
        %v2757 = vcombine.high %v662, %v662
        %v2758 = vcombine.high %v663, %v663
        %v2759 = vcombine.high %v664, %v664
        %vm2760 = vcmask 23552
        %v2762 = vsel %vm2760, %v2748, 0
        %v2765 = vsel %vm2760, %v2749, 0
        %v2768 = vsel %vm2760, %v2750, 0
        %v2771 = vsel %vm2760, %v2751, 0
        %vm2773 = vcmask 1042432
        %v2774 = vsel %vm2773, %v661, 0
        %v2776 = vsel %vm2773, %v2756, 0
        %v2778 = vsel %vm2773, %v662, 0
        %v2780 = vsel %vm2773, %v2757, 0
        %v2782 = vsel %vm2773, %v663, 0
        %v2784 = vsel %vm2773, %v2758, 0
        %v2786 = vsel %vm2773, %v664, 0
        %v2788 = vsel %vm2773, %v2759, 0
        %2790 = vmatprep.subr.mxu0 %v2776
        %2791 = vmatpush1.msra.mxu0 %v2774
        %2792 = vmatprep.subr.mxu0 0.0
        %2793 = vmatpush1.msra.mxu0 0.0
        %2794 = vmatprep.subr.mxu0 0.0
        %2795 = vmatpush1.msra.mxu0 0.0
        %2796 = vmatprep.subr.mxu0 0.0
        %2797 = vmatpush1.msra.mxu0 0.0
        %2798 = vmatprep.subr.mxu0 0.0
        %2799 = vmatpush1.msra.mxu0 0.0
        %2800 = vmatprep.subr.mxu0 0.0
        %2801 = vmatpush1.msra.mxu0 0.0
        %2802 = vmatprep.subr.mxu0 0.0
        %2803 = vmatpush1.msra.mxu0 0.0
        %2804 = vmatprep.subr.mxu0 0.0
        %2805 = vmatpush1.msra.mxu0 0.0
        %2806 = vmatprep.subr.mxu0 0.0
        %2807 = vmatpush1.msra.mxu0 0.0
        %2808 = vmatprep.subr.mxu0 0.0
        %2809 = vmatpush1.msra.mxu0 0.0
        %2810 = vmatprep.subr.mxu0 0.0
        %2811 = vmatpush1.msra.mxu0 0.0
        %2812 = vmatprep.subr.mxu0 0.0
        %2813 = vmatpush1.msra.mxu0 0.0
        %2814 = vmatprep.subr.mxu0 0.0
        %2815 = vmatpush1.msra.mxu0 0.0
        %2816 = vmatprep.subr.mxu0 0.0
        %2817 = vmatpush1.msra.mxu0 0.0
        %2818 = vmatprep.subr.mxu0 0.0
        %2819 = vmatpush1.msra.mxu0 0.0
        %2820 = vmatprep.subr.mxu0 0.0
        %2821 = vmatpush1.msra.mxu0 0.0
        %2822 = vmatprep.subr.mxu0 0.0
        %2823 = vmatpush1.msra.mxu0 0.0
        %2824 = vmatprep.subr.mxu0 0.0
        %2825 = vmatpush1.msra.mxu0 0.0
        %2826 = vmatprep.subr.mxu0 0.0
        %2827 = vmatpush1.msra.mxu0 0.0
        %2828 = vmatprep.subr.mxu0 0.0
        %2829 = vmatpush1.msra.mxu0 0.0
        %2830 = vmatprep.subr.mxu0 0.0
        %2831 = vmatpush1.msra.mxu0 0.0
        %2832 = vmatprep.subr.mxu0 0.0
        %2833 = vmatpush1.msra.mxu0 0.0
        %2834 = vmatprep.subr.mxu0 0.0
        %2835 = vmatpush1.msra.mxu0 0.0
        %2836 = vmatprep.subr.mxu0 0.0
        %2837 = vmatpush1.msra.mxu0 0.0
        %2838 = vmatprep.subr.mxu0 0.0
        %2839 = vmatpush1.msra.mxu0 0.0
        %2840 = vmatprep.subr.mxu0 0.0
        %2841 = vmatpush1.msra.mxu0 0.0
        %2842 = vmatprep.subr.mxu0 0.0
        %2843 = vmatpush1.msra.mxu0 0.0
        %2844 = vmatprep.subr.mxu0 0.0
        %2845 = vmatpush1.msra.mxu0 0.0
        %2846 = vmatprep.subr.mxu0 0.0
        %2847 = vmatpush1.msra.mxu0 0.0
        %2848 = vmatprep.subr.mxu0 0.0
        %2849 = vmatpush1.msra.mxu0 0.0
        %2850 = vmatprep.subr.mxu0 0.0
        %2851 = vmatpush1.msra.mxu0 0.0
        %2852 = vmatprep.subr.mxu0 0.0
        %2853 = vmatpush1.msra.mxu0 0.0
        %2854 = vmatprep.mubr.f32.mxu0 0.0
        %2855 = vmatmul.mubr.f32.gmra.mrb[0].mxu0 %v2762
        %v2856 = vpop.f32.mrb[0].mxu0
        %v2857 = vadd.f32 0.0, %v2856
        %v2858 = vpop.f32.mrb[0].mxu0
        %v2859 = vadd.f32 0.0, %v2858
        %2860 = vmatprep.mubr.f32.mxu0 0.0
        %2861 = vmatmul.mubr.f32.gmra.mrb[0].mxu0 %v2765
        %v2862 = vpop.f32.mrb[0].mxu0
        %v2863 = vadd.f32 0.0, %v2862
        %v2864 = vpop.f32.mrb[0].mxu0
        %v2865 = vadd.f32 0.0, %v2864
        %2866 = vmatprep.mubr.f32.mxu0 0.0
        %2867 = vmatmul.mubr.f32.gmra.mrb[0].mxu0 %v2768
        %v2868 = vpop.f32.mrb[0].mxu0
        %v2869 = vadd.f32 0.0, %v2868
        %v2870 = vpop.f32.mrb[0].mxu0
        %v2871 = vadd.f32 0.0, %v2870
        %2872 = vmatprep.mubr.f32.mxu0 0.0
        %2873 = vmatmul.mubr.f32.gmra.mrb[0].mxu0 %v2771
        %v2874 = vpop.f32.mrb[0].mxu0
        %v2875 = vadd.f32 0.0, %v2874
        %v2876 = vpop.f32.mrb[0].mxu0
        %v2877 = vadd.f32 0.0, %v2876
        %2878 = vdwg.mxu0
        %2879 = vmatprep.subr.mxu0 %v2780
        %2880 = vmatpush1.msra.mxu0 %v2778
        %2881 = vmatprep.subr.mxu0 0.0
        %2882 = vmatpush1.msra.mxu0 0.0
        %2883 = vmatprep.subr.mxu0 0.0
        %2884 = vmatpush1.msra.mxu0 0.0
        %2885 = vmatprep.subr.mxu0 0.0
        %2886 = vmatpush1.msra.mxu0 0.0
        %2887 = vmatprep.subr.mxu0 0.0
        %2888 = vmatpush1.msra.mxu0 0.0
        %2889 = vmatprep.subr.mxu0 0.0
        %2890 = vmatpush1.msra.mxu0 0.0
        %2891 = vmatprep.subr.mxu0 0.0
        %2892 = vmatpush1.msra.mxu0 0.0
        %2893 = vmatprep.subr.mxu0 0.0
        %2894 = vmatpush1.msra.mxu0 0.0
        %2895 = vmatprep.subr.mxu0 0.0
        %2896 = vmatpush1.msra.mxu0 0.0
        %2897 = vmatprep.subr.mxu0 0.0
        %2898 = vmatpush1.msra.mxu0 0.0
        %2899 = vmatprep.subr.mxu0 0.0
        %2900 = vmatpush1.msra.mxu0 0.0
        %2901 = vmatprep.subr.mxu0 0.0
        %2902 = vmatpush1.msra.mxu0 0.0
        %2903 = vmatprep.subr.mxu0 0.0
        %2904 = vmatpush1.msra.mxu0 0.0
        %2905 = vmatprep.subr.mxu0 0.0
        %2906 = vmatpush1.msra.mxu0 0.0
        %2907 = vmatprep.subr.mxu0 0.0
        %2908 = vmatpush1.msra.mxu0 0.0
        %2909 = vmatprep.subr.mxu0 0.0
        %2910 = vmatpush1.msra.mxu0 0.0
        %2911 = vmatprep.subr.mxu0 0.0
        %2912 = vmatpush1.msra.mxu0 0.0
        %2913 = vmatprep.subr.mxu0 0.0
        %2914 = vmatpush1.msra.mxu0 0.0
        %2915 = vmatprep.subr.mxu0 0.0
        %2916 = vmatpush1.msra.mxu0 0.0
        %2917 = vmatprep.subr.mxu0 0.0
        %2918 = vmatpush1.msra.mxu0 0.0
        %2919 = vmatprep.subr.mxu0 0.0
        %2920 = vmatpush1.msra.mxu0 0.0
        %2921 = vmatprep.subr.mxu0 0.0
        %2922 = vmatpush1.msra.mxu0 0.0
        %2923 = vmatprep.subr.mxu0 0.0
        %2924 = vmatpush1.msra.mxu0 0.0
        %2925 = vmatprep.subr.mxu0 0.0
        %2926 = vmatpush1.msra.mxu0 0.0
        %2927 = vmatprep.subr.mxu0 0.0
        %2928 = vmatpush1.msra.mxu0 0.0
        %2929 = vmatprep.subr.mxu0 0.0
        %2930 = vmatpush1.msra.mxu0 0.0
        %2931 = vmatprep.subr.mxu0 0.0
        %2932 = vmatpush1.msra.mxu0 0.0
        %2933 = vmatprep.subr.mxu0 0.0
        %2934 = vmatpush1.msra.mxu0 0.0
        %2935 = vmatprep.subr.mxu0 0.0
        %2936 = vmatpush1.msra.mxu0 0.0
        %2937 = vmatprep.subr.mxu0 0.0
        %2938 = vmatpush1.msra.mxu0 0.0
        %2939 = vmatprep.subr.mxu0 0.0
        %2940 = vmatpush1.msra.mxu0 0.0
        %2941 = vmatprep.subr.mxu0 0.0
        %2942 = vmatpush1.msra.mxu0 0.0
        %2943 = vmatprep.mubr.f32.mxu0 0.0
        %2944 = vmatmul.mubr.f32.gmra.mrb[0].mxu0 %v2762
        %v2945 = vpop.f32.mrb[0].mxu0
        %v2946 = vadd.f32 0.0, %v2945
        %v2947 = vpop.f32.mrb[0].mxu0
        %v2948 = vadd.f32 0.0, %v2947
        %2949 = vmatprep.mubr.f32.mxu0 0.0
        %2950 = vmatmul.mubr.f32.gmra.mrb[0].mxu0 %v2765
        %v2951 = vpop.f32.mrb[0].mxu0
        %v2952 = vadd.f32 0.0, %v2951
        %v2953 = vpop.f32.mrb[0].mxu0
        %v2954 = vadd.f32 0.0, %v2953
        %2955 = vmatprep.mubr.f32.mxu0 0.0
        %2956 = vmatmul.mubr.f32.gmra.mrb[0].mxu0 %v2768
        %v2957 = vpop.f32.mrb[0].mxu0
        %v2958 = vadd.f32 0.0, %v2957
        %v2959 = vpop.f32.mrb[0].mxu0
        %v2960 = vadd.f32 0.0, %v2959
        %2961 = vmatprep.mubr.f32.mxu0 0.0
        %2962 = vmatmul.mubr.f32.gmra.mrb[0].mxu0 %v2771
        %v2963 = vpop.f32.mrb[0].mxu0
        %v2964 = vadd.f32 0.0, %v2963
        %v2965 = vpop.f32.mrb[0].mxu0
        %v2966 = vadd.f32 0.0, %v2965
        %2967 = vdwg.mxu0
        %2968 = vmatprep.subr.mxu0 %v2784
        %2969 = vmatpush1.msra.mxu0 %v2782
        %2970 = vmatprep.subr.mxu0 0.0
        %2971 = vmatpush1.msra.mxu0 0.0
        %2972 = vmatprep.subr.mxu0 0.0
        %2973 = vmatpush1.msra.mxu0 0.0
        %2974 = vmatprep.subr.mxu0 0.0
        %2975 = vmatpush1.msra.mxu0 0.0
        %2976 = vmatprep.subr.mxu0 0.0
        %2977 = vmatpush1.msra.mxu0 0.0
        %2978 = vmatprep.subr.mxu0 0.0
        %2979 = vmatpush1.msra.mxu0 0.0
        %2980 = vmatprep.subr.mxu0 0.0
        %2981 = vmatpush1.msra.mxu0 0.0
        %2982 = vmatprep.subr.mxu0 0.0
        %2983 = vmatpush1.msra.mxu0 0.0
        %2984 = vmatprep.subr.mxu0 0.0
        %2985 = vmatpush1.msra.mxu0 0.0
        %2986 = vmatprep.subr.mxu0 0.0
        %2987 = vmatpush1.msra.mxu0 0.0
        %2988 = vmatprep.subr.mxu0 0.0
        %2989 = vmatpush1.msra.mxu0 0.0
        %2990 = vmatprep.subr.mxu0 0.0
        %2991 = vmatpush1.msra.mxu0 0.0
        %2992 = vmatprep.subr.mxu0 0.0
        %2993 = vmatpush1.msra.mxu0 0.0
        %2994 = vmatprep.subr.mxu0 0.0
        %2995 = vmatpush1.msra.mxu0 0.0
        %2996 = vmatprep.subr.mxu0 0.0
        %2997 = vmatpush1.msra.mxu0 0.0
        %2998 = vmatprep.subr.mxu0 0.0
        %2999 = vmatpush1.msra.mxu0 0.0
        %3000 = vmatprep.subr.mxu0 0.0
        %3001 = vmatpush1.msra.mxu0 0.0
        %3002 = vmatprep.subr.mxu0 0.0
        %3003 = vmatpush1.msra.mxu0 0.0
        %3004 = vmatprep.subr.mxu0 0.0
        %3005 = vmatpush1.msra.mxu0 0.0
        %3006 = vmatprep.subr.mxu0 0.0
        %3007 = vmatpush1.msra.mxu0 0.0
        %3008 = vmatprep.subr.mxu0 0.0
        %3009 = vmatpush1.msra.mxu0 0.0
        %3010 = vmatprep.subr.mxu0 0.0
        %3011 = vmatpush1.msra.mxu0 0.0
        %3012 = vmatprep.subr.mxu0 0.0
        %3013 = vmatpush1.msra.mxu0 0.0
        %3014 = vmatprep.subr.mxu0 0.0
        %3015 = vmatpush1.msra.mxu0 0.0
        %3016 = vmatprep.subr.mxu0 0.0
        %3017 = vmatpush1.msra.mxu0 0.0
        %3018 = vmatprep.subr.mxu0 0.0
        %3019 = vmatpush1.msra.mxu0 0.0
        %3020 = vmatprep.subr.mxu0 0.0
        %3021 = vmatpush1.msra.mxu0 0.0
        %3022 = vmatprep.subr.mxu0 0.0
        %3023 = vmatpush1.msra.mxu0 0.0
        %3024 = vmatprep.subr.mxu0 0.0
        %3025 = vmatpush1.msra.mxu0 0.0
        %3026 = vmatprep.subr.mxu0 0.0
        %3027 = vmatpush1.msra.mxu0 0.0
        %3028 = vmatprep.subr.mxu0 0.0
        %3029 = vmatpush1.msra.mxu0 0.0
        %3030 = vmatprep.subr.mxu0 0.0
        %3031 = vmatpush1.msra.mxu0 0.0
        %3032 = vmatprep.mubr.f32.mxu0 0.0
        %3033 = vmatmul.mubr.f32.gmra.mrb[0].mxu0 %v2762
        %v3034 = vpop.f32.mrb[0].mxu0
        %v3035 = vadd.f32 0.0, %v3034
        %v3036 = vpop.f32.mrb[0].mxu0
        %v3037 = vadd.f32 0.0, %v3036
        %3038 = vmatprep.mubr.f32.mxu0 0.0
        %3039 = vmatmul.mubr.f32.gmra.mrb[0].mxu0 %v2765
        %v3040 = vpop.f32.mrb[0].mxu0
        %v3041 = vadd.f32 0.0, %v3040
        %v3042 = vpop.f32.mrb[0].mxu0
        %v3043 = vadd.f32 0.0, %v3042
        %3044 = vmatprep.mubr.f32.mxu0 0.0
        %3045 = vmatmul.mubr.f32.gmra.mrb[0].mxu0 %v2768
        %v3046 = vpop.f32.mrb[0].mxu0
        %v3047 = vadd.f32 0.0, %v3046
        %v3048 = vpop.f32.mrb[0].mxu0
        %v3049 = vadd.f32 0.0, %v3048
        %3050 = vmatprep.mubr.f32.mxu0 0.0
        %3051 = vmatmul.mubr.f32.gmra.mrb[0].mxu0 %v2771
        %v3052 = vpop.f32.mrb[0].mxu0
        %v3053 = vadd.f32 0.0, %v3052
        %v3054 = vpop.f32.mrb[0].mxu0
        %v3055 = vadd.f32 0.0, %v3054
        %3056 = vdwg.mxu0
        %3057 = vmatprep.subr.mxu0 %v2788
        %3058 = vmatpush1.msra.mxu0 %v2786
        %3059 = vmatprep.subr.mxu0 0.0
        %3060 = vmatpush1.msra.mxu0 0.0
        %3061 = vmatprep.subr.mxu0 0.0
        %3062 = vmatpush1.msra.mxu0 0.0
        %3063 = vmatprep.subr.mxu0 0.0
        %3064 = vmatpush1.msra.mxu0 0.0
        %3065 = vmatprep.subr.mxu0 0.0
        %3066 = vmatpush1.msra.mxu0 0.0
        %3067 = vmatprep.subr.mxu0 0.0
        %3068 = vmatpush1.msra.mxu0 0.0
        %3069 = vmatprep.subr.mxu0 0.0
        %3070 = vmatpush1.msra.mxu0 0.0
        %3071 = vmatprep.subr.mxu0 0.0
        %3072 = vmatpush1.msra.mxu0 0.0
        %3073 = vmatprep.subr.mxu0 0.0
        %3074 = vmatpush1.msra.mxu0 0.0
        %3075 = vmatprep.subr.mxu0 0.0
        %3076 = vmatpush1.msra.mxu0 0.0
        %3077 = vmatprep.subr.mxu0 0.0
        %3078 = vmatpush1.msra.mxu0 0.0
        %3079 = vmatprep.subr.mxu0 0.0
        %3080 = vmatpush1.msra.mxu0 0.0
        %3081 = vmatprep.subr.mxu0 0.0
        %3082 = vmatpush1.msra.mxu0 0.0
        %3083 = vmatprep.subr.mxu0 0.0
        %3084 = vmatpush1.msra.mxu0 0.0
        %3085 = vmatprep.subr.mxu0 0.0
        %3086 = vmatpush1.msra.mxu0 0.0
        %3087 = vmatprep.subr.mxu0 0.0
        %3088 = vmatpush1.msra.mxu0 0.0
        %3089 = vmatprep.subr.mxu0 0.0
        %3090 = vmatpush1.msra.mxu0 0.0
        %3091 = vmatprep.subr.mxu0 0.0
        %3092 = vmatpush1.msra.mxu0 0.0
        %3093 = vmatprep.subr.mxu0 0.0
        %3094 = vmatpush1.msra.mxu0 0.0
        %3095 = vmatprep.subr.mxu0 0.0
        %3096 = vmatpush1.msra.mxu0 0.0
        %3097 = vmatprep.subr.mxu0 0.0
        %3098 = vmatpush1.msra.mxu0 0.0
        %3099 = vmatprep.subr.mxu0 0.0
        %3100 = vmatpush1.msra.mxu0 0.0
        %3101 = vmatprep.subr.mxu0 0.0
        %3102 = vmatpush1.msra.mxu0 0.0
        %3103 = vmatprep.subr.mxu0 0.0
        %3104 = vmatpush1.msra.mxu0 0.0
        %3105 = vmatprep.subr.mxu0 0.0
        %3106 = vmatpush1.msra.mxu0 0.0
        %3107 = vmatprep.subr.mxu0 0.0
        %3108 = vmatpush1.msra.mxu0 0.0
        %3109 = vmatprep.subr.mxu0 0.0
        %3110 = vmatpush1.msra.mxu0 0.0
        %3111 = vmatprep.subr.mxu0 0.0
        %3112 = vmatpush1.msra.mxu0 0.0
        %3113 = vmatprep.subr.mxu0 0.0
        %3114 = vmatpush1.msra.mxu0 0.0
        %3115 = vmatprep.subr.mxu0 0.0
        %3116 = vmatpush1.msra.mxu0 0.0
        %3117 = vmatprep.subr.mxu0 0.0
        %3118 = vmatpush1.msra.mxu0 0.0
        %3119 = vmatprep.subr.mxu0 0.0
        %3120 = vmatpush1.msra.mxu0 0.0
        %3121 = vmatprep.mubr.f32.mxu0 0.0
        %3122 = vmatmul.mubr.f32.gmra.mrb[0].mxu0 %v2762
        %v3123 = vpop.f32.mrb[0].mxu0
        %v3124 = vadd.f32 0.0, %v3123
        %v3125 = vpop.f32.mrb[0].mxu0
        %v3126 = vadd.f32 0.0, %v3125
        %3127 = vmatprep.mubr.f32.mxu0 0.0
        %3128 = vmatmul.mubr.f32.gmra.mrb[0].mxu0 %v2765
        %v3129 = vpop.f32.mrb[0].mxu0
        %v3130 = vadd.f32 0.0, %v3129
        %v3131 = vpop.f32.mrb[0].mxu0
        %v3132 = vadd.f32 0.0, %v3131
        %3133 = vmatprep.mubr.f32.mxu0 0.0
        %3134 = vmatmul.mubr.f32.gmra.mrb[0].mxu0 %v2768
        %v3135 = vpop.f32.mrb[0].mxu0
        %v3136 = vadd.f32 0.0, %v3135
        %v3137 = vpop.f32.mrb[0].mxu0
        %v3138 = vadd.f32 0.0, %v3137
        %3139 = vmatprep.mubr.f32.mxu0 0.0
        %3140 = vmatmul.mubr.f32.gmra.mrb[0].mxu0 %v2771
        %v3141 = vpop.f32.mrb[0].mxu0
        %v3142 = vadd.f32 0.0, %v3141
        %v3143 = vpop.f32.mrb[0].mxu0
        %v3144 = vadd.f32 0.0, %v3143
        %3145 = vdwg.mxu0
        %3147 = vset.pattern.permute.xlu0 0
        %3148 = vperm.xlu0 %3147, %v2744
        %v3149 = vpop.permute.xlu0 %3148
        %3152 = vset.pattern.permute.xlu0 0
        %3153 = vperm.xlu0 %3152, %v2745
        %v3154 = vpop.permute.xlu0 %3153
        %3157 = vset.pattern.permute.xlu0 0
        %3158 = vperm.xlu0 %3157, %v2746
        %v3159 = vpop.permute.xlu0 %3158
        %3162 = vset.pattern.permute.xlu0 0
        %3163 = vperm.xlu0 %3162, %v2747
        %v3164 = vpop.permute.xlu0 %3163
        %v3166 = vadd.f32 %v3149, %v2857
        %v3167 = vadd.f32 %v3149, %v2859
        %v3168 = vadd.f32 %v3149, %v2946
        %v3169 = vadd.f32 %v3149, %v2948
        %v3170 = vadd.f32 %v3149, %v3035
        %v3171 = vadd.f32 %v3149, %v3037
        %v3172 = vadd.f32 %v3149, %v3124
        %v3173 = vadd.f32 %v3149, %v3126
        %v3174 = vadd.f32 %v3154, %v2863
        %v3175 = vadd.f32 %v3154, %v2865
        %v3176 = vadd.f32 %v3154, %v2952
        %v3177 = vadd.f32 %v3154, %v2954
        %v3178 = vadd.f32 %v3154, %v3041
        %v3179 = vadd.f32 %v3154, %v3043
        %v3180 = vadd.f32 %v3154, %v3130
        %v3181 = vadd.f32 %v3154, %v3132
        %v3182 = vadd.f32 %v3159, %v2869
        %v3183 = vadd.f32 %v3159, %v2871
        %v3184 = vadd.f32 %v3159, %v2958
        %v3185 = vadd.f32 %v3159, %v2960
        %v3186 = vadd.f32 %v3159, %v3047
        %v3187 = vadd.f32 %v3159, %v3049
        %v3188 = vadd.f32 %v3159, %v3136
        %v3189 = vadd.f32 %v3159, %v3138
        %v3190 = vadd.f32 %v3164, %v2875
        %v3191 = vadd.f32 %v3164, %v2877
        %v3192 = vadd.f32 %v3164, %v2964
        %v3193 = vadd.f32 %v3164, %v2966
        %v3194 = vadd.f32 %v3164, %v3053
        %v3195 = vadd.f32 %v3164, %v3055
        %v3196 = vadd.f32 %v3164, %v3142
        %v3197 = vadd.f32 %v3164, %v3144
        %v3198 = vld [vmem:[#allocation8] sm:$0xff]
        %v3199 = vld [vmem:[#allocation8 + $0x8] sm:$0xff]
        %v3200 = vld [vmem:[#allocation8 + $0x10] sm:$0xff]
        %v3201 = vld [vmem:[#allocation8 + $0x18] sm:$0xff]
        %3203 = vset.pattern.permute.xlu0 0
        %3204 = vperm.xlu0 %3203, %v3198
        %v3205 = vpop.permute.xlu0 %3204
        %3208 = vset.pattern.permute.xlu0 0
        %3209 = vperm.xlu0 %3208, %v3199
        %v3210 = vpop.permute.xlu0 %3209
        %3213 = vset.pattern.permute.xlu0 0
        %3214 = vperm.xlu0 %3213, %v3200
        %v3215 = vpop.permute.xlu0 %3214
        %3218 = vset.pattern.permute.xlu0 0
        %3219 = vperm.xlu0 %3218, %v3201
        %v3220 = vpop.permute.xlu0 %3219
        %v3222 = vmul.f32 %v3166, %v3205
        %v3223 = vmul.f32 %v3167, %v3205
        %v3224 = vmul.f32 %v3168, %v3205
        %v3225 = vmul.f32 %v3169, %v3205
        %v3226 = vmul.f32 %v3170, %v3205
        %v3227 = vmul.f32 %v3171, %v3205
        %v3228 = vmul.f32 %v3172, %v3205
        %v3229 = vmul.f32 %v3173, %v3205
        %v3230 = vmul.f32 %v3174, %v3210
        %v3231 = vmul.f32 %v3175, %v3210
        %v3232 = vmul.f32 %v3176, %v3210
        %v3233 = vmul.f32 %v3177, %v3210
        %v3234 = vmul.f32 %v3178, %v3210
        %v3235 = vmul.f32 %v3179, %v3210
        %v3236 = vmul.f32 %v3180, %v3210
        %v3237 = vmul.f32 %v3181, %v3210
        %v3238 = vmul.f32 %v3182, %v3215
        %v3239 = vmul.f32 %v3183, %v3215
        %v3240 = vmul.f32 %v3184, %v3215
        %v3241 = vmul.f32 %v3185, %v3215
        %v3242 = vmul.f32 %v3186, %v3215
        %v3243 = vmul.f32 %v3187, %v3215
        %v3244 = vmul.f32 %v3188, %v3215
        %v3245 = vmul.f32 %v3189, %v3215
        %v3246 = vmul.f32 %v3190, %v3220
        %v3247 = vmul.f32 %v3191, %v3220
        %v3248 = vmul.f32 %v3192, %v3220
        %v3249 = vmul.f32 %v3193, %v3220
        %v3250 = vmul.f32 %v3194, %v3220
        %v3251 = vmul.f32 %v3195, %v3220
        %v3252 = vmul.f32 %v3196, %v3220
        %v3253 = vmul.f32 %v3197, %v3220
        %v3254 = vld [vmem:[#allocation9] sm:$0xff]
        %v3255 = vld [vmem:[#allocation9 + $0x8] sm:$0xff]
        %v3256 = vld [vmem:[#allocation9 + $0x10] sm:$0xff]
        %v3257 = vld [vmem:[#allocation9 + $0x18] sm:$0xff]
        %3259 = vset.pattern.permute.xlu0 0
        %3260 = vperm.xlu0 %3259, %v3254
        %v3261 = vpop.permute.xlu0 %3260
        %3264 = vset.pattern.permute.xlu0 0
        %3265 = vperm.xlu0 %3264, %v3255
        %v3266 = vpop.permute.xlu0 %3265
        %3269 = vset.pattern.permute.xlu0 0
        %3270 = vperm.xlu0 %3269, %v3256
        %v3271 = vpop.permute.xlu0 %3270
        %3274 = vset.pattern.permute.xlu0 0
        %3275 = vperm.xlu0 %3274, %v3257
        %v3276 = vpop.permute.xlu0 %3275
        %v3278 = vadd.f32 %v3222, %v3261
        %v3279 = vadd.f32 %v3223, %v3261
        %v3280 = vadd.f32 %v3224, %v3261
        %v3281 = vadd.f32 %v3225, %v3261
        %v3282 = vadd.f32 %v3226, %v3261
        %v3283 = vadd.f32 %v3227, %v3261
        %v3284 = vadd.f32 %v3228, %v3261
        %v3285 = vadd.f32 %v3229, %v3261
        %v3286 = vadd.f32 %v3230, %v3266
        %v3287 = vadd.f32 %v3231, %v3266
        %v3288 = vadd.f32 %v3232, %v3266
        %v3289 = vadd.f32 %v3233, %v3266
        %v3290 = vadd.f32 %v3234, %v3266
        %v3291 = vadd.f32 %v3235, %v3266
        %v3292 = vadd.f32 %v3236, %v3266
        %v3293 = vadd.f32 %v3237, %v3266
        %v3294 = vadd.f32 %v3238, %v3271
        %v3295 = vadd.f32 %v3239, %v3271
        %v3296 = vadd.f32 %v3240, %v3271
        %v3297 = vadd.f32 %v3241, %v3271
        %v3298 = vadd.f32 %v3242, %v3271
        %v3299 = vadd.f32 %v3243, %v3271
        %v3300 = vadd.f32 %v3244, %v3271
        %v3301 = vadd.f32 %v3245, %v3271
        %v3302 = vadd.f32 %v3246, %v3276
        %v3303 = vadd.f32 %v3247, %v3276
        %v3304 = vadd.f32 %v3248, %v3276
        %v3305 = vadd.f32 %v3249, %v3276
        %v3306 = vadd.f32 %v3250, %v3276
        %v3307 = vadd.f32 %v3251, %v3276
        %v3308 = vadd.f32 %v3252, %v3276
        %v3309 = vadd.f32 %v3253, %v3276
        %v3310 = vmax.f32 %v3278, 0.0
        %v3311 = vmax.f32 %v3279, 0.0
        %v3312 = vmax.f32 %v3280, 0.0
        %v3313 = vmax.f32 %v3281, 0.0
        %v3314 = vmax.f32 %v3282, 0.0
        %v3315 = vmax.f32 %v3283, 0.0
        %v3316 = vmax.f32 %v3284, 0.0
        %v3317 = vmax.f32 %v3285, 0.0
        %v3318 = vmax.f32 %v3286, 0.0
        %v3319 = vmax.f32 %v3287, 0.0
        %v3320 = vmax.f32 %v3288, 0.0
        %v3321 = vmax.f32 %v3289, 0.0
        %v3322 = vmax.f32 %v3290, 0.0
        %v3323 = vmax.f32 %v3291, 0.0
        %v3324 = vmax.f32 %v3292, 0.0
        %v3325 = vmax.f32 %v3293, 0.0
        %v3326 = vmax.f32 %v3294, 0.0
        %v3327 = vmax.f32 %v3295, 0.0
        %v3328 = vmax.f32 %v3296, 0.0
        %v3329 = vmax.f32 %v3297, 0.0
        %v3330 = vmax.f32 %v3298, 0.0
        %v3331 = vmax.f32 %v3299, 0.0
        %v3332 = vmax.f32 %v3300, 0.0
        %v3333 = vmax.f32 %v3301, 0.0
        %v3334 = vmax.f32 %v3302, 0.0
        %v3335 = vmax.f32 %v3303, 0.0
        %v3336 = vmax.f32 %v3304, 0.0
        %v3337 = vmax.f32 %v3305, 0.0
        %v3338 = vmax.f32 %v3306, 0.0
        %v3339 = vmax.f32 %v3307, 0.0
        %v3340 = vmax.f32 %v3308, 0.0
        %v3341 = vmax.f32 %v3309, 0.0
        %v3342 = vld [vmem:[%s5] sm:$0xff]
        %v3343 = vld [vmem:[%s5 + $0x8] sm:$0xff]
        %v3344 = vld [vmem:[%s6] sm:$0xff]
        %v3345 = vld [vmem:[%s6 + $0x8] sm:$0xff]
        %v3347 = vsel %vm2760, %v3344, 0
        %v3350 = vsel %vm2760, %v3345, 0
        %3352 = vmatprep.subr.mxu0 %v2776
        %3353 = vmatpush1.msra.mxu0 %v2774
        %3354 = vmatprep.subr.mxu0 0.0
        %3355 = vmatpush1.msra.mxu0 0.0
        %3356 = vmatprep.subr.mxu0 0.0
        %3357 = vmatpush1.msra.mxu0 0.0
        %3358 = vmatprep.subr.mxu0 0.0
        %3359 = vmatpush1.msra.mxu0 0.0
        %3360 = vmatprep.subr.mxu0 0.0
        %3361 = vmatpush1.msra.mxu0 0.0
        %3362 = vmatprep.subr.mxu0 0.0
        %3363 = vmatpush1.msra.mxu0 0.0
        %3364 = vmatprep.subr.mxu0 0.0
        %3365 = vmatpush1.msra.mxu0 0.0
        %3366 = vmatprep.subr.mxu0 0.0
        %3367 = vmatpush1.msra.mxu0 0.0
        %3368 = vmatprep.subr.mxu0 0.0
        %3369 = vmatpush1.msra.mxu0 0.0
        %3370 = vmatprep.subr.mxu0 0.0
        %3371 = vmatpush1.msra.mxu0 0.0
        %3372 = vmatprep.subr.mxu0 0.0
        %3373 = vmatpush1.msra.mxu0 0.0
        %3374 = vmatprep.subr.mxu0 0.0
        %3375 = vmatpush1.msra.mxu0 0.0
        %3376 = vmatprep.subr.mxu0 0.0
        %3377 = vmatpush1.msra.mxu0 0.0
        %3378 = vmatprep.subr.mxu0 0.0
        %3379 = vmatpush1.msra.mxu0 0.0
        %3380 = vmatprep.subr.mxu0 0.0
        %3381 = vmatpush1.msra.mxu0 0.0
        %3382 = vmatprep.subr.mxu0 0.0
        %3383 = vmatpush1.msra.mxu0 0.0
        %3384 = vmatprep.subr.mxu0 0.0
        %3385 = vmatpush1.msra.mxu0 0.0
        %3386 = vmatprep.subr.mxu0 0.0
        %3387 = vmatpush1.msra.mxu0 0.0
        %3388 = vmatprep.subr.mxu0 0.0
        %3389 = vmatpush1.msra.mxu0 0.0
        %3390 = vmatprep.subr.mxu0 0.0
        %3391 = vmatpush1.msra.mxu0 0.0
        %3392 = vmatprep.subr.mxu0 0.0
        %3393 = vmatpush1.msra.mxu0 0.0
        %3394 = vmatprep.subr.mxu0 0.0
        %3395 = vmatpush1.msra.mxu0 0.0
        %3396 = vmatprep.subr.mxu0 0.0
        %3397 = vmatpush1.msra.mxu0 0.0
        %3398 = vmatprep.subr.mxu0 0.0
        %3399 = vmatpush1.msra.mxu0 0.0
        %3400 = vmatprep.subr.mxu0 0.0
        %3401 = vmatpush1.msra.mxu0 0.0
        %3402 = vmatprep.subr.mxu0 0.0
        %3403 = vmatpush1.msra.mxu0 0.0
        %3404 = vmatprep.subr.mxu0 0.0
        %3405 = vmatpush1.msra.mxu0 0.0
        %3406 = vmatprep.subr.mxu0 0.0
        %3407 = vmatpush1.msra.mxu0 0.0
        %3408 = vmatprep.subr.mxu0 0.0
        %3409 = vmatpush1.msra.mxu0 0.0
        %3410 = vmatprep.subr.mxu0 0.0
        %3411 = vmatpush1.msra.mxu0 0.0
        %3412 = vmatprep.subr.mxu0 0.0
        %3413 = vmatpush1.msra.mxu0 0.0
        %3414 = vmatprep.subr.mxu0 0.0
        %3415 = vmatpush1.msra.mxu0 0.0
        %3416 = vmatprep.mubr.f32.mxu0 0.0
        %3417 = vmatmul.mubr.f32.gmra.mrb[0].mxu0 %v3347
        %v3418 = vpop.f32.mrb[0].mxu0
        %v3419 = vadd.f32 0.0, %v3418
        %v3420 = vpop.f32.mrb[0].mxu0
        %v3421 = vadd.f32 0.0, %v3420
        %3422 = vmatprep.mubr.f32.mxu0 0.0
        %3423 = vmatmul.mubr.f32.gmra.mrb[0].mxu0 %v3350
        %v3424 = vpop.f32.mrb[0].mxu0
        %v3425 = vadd.f32 0.0, %v3424
        %v3426 = vpop.f32.mrb[0].mxu0
        %v3427 = vadd.f32 0.0, %v3426
        %3428 = vdwg.mxu0
        %3429 = vmatprep.subr.mxu0 %v2780
        %3430 = vmatpush1.msra.mxu0 %v2778
        %3431 = vmatprep.subr.mxu0 0.0
        %3432 = vmatpush1.msra.mxu0 0.0
        %3433 = vmatprep.subr.mxu0 0.0
        %3434 = vmatpush1.msra.mxu0 0.0
        %3435 = vmatprep.subr.mxu0 0.0
        %3436 = vmatpush1.msra.mxu0 0.0
        %3437 = vmatprep.subr.mxu0 0.0
        %3438 = vmatpush1.msra.mxu0 0.0
        %3439 = vmatprep.subr.mxu0 0.0
        %3440 = vmatpush1.msra.mxu0 0.0
        %3441 = vmatprep.subr.mxu0 0.0
        %3442 = vmatpush1.msra.mxu0 0.0
        %3443 = vmatprep.subr.mxu0 0.0
        %3444 = vmatpush1.msra.mxu0 0.0
        %3445 = vmatprep.subr.mxu0 0.0
        %3446 = vmatpush1.msra.mxu0 0.0
        %3447 = vmatprep.subr.mxu0 0.0
        %3448 = vmatpush1.msra.mxu0 0.0
        %3449 = vmatprep.subr.mxu0 0.0
        %3450 = vmatpush1.msra.mxu0 0.0
        %3451 = vmatprep.subr.mxu0 0.0
        %3452 = vmatpush1.msra.mxu0 0.0
        %3453 = vmatprep.subr.mxu0 0.0
        %3454 = vmatpush1.msra.mxu0 0.0
        %3455 = vmatprep.subr.mxu0 0.0
        %3456 = vmatpush1.msra.mxu0 0.0
        %3457 = vmatprep.subr.mxu0 0.0
        %3458 = vmatpush1.msra.mxu0 0.0
        %3459 = vmatprep.subr.mxu0 0.0
        %3460 = vmatpush1.msra.mxu0 0.0
        %3461 = vmatprep.subr.mxu0 0.0
        %3462 = vmatpush1.msra.mxu0 0.0
        %3463 = vmatprep.subr.mxu0 0.0
        %3464 = vmatpush1.msra.mxu0 0.0
        %3465 = vmatprep.subr.mxu0 0.0
        %3466 = vmatpush1.msra.mxu0 0.0
        %3467 = vmatprep.subr.mxu0 0.0
        %3468 = vmatpush1.msra.mxu0 0.0
        %3469 = vmatprep.subr.mxu0 0.0
        %3470 = vmatpush1.msra.mxu0 0.0
        %3471 = vmatprep.subr.mxu0 0.0
        %3472 = vmatpush1.msra.mxu0 0.0
        %3473 = vmatprep.subr.mxu0 0.0
        %3474 = vmatpush1.msra.mxu0 0.0
        %3475 = vmatprep.subr.mxu0 0.0
        %3476 = vmatpush1.msra.mxu0 0.0
        %3477 = vmatprep.subr.mxu0 0.0
        %3478 = vmatpush1.msra.mxu0 0.0
        %3479 = vmatprep.subr.mxu0 0.0
        %3480 = vmatpush1.msra.mxu0 0.0
        %3481 = vmatprep.subr.mxu0 0.0
        %3482 = vmatpush1.msra.mxu0 0.0
        %3483 = vmatprep.subr.mxu0 0.0
        %3484 = vmatpush1.msra.mxu0 0.0
        %3485 = vmatprep.subr.mxu0 0.0
        %3486 = vmatpush1.msra.mxu0 0.0
        %3487 = vmatprep.subr.mxu0 0.0
        %3488 = vmatpush1.msra.mxu0 0.0
        %3489 = vmatprep.subr.mxu0 0.0
        %3490 = vmatpush1.msra.mxu0 0.0
        %3491 = vmatprep.subr.mxu0 0.0
        %3492 = vmatpush1.msra.mxu0 0.0
        %3493 = vmatprep.mubr.f32.mxu0 0.0
        %3494 = vmatmul.mubr.f32.gmra.mrb[0].mxu0 %v3347
        %v3495 = vpop.f32.mrb[0].mxu0
        %v3496 = vadd.f32 0.0, %v3495
        %v3497 = vpop.f32.mrb[0].mxu0
        %v3498 = vadd.f32 0.0, %v3497
        %3499 = vmatprep.mubr.f32.mxu0 0.0
        %3500 = vmatmul.mubr.f32.gmra.mrb[0].mxu0 %v3350
        %v3501 = vpop.f32.mrb[0].mxu0
        %v3502 = vadd.f32 0.0, %v3501
        %v3503 = vpop.f32.mrb[0].mxu0
        %v3504 = vadd.f32 0.0, %v3503
        %3505 = vdwg.mxu0
        %3506 = vmatprep.subr.mxu0 %v2784
        %3507 = vmatpush1.msra.mxu0 %v2782
        %3508 = vmatprep.subr.mxu0 0.0
        %3509 = vmatpush1.msra.mxu0 0.0
        %3510 = vmatprep.subr.mxu0 0.0
        %3511 = vmatpush1.msra.mxu0 0.0
        %3512 = vmatprep.subr.mxu0 0.0
        %3513 = vmatpush1.msra.mxu0 0.0
        %3514 = vmatprep.subr.mxu0 0.0
        %3515 = vmatpush1.msra.mxu0 0.0
        %3516 = vmatprep.subr.mxu0 0.0
        %3517 = vmatpush1.msra.mxu0 0.0
        %3518 = vmatprep.subr.mxu0 0.0
        %3519 = vmatpush1.msra.mxu0 0.0
        %3520 = vmatprep.subr.mxu0 0.0
        %3521 = vmatpush1.msra.mxu0 0.0
        %3522 = vmatprep.subr.mxu0 0.0
        %3523 = vmatpush1.msra.mxu0 0.0
        %3524 = vmatprep.subr.mxu0 0.0
        %3525 = vmatpush1.msra.mxu0 0.0
        %3526 = vmatprep.subr.mxu0 0.0
        %3527 = vmatpush1.msra.mxu0 0.0
        %3528 = vmatprep.subr.mxu0 0.0
        %3529 = vmatpush1.msra.mxu0 0.0
        %3530 = vmatprep.subr.mxu0 0.0
        %3531 = vmatpush1.msra.mxu0 0.0
        %3532 = vmatprep.subr.mxu0 0.0
        %3533 = vmatpush1.msra.mxu0 0.0
        %3534 = vmatprep.subr.mxu0 0.0
        %3535 = vmatpush1.msra.mxu0 0.0
        %3536 = vmatprep.subr.mxu0 0.0
        %3537 = vmatpush1.msra.mxu0 0.0
        %3538 = vmatprep.subr.mxu0 0.0
        %3539 = vmatpush1.msra.mxu0 0.0
        %3540 = vmatprep.subr.mxu0 0.0
        %3541 = vmatpush1.msra.mxu0 0.0
        %3542 = vmatprep.subr.mxu0 0.0
        %3543 = vmatpush1.msra.mxu0 0.0
        %3544 = vmatprep.subr.mxu0 0.0
        %3545 = vmatpush1.msra.mxu0 0.0
        %3546 = vmatprep.subr.mxu0 0.0
        %3547 = vmatpush1.msra.mxu0 0.0
        %3548 = vmatprep.subr.mxu0 0.0
        %3549 = vmatpush1.msra.mxu0 0.0
        %3550 = vmatprep.subr.mxu0 0.0
        %3551 = vmatpush1.msra.mxu0 0.0
        %3552 = vmatprep.subr.mxu0 0.0
        %3553 = vmatpush1.msra.mxu0 0.0
        %3554 = vmatprep.subr.mxu0 0.0
        %3555 = vmatpush1.msra.mxu0 0.0
        %3556 = vmatprep.subr.mxu0 0.0
        %3557 = vmatpush1.msra.mxu0 0.0
        %3558 = vmatprep.subr.mxu0 0.0
        %3559 = vmatpush1.msra.mxu0 0.0
        %3560 = vmatprep.subr.mxu0 0.0
        %3561 = vmatpush1.msra.mxu0 0.0
        %3562 = vmatprep.subr.mxu0 0.0
        %3563 = vmatpush1.msra.mxu0 0.0
        %3564 = vmatprep.subr.mxu0 0.0
        %3565 = vmatpush1.msra.mxu0 0.0
        %3566 = vmatprep.subr.mxu0 0.0
        %3567 = vmatpush1.msra.mxu0 0.0
        %3568 = vmatprep.subr.mxu0 0.0
        %3569 = vmatpush1.msra.mxu0 0.0
        %3570 = vmatprep.mubr.f32.mxu0 0.0
        %3571 = vmatmul.mubr.f32.gmra.mrb[0].mxu0 %v3347
        %v3572 = vpop.f32.mrb[0].mxu0
        %v3573 = vadd.f32 0.0, %v3572
        %v3574 = vpop.f32.mrb[0].mxu0
        %v3575 = vadd.f32 0.0, %v3574
        %3576 = vmatprep.mubr.f32.mxu0 0.0
        %3577 = vmatmul.mubr.f32.gmra.mrb[0].mxu0 %v3350
        %v3578 = vpop.f32.mrb[0].mxu0
        %v3579 = vadd.f32 0.0, %v3578
        %v3580 = vpop.f32.mrb[0].mxu0
        %v3581 = vadd.f32 0.0, %v3580
        %3582 = vdwg.mxu0
        %3583 = vmatprep.subr.mxu0 %v2788
        %3584 = vmatpush1.msra.mxu0 %v2786
        %3585 = vmatprep.subr.mxu0 0.0
        %3586 = vmatpush1.msra.mxu0 0.0
        %3587 = vmatprep.subr.mxu0 0.0
        %3588 = vmatpush1.msra.mxu0 0.0
        %3589 = vmatprep.subr.mxu0 0.0
        %3590 = vmatpush1.msra.mxu0 0.0
        %3591 = vmatprep.subr.mxu0 0.0
        %3592 = vmatpush1.msra.mxu0 0.0
        %3593 = vmatprep.subr.mxu0 0.0
        %3594 = vmatpush1.msra.mxu0 0.0
        %3595 = vmatprep.subr.mxu0 0.0
        %3596 = vmatpush1.msra.mxu0 0.0
        %3597 = vmatprep.subr.mxu0 0.0
        %3598 = vmatpush1.msra.mxu0 0.0
        %3599 = vmatprep.subr.mxu0 0.0
        %3600 = vmatpush1.msra.mxu0 0.0
        %3601 = vmatprep.subr.mxu0 0.0
        %3602 = vmatpush1.msra.mxu0 0.0
        %3603 = vmatprep.subr.mxu0 0.0
        %3604 = vmatpush1.msra.mxu0 0.0
        %3605 = vmatprep.subr.mxu0 0.0
        %3606 = vmatpush1.msra.mxu0 0.0
        %3607 = vmatprep.subr.mxu0 0.0
        %3608 = vmatpush1.msra.mxu0 0.0
        %3609 = vmatprep.subr.mxu0 0.0
        %3610 = vmatpush1.msra.mxu0 0.0
        %3611 = vmatprep.subr.mxu0 0.0
        %3612 = vmatpush1.msra.mxu0 0.0
        %3613 = vmatprep.subr.mxu0 0.0
        %3614 = vmatpush1.msra.mxu0 0.0
        %3615 = vmatprep.subr.mxu0 0.0
        %3616 = vmatpush1.msra.mxu0 0.0
        %3617 = vmatprep.subr.mxu0 0.0
        %3618 = vmatpush1.msra.mxu0 0.0
        %3619 = vmatprep.subr.mxu0 0.0
        %3620 = vmatpush1.msra.mxu0 0.0
        %3621 = vmatprep.subr.mxu0 0.0
        %3622 = vmatpush1.msra.mxu0 0.0
        %3623 = vmatprep.subr.mxu0 0.0
        %3624 = vmatpush1.msra.mxu0 0.0
        %3625 = vmatprep.subr.mxu0 0.0
        %3626 = vmatpush1.msra.mxu0 0.0
        %3627 = vmatprep.subr.mxu0 0.0
        %3628 = vmatpush1.msra.mxu0 0.0
        %3629 = vmatprep.subr.mxu0 0.0
        %3630 = vmatpush1.msra.mxu0 0.0
        %3631 = vmatprep.subr.mxu0 0.0
        %3632 = vmatpush1.msra.mxu0 0.0
        %3633 = vmatprep.subr.mxu0 0.0
        %3634 = vmatpush1.msra.mxu0 0.0
        %3635 = vmatprep.subr.mxu0 0.0
        %3636 = vmatpush1.msra.mxu0 0.0
        %3637 = vmatprep.subr.mxu0 0.0
        %3638 = vmatpush1.msra.mxu0 0.0
        %3639 = vmatprep.subr.mxu0 0.0
        %3640 = vmatpush1.msra.mxu0 0.0
        %3641 = vmatprep.subr.mxu0 0.0
        %3642 = vmatpush1.msra.mxu0 0.0
        %3643 = vmatprep.subr.mxu0 0.0
        %3644 = vmatpush1.msra.mxu0 0.0
        %3645 = vmatprep.subr.mxu0 0.0
        %3646 = vmatpush1.msra.mxu0 0.0
        %3647 = vmatprep.mubr.f32.mxu0 0.0
        %3648 = vmatmul.mubr.f32.gmra.mrb[0].mxu0 %v3347
        %v3649 = vpop.f32.mrb[0].mxu0
        %v3650 = vadd.f32 0.0, %v3649
        %v3651 = vpop.f32.mrb[0].mxu0
        %v3652 = vadd.f32 0.0, %v3651
        %3653 = vmatprep.mubr.f32.mxu0 0.0
        %3654 = vmatmul.mubr.f32.gmra.mrb[0].mxu0 %v3350
        %v3655 = vpop.f32.mrb[0].mxu0
        %v3656 = vadd.f32 0.0, %v3655
        %v3657 = vpop.f32.mrb[0].mxu0
        %v3658 = vadd.f32 0.0, %v3657
        %3659 = vdwg.mxu0
        %vm3660 = vcmask 261120
        %v3662 = vsel %vm3660, %v3342, 0
        %v3665 = vsel %vm3660, %v3343, 0
        %3667 = vmatprep.subr.mxu0 %v3311
        %3668 = vmatpush1.msra.mxu0 %v3310
        %3669 = vmatprep.subr.mxu0 %v3319
        %3670 = vmatpush1.msra.mxu0 %v3318
        %3671 = vmatprep.subr.mxu0 %v3327
        %3672 = vmatpush1.msra.mxu0 %v3326
        %3673 = vmatprep.subr.mxu0 %v3335
        %3674 = vmatpush1.msra.mxu0 %v3334
        %3675 = vmatprep.subr.mxu0 0.0
        %3676 = vmatpush1.msra.mxu0 0.0
        %3677 = vmatprep.subr.mxu0 0.0
        %3678 = vmatpush1.msra.mxu0 0.0
        %3679 = vmatprep.subr.mxu0 0.0
        %3680 = vmatpush1.msra.mxu0 0.0
        %3681 = vmatprep.subr.mxu0 0.0
        %3682 = vmatpush1.msra.mxu0 0.0
        %3683 = vmatprep.subr.mxu0 0.0
        %3684 = vmatpush1.msra.mxu0 0.0
        %3685 = vmatprep.subr.mxu0 0.0
        %3686 = vmatpush1.msra.mxu0 0.0
        %3687 = vmatprep.subr.mxu0 0.0
        %3688 = vmatpush1.msra.mxu0 0.0
        %3689 = vmatprep.subr.mxu0 0.0
        %3690 = vmatpush1.msra.mxu0 0.0
        %3691 = vmatprep.subr.mxu0 0.0
        %3692 = vmatpush1.msra.mxu0 0.0
        %3693 = vmatprep.subr.mxu0 0.0
        %3694 = vmatpush1.msra.mxu0 0.0
        %3695 = vmatprep.subr.mxu0 0.0
        %3696 = vmatpush1.msra.mxu0 0.0
        %3697 = vmatprep.subr.mxu0 0.0
        %3698 = vmatpush1.msra.mxu0 0.0
        %3699 = vmatprep.subr.mxu0 0.0
        %3700 = vmatpush1.msra.mxu0 0.0
        %3701 = vmatprep.subr.mxu0 0.0
        %3702 = vmatpush1.msra.mxu0 0.0
        %3703 = vmatprep.subr.mxu0 0.0
        %3704 = vmatpush1.msra.mxu0 0.0
        %3705 = vmatprep.subr.mxu0 0.0
        %3706 = vmatpush1.msra.mxu0 0.0
        %3707 = vmatprep.subr.mxu0 0.0
        %3708 = vmatpush1.msra.mxu0 0.0
        %3709 = vmatprep.subr.mxu0 0.0
        %3710 = vmatpush1.msra.mxu0 0.0
        %3711 = vmatprep.subr.mxu0 0.0
        %3712 = vmatpush1.msra.mxu0 0.0
        %3713 = vmatprep.subr.mxu0 0.0
        %3714 = vmatpush1.msra.mxu0 0.0
        %3715 = vmatprep.subr.mxu0 0.0
        %3716 = vmatpush1.msra.mxu0 0.0
        %3717 = vmatprep.subr.mxu0 0.0
        %3718 = vmatpush1.msra.mxu0 0.0
        %3719 = vmatprep.subr.mxu0 0.0
        %3720 = vmatpush1.msra.mxu0 0.0
        %3721 = vmatprep.subr.mxu0 0.0
        %3722 = vmatpush1.msra.mxu0 0.0
        %3723 = vmatprep.subr.mxu0 0.0
        %3724 = vmatpush1.msra.mxu0 0.0
        %3725 = vmatprep.subr.mxu0 0.0
        %3726 = vmatpush1.msra.mxu0 0.0
        %3727 = vmatprep.subr.mxu0 0.0
        %3728 = vmatpush1.msra.mxu0 0.0
        %3729 = vmatprep.subr.mxu0 0.0
        %3730 = vmatpush1.msra.mxu0 0.0
        %3731 = vmatprep.mubr.f32.mxu0 0.0
        %3732 = vmatmul.mubr.f32.gmra.mrb[0].mxu0 %v3662
        %v3733 = vpop.f32.mrb[0].mxu0
        %v3734 = vadd.f32 %v3419, %v3733
        %v3735 = vpop.f32.mrb[0].mxu0
        %v3736 = vadd.f32 %v3421, %v3735
        %3737 = vmatprep.mubr.f32.mxu0 0.0
        %3738 = vmatmul.mubr.f32.gmra.mrb[0].mxu0 %v3665
        %v3739 = vpop.f32.mrb[0].mxu0
        %v3740 = vadd.f32 %v3425, %v3739
        %v3741 = vpop.f32.mrb[0].mxu0
        %v3742 = vadd.f32 %v3427, %v3741
        %3743 = vdwg.mxu0
        %3744 = vmatprep.subr.mxu0 %v3313
        %3745 = vmatpush1.msra.mxu0 %v3312
        %3746 = vmatprep.subr.mxu0 %v3321
        %3747 = vmatpush1.msra.mxu0 %v3320
        %3748 = vmatprep.subr.mxu0 %v3329
        %3749 = vmatpush1.msra.mxu0 %v3328
        %3750 = vmatprep.subr.mxu0 %v3337
        %3751 = vmatpush1.msra.mxu0 %v3336
        %3752 = vmatprep.subr.mxu0 0.0
        %3753 = vmatpush1.msra.mxu0 0.0
        %3754 = vmatprep.subr.mxu0 0.0
        %3755 = vmatpush1.msra.mxu0 0.0
        %3756 = vmatprep.subr.mxu0 0.0
        %3757 = vmatpush1.msra.mxu0 0.0
        %3758 = vmatprep.subr.mxu0 0.0
        %3759 = vmatpush1.msra.mxu0 0.0
        %3760 = vmatprep.subr.mxu0 0.0
        %3761 = vmatpush1.msra.mxu0 0.0
        %3762 = vmatprep.subr.mxu0 0.0
        %3763 = vmatpush1.msra.mxu0 0.0
        %3764 = vmatprep.subr.mxu0 0.0
        %3765 = vmatpush1.msra.mxu0 0.0
        %3766 = vmatprep.subr.mxu0 0.0
        %3767 = vmatpush1.msra.mxu0 0.0
        %3768 = vmatprep.subr.mxu0 0.0
        %3769 = vmatpush1.msra.mxu0 0.0
        %3770 = vmatprep.subr.mxu0 0.0
        %3771 = vmatpush1.msra.mxu0 0.0
        %3772 = vmatprep.subr.mxu0 0.0
        %3773 = vmatpush1.msra.mxu0 0.0
        %3774 = vmatprep.subr.mxu0 0.0
        %3775 = vmatpush1.msra.mxu0 0.0
        %3776 = vmatprep.subr.mxu0 0.0
        %3777 = vmatpush1.msra.mxu0 0.0
        %3778 = vmatprep.subr.mxu0 0.0
        %3779 = vmatpush1.msra.mxu0 0.0
        %3780 = vmatprep.subr.mxu0 0.0
        %3781 = vmatpush1.msra.mxu0 0.0
        %3782 = vmatprep.subr.mxu0 0.0
        %3783 = vmatpush1.msra.mxu0 0.0
        %3784 = vmatprep.subr.mxu0 0.0
        %3785 = vmatpush1.msra.mxu0 0.0
        %3786 = vmatprep.subr.mxu0 0.0
        %3787 = vmatpush1.msra.mxu0 0.0
        %3788 = vmatprep.subr.mxu0 0.0
        %3789 = vmatpush1.msra.mxu0 0.0
        %3790 = vmatprep.subr.mxu0 0.0
        %3791 = vmatpush1.msra.mxu0 0.0
        %3792 = vmatprep.subr.mxu0 0.0
        %3793 = vmatpush1.msra.mxu0 0.0
        %3794 = vmatprep.subr.mxu0 0.0
        %3795 = vmatpush1.msra.mxu0 0.0
        %3796 = vmatprep.subr.mxu0 0.0
        %3797 = vmatpush1.msra.mxu0 0.0
        %3798 = vmatprep.subr.mxu0 0.0
        %3799 = vmatpush1.msra.mxu0 0.0
        %3800 = vmatprep.subr.mxu0 0.0
        %3801 = vmatpush1.msra.mxu0 0.0
        %3802 = vmatprep.subr.mxu0 0.0
        %3803 = vmatpush1.msra.mxu0 0.0
        %3804 = vmatprep.subr.mxu0 0.0
        %3805 = vmatpush1.msra.mxu0 0.0
        %3806 = vmatprep.subr.mxu0 0.0
        %3807 = vmatpush1.msra.mxu0 0.0
        %3808 = vmatprep.mubr.f32.mxu0 0.0
        %3809 = vmatmul.mubr.f32.gmra.mrb[0].mxu0 %v3662
        %v3810 = vpop.f32.mrb[0].mxu0
        %v3811 = vadd.f32 %v3496, %v3810
        %v3812 = vpop.f32.mrb[0].mxu0
        %v3813 = vadd.f32 %v3498, %v3812
        %3814 = vmatprep.mubr.f32.mxu0 0.0
        %3815 = vmatmul.mubr.f32.gmra.mrb[0].mxu0 %v3665
        %v3816 = vpop.f32.mrb[0].mxu0
        %v3817 = vadd.f32 %v3502, %v3816
        %v3818 = vpop.f32.mrb[0].mxu0
        %v3819 = vadd.f32 %v3504, %v3818
        %3820 = vdwg.mxu0
        %3821 = vmatprep.subr.mxu0 %v3315
        %3822 = vmatpush1.msra.mxu0 %v3314
        %3823 = vmatprep.subr.mxu0 %v3323
        %3824 = vmatpush1.msra.mxu0 %v3322
        %3825 = vmatprep.subr.mxu0 %v3331
        %3826 = vmatpush1.msra.mxu0 %v3330
        %3827 = vmatprep.subr.mxu0 %v3339
        %3828 = vmatpush1.msra.mxu0 %v3338
        %3829 = vmatprep.subr.mxu0 0.0
        %3830 = vmatpush1.msra.mxu0 0.0
        %3831 = vmatprep.subr.mxu0 0.0
        %3832 = vmatpush1.msra.mxu0 0.0
        %3833 = vmatprep.subr.mxu0 0.0
        %3834 = vmatpush1.msra.mxu0 0.0
        %3835 = vmatprep.subr.mxu0 0.0
        %3836 = vmatpush1.msra.mxu0 0.0
        %3837 = vmatprep.subr.mxu0 0.0
        %3838 = vmatpush1.msra.mxu0 0.0
        %3839 = vmatprep.subr.mxu0 0.0
        %3840 = vmatpush1.msra.mxu0 0.0
        %3841 = vmatprep.subr.mxu0 0.0
        %3842 = vmatpush1.msra.mxu0 0.0
        %3843 = vmatprep.subr.mxu0 0.0
        %3844 = vmatpush1.msra.mxu0 0.0
        %3845 = vmatprep.subr.mxu0 0.0
        %3846 = vmatpush1.msra.mxu0 0.0
        %3847 = vmatprep.subr.mxu0 0.0
        %3848 = vmatpush1.msra.mxu0 0.0
        %3849 = vmatprep.subr.mxu0 0.0
        %3850 = vmatpush1.msra.mxu0 0.0
        %3851 = vmatprep.subr.mxu0 0.0
        %3852 = vmatpush1.msra.mxu0 0.0
        %3853 = vmatprep.subr.mxu0 0.0
        %3854 = vmatpush1.msra.mxu0 0.0
        %3855 = vmatprep.subr.mxu0 0.0
        %3856 = vmatpush1.msra.mxu0 0.0
        %3857 = vmatprep.subr.mxu0 0.0
        %3858 = vmatpush1.msra.mxu0 0.0
        %3859 = vmatprep.subr.mxu0 0.0
        %3860 = vmatpush1.msra.mxu0 0.0
        %3861 = vmatprep.subr.mxu0 0.0
        %3862 = vmatpush1.msra.mxu0 0.0
        %3863 = vmatprep.subr.mxu0 0.0
        %3864 = vmatpush1.msra.mxu0 0.0
        %3865 = vmatprep.subr.mxu0 0.0
        %3866 = vmatpush1.msra.mxu0 0.0
        %3867 = vmatprep.subr.mxu0 0.0
        %3868 = vmatpush1.msra.mxu0 0.0
        %3869 = vmatprep.subr.mxu0 0.0
        %3870 = vmatpush1.msra.mxu0 0.0
        %3871 = vmatprep.subr.mxu0 0.0
        %3872 = vmatpush1.msra.mxu0 0.0
        %3873 = vmatprep.subr.mxu0 0.0
        %3874 = vmatpush1.msra.mxu0 0.0
        %3875 = vmatprep.subr.mxu0 0.0
        %3876 = vmatpush1.msra.mxu0 0.0
        %3877 = vmatprep.subr.mxu0 0.0
        %3878 = vmatpush1.msra.mxu0 0.0
        %3879 = vmatprep.subr.mxu0 0.0
        %3880 = vmatpush1.msra.mxu0 0.0
        %3881 = vmatprep.subr.mxu0 0.0
        %3882 = vmatpush1.msra.mxu0 0.0
        %3883 = vmatprep.subr.mxu0 0.0
        %3884 = vmatpush1.msra.mxu0 0.0
        %3885 = vmatprep.mubr.f32.mxu0 0.0
        %3886 = vmatmul.mubr.f32.gmra.mrb[0].mxu0 %v3662
        %v3887 = vpop.f32.mrb[0].mxu0
        %v3888 = vadd.f32 %v3573, %v3887
        %v3889 = vpop.f32.mrb[0].mxu0
        %v3890 = vadd.f32 %v3575, %v3889
        %3891 = vmatprep.mubr.f32.mxu0 0.0
        %3892 = vmatmul.mubr.f32.gmra.mrb[0].mxu0 %v3665
        %v3893 = vpop.f32.mrb[0].mxu0
        %v3894 = vadd.f32 %v3579, %v3893
        %v3895 = vpop.f32.mrb[0].mxu0
        %v3896 = vadd.f32 %v3581, %v3895
        %3897 = vdwg.mxu0
        %3898 = vmatprep.subr.mxu0 %v3317
        %3899 = vmatpush1.msra.mxu0 %v3316
        %3900 = vmatprep.subr.mxu0 %v3325
        %3901 = vmatpush1.msra.mxu0 %v3324
        %3902 = vmatprep.subr.mxu0 %v3333
        %3903 = vmatpush1.msra.mxu0 %v3332
        %3904 = vmatprep.subr.mxu0 %v3341
        %3905 = vmatpush1.msra.mxu0 %v3340
        %3906 = vmatprep.subr.mxu0 0.0
        %3907 = vmatpush1.msra.mxu0 0.0
        %3908 = vmatprep.subr.mxu0 0.0
        %3909 = vmatpush1.msra.mxu0 0.0
        %3910 = vmatprep.subr.mxu0 0.0
        %3911 = vmatpush1.msra.mxu0 0.0
        %3912 = vmatprep.subr.mxu0 0.0
        %3913 = vmatpush1.msra.mxu0 0.0
        %3914 = vmatprep.subr.mxu0 0.0
        %3915 = vmatpush1.msra.mxu0 0.0
        %3916 = vmatprep.subr.mxu0 0.0
        %3917 = vmatpush1.msra.mxu0 0.0
        %3918 = vmatprep.subr.mxu0 0.0
        %3919 = vmatpush1.msra.mxu0 0.0
        %3920 = vmatprep.subr.mxu0 0.0
        %3921 = vmatpush1.msra.mxu0 0.0
        %3922 = vmatprep.subr.mxu0 0.0
        %3923 = vmatpush1.msra.mxu0 0.0
        %3924 = vmatprep.subr.mxu0 0.0
        %3925 = vmatpush1.msra.mxu0 0.0
        %3926 = vmatprep.subr.mxu0 0.0
        %3927 = vmatpush1.msra.mxu0 0.0
        %3928 = vmatprep.subr.mxu0 0.0
        %3929 = vmatpush1.msra.mxu0 0.0
        %3930 = vmatprep.subr.mxu0 0.0
        %3931 = vmatpush1.msra.mxu0 0.0
        %3932 = vmatprep.subr.mxu0 0.0
        %3933 = vmatpush1.msra.mxu0 0.0
        %3934 = vmatprep.subr.mxu0 0.0
        %3935 = vmatpush1.msra.mxu0 0.0
        %3936 = vmatprep.subr.mxu0 0.0
        %3937 = vmatpush1.msra.mxu0 0.0
        %3938 = vmatprep.subr.mxu0 0.0
        %3939 = vmatpush1.msra.mxu0 0.0
        %3940 = vmatprep.subr.mxu0 0.0
        %3941 = vmatpush1.msra.mxu0 0.0
        %3942 = vmatprep.subr.mxu0 0.0
        %3943 = vmatpush1.msra.mxu0 0.0
        %3944 = vmatprep.subr.mxu0 0.0
        %3945 = vmatpush1.msra.mxu0 0.0
        %3946 = vmatprep.subr.mxu0 0.0
        %3947 = vmatpush1.msra.mxu0 0.0
        %3948 = vmatprep.subr.mxu0 0.0
        %3949 = vmatpush1.msra.mxu0 0.0
        %3950 = vmatprep.subr.mxu0 0.0
        %3951 = vmatpush1.msra.mxu0 0.0
        %3952 = vmatprep.subr.mxu0 0.0
        %3953 = vmatpush1.msra.mxu0 0.0
        %3954 = vmatprep.subr.mxu0 0.0
        %3955 = vmatpush1.msra.mxu0 0.0
        %3956 = vmatprep.subr.mxu0 0.0
        %3957 = vmatpush1.msra.mxu0 0.0
        %3958 = vmatprep.subr.mxu0 0.0
        %3959 = vmatpush1.msra.mxu0 0.0
        %3960 = vmatprep.subr.mxu0 0.0
        %3961 = vmatpush1.msra.mxu0 0.0
        %3962 = vmatprep.mubr.f32.mxu0 0.0
        %3963 = vmatmul.mubr.f32.gmra.mrb[0].mxu0 %v3662
        %v3964 = vpop.f32.mrb[0].mxu0
        %v3965 = vadd.f32 %v3650, %v3964
        %v3966 = vpop.f32.mrb[0].mxu0
        %v3967 = vadd.f32 %v3652, %v3966
        %3968 = vmatprep.mubr.f32.mxu0 0.0
        %3969 = vmatmul.mubr.f32.gmra.mrb[0].mxu0 %v3665
        %v3970 = vpop.f32.mrb[0].mxu0
        %v3971 = vadd.f32 %v3656, %v3970
        %v3972 = vpop.f32.mrb[0].mxu0
        %v3973 = vadd.f32 %v3658, %v3972
        %3974 = vdwg.mxu0
        %v3975 = vld [vmem:[%s7] sm:$0xff]
        %v3976 = vld [vmem:[%s7 + $0x8] sm:$0xff]
        %3978 = vset.pattern.permute.xlu0 0
        %3979 = vperm.xlu0 %3978, %v3975
        %v3980 = vpop.permute.xlu0 %3979
        %3983 = vset.pattern.permute.xlu0 0
        %3984 = vperm.xlu0 %3983, %v3976
        %v3985 = vpop.permute.xlu0 %3984
        %v3987 = vadd.f32 %v3734, %v3980
        %v3988 = vadd.f32 %v3736, %v3980
        %v3989 = vadd.f32 %v3811, %v3980
        %v3990 = vadd.f32 %v3813, %v3980
        %v3991 = vadd.f32 %v3888, %v3980
        %v3992 = vadd.f32 %v3890, %v3980
        %v3993 = vadd.f32 %v3965, %v3980
        %v3994 = vadd.f32 %v3967, %v3980
        %v3995 = vadd.f32 %v3740, %v3985
        %v3996 = vadd.f32 %v3742, %v3985
        %v3997 = vadd.f32 %v3817, %v3985
        %v3998 = vadd.f32 %v3819, %v3985
        %v3999 = vadd.f32 %v3894, %v3985
        %v4000 = vadd.f32 %v3896, %v3985
        %v4001 = vadd.f32 %v3971, %v3985
        %v4002 = vadd.f32 %v3973, %v3985
        %v4003 = vld [vmem:[#allocation10] sm:$0xff]
        %v4004 = vld [vmem:[#allocation10 + $0x8] sm:$0xff]
        %4006 = vset.pattern.permute.xlu0 0
        %4007 = vperm.xlu0 %4006, %v4003
        %v4008 = vpop.permute.xlu0 %4007
        %4011 = vset.pattern.permute.xlu0 0
        %4012 = vperm.xlu0 %4011, %v4004
        %v4013 = vpop.permute.xlu0 %4012
        %v4015 = vmul.f32 %v3987, %v4008
        %v4016 = vmul.f32 %v3988, %v4008
        %v4017 = vmul.f32 %v3989, %v4008
        %v4018 = vmul.f32 %v3990, %v4008
        %v4019 = vmul.f32 %v3991, %v4008
        %v4020 = vmul.f32 %v3992, %v4008
        %v4021 = vmul.f32 %v3993, %v4008
        %v4022 = vmul.f32 %v3994, %v4008
        %v4023 = vmul.f32 %v3995, %v4013
        %v4024 = vmul.f32 %v3996, %v4013
        %v4025 = vmul.f32 %v3997, %v4013
        %v4026 = vmul.f32 %v3998, %v4013
        %v4027 = vmul.f32 %v3999, %v4013
        %v4028 = vmul.f32 %v4000, %v4013
        %v4029 = vmul.f32 %v4001, %v4013
        %v4030 = vmul.f32 %v4002, %v4013
        %v4031 = vld [vmem:[#allocation11] sm:$0xff]
        %v4032 = vld [vmem:[#allocation11 + $0x8] sm:$0xff]
        %4034 = vset.pattern.permute.xlu0 0
        %4035 = vperm.xlu0 %4034, %v4031
        %v4036 = vpop.permute.xlu0 %4035
        %4039 = vset.pattern.permute.xlu0 0
        %4040 = vperm.xlu0 %4039, %v4032
        %v4041 = vpop.permute.xlu0 %4040
        %v4043 = vadd.f32 %v4015, %v4036
        %v4044 = vadd.f32 %v4016, %v4036
        %v4045 = vadd.f32 %v4017, %v4036
        %v4046 = vadd.f32 %v4018, %v4036
        %v4047 = vadd.f32 %v4019, %v4036
        %v4048 = vadd.f32 %v4020, %v4036
        %v4049 = vadd.f32 %v4021, %v4036
        %v4050 = vadd.f32 %v4022, %v4036
        %v4051 = vadd.f32 %v4023, %v4041
        %v4052 = vadd.f32 %v4024, %v4041
        %v4053 = vadd.f32 %v4025, %v4041
        %v4054 = vadd.f32 %v4026, %v4041
        %v4055 = vadd.f32 %v4027, %v4041
        %v4056 = vadd.f32 %v4028, %v4041
        %v4057 = vadd.f32 %v4029, %v4041
        %v4058 = vadd.f32 %v4030, %v4041
        %v4059 = vmax.f32 %v4043, 0.0
        %v4060 = vmax.f32 %v4044, 0.0
        %v4061 = vmax.f32 %v4045, 0.0
        %v4062 = vmax.f32 %v4046, 0.0
        %v4063 = vmax.f32 %v4047, 0.0
        %v4064 = vmax.f32 %v4048, 0.0
        %v4065 = vmax.f32 %v4049, 0.0
        %v4066 = vmax.f32 %v4050, 0.0
        %v4067 = vmax.f32 %v4051, 0.0
        %v4068 = vmax.f32 %v4052, 0.0
        %v4069 = vmax.f32 %v4053, 0.0
        %v4070 = vmax.f32 %v4054, 0.0
        %v4071 = vmax.f32 %v4055, 0.0
        %v4072 = vmax.f32 %v4056, 0.0
        %v4073 = vmax.f32 %v4057, 0.0
        %v4074 = vmax.f32 %v4058, 0.0
        %v4075 = vld [vmem:[%s10] sm:$0xff]
        %v4076 = vld [vmem:[%s11] sm:$0xff]
        %v4078 = vsel %vm2760, %v4076, 0
        %4080 = vmatprep.subr.mxu0 %v2776
        %4081 = vmatpush1.msra.mxu0 %v2774
        %4082 = vmatprep.subr.mxu0 0.0
        %4083 = vmatpush1.msra.mxu0 0.0
        %4084 = vmatprep.subr.mxu0 0.0
        %4085 = vmatpush1.msra.mxu0 0.0
        %4086 = vmatprep.subr.mxu0 0.0
        %4087 = vmatpush1.msra.mxu0 0.0
        %4088 = vmatprep.subr.mxu0 0.0
        %4089 = vmatpush1.msra.mxu0 0.0
        %4090 = vmatprep.subr.mxu0 0.0
        %4091 = vmatpush1.msra.mxu0 0.0
        %4092 = vmatprep.subr.mxu0 0.0
        %4093 = vmatpush1.msra.mxu0 0.0
        %4094 = vmatprep.subr.mxu0 0.0
        %4095 = vmatpush1.msra.mxu0 0.0
        %4096 = vmatprep.subr.mxu0 0.0
        %4097 = vmatpush1.msra.mxu0 0.0
        %4098 = vmatprep.subr.mxu0 0.0
        %4099 = vmatpush1.msra.mxu0 0.0
        %4100 = vmatprep.subr.mxu0 0.0
        %4101 = vmatpush1.msra.mxu0 0.0
        %4102 = vmatprep.subr.mxu0 0.0
        %4103 = vmatpush1.msra.mxu0 0.0
        %4104 = vmatprep.subr.mxu0 0.0
        %4105 = vmatpush1.msra.mxu0 0.0
        %4106 = vmatprep.subr.mxu0 0.0
        %4107 = vmatpush1.msra.mxu0 0.0
        %4108 = vmatprep.subr.mxu0 0.0
        %4109 = vmatpush1.msra.mxu0 0.0
        %4110 = vmatprep.subr.mxu0 0.0
        %4111 = vmatpush1.msra.mxu0 0.0
        %4112 = vmatprep.subr.mxu0 0.0
        %4113 = vmatpush1.msra.mxu0 0.0
        %4114 = vmatprep.subr.mxu0 0.0
        %4115 = vmatpush1.msra.mxu0 0.0
        %4116 = vmatprep.subr.mxu0 0.0
        %4117 = vmatpush1.msra.mxu0 0.0
        %4118 = vmatprep.subr.mxu0 0.0
        %4119 = vmatpush1.msra.mxu0 0.0
        %4120 = vmatprep.subr.mxu0 0.0
        %4121 = vmatpush1.msra.mxu0 0.0
        %4122 = vmatprep.subr.mxu0 0.0
        %4123 = vmatpush1.msra.mxu0 0.0
        %4124 = vmatprep.subr.mxu0 0.0
        %4125 = vmatpush1.msra.mxu0 0.0
        %4126 = vmatprep.subr.mxu0 0.0
        %4127 = vmatpush1.msra.mxu0 0.0
        %4128 = vmatprep.subr.mxu0 0.0
        %4129 = vmatpush1.msra.mxu0 0.0
        %4130 = vmatprep.subr.mxu0 0.0
        %4131 = vmatpush1.msra.mxu0 0.0
        %4132 = vmatprep.subr.mxu0 0.0
        %4133 = vmatpush1.msra.mxu0 0.0
        %4134 = vmatprep.subr.mxu0 0.0
        %4135 = vmatpush1.msra.mxu0 0.0
        %4136 = vmatprep.subr.mxu0 0.0
        %4137 = vmatpush1.msra.mxu0 0.0
        %4138 = vmatprep.subr.mxu0 0.0
        %4139 = vmatpush1.msra.mxu0 0.0
        %4140 = vmatprep.subr.mxu0 0.0
        %4141 = vmatpush1.msra.mxu0 0.0
        %4142 = vmatprep.subr.mxu0 0.0
        %4143 = vmatpush1.msra.mxu0 0.0
        %4144 = vmatprep.mubr.f32.mxu0 0.0
        %4145 = vmatmul.mubr.f32.gmra.mrb[0].mxu0 %v4078
        %v4146 = vpop.f32.mrb[0].mxu0
        %v4147 = vadd.f32 0.0, %v4146
        %v4148 = vpop.f32.mrb[0].mxu0
        %v4149 = vadd.f32 0.0, %v4148
        %4150 = vdwg.mxu0
        %4151 = vmatprep.subr.mxu0 %v2780
        %4152 = vmatpush1.msra.mxu0 %v2778
        %4153 = vmatprep.subr.mxu0 0.0
        %4154 = vmatpush1.msra.mxu0 0.0
        %4155 = vmatprep.subr.mxu0 0.0
        %4156 = vmatpush1.msra.mxu0 0.0
        %4157 = vmatprep.subr.mxu0 0.0
        %4158 = vmatpush1.msra.mxu0 0.0
        %4159 = vmatprep.subr.mxu0 0.0
        %4160 = vmatpush1.msra.mxu0 0.0
        %4161 = vmatprep.subr.mxu0 0.0
        %4162 = vmatpush1.msra.mxu0 0.0
        %4163 = vmatprep.subr.mxu0 0.0
        %4164 = vmatpush1.msra.mxu0 0.0
        %4165 = vmatprep.subr.mxu0 0.0
        %4166 = vmatpush1.msra.mxu0 0.0
        %4167 = vmatprep.subr.mxu0 0.0
        %4168 = vmatpush1.msra.mxu0 0.0
        %4169 = vmatprep.subr.mxu0 0.0
        %4170 = vmatpush1.msra.mxu0 0.0
        %4171 = vmatprep.subr.mxu0 0.0
        %4172 = vmatpush1.msra.mxu0 0.0
        %4173 = vmatprep.subr.mxu0 0.0
        %4174 = vmatpush1.msra.mxu0 0.0
        %4175 = vmatprep.subr.mxu0 0.0
        %4176 = vmatpush1.msra.mxu0 0.0
        %4177 = vmatprep.subr.mxu0 0.0
        %4178 = vmatpush1.msra.mxu0 0.0
        %4179 = vmatprep.subr.mxu0 0.0
        %4180 = vmatpush1.msra.mxu0 0.0
        %4181 = vmatprep.subr.mxu0 0.0
        %4182 = vmatpush1.msra.mxu0 0.0
        %4183 = vmatprep.subr.mxu0 0.0
        %4184 = vmatpush1.msra.mxu0 0.0
        %4185 = vmatprep.subr.mxu0 0.0
        %4186 = vmatpush1.msra.mxu0 0.0
        %4187 = vmatprep.subr.mxu0 0.0
        %4188 = vmatpush1.msra.mxu0 0.0
        %4189 = vmatprep.subr.mxu0 0.0
        %4190 = vmatpush1.msra.mxu0 0.0
        %4191 = vmatprep.subr.mxu0 0.0
        %4192 = vmatpush1.msra.mxu0 0.0
        %4193 = vmatprep.subr.mxu0 0.0
        %4194 = vmatpush1.msra.mxu0 0.0
        %4195 = vmatprep.subr.mxu0 0.0
        %4196 = vmatpush1.msra.mxu0 0.0
        %4197 = vmatprep.subr.mxu0 0.0
        %4198 = vmatpush1.msra.mxu0 0.0
        %4199 = vmatprep.subr.mxu0 0.0
        %4200 = vmatpush1.msra.mxu0 0.0
        %4201 = vmatprep.subr.mxu0 0.0
        %4202 = vmatpush1.msra.mxu0 0.0
        %4203 = vmatprep.subr.mxu0 0.0
        %4204 = vmatpush1.msra.mxu0 0.0
        %4205 = vmatprep.subr.mxu0 0.0
        %4206 = vmatpush1.msra.mxu0 0.0
        %4207 = vmatprep.subr.mxu0 0.0
        %4208 = vmatpush1.msra.mxu0 0.0
        %4209 = vmatprep.subr.mxu0 0.0
        %4210 = vmatpush1.msra.mxu0 0.0
        %4211 = vmatprep.subr.mxu0 0.0
        %4212 = vmatpush1.msra.mxu0 0.0
        %4213 = vmatprep.subr.mxu0 0.0
        %4214 = vmatpush1.msra.mxu0 0.0
        %4215 = vmatprep.mubr.f32.mxu0 0.0
        %4216 = vmatmul.mubr.f32.gmra.mrb[0].mxu0 %v4078
        %v4217 = vpop.f32.mrb[0].mxu0
        %v4218 = vadd.f32 0.0, %v4217
        %v4219 = vpop.f32.mrb[0].mxu0
        %v4220 = vadd.f32 0.0, %v4219
        %4221 = vdwg.mxu0
        %4222 = vmatprep.subr.mxu0 %v2784
        %4223 = vmatpush1.msra.mxu0 %v2782
        %4224 = vmatprep.subr.mxu0 0.0
        %4225 = vmatpush1.msra.mxu0 0.0
        %4226 = vmatprep.subr.mxu0 0.0
        %4227 = vmatpush1.msra.mxu0 0.0
        %4228 = vmatprep.subr.mxu0 0.0
        %4229 = vmatpush1.msra.mxu0 0.0
        %4230 = vmatprep.subr.mxu0 0.0
        %4231 = vmatpush1.msra.mxu0 0.0
        %4232 = vmatprep.subr.mxu0 0.0
        %4233 = vmatpush1.msra.mxu0 0.0
        %4234 = vmatprep.subr.mxu0 0.0
        %4235 = vmatpush1.msra.mxu0 0.0
        %4236 = vmatprep.subr.mxu0 0.0
        %4237 = vmatpush1.msra.mxu0 0.0
        %4238 = vmatprep.subr.mxu0 0.0
        %4239 = vmatpush1.msra.mxu0 0.0
        %4240 = vmatprep.subr.mxu0 0.0
        %4241 = vmatpush1.msra.mxu0 0.0
        %4242 = vmatprep.subr.mxu0 0.0
        %4243 = vmatpush1.msra.mxu0 0.0
        %4244 = vmatprep.subr.mxu0 0.0
        %4245 = vmatpush1.msra.mxu0 0.0
        %4246 = vmatprep.subr.mxu0 0.0
        %4247 = vmatpush1.msra.mxu0 0.0
        %4248 = vmatprep.subr.mxu0 0.0
        %4249 = vmatpush1.msra.mxu0 0.0
        %4250 = vmatprep.subr.mxu0 0.0
        %4251 = vmatpush1.msra.mxu0 0.0
        %4252 = vmatprep.subr.mxu0 0.0
        %4253 = vmatpush1.msra.mxu0 0.0
        %4254 = vmatprep.subr.mxu0 0.0
        %4255 = vmatpush1.msra.mxu0 0.0
        %4256 = vmatprep.subr.mxu0 0.0
        %4257 = vmatpush1.msra.mxu0 0.0
        %4258 = vmatprep.subr.mxu0 0.0
        %4259 = vmatpush1.msra.mxu0 0.0
        %4260 = vmatprep.subr.mxu0 0.0
        %4261 = vmatpush1.msra.mxu0 0.0
        %4262 = vmatprep.subr.mxu0 0.0
        %4263 = vmatpush1.msra.mxu0 0.0
        %4264 = vmatprep.subr.mxu0 0.0
        %4265 = vmatpush1.msra.mxu0 0.0
        %4266 = vmatprep.subr.mxu0 0.0
        %4267 = vmatpush1.msra.mxu0 0.0
        %4268 = vmatprep.subr.mxu0 0.0
        %4269 = vmatpush1.msra.mxu0 0.0
        %4270 = vmatprep.subr.mxu0 0.0
        %4271 = vmatpush1.msra.mxu0 0.0
        %4272 = vmatprep.subr.mxu0 0.0
        %4273 = vmatpush1.msra.mxu0 0.0
        %4274 = vmatprep.subr.mxu0 0.0
        %4275 = vmatpush1.msra.mxu0 0.0
        %4276 = vmatprep.subr.mxu0 0.0
        %4277 = vmatpush1.msra.mxu0 0.0
        %4278 = vmatprep.subr.mxu0 0.0
        %4279 = vmatpush1.msra.mxu0 0.0
        %4280 = vmatprep.subr.mxu0 0.0
        %4281 = vmatpush1.msra.mxu0 0.0
        %4282 = vmatprep.subr.mxu0 0.0
        %4283 = vmatpush1.msra.mxu0 0.0
        %4284 = vmatprep.subr.mxu0 0.0
        %4285 = vmatpush1.msra.mxu0 0.0
        %4286 = vmatprep.mubr.f32.mxu0 0.0
        %4287 = vmatmul.mubr.f32.gmra.mrb[0].mxu0 %v4078
        %v4288 = vpop.f32.mrb[0].mxu0
        %v4289 = vadd.f32 0.0, %v4288
        %v4290 = vpop.f32.mrb[0].mxu0
        %v4291 = vadd.f32 0.0, %v4290
        %4292 = vdwg.mxu0
        %4293 = vmatprep.subr.mxu0 %v2788
        %4294 = vmatpush1.msra.mxu0 %v2786
        %4295 = vmatprep.subr.mxu0 0.0
        %4296 = vmatpush1.msra.mxu0 0.0
        %4297 = vmatprep.subr.mxu0 0.0
        %4298 = vmatpush1.msra.mxu0 0.0
        %4299 = vmatprep.subr.mxu0 0.0
        %4300 = vmatpush1.msra.mxu0 0.0
        %4301 = vmatprep.subr.mxu0 0.0
        %4302 = vmatpush1.msra.mxu0 0.0
        %4303 = vmatprep.subr.mxu0 0.0
        %4304 = vmatpush1.msra.mxu0 0.0
        %4305 = vmatprep.subr.mxu0 0.0
        %4306 = vmatpush1.msra.mxu0 0.0
        %4307 = vmatprep.subr.mxu0 0.0
        %4308 = vmatpush1.msra.mxu0 0.0
        %4309 = vmatprep.subr.mxu0 0.0
        %4310 = vmatpush1.msra.mxu0 0.0
        %4311 = vmatprep.subr.mxu0 0.0
        %4312 = vmatpush1.msra.mxu0 0.0
        %4313 = vmatprep.subr.mxu0 0.0
        %4314 = vmatpush1.msra.mxu0 0.0
        %4315 = vmatprep.subr.mxu0 0.0
        %4316 = vmatpush1.msra.mxu0 0.0
        %4317 = vmatprep.subr.mxu0 0.0
        %4318 = vmatpush1.msra.mxu0 0.0
        %4319 = vmatprep.subr.mxu0 0.0
        %4320 = vmatpush1.msra.mxu0 0.0
        %4321 = vmatprep.subr.mxu0 0.0
        %4322 = vmatpush1.msra.mxu0 0.0
        %4323 = vmatprep.subr.mxu0 0.0
        %4324 = vmatpush1.msra.mxu0 0.0
        %4325 = vmatprep.subr.mxu0 0.0
        %4326 = vmatpush1.msra.mxu0 0.0
        %4327 = vmatprep.subr.mxu0 0.0
        %4328 = vmatpush1.msra.mxu0 0.0
        %4329 = vmatprep.subr.mxu0 0.0
        %4330 = vmatpush1.msra.mxu0 0.0
        %4331 = vmatprep.subr.mxu0 0.0
        %4332 = vmatpush1.msra.mxu0 0.0
        %4333 = vmatprep.subr.mxu0 0.0
        %4334 = vmatpush1.msra.mxu0 0.0
        %4335 = vmatprep.subr.mxu0 0.0
        %4336 = vmatpush1.msra.mxu0 0.0
        %4337 = vmatprep.subr.mxu0 0.0
        %4338 = vmatpush1.msra.mxu0 0.0
        %4339 = vmatprep.subr.mxu0 0.0
        %4340 = vmatpush1.msra.mxu0 0.0
        %4341 = vmatprep.subr.mxu0 0.0
        %4342 = vmatpush1.msra.mxu0 0.0
        %4343 = vmatprep.subr.mxu0 0.0
        %4344 = vmatpush1.msra.mxu0 0.0
        %4345 = vmatprep.subr.mxu0 0.0
        %4346 = vmatpush1.msra.mxu0 0.0
        %4347 = vmatprep.subr.mxu0 0.0
        %4348 = vmatpush1.msra.mxu0 0.0
        %4349 = vmatprep.subr.mxu0 0.0
        %4350 = vmatpush1.msra.mxu0 0.0
        %4351 = vmatprep.subr.mxu0 0.0
        %4352 = vmatpush1.msra.mxu0 0.0
        %4353 = vmatprep.subr.mxu0 0.0
        %4354 = vmatpush1.msra.mxu0 0.0
        %4355 = vmatprep.subr.mxu0 0.0
        %4356 = vmatpush1.msra.mxu0 0.0
        %4357 = vmatprep.mubr.f32.mxu0 0.0
        %4358 = vmatmul.mubr.f32.gmra.mrb[0].mxu0 %v4078
        %v4359 = vpop.f32.mrb[0].mxu0
        %v4360 = vadd.f32 0.0, %v4359
        %v4361 = vpop.f32.mrb[0].mxu0
        %v4362 = vadd.f32 0.0, %v4361
        %4363 = vdwg.mxu0
        %vm4364 = vcmask 130048
        %v4366 = vsel %vm4364, %v4075, 0
        %4368 = vmatprep.subr.mxu0 %v4060
        %4369 = vmatpush1.msra.mxu0 %v4059
        %4370 = vmatprep.subr.mxu0 %v4068
        %4371 = vmatpush1.msra.mxu0 %v4067
        %4372 = vmatprep.subr.mxu0 0.0
        %4373 = vmatpush1.msra.mxu0 0.0
        %4374 = vmatprep.subr.mxu0 0.0
        %4375 = vmatpush1.msra.mxu0 0.0
        %4376 = vmatprep.subr.mxu0 0.0
        %4377 = vmatpush1.msra.mxu0 0.0
        %4378 = vmatprep.subr.mxu0 0.0
        %4379 = vmatpush1.msra.mxu0 0.0
        %4380 = vmatprep.subr.mxu0 0.0
        %4381 = vmatpush1.msra.mxu0 0.0
        %4382 = vmatprep.subr.mxu0 0.0
        %4383 = vmatpush1.msra.mxu0 0.0
        %4384 = vmatprep.subr.mxu0 0.0
        %4385 = vmatpush1.msra.mxu0 0.0
        %4386 = vmatprep.subr.mxu0 0.0
        %4387 = vmatpush1.msra.mxu0 0.0
        %4388 = vmatprep.subr.mxu0 0.0
        %4389 = vmatpush1.msra.mxu0 0.0
        %4390 = vmatprep.subr.mxu0 0.0
        %4391 = vmatpush1.msra.mxu0 0.0
        %4392 = vmatprep.subr.mxu0 0.0
        %4393 = vmatpush1.msra.mxu0 0.0
        %4394 = vmatprep.subr.mxu0 0.0
        %4395 = vmatpush1.msra.mxu0 0.0
        %4396 = vmatprep.subr.mxu0 0.0
        %4397 = vmatpush1.msra.mxu0 0.0
        %4398 = vmatprep.subr.mxu0 0.0
        %4399 = vmatpush1.msra.mxu0 0.0
        %4400 = vmatprep.subr.mxu0 0.0
        %4401 = vmatpush1.msra.mxu0 0.0
        %4402 = vmatprep.subr.mxu0 0.0
        %4403 = vmatpush1.msra.mxu0 0.0
        %4404 = vmatprep.subr.mxu0 0.0
        %4405 = vmatpush1.msra.mxu0 0.0
        %4406 = vmatprep.subr.mxu0 0.0
        %4407 = vmatpush1.msra.mxu0 0.0
        %4408 = vmatprep.subr.mxu0 0.0
        %4409 = vmatpush1.msra.mxu0 0.0
        %4410 = vmatprep.subr.mxu0 0.0
        %4411 = vmatpush1.msra.mxu0 0.0
        %4412 = vmatprep.subr.mxu0 0.0
        %4413 = vmatpush1.msra.mxu0 0.0
        %4414 = vmatprep.subr.mxu0 0.0
        %4415 = vmatpush1.msra.mxu0 0.0
        %4416 = vmatprep.subr.mxu0 0.0
        %4417 = vmatpush1.msra.mxu0 0.0
        %4418 = vmatprep.subr.mxu0 0.0
        %4419 = vmatpush1.msra.mxu0 0.0
        %4420 = vmatprep.subr.mxu0 0.0
        %4421 = vmatpush1.msra.mxu0 0.0
        %4422 = vmatprep.subr.mxu0 0.0
        %4423 = vmatpush1.msra.mxu0 0.0
        %4424 = vmatprep.subr.mxu0 0.0
        %4425 = vmatpush1.msra.mxu0 0.0
        %4426 = vmatprep.subr.mxu0 0.0
        %4427 = vmatpush1.msra.mxu0 0.0
        %4428 = vmatprep.subr.mxu0 0.0
        %4429 = vmatpush1.msra.mxu0 0.0
        %4430 = vmatprep.subr.mxu0 0.0
        %4431 = vmatpush1.msra.mxu0 0.0
        %4432 = vmatprep.mubr.f32.mxu0 0.0
        %4433 = vmatmul.mubr.f32.gmra.mrb[0].mxu0 %v4366
        %v4434 = vpop.f32.mrb[0].mxu0
        %v4435 = vadd.f32 %v4147, %v4434
        %v4436 = vpop.f32.mrb[0].mxu0
        %v4437 = vadd.f32 %v4149, %v4436
        %4438 = vdwg.mxu0
        %4439 = vmatprep.subr.mxu0 %v4062
        %4440 = vmatpush1.msra.mxu0 %v4061
        %4441 = vmatprep.subr.mxu0 %v4070
        %4442 = vmatpush1.msra.mxu0 %v4069
        %4443 = vmatprep.subr.mxu0 0.0
        %4444 = vmatpush1.msra.mxu0 0.0
        %4445 = vmatprep.subr.mxu0 0.0
        %4446 = vmatpush1.msra.mxu0 0.0
        %4447 = vmatprep.subr.mxu0 0.0
        %4448 = vmatpush1.msra.mxu0 0.0
        %4449 = vmatprep.subr.mxu0 0.0
        %4450 = vmatpush1.msra.mxu0 0.0
        %4451 = vmatprep.subr.mxu0 0.0
        %4452 = vmatpush1.msra.mxu0 0.0
        %4453 = vmatprep.subr.mxu0 0.0
        %4454 = vmatpush1.msra.mxu0 0.0
        %4455 = vmatprep.subr.mxu0 0.0
        %4456 = vmatpush1.msra.mxu0 0.0
        %4457 = vmatprep.subr.mxu0 0.0
        %4458 = vmatpush1.msra.mxu0 0.0
        %4459 = vmatprep.subr.mxu0 0.0
        %4460 = vmatpush1.msra.mxu0 0.0
        %4461 = vmatprep.subr.mxu0 0.0
        %4462 = vmatpush1.msra.mxu0 0.0
        %4463 = vmatprep.subr.mxu0 0.0
        %4464 = vmatpush1.msra.mxu0 0.0
        %4465 = vmatprep.subr.mxu0 0.0
        %4466 = vmatpush1.msra.mxu0 0.0
        %4467 = vmatprep.subr.mxu0 0.0
        %4468 = vmatpush1.msra.mxu0 0.0
        %4469 = vmatprep.subr.mxu0 0.0
        %4470 = vmatpush1.msra.mxu0 0.0
        %4471 = vmatprep.subr.mxu0 0.0
        %4472 = vmatpush1.msra.mxu0 0.0
        %4473 = vmatprep.subr.mxu0 0.0
        %4474 = vmatpush1.msra.mxu0 0.0
        %4475 = vmatprep.subr.mxu0 0.0
        %4476 = vmatpush1.msra.mxu0 0.0
        %4477 = vmatprep.subr.mxu0 0.0
        %4478 = vmatpush1.msra.mxu0 0.0
        %4479 = vmatprep.subr.mxu0 0.0
        %4480 = vmatpush1.msra.mxu0 0.0
        %4481 = vmatprep.subr.mxu0 0.0
        %4482 = vmatpush1.msra.mxu0 0.0
        %4483 = vmatprep.subr.mxu0 0.0
        %4484 = vmatpush1.msra.mxu0 0.0
        %4485 = vmatprep.subr.mxu0 0.0
        %4486 = vmatpush1.msra.mxu0 0.0
        %4487 = vmatprep.subr.mxu0 0.0
        %4488 = vmatpush1.msra.mxu0 0.0
        %4489 = vmatprep.subr.mxu0 0.0
        %4490 = vmatpush1.msra.mxu0 0.0
        %4491 = vmatprep.subr.mxu0 0.0
        %4492 = vmatpush1.msra.mxu0 0.0
        %4493 = vmatprep.subr.mxu0 0.0
        %4494 = vmatpush1.msra.mxu0 0.0
        %4495 = vmatprep.subr.mxu0 0.0
        %4496 = vmatpush1.msra.mxu0 0.0
        %4497 = vmatprep.subr.mxu0 0.0
        %4498 = vmatpush1.msra.mxu0 0.0
        %4499 = vmatprep.subr.mxu0 0.0
        %4500 = vmatpush1.msra.mxu0 0.0
        %4501 = vmatprep.subr.mxu0 0.0
        %4502 = vmatpush1.msra.mxu0 0.0
        %4503 = vmatprep.mubr.f32.mxu0 0.0
        %4504 = vmatmul.mubr.f32.gmra.mrb[0].mxu0 %v4366
        %v4505 = vpop.f32.mrb[0].mxu0
        %v4506 = vadd.f32 %v4218, %v4505
        %v4507 = vpop.f32.mrb[0].mxu0
        %v4508 = vadd.f32 %v4220, %v4507
        %4509 = vdwg.mxu0
        %4510 = vmatprep.subr.mxu0 %v4064
        %4511 = vmatpush1.msra.mxu0 %v4063
        %4512 = vmatprep.subr.mxu0 %v4072
        %4513 = vmatpush1.msra.mxu0 %v4071
        %4514 = vmatprep.subr.mxu0 0.0
        %4515 = vmatpush1.msra.mxu0 0.0
        %4516 = vmatprep.subr.mxu0 0.0
        %4517 = vmatpush1.msra.mxu0 0.0
        %4518 = vmatprep.subr.mxu0 0.0
        %4519 = vmatpush1.msra.mxu0 0.0
        %4520 = vmatprep.subr.mxu0 0.0
        %4521 = vmatpush1.msra.mxu0 0.0
        %4522 = vmatprep.subr.mxu0 0.0
        %4523 = vmatpush1.msra.mxu0 0.0
        %4524 = vmatprep.subr.mxu0 0.0
        %4525 = vmatpush1.msra.mxu0 0.0
        %4526 = vmatprep.subr.mxu0 0.0
        %4527 = vmatpush1.msra.mxu0 0.0
        %4528 = vmatprep.subr.mxu0 0.0
        %4529 = vmatpush1.msra.mxu0 0.0
        %4530 = vmatprep.subr.mxu0 0.0
        %4531 = vmatpush1.msra.mxu0 0.0
        %4532 = vmatprep.subr.mxu0 0.0
        %4533 = vmatpush1.msra.mxu0 0.0
        %4534 = vmatprep.subr.mxu0 0.0
        %4535 = vmatpush1.msra.mxu0 0.0
        %4536 = vmatprep.subr.mxu0 0.0
        %4537 = vmatpush1.msra.mxu0 0.0
        %4538 = vmatprep.subr.mxu0 0.0
        %4539 = vmatpush1.msra.mxu0 0.0
        %4540 = vmatprep.subr.mxu0 0.0
        %4541 = vmatpush1.msra.mxu0 0.0
        %4542 = vmatprep.subr.mxu0 0.0
        %4543 = vmatpush1.msra.mxu0 0.0
        %4544 = vmatprep.subr.mxu0 0.0
        %4545 = vmatpush1.msra.mxu0 0.0
        %4546 = vmatprep.subr.mxu0 0.0
        %4547 = vmatpush1.msra.mxu0 0.0
        %4548 = vmatprep.subr.mxu0 0.0
        %4549 = vmatpush1.msra.mxu0 0.0
        %4550 = vmatprep.subr.mxu0 0.0
        %4551 = vmatpush1.msra.mxu0 0.0
        %4552 = vmatprep.subr.mxu0 0.0
        %4553 = vmatpush1.msra.mxu0 0.0
        %4554 = vmatprep.subr.mxu0 0.0
        %4555 = vmatpush1.msra.mxu0 0.0
        %4556 = vmatprep.subr.mxu0 0.0
        %4557 = vmatpush1.msra.mxu0 0.0
        %4558 = vmatprep.subr.mxu0 0.0
        %4559 = vmatpush1.msra.mxu0 0.0
        %4560 = vmatprep.subr.mxu0 0.0
        %4561 = vmatpush1.msra.mxu0 0.0
        %4562 = vmatprep.subr.mxu0 0.0
        %4563 = vmatpush1.msra.mxu0 0.0
        %4564 = vmatprep.subr.mxu0 0.0
        %4565 = vmatpush1.msra.mxu0 0.0
        %4566 = vmatprep.subr.mxu0 0.0
        %4567 = vmatpush1.msra.mxu0 0.0
        %4568 = vmatprep.subr.mxu0 0.0
        %4569 = vmatpush1.msra.mxu0 0.0
        %4570 = vmatprep.subr.mxu0 0.0
        %4571 = vmatpush1.msra.mxu0 0.0
        %4572 = vmatprep.subr.mxu0 0.0
        %4573 = vmatpush1.msra.mxu0 0.0
        %4574 = vmatprep.mubr.f32.mxu0 0.0
        %4575 = vmatmul.mubr.f32.gmra.mrb[0].mxu0 %v4366
        %v4576 = vpop.f32.mrb[0].mxu0
        %v4577 = vadd.f32 %v4289, %v4576
        %v4578 = vpop.f32.mrb[0].mxu0
        %v4579 = vadd.f32 %v4291, %v4578
        %4580 = vdwg.mxu0
        %4581 = vmatprep.subr.mxu0 %v4066
        %4582 = vmatpush1.msra.mxu0 %v4065
        %4583 = vmatprep.subr.mxu0 %v4074
        %4584 = vmatpush1.msra.mxu0 %v4073
        %4585 = vmatprep.subr.mxu0 0.0
        %4586 = vmatpush1.msra.mxu0 0.0
        %4587 = vmatprep.subr.mxu0 0.0
        %4588 = vmatpush1.msra.mxu0 0.0
        %4589 = vmatprep.subr.mxu0 0.0
        %4590 = vmatpush1.msra.mxu0 0.0
        %4591 = vmatprep.subr.mxu0 0.0
        %4592 = vmatpush1.msra.mxu0 0.0
        %4593 = vmatprep.subr.mxu0 0.0
        %4594 = vmatpush1.msra.mxu0 0.0
        %4595 = vmatprep.subr.mxu0 0.0
        %4596 = vmatpush1.msra.mxu0 0.0
        %4597 = vmatprep.subr.mxu0 0.0
        %4598 = vmatpush1.msra.mxu0 0.0
        %4599 = vmatprep.subr.mxu0 0.0
        %4600 = vmatpush1.msra.mxu0 0.0
        %4601 = vmatprep.subr.mxu0 0.0
        %4602 = vmatpush1.msra.mxu0 0.0
        %4603 = vmatprep.subr.mxu0 0.0
        %4604 = vmatpush1.msra.mxu0 0.0
        %4605 = vmatprep.subr.mxu0 0.0
        %4606 = vmatpush1.msra.mxu0 0.0
        %4607 = vmatprep.subr.mxu0 0.0
        %4608 = vmatpush1.msra.mxu0 0.0
        %4609 = vmatprep.subr.mxu0 0.0
        %4610 = vmatpush1.msra.mxu0 0.0
        %4611 = vmatprep.subr.mxu0 0.0
        %4612 = vmatpush1.msra.mxu0 0.0
        %4613 = vmatprep.subr.mxu0 0.0
        %4614 = vmatpush1.msra.mxu0 0.0
        %4615 = vmatprep.subr.mxu0 0.0
        %4616 = vmatpush1.msra.mxu0 0.0
        %4617 = vmatprep.subr.mxu0 0.0
        %4618 = vmatpush1.msra.mxu0 0.0
        %4619 = vmatprep.subr.mxu0 0.0
        %4620 = vmatpush1.msra.mxu0 0.0
        %4621 = vmatprep.subr.mxu0 0.0
        %4622 = vmatpush1.msra.mxu0 0.0
        %4623 = vmatprep.subr.mxu0 0.0
        %4624 = vmatpush1.msra.mxu0 0.0
        %4625 = vmatprep.subr.mxu0 0.0
        %4626 = vmatpush1.msra.mxu0 0.0
        %4627 = vmatprep.subr.mxu0 0.0
        %4628 = vmatpush1.msra.mxu0 0.0
        %4629 = vmatprep.subr.mxu0 0.0
        %4630 = vmatpush1.msra.mxu0 0.0
        %4631 = vmatprep.subr.mxu0 0.0
        %4632 = vmatpush1.msra.mxu0 0.0
        %4633 = vmatprep.subr.mxu0 0.0
        %4634 = vmatpush1.msra.mxu0 0.0
        %4635 = vmatprep.subr.mxu0 0.0
        %4636 = vmatpush1.msra.mxu0 0.0
        %4637 = vmatprep.subr.mxu0 0.0
        %4638 = vmatpush1.msra.mxu0 0.0
        %4639 = vmatprep.subr.mxu0 0.0
        %4640 = vmatpush1.msra.mxu0 0.0
        %4641 = vmatprep.subr.mxu0 0.0
        %4642 = vmatpush1.msra.mxu0 0.0
        %4643 = vmatprep.subr.mxu0 0.0
        %4644 = vmatpush1.msra.mxu0 0.0
        %4645 = vmatprep.mubr.f32.mxu0 0.0
        %4646 = vmatmul.mubr.f32.gmra.mrb[0].mxu0 %v4366
        %v4647 = vpop.f32.mrb[0].mxu0
        %v4648 = vadd.f32 %v4360, %v4647
        %v4649 = vpop.f32.mrb[0].mxu0
        %v4650 = vadd.f32 %v4362, %v4649
        %4651 = vdwg.mxu0
        %v4652 = vld [vmem:[%s12] sm:$0xff]
        %4654 = vset.pattern.permute.xlu0 0
        %4655 = vperm.xlu0 %4654, %v4652
        %v4656 = vpop.permute.xlu0 %4655
        %v4658 = vadd.f32 %v4435, %v4656
        %v4659 = vadd.f32 %v4437, %v4656
        %v4660 = vadd.f32 %v4506, %v4656
        %v4661 = vadd.f32 %v4508, %v4656
        %v4662 = vadd.f32 %v4577, %v4656
        %v4663 = vadd.f32 %v4579, %v4656
        %v4664 = vadd.f32 %v4648, %v4656
        %v4665 = vadd.f32 %v4650, %v4656
        %v4666 = vadd.f32 %v4658, 0.0
        %v4667 = vmul.f32 %v4658, %v4658
        %v4668 = vadd.f32 %v4667, 0.0
        %v4669 = vadd.f32 %v4666, %v4659
        %v4670 = vmul.f32 %v4659, %v4659
        %v4671 = vadd.f32 %v4668, %v4670
        %v4672 = vadd.f32 %v4669, %v4660
        %v4673 = vmul.f32 %v4660, %v4660
        %v4674 = vadd.f32 %v4671, %v4673
        %v4675 = vadd.f32 %v4672, %v4661
        %v4676 = vmul.f32 %v4661, %v4661
        %v4677 = vadd.f32 %v4674, %v4676
        %v4678 = vadd.f32 %v4675, %v4662
        %v4679 = vmul.f32 %v4662, %v4662
        %v4680 = vadd.f32 %v4677, %v4679
        %v4681 = vadd.f32 %v4678, %v4663
        %v4682 = vmul.f32 %v4663, %v4663
        %v4683 = vadd.f32 %v4680, %v4682
        %v4684 = vadd.f32 %v4681, %v4664
        %v4685 = vmul.f32 %v4664, %v4664
        %v4686 = vadd.f32 %v4683, %v4685
        %v4687 = vadd.f32 %v4684, %v4665
        %v4688 = vmul.f32 %v4665, %v4665
        %v4689 = vadd.f32 %v4686, %v4688
        %v4690 = vld [vmem:[#allocation6] sm:$0xff]
        %v4691 = vadd.f32 %v4690, %v4687
        %4692 = vst [vmem:[#allocation6] sm:$0xff] %v4691
        %v4693 = vld [vmem:[#allocation7] sm:$0xff]
        %v4694 = vadd.f32 %v4693, %v4689
        %4695 = vst [vmem:[#allocation7] sm:$0xff] %v4694
      $region120: #{tpu_custom_call.1} parent=91 // pred_fallthru
        _
      // Predicated region
      $region121: #{tpu_custom_call.1} parent=91 // pred_check
        %p4696 = pneg %p816
      $region122: #{tpu_custom_call.1} parent=91 // pred_check_branch
        %4698 = sbr.rel (%p4696) target = $region124
      $region123: #{tpu_custom_call.1} parent=91 // pred_region
        %v4699 = vld [vmem:[%s630] sm:$0xff]
        %v4700 = vld [vmem:[%s630 + $0x8] sm:$0xff]
        %v4701 = vld [vmem:[%s630 + $0x10] sm:$0xff]
        %v4702 = vld [vmem:[%s630 + $0x18] sm:$0xff]
        %v4703 = vld [vmem:[%s2] sm:$0xff]
        %v4704 = vld [vmem:[%s2 + $0x8] sm:$0xff]
        %v4705 = vld [vmem:[%s2 + $0x10] sm:$0xff]
        %v4706 = vld [vmem:[%s2 + $0x18] sm:$0xff]
        %v4711 = vcombine.high %v661, %v661
        %v4712 = vcombine.high %v662, %v662
        %v4713 = vcombine.high %v663, %v663
        %v4714 = vcombine.high %v664, %v664
        %vm4715 = vcmask 23552
        %v4717 = vsel %vm4715, %v4703, 0
        %v4720 = vsel %vm4715, %v4704, 0
        %v4723 = vsel %vm4715, %v4705, 0
        %v4726 = vsel %vm4715, %v4706, 0
        %vm4728 = vcmask 1042432
        %v4729 = vsel %vm4728, %v661, 0
        %v4731 = vsel %vm4728, %v4711, 0
        %v4733 = vsel %vm4728, %v662, 0
        %v4735 = vsel %vm4728, %v4712, 0
        %v4737 = vsel %vm4728, %v663, 0
        %v4739 = vsel %vm4728, %v4713, 0
        %v4741 = vsel %vm4728, %v664, 0
        %v4743 = vsel %vm4728, %v4714, 0
        %4745 = vmatprep.subr.mxu0 %v4731
        %4746 = vmatpush1.msra.mxu0 %v4729
        %4747 = vmatprep.subr.mxu0 0.0
        %4748 = vmatpush1.msra.mxu0 0.0
        %4749 = vmatprep.subr.mxu0 0.0
        %4750 = vmatpush1.msra.mxu0 0.0
        %4751 = vmatprep.subr.mxu0 0.0
        %4752 = vmatpush1.msra.mxu0 0.0
        %4753 = vmatprep.subr.mxu0 0.0
        %4754 = vmatpush1.msra.mxu0 0.0
        %4755 = vmatprep.subr.mxu0 0.0
        %4756 = vmatpush1.msra.mxu0 0.0
        %4757 = vmatprep.subr.mxu0 0.0
        %4758 = vmatpush1.msra.mxu0 0.0
        %4759 = vmatprep.subr.mxu0 0.0
        %4760 = vmatpush1.msra.mxu0 0.0
        %4761 = vmatprep.subr.mxu0 0.0
        %4762 = vmatpush1.msra.mxu0 0.0
        %4763 = vmatprep.subr.mxu0 0.0
        %4764 = vmatpush1.msra.mxu0 0.0
        %4765 = vmatprep.subr.mxu0 0.0
        %4766 = vmatpush1.msra.mxu0 0.0
        %4767 = vmatprep.subr.mxu0 0.0
        %4768 = vmatpush1.msra.mxu0 0.0
        %4769 = vmatprep.subr.mxu0 0.0
        %4770 = vmatpush1.msra.mxu0 0.0
        %4771 = vmatprep.subr.mxu0 0.0
        %4772 = vmatpush1.msra.mxu0 0.0
        %4773 = vmatprep.subr.mxu0 0.0
        %4774 = vmatpush1.msra.mxu0 0.0
        %4775 = vmatprep.subr.mxu0 0.0
        %4776 = vmatpush1.msra.mxu0 0.0
        %4777 = vmatprep.subr.mxu0 0.0
        %4778 = vmatpush1.msra.mxu0 0.0
        %4779 = vmatprep.subr.mxu0 0.0
        %4780 = vmatpush1.msra.mxu0 0.0
        %4781 = vmatprep.subr.mxu0 0.0
        %4782 = vmatpush1.msra.mxu0 0.0
        %4783 = vmatprep.subr.mxu0 0.0
        %4784 = vmatpush1.msra.mxu0 0.0
        %4785 = vmatprep.subr.mxu0 0.0
        %4786 = vmatpush1.msra.mxu0 0.0
        %4787 = vmatprep.subr.mxu0 0.0
        %4788 = vmatpush1.msra.mxu0 0.0
        %4789 = vmatprep.subr.mxu0 0.0
        %4790 = vmatpush1.msra.mxu0 0.0
        %4791 = vmatprep.subr.mxu0 0.0
        %4792 = vmatpush1.msra.mxu0 0.0
        %4793 = vmatprep.subr.mxu0 0.0
        %4794 = vmatpush1.msra.mxu0 0.0
        %4795 = vmatprep.subr.mxu0 0.0
        %4796 = vmatpush1.msra.mxu0 0.0
        %4797 = vmatprep.subr.mxu0 0.0
        %4798 = vmatpush1.msra.mxu0 0.0
        %4799 = vmatprep.subr.mxu0 0.0
        %4800 = vmatpush1.msra.mxu0 0.0
        %4801 = vmatprep.subr.mxu0 0.0
        %4802 = vmatpush1.msra.mxu0 0.0
        %4803 = vmatprep.subr.mxu0 0.0
        %4804 = vmatpush1.msra.mxu0 0.0
        %4805 = vmatprep.subr.mxu0 0.0
        %4806 = vmatpush1.msra.mxu0 0.0
        %4807 = vmatprep.subr.mxu0 0.0
        %4808 = vmatpush1.msra.mxu0 0.0
        %4809 = vmatprep.mubr.f32.mxu0 0.0
        %4810 = vmatmul.mubr.f32.gmra.mrb[0].mxu0 %v4717
        %v4811 = vpop.f32.mrb[0].mxu0
        %v4812 = vadd.f32 0.0, %v4811
        %v4813 = vpop.f32.mrb[0].mxu0
        %v4814 = vadd.f32 0.0, %v4813
        %4815 = vmatprep.mubr.f32.mxu0 0.0
        %4816 = vmatmul.mubr.f32.gmra.mrb[0].mxu0 %v4720
        %v4817 = vpop.f32.mrb[0].mxu0
        %v4818 = vadd.f32 0.0, %v4817
        %v4819 = vpop.f32.mrb[0].mxu0
        %v4820 = vadd.f32 0.0, %v4819
        %4821 = vmatprep.mubr.f32.mxu0 0.0
        %4822 = vmatmul.mubr.f32.gmra.mrb[0].mxu0 %v4723
        %v4823 = vpop.f32.mrb[0].mxu0
        %v4824 = vadd.f32 0.0, %v4823
        %v4825 = vpop.f32.mrb[0].mxu0
        %v4826 = vadd.f32 0.0, %v4825
        %4827 = vmatprep.mubr.f32.mxu0 0.0
        %4828 = vmatmul.mubr.f32.gmra.mrb[0].mxu0 %v4726
        %v4829 = vpop.f32.mrb[0].mxu0
        %v4830 = vadd.f32 0.0, %v4829
        %v4831 = vpop.f32.mrb[0].mxu0
        %v4832 = vadd.f32 0.0, %v4831
        %4833 = vdwg.mxu0
        %4834 = vmatprep.subr.mxu0 %v4735
        %4835 = vmatpush1.msra.mxu0 %v4733
        %4836 = vmatprep.subr.mxu0 0.0
        %4837 = vmatpush1.msra.mxu0 0.0
        %4838 = vmatprep.subr.mxu0 0.0
        %4839 = vmatpush1.msra.mxu0 0.0
        %4840 = vmatprep.subr.mxu0 0.0
        %4841 = vmatpush1.msra.mxu0 0.0
        %4842 = vmatprep.subr.mxu0 0.0
        %4843 = vmatpush1.msra.mxu0 0.0
        %4844 = vmatprep.subr.mxu0 0.0
        %4845 = vmatpush1.msra.mxu0 0.0
        %4846 = vmatprep.subr.mxu0 0.0
        %4847 = vmatpush1.msra.mxu0 0.0
        %4848 = vmatprep.subr.mxu0 0.0
        %4849 = vmatpush1.msra.mxu0 0.0
        %4850 = vmatprep.subr.mxu0 0.0
        %4851 = vmatpush1.msra.mxu0 0.0
        %4852 = vmatprep.subr.mxu0 0.0
        %4853 = vmatpush1.msra.mxu0 0.0
        %4854 = vmatprep.subr.mxu0 0.0
        %4855 = vmatpush1.msra.mxu0 0.0
        %4856 = vmatprep.subr.mxu0 0.0
        %4857 = vmatpush1.msra.mxu0 0.0
        %4858 = vmatprep.subr.mxu0 0.0
        %4859 = vmatpush1.msra.mxu0 0.0
        %4860 = vmatprep.subr.mxu0 0.0
        %4861 = vmatpush1.msra.mxu0 0.0
        %4862 = vmatprep.subr.mxu0 0.0
        %4863 = vmatpush1.msra.mxu0 0.0
        %4864 = vmatprep.subr.mxu0 0.0
        %4865 = vmatpush1.msra.mxu0 0.0
        %4866 = vmatprep.subr.mxu0 0.0
        %4867 = vmatpush1.msra.mxu0 0.0
        %4868 = vmatprep.subr.mxu0 0.0
        %4869 = vmatpush1.msra.mxu0 0.0
        %4870 = vmatprep.subr.mxu0 0.0
        %4871 = vmatpush1.msra.mxu0 0.0
        %4872 = vmatprep.subr.mxu0 0.0
        %4873 = vmatpush1.msra.mxu0 0.0
        %4874 = vmatprep.subr.mxu0 0.0
        %4875 = vmatpush1.msra.mxu0 0.0
        %4876 = vmatprep.subr.mxu0 0.0
        %4877 = vmatpush1.msra.mxu0 0.0
        %4878 = vmatprep.subr.mxu0 0.0
        %4879 = vmatpush1.msra.mxu0 0.0
        %4880 = vmatprep.subr.mxu0 0.0
        %4881 = vmatpush1.msra.mxu0 0.0
        %4882 = vmatprep.subr.mxu0 0.0
        %4883 = vmatpush1.msra.mxu0 0.0
        %4884 = vmatprep.subr.mxu0 0.0
        %4885 = vmatpush1.msra.mxu0 0.0
        %4886 = vmatprep.subr.mxu0 0.0
        %4887 = vmatpush1.msra.mxu0 0.0
        %4888 = vmatprep.subr.mxu0 0.0
        %4889 = vmatpush1.msra.mxu0 0.0
        %4890 = vmatprep.subr.mxu0 0.0
        %4891 = vmatpush1.msra.mxu0 0.0
        %4892 = vmatprep.subr.mxu0 0.0
        %4893 = vmatpush1.msra.mxu0 0.0
        %4894 = vmatprep.subr.mxu0 0.0
        %4895 = vmatpush1.msra.mxu0 0.0
        %4896 = vmatprep.subr.mxu0 0.0
        %4897 = vmatpush1.msra.mxu0 0.0
        %4898 = vmatprep.mubr.f32.mxu0 0.0
        %4899 = vmatmul.mubr.f32.gmra.mrb[0].mxu0 %v4717
        %v4900 = vpop.f32.mrb[0].mxu0
        %v4901 = vadd.f32 0.0, %v4900
        %v4902 = vpop.f32.mrb[0].mxu0
        %v4903 = vadd.f32 0.0, %v4902
        %4904 = vmatprep.mubr.f32.mxu0 0.0
        %4905 = vmatmul.mubr.f32.gmra.mrb[0].mxu0 %v4720
        %v4906 = vpop.f32.mrb[0].mxu0
        %v4907 = vadd.f32 0.0, %v4906
        %v4908 = vpop.f32.mrb[0].mxu0
        %v4909 = vadd.f32 0.0, %v4908
        %4910 = vmatprep.mubr.f32.mxu0 0.0
        %4911 = vmatmul.mubr.f32.gmra.mrb[0].mxu0 %v4723
        %v4912 = vpop.f32.mrb[0].mxu0
        %v4913 = vadd.f32 0.0, %v4912
        %v4914 = vpop.f32.mrb[0].mxu0
        %v4915 = vadd.f32 0.0, %v4914
        %4916 = vmatprep.mubr.f32.mxu0 0.0
        %4917 = vmatmul.mubr.f32.gmra.mrb[0].mxu0 %v4726
        %v4918 = vpop.f32.mrb[0].mxu0
        %v4919 = vadd.f32 0.0, %v4918
        %v4920 = vpop.f32.mrb[0].mxu0
        %v4921 = vadd.f32 0.0, %v4920
        %4922 = vdwg.mxu0
        %4923 = vmatprep.subr.mxu0 %v4739
        %4924 = vmatpush1.msra.mxu0 %v4737
        %4925 = vmatprep.subr.mxu0 0.0
        %4926 = vmatpush1.msra.mxu0 0.0
        %4927 = vmatprep.subr.mxu0 0.0
        %4928 = vmatpush1.msra.mxu0 0.0
        %4929 = vmatprep.subr.mxu0 0.0
        %4930 = vmatpush1.msra.mxu0 0.0
        %4931 = vmatprep.subr.mxu0 0.0
        %4932 = vmatpush1.msra.mxu0 0.0
        %4933 = vmatprep.subr.mxu0 0.0
        %4934 = vmatpush1.msra.mxu0 0.0
        %4935 = vmatprep.subr.mxu0 0.0
        %4936 = vmatpush1.msra.mxu0 0.0
        %4937 = vmatprep.subr.mxu0 0.0
        %4938 = vmatpush1.msra.mxu0 0.0
        %4939 = vmatprep.subr.mxu0 0.0
        %4940 = vmatpush1.msra.mxu0 0.0
        %4941 = vmatprep.subr.mxu0 0.0
        %4942 = vmatpush1.msra.mxu0 0.0
        %4943 = vmatprep.subr.mxu0 0.0
        %4944 = vmatpush1.msra.mxu0 0.0
        %4945 = vmatprep.subr.mxu0 0.0
        %4946 = vmatpush1.msra.mxu0 0.0
        %4947 = vmatprep.subr.mxu0 0.0
        %4948 = vmatpush1.msra.mxu0 0.0
        %4949 = vmatprep.subr.mxu0 0.0
        %4950 = vmatpush1.msra.mxu0 0.0
        %4951 = vmatprep.subr.mxu0 0.0
        %4952 = vmatpush1.msra.mxu0 0.0
        %4953 = vmatprep.subr.mxu0 0.0
        %4954 = vmatpush1.msra.mxu0 0.0
        %4955 = vmatprep.subr.mxu0 0.0
        %4956 = vmatpush1.msra.mxu0 0.0
        %4957 = vmatprep.subr.mxu0 0.0
        %4958 = vmatpush1.msra.mxu0 0.0
        %4959 = vmatprep.subr.mxu0 0.0
        %4960 = vmatpush1.msra.mxu0 0.0
        %4961 = vmatprep.subr.mxu0 0.0
        %4962 = vmatpush1.msra.mxu0 0.0
        %4963 = vmatprep.subr.mxu0 0.0
        %4964 = vmatpush1.msra.mxu0 0.0
        %4965 = vmatprep.subr.mxu0 0.0
        %4966 = vmatpush1.msra.mxu0 0.0
        %4967 = vmatprep.subr.mxu0 0.0
        %4968 = vmatpush1.msra.mxu0 0.0
        %4969 = vmatprep.subr.mxu0 0.0
        %4970 = vmatpush1.msra.mxu0 0.0
        %4971 = vmatprep.subr.mxu0 0.0
        %4972 = vmatpush1.msra.mxu0 0.0
        %4973 = vmatprep.subr.mxu0 0.0
        %4974 = vmatpush1.msra.mxu0 0.0
        %4975 = vmatprep.subr.mxu0 0.0
        %4976 = vmatpush1.msra.mxu0 0.0
        %4977 = vmatprep.subr.mxu0 0.0
        %4978 = vmatpush1.msra.mxu0 0.0
        %4979 = vmatprep.subr.mxu0 0.0
        %4980 = vmatpush1.msra.mxu0 0.0
        %4981 = vmatprep.subr.mxu0 0.0
        %4982 = vmatpush1.msra.mxu0 0.0
        %4983 = vmatprep.subr.mxu0 0.0
        %4984 = vmatpush1.msra.mxu0 0.0
        %4985 = vmatprep.subr.mxu0 0.0
        %4986 = vmatpush1.msra.mxu0 0.0
        %4987 = vmatprep.mubr.f32.mxu0 0.0
        %4988 = vmatmul.mubr.f32.gmra.mrb[0].mxu0 %v4717
        %v4989 = vpop.f32.mrb[0].mxu0
        %v4990 = vadd.f32 0.0, %v4989
        %v4991 = vpop.f32.mrb[0].mxu0
        %v4992 = vadd.f32 0.0, %v4991
        %4993 = vmatprep.mubr.f32.mxu0 0.0
        %4994 = vmatmul.mubr.f32.gmra.mrb[0].mxu0 %v4720
        %v4995 = vpop.f32.mrb[0].mxu0
        %v4996 = vadd.f32 0.0, %v4995
        %v4997 = vpop.f32.mrb[0].mxu0
        %v4998 = vadd.f32 0.0, %v4997
        %4999 = vmatprep.mubr.f32.mxu0 0.0
        %5000 = vmatmul.mubr.f32.gmra.mrb[0].mxu0 %v4723
        %v5001 = vpop.f32.mrb[0].mxu0
        %v5002 = vadd.f32 0.0, %v5001
        %v5003 = vpop.f32.mrb[0].mxu0
        %v5004 = vadd.f32 0.0, %v5003
        %5005 = vmatprep.mubr.f32.mxu0 0.0
        %5006 = vmatmul.mubr.f32.gmra.mrb[0].mxu0 %v4726
        %v5007 = vpop.f32.mrb[0].mxu0
        %v5008 = vadd.f32 0.0, %v5007
        %v5009 = vpop.f32.mrb[0].mxu0
        %v5010 = vadd.f32 0.0, %v5009
        %5011 = vdwg.mxu0
        %5012 = vmatprep.subr.mxu0 %v4743
        %5013 = vmatpush1.msra.mxu0 %v4741
        %5014 = vmatprep.subr.mxu0 0.0
        %5015 = vmatpush1.msra.mxu0 0.0
        %5016 = vmatprep.subr.mxu0 0.0
        %5017 = vmatpush1.msra.mxu0 0.0
        %5018 = vmatprep.subr.mxu0 0.0
        %5019 = vmatpush1.msra.mxu0 0.0
        %5020 = vmatprep.subr.mxu0 0.0
        %5021 = vmatpush1.msra.mxu0 0.0
        %5022 = vmatprep.subr.mxu0 0.0
        %5023 = vmatpush1.msra.mxu0 0.0
        %5024 = vmatprep.subr.mxu0 0.0
        %5025 = vmatpush1.msra.mxu0 0.0
        %5026 = vmatprep.subr.mxu0 0.0
        %5027 = vmatpush1.msra.mxu0 0.0
        %5028 = vmatprep.subr.mxu0 0.0
        %5029 = vmatpush1.msra.mxu0 0.0
        %5030 = vmatprep.subr.mxu0 0.0
        %5031 = vmatpush1.msra.mxu0 0.0
        %5032 = vmatprep.subr.mxu0 0.0
        %5033 = vmatpush1.msra.mxu0 0.0
        %5034 = vmatprep.subr.mxu0 0.0
        %5035 = vmatpush1.msra.mxu0 0.0
        %5036 = vmatprep.subr.mxu0 0.0
        %5037 = vmatpush1.msra.mxu0 0.0
        %5038 = vmatprep.subr.mxu0 0.0
        %5039 = vmatpush1.msra.mxu0 0.0
        %5040 = vmatprep.subr.mxu0 0.0
        %5041 = vmatpush1.msra.mxu0 0.0
        %5042 = vmatprep.subr.mxu0 0.0
        %5043 = vmatpush1.msra.mxu0 0.0
        %5044 = vmatprep.subr.mxu0 0.0
        %5045 = vmatpush1.msra.mxu0 0.0
        %5046 = vmatprep.subr.mxu0 0.0
        %5047 = vmatpush1.msra.mxu0 0.0
        %5048 = vmatprep.subr.mxu0 0.0
        %5049 = vmatpush1.msra.mxu0 0.0
        %5050 = vmatprep.subr.mxu0 0.0
        %5051 = vmatpush1.msra.mxu0 0.0
        %5052 = vmatprep.subr.mxu0 0.0
        %5053 = vmatpush1.msra.mxu0 0.0
        %5054 = vmatprep.subr.mxu0 0.0
        %5055 = vmatpush1.msra.mxu0 0.0
        %5056 = vmatprep.subr.mxu0 0.0
        %5057 = vmatpush1.msra.mxu0 0.0
        %5058 = vmatprep.subr.mxu0 0.0
        %5059 = vmatpush1.msra.mxu0 0.0
        %5060 = vmatprep.subr.mxu0 0.0
        %5061 = vmatpush1.msra.mxu0 0.0
        %5062 = vmatprep.subr.mxu0 0.0
        %5063 = vmatpush1.msra.mxu0 0.0
        %5064 = vmatprep.subr.mxu0 0.0
        %5065 = vmatpush1.msra.mxu0 0.0
        %5066 = vmatprep.subr.mxu0 0.0
        %5067 = vmatpush1.msra.mxu0 0.0
        %5068 = vmatprep.subr.mxu0 0.0
        %5069 = vmatpush1.msra.mxu0 0.0
        %5070 = vmatprep.subr.mxu0 0.0
        %5071 = vmatpush1.msra.mxu0 0.0
        %5072 = vmatprep.subr.mxu0 0.0
        %5073 = vmatpush1.msra.mxu0 0.0
        %5074 = vmatprep.subr.mxu0 0.0
        %5075 = vmatpush1.msra.mxu0 0.0
        %5076 = vmatprep.mubr.f32.mxu0 0.0
        %5077 = vmatmul.mubr.f32.gmra.mrb[0].mxu0 %v4717
        %v5078 = vpop.f32.mrb[0].mxu0
        %v5079 = vadd.f32 0.0, %v5078
        %v5080 = vpop.f32.mrb[0].mxu0
        %v5081 = vadd.f32 0.0, %v5080
        %5082 = vmatprep.mubr.f32.mxu0 0.0
        %5083 = vmatmul.mubr.f32.gmra.mrb[0].mxu0 %v4720
        %v5084 = vpop.f32.mrb[0].mxu0
        %v5085 = vadd.f32 0.0, %v5084
        %v5086 = vpop.f32.mrb[0].mxu0
        %v5087 = vadd.f32 0.0, %v5086
        %5088 = vmatprep.mubr.f32.mxu0 0.0
        %5089 = vmatmul.mubr.f32.gmra.mrb[0].mxu0 %v4723
        %v5090 = vpop.f32.mrb[0].mxu0
        %v5091 = vadd.f32 0.0, %v5090
        %v5092 = vpop.f32.mrb[0].mxu0
        %v5093 = vadd.f32 0.0, %v5092
        %5094 = vmatprep.mubr.f32.mxu0 0.0
        %5095 = vmatmul.mubr.f32.gmra.mrb[0].mxu0 %v4726
        %v5096 = vpop.f32.mrb[0].mxu0
        %v5097 = vadd.f32 0.0, %v5096
        %v5098 = vpop.f32.mrb[0].mxu0
        %v5099 = vadd.f32 0.0, %v5098
        %5100 = vdwg.mxu0
        %5102 = vset.pattern.permute.xlu0 0
        %5103 = vperm.xlu0 %5102, %v4699
        %v5104 = vpop.permute.xlu0 %5103
        %5107 = vset.pattern.permute.xlu0 0
        %5108 = vperm.xlu0 %5107, %v4700
        %v5109 = vpop.permute.xlu0 %5108
        %5112 = vset.pattern.permute.xlu0 0
        %5113 = vperm.xlu0 %5112, %v4701
        %v5114 = vpop.permute.xlu0 %5113
        %5117 = vset.pattern.permute.xlu0 0
        %5118 = vperm.xlu0 %5117, %v4702
        %v5119 = vpop.permute.xlu0 %5118
        %v5121 = vadd.f32 %v5104, %v4812
        %v5122 = vadd.f32 %v5104, %v4814
        %v5123 = vadd.f32 %v5104, %v4901
        %v5124 = vadd.f32 %v5104, %v4903
        %v5125 = vadd.f32 %v5104, %v4990
        %v5126 = vadd.f32 %v5104, %v4992
        %v5127 = vadd.f32 %v5104, %v5079
        %v5128 = vadd.f32 %v5104, %v5081
        %v5129 = vadd.f32 %v5109, %v4818
        %v5130 = vadd.f32 %v5109, %v4820
        %v5131 = vadd.f32 %v5109, %v4907
        %v5132 = vadd.f32 %v5109, %v4909
        %v5133 = vadd.f32 %v5109, %v4996
        %v5134 = vadd.f32 %v5109, %v4998
        %v5135 = vadd.f32 %v5109, %v5085
        %v5136 = vadd.f32 %v5109, %v5087
        %v5137 = vadd.f32 %v5114, %v4824
        %v5138 = vadd.f32 %v5114, %v4826
        %v5139 = vadd.f32 %v5114, %v4913
        %v5140 = vadd.f32 %v5114, %v4915
        %v5141 = vadd.f32 %v5114, %v5002
        %v5142 = vadd.f32 %v5114, %v5004
        %v5143 = vadd.f32 %v5114, %v5091
        %v5144 = vadd.f32 %v5114, %v5093
        %v5145 = vadd.f32 %v5119, %v4830
        %v5146 = vadd.f32 %v5119, %v4832
        %v5147 = vadd.f32 %v5119, %v4919
        %v5148 = vadd.f32 %v5119, %v4921
        %v5149 = vadd.f32 %v5119, %v5008
        %v5150 = vadd.f32 %v5119, %v5010
        %v5151 = vadd.f32 %v5119, %v5097
        %v5152 = vadd.f32 %v5119, %v5099
        %v5153 = vld [vmem:[#allocation8] sm:$0xff]
        %v5154 = vld [vmem:[#allocation8 + $0x8] sm:$0xff]
        %v5155 = vld [vmem:[#allocation8 + $0x10] sm:$0xff]
        %v5156 = vld [vmem:[#allocation8 + $0x18] sm:$0xff]
        %5158 = vset.pattern.permute.xlu0 0
        %5159 = vperm.xlu0 %5158, %v5153
        %v5160 = vpop.permute.xlu0 %5159
        %5163 = vset.pattern.permute.xlu0 0
        %5164 = vperm.xlu0 %5163, %v5154
        %v5165 = vpop.permute.xlu0 %5164
        %5168 = vset.pattern.permute.xlu0 0
        %5169 = vperm.xlu0 %5168, %v5155
        %v5170 = vpop.permute.xlu0 %5169
        %5173 = vset.pattern.permute.xlu0 0
        %5174 = vperm.xlu0 %5173, %v5156
        %v5175 = vpop.permute.xlu0 %5174
        %v5177 = vmul.f32 %v5121, %v5160
        %v5178 = vmul.f32 %v5122, %v5160
        %v5179 = vmul.f32 %v5123, %v5160
        %v5180 = vmul.f32 %v5124, %v5160
        %v5181 = vmul.f32 %v5125, %v5160
        %v5182 = vmul.f32 %v5126, %v5160
        %v5183 = vmul.f32 %v5127, %v5160
        %v5184 = vmul.f32 %v5128, %v5160
        %v5185 = vmul.f32 %v5129, %v5165
        %v5186 = vmul.f32 %v5130, %v5165
        %v5187 = vmul.f32 %v5131, %v5165
        %v5188 = vmul.f32 %v5132, %v5165
        %v5189 = vmul.f32 %v5133, %v5165
        %v5190 = vmul.f32 %v5134, %v5165
        %v5191 = vmul.f32 %v5135, %v5165
        %v5192 = vmul.f32 %v5136, %v5165
        %v5193 = vmul.f32 %v5137, %v5170
        %v5194 = vmul.f32 %v5138, %v5170
        %v5195 = vmul.f32 %v5139, %v5170
        %v5196 = vmul.f32 %v5140, %v5170
        %v5197 = vmul.f32 %v5141, %v5170
        %v5198 = vmul.f32 %v5142, %v5170
        %v5199 = vmul.f32 %v5143, %v5170
        %v5200 = vmul.f32 %v5144, %v5170
        %v5201 = vmul.f32 %v5145, %v5175
        %v5202 = vmul.f32 %v5146, %v5175
        %v5203 = vmul.f32 %v5147, %v5175
        %v5204 = vmul.f32 %v5148, %v5175
        %v5205 = vmul.f32 %v5149, %v5175
        %v5206 = vmul.f32 %v5150, %v5175
        %v5207 = vmul.f32 %v5151, %v5175
        %v5208 = vmul.f32 %v5152, %v5175
        %v5209 = vld [vmem:[#allocation9] sm:$0xff]
        %v5210 = vld [vmem:[#allocation9 + $0x8] sm:$0xff]
        %v5211 = vld [vmem:[#allocation9 + $0x10] sm:$0xff]
        %v5212 = vld [vmem:[#allocation9 + $0x18] sm:$0xff]
        %5214 = vset.pattern.permute.xlu0 0
        %5215 = vperm.xlu0 %5214, %v5209
        %v5216 = vpop.permute.xlu0 %5215
        %5219 = vset.pattern.permute.xlu0 0
        %5220 = vperm.xlu0 %5219, %v5210
        %v5221 = vpop.permute.xlu0 %5220
        %5224 = vset.pattern.permute.xlu0 0
        %5225 = vperm.xlu0 %5224, %v5211
        %v5226 = vpop.permute.xlu0 %5225
        %5229 = vset.pattern.permute.xlu0 0
        %5230 = vperm.xlu0 %5229, %v5212
        %v5231 = vpop.permute.xlu0 %5230
        %v5233 = vadd.f32 %v5177, %v5216
        %v5234 = vadd.f32 %v5178, %v5216
        %v5235 = vadd.f32 %v5179, %v5216
        %v5236 = vadd.f32 %v5180, %v5216
        %v5237 = vadd.f32 %v5181, %v5216
        %v5238 = vadd.f32 %v5182, %v5216
        %v5239 = vadd.f32 %v5183, %v5216
        %v5240 = vadd.f32 %v5184, %v5216
        %v5241 = vadd.f32 %v5185, %v5221
        %v5242 = vadd.f32 %v5186, %v5221
        %v5243 = vadd.f32 %v5187, %v5221
        %v5244 = vadd.f32 %v5188, %v5221
        %v5245 = vadd.f32 %v5189, %v5221
        %v5246 = vadd.f32 %v5190, %v5221
        %v5247 = vadd.f32 %v5191, %v5221
        %v5248 = vadd.f32 %v5192, %v5221
        %v5249 = vadd.f32 %v5193, %v5226
        %v5250 = vadd.f32 %v5194, %v5226
        %v5251 = vadd.f32 %v5195, %v5226
        %v5252 = vadd.f32 %v5196, %v5226
        %v5253 = vadd.f32 %v5197, %v5226
        %v5254 = vadd.f32 %v5198, %v5226
        %v5255 = vadd.f32 %v5199, %v5226
        %v5256 = vadd.f32 %v5200, %v5226
        %v5257 = vadd.f32 %v5201, %v5231
        %v5258 = vadd.f32 %v5202, %v5231
        %v5259 = vadd.f32 %v5203, %v5231
        %v5260 = vadd.f32 %v5204, %v5231
        %v5261 = vadd.f32 %v5205, %v5231
        %v5262 = vadd.f32 %v5206, %v5231
        %v5263 = vadd.f32 %v5207, %v5231
        %v5264 = vadd.f32 %v5208, %v5231
        %v5265 = vmax.f32 %v5233, 0.0
        %v5266 = vmax.f32 %v5234, 0.0
        %v5267 = vmax.f32 %v5235, 0.0
        %v5268 = vmax.f32 %v5236, 0.0
        %v5269 = vmax.f32 %v5237, 0.0
        %v5270 = vmax.f32 %v5238, 0.0
        %v5271 = vmax.f32 %v5239, 0.0
        %v5272 = vmax.f32 %v5240, 0.0
        %v5273 = vmax.f32 %v5241, 0.0
        %v5274 = vmax.f32 %v5242, 0.0
        %v5275 = vmax.f32 %v5243, 0.0
        %v5276 = vmax.f32 %v5244, 0.0
        %v5277 = vmax.f32 %v5245, 0.0
        %v5278 = vmax.f32 %v5246, 0.0
        %v5279 = vmax.f32 %v5247, 0.0
        %v5280 = vmax.f32 %v5248, 0.0
        %v5281 = vmax.f32 %v5249, 0.0
        %v5282 = vmax.f32 %v5250, 0.0
        %v5283 = vmax.f32 %v5251, 0.0
        %v5284 = vmax.f32 %v5252, 0.0
        %v5285 = vmax.f32 %v5253, 0.0
        %v5286 = vmax.f32 %v5254, 0.0
        %v5287 = vmax.f32 %v5255, 0.0
        %v5288 = vmax.f32 %v5256, 0.0
        %v5289 = vmax.f32 %v5257, 0.0
        %v5290 = vmax.f32 %v5258, 0.0
        %v5291 = vmax.f32 %v5259, 0.0
        %v5292 = vmax.f32 %v5260, 0.0
        %v5293 = vmax.f32 %v5261, 0.0
        %v5294 = vmax.f32 %v5262, 0.0
        %v5295 = vmax.f32 %v5263, 0.0
        %v5296 = vmax.f32 %v5264, 0.0
        %v5297 = vld [vmem:[%s5] sm:$0xff]
        %v5298 = vld [vmem:[%s5 + $0x8] sm:$0xff]
        %v5299 = vld [vmem:[%s6] sm:$0xff]
        %v5300 = vld [vmem:[%s6 + $0x8] sm:$0xff]
        %v5302 = vsel %vm4715, %v5299, 0
        %v5305 = vsel %vm4715, %v5300, 0
        %5307 = vmatprep.subr.mxu0 %v4731
        %5308 = vmatpush1.msra.mxu0 %v4729
        %5309 = vmatprep.subr.mxu0 0.0
        %5310 = vmatpush1.msra.mxu0 0.0
        %5311 = vmatprep.subr.mxu0 0.0
        %5312 = vmatpush1.msra.mxu0 0.0
        %5313 = vmatprep.subr.mxu0 0.0
        %5314 = vmatpush1.msra.mxu0 0.0
        %5315 = vmatprep.subr.mxu0 0.0
        %5316 = vmatpush1.msra.mxu0 0.0
        %5317 = vmatprep.subr.mxu0 0.0
        %5318 = vmatpush1.msra.mxu0 0.0
        %5319 = vmatprep.subr.mxu0 0.0
        %5320 = vmatpush1.msra.mxu0 0.0
        %5321 = vmatprep.subr.mxu0 0.0
        %5322 = vmatpush1.msra.mxu0 0.0
        %5323 = vmatprep.subr.mxu0 0.0
        %5324 = vmatpush1.msra.mxu0 0.0
        %5325 = vmatprep.subr.mxu0 0.0
        %5326 = vmatpush1.msra.mxu0 0.0
        %5327 = vmatprep.subr.mxu0 0.0
        %5328 = vmatpush1.msra.mxu0 0.0
        %5329 = vmatprep.subr.mxu0 0.0
        %5330 = vmatpush1.msra.mxu0 0.0
        %5331 = vmatprep.subr.mxu0 0.0
        %5332 = vmatpush1.msra.mxu0 0.0
        %5333 = vmatprep.subr.mxu0 0.0
        %5334 = vmatpush1.msra.mxu0 0.0
        %5335 = vmatprep.subr.mxu0 0.0
        %5336 = vmatpush1.msra.mxu0 0.0
        %5337 = vmatprep.subr.mxu0 0.0
        %5338 = vmatpush1.msra.mxu0 0.0
        %5339 = vmatprep.subr.mxu0 0.0
        %5340 = vmatpush1.msra.mxu0 0.0
        %5341 = vmatprep.subr.mxu0 0.0
        %5342 = vmatpush1.msra.mxu0 0.0
        %5343 = vmatprep.subr.mxu0 0.0
        %5344 = vmatpush1.msra.mxu0 0.0
        %5345 = vmatprep.subr.mxu0 0.0
        %5346 = vmatpush1.msra.mxu0 0.0
        %5347 = vmatprep.subr.mxu0 0.0
        %5348 = vmatpush1.msra.mxu0 0.0
        %5349 = vmatprep.subr.mxu0 0.0
        %5350 = vmatpush1.msra.mxu0 0.0
        %5351 = vmatprep.subr.mxu0 0.0
        %5352 = vmatpush1.msra.mxu0 0.0
        %5353 = vmatprep.subr.mxu0 0.0
        %5354 = vmatpush1.msra.mxu0 0.0
        %5355 = vmatprep.subr.mxu0 0.0
        %5356 = vmatpush1.msra.mxu0 0.0
        %5357 = vmatprep.subr.mxu0 0.0
        %5358 = vmatpush1.msra.mxu0 0.0
        %5359 = vmatprep.subr.mxu0 0.0
        %5360 = vmatpush1.msra.mxu0 0.0
        %5361 = vmatprep.subr.mxu0 0.0
        %5362 = vmatpush1.msra.mxu0 0.0
        %5363 = vmatprep.subr.mxu0 0.0
        %5364 = vmatpush1.msra.mxu0 0.0
        %5365 = vmatprep.subr.mxu0 0.0
        %5366 = vmatpush1.msra.mxu0 0.0
        %5367 = vmatprep.subr.mxu0 0.0
        %5368 = vmatpush1.msra.mxu0 0.0
        %5369 = vmatprep.subr.mxu0 0.0
        %5370 = vmatpush1.msra.mxu0 0.0
        %5371 = vmatprep.mubr.f32.mxu0 0.0
        %5372 = vmatmul.mubr.f32.gmra.mrb[0].mxu0 %v5302
        %v5373 = vpop.f32.mrb[0].mxu0
        %v5374 = vadd.f32 0.0, %v5373
        %v5375 = vpop.f32.mrb[0].mxu0
        %v5376 = vadd.f32 0.0, %v5375
        %5377 = vmatprep.mubr.f32.mxu0 0.0
        %5378 = vmatmul.mubr.f32.gmra.mrb[0].mxu0 %v5305
        %v5379 = vpop.f32.mrb[0].mxu0
        %v5380 = vadd.f32 0.0, %v5379
        %v5381 = vpop.f32.mrb[0].mxu0
        %v5382 = vadd.f32 0.0, %v5381
        %5383 = vdwg.mxu0
        %5384 = vmatprep.subr.mxu0 %v4735
        %5385 = vmatpush1.msra.mxu0 %v4733
        %5386 = vmatprep.subr.mxu0 0.0
        %5387 = vmatpush1.msra.mxu0 0.0
        %5388 = vmatprep.subr.mxu0 0.0
        %5389 = vmatpush1.msra.mxu0 0.0
        %5390 = vmatprep.subr.mxu0 0.0
        %5391 = vmatpush1.msra.mxu0 0.0
        %5392 = vmatprep.subr.mxu0 0.0
        %5393 = vmatpush1.msra.mxu0 0.0
        %5394 = vmatprep.subr.mxu0 0.0
        %5395 = vmatpush1.msra.mxu0 0.0
        %5396 = vmatprep.subr.mxu0 0.0
        %5397 = vmatpush1.msra.mxu0 0.0
        %5398 = vmatprep.subr.mxu0 0.0
        %5399 = vmatpush1.msra.mxu0 0.0
        %5400 = vmatprep.subr.mxu0 0.0
        %5401 = vmatpush1.msra.mxu0 0.0
        %5402 = vmatprep.subr.mxu0 0.0
        %5403 = vmatpush1.msra.mxu0 0.0
        %5404 = vmatprep.subr.mxu0 0.0
        %5405 = vmatpush1.msra.mxu0 0.0
        %5406 = vmatprep.subr.mxu0 0.0
        %5407 = vmatpush1.msra.mxu0 0.0
        %5408 = vmatprep.subr.mxu0 0.0
        %5409 = vmatpush1.msra.mxu0 0.0
        %5410 = vmatprep.subr.mxu0 0.0
        %5411 = vmatpush1.msra.mxu0 0.0
        %5412 = vmatprep.subr.mxu0 0.0
        %5413 = vmatpush1.msra.mxu0 0.0
        %5414 = vmatprep.subr.mxu0 0.0
        %5415 = vmatpush1.msra.mxu0 0.0
        %5416 = vmatprep.subr.mxu0 0.0
        %5417 = vmatpush1.msra.mxu0 0.0
        %5418 = vmatprep.subr.mxu0 0.0
        %5419 = vmatpush1.msra.mxu0 0.0
        %5420 = vmatprep.subr.mxu0 0.0
        %5421 = vmatpush1.msra.mxu0 0.0
        %5422 = vmatprep.subr.mxu0 0.0
        %5423 = vmatpush1.msra.mxu0 0.0
        %5424 = vmatprep.subr.mxu0 0.0
        %5425 = vmatpush1.msra.mxu0 0.0
        %5426 = vmatprep.subr.mxu0 0.0
        %5427 = vmatpush1.msra.mxu0 0.0
        %5428 = vmatprep.subr.mxu0 0.0
        %5429 = vmatpush1.msra.mxu0 0.0
        %5430 = vmatprep.subr.mxu0 0.0
        %5431 = vmatpush1.msra.mxu0 0.0
        %5432 = vmatprep.subr.mxu0 0.0
        %5433 = vmatpush1.msra.mxu0 0.0
        %5434 = vmatprep.subr.mxu0 0.0
        %5435 = vmatpush1.msra.mxu0 0.0
        %5436 = vmatprep.subr.mxu0 0.0
        %5437 = vmatpush1.msra.mxu0 0.0
        %5438 = vmatprep.subr.mxu0 0.0
        %5439 = vmatpush1.msra.mxu0 0.0
        %5440 = vmatprep.subr.mxu0 0.0
        %5441 = vmatpush1.msra.mxu0 0.0
        %5442 = vmatprep.subr.mxu0 0.0
        %5443 = vmatpush1.msra.mxu0 0.0
        %5444 = vmatprep.subr.mxu0 0.0
        %5445 = vmatpush1.msra.mxu0 0.0
        %5446 = vmatprep.subr.mxu0 0.0
        %5447 = vmatpush1.msra.mxu0 0.0
        %5448 = vmatprep.mubr.f32.mxu0 0.0
        %5449 = vmatmul.mubr.f32.gmra.mrb[0].mxu0 %v5302
        %v5450 = vpop.f32.mrb[0].mxu0
        %v5451 = vadd.f32 0.0, %v5450
        %v5452 = vpop.f32.mrb[0].mxu0
        %v5453 = vadd.f32 0.0, %v5452
        %5454 = vmatprep.mubr.f32.mxu0 0.0
        %5455 = vmatmul.mubr.f32.gmra.mrb[0].mxu0 %v5305
        %v5456 = vpop.f32.mrb[0].mxu0
        %v5457 = vadd.f32 0.0, %v5456
        %v5458 = vpop.f32.mrb[0].mxu0
        %v5459 = vadd.f32 0.0, %v5458
        %5460 = vdwg.mxu0
        %5461 = vmatprep.subr.mxu0 %v4739
        %5462 = vmatpush1.msra.mxu0 %v4737
        %5463 = vmatprep.subr.mxu0 0.0
        %5464 = vmatpush1.msra.mxu0 0.0
        %5465 = vmatprep.subr.mxu0 0.0
        %5466 = vmatpush1.msra.mxu0 0.0
        %5467 = vmatprep.subr.mxu0 0.0
        %5468 = vmatpush1.msra.mxu0 0.0
        %5469 = vmatprep.subr.mxu0 0.0
        %5470 = vmatpush1.msra.mxu0 0.0
        %5471 = vmatprep.subr.mxu0 0.0
        %5472 = vmatpush1.msra.mxu0 0.0
        %5473 = vmatprep.subr.mxu0 0.0
        %5474 = vmatpush1.msra.mxu0 0.0
        %5475 = vmatprep.subr.mxu0 0.0
        %5476 = vmatpush1.msra.mxu0 0.0
        %5477 = vmatprep.subr.mxu0 0.0
        %5478 = vmatpush1.msra.mxu0 0.0
        %5479 = vmatprep.subr.mxu0 0.0
        %5480 = vmatpush1.msra.mxu0 0.0
        %5481 = vmatprep.subr.mxu0 0.0
        %5482 = vmatpush1.msra.mxu0 0.0
        %5483 = vmatprep.subr.mxu0 0.0
        %5484 = vmatpush1.msra.mxu0 0.0
        %5485 = vmatprep.subr.mxu0 0.0
        %5486 = vmatpush1.msra.mxu0 0.0
        %5487 = vmatprep.subr.mxu0 0.0
        %5488 = vmatpush1.msra.mxu0 0.0
        %5489 = vmatprep.subr.mxu0 0.0
        %5490 = vmatpush1.msra.mxu0 0.0
        %5491 = vmatprep.subr.mxu0 0.0
        %5492 = vmatpush1.msra.mxu0 0.0
        %5493 = vmatprep.subr.mxu0 0.0
        %5494 = vmatpush1.msra.mxu0 0.0
        %5495 = vmatprep.subr.mxu0 0.0
        %5496 = vmatpush1.msra.mxu0 0.0
        %5497 = vmatprep.subr.mxu0 0.0
        %5498 = vmatpush1.msra.mxu0 0.0
        %5499 = vmatprep.subr.mxu0 0.0
        %5500 = vmatpush1.msra.mxu0 0.0
        %5501 = vmatprep.subr.mxu0 0.0
        %5502 = vmatpush1.msra.mxu0 0.0
        %5503 = vmatprep.subr.mxu0 0.0
        %5504 = vmatpush1.msra.mxu0 0.0
        %5505 = vmatprep.subr.mxu0 0.0
        %5506 = vmatpush1.msra.mxu0 0.0
        %5507 = vmatprep.subr.mxu0 0.0
        %5508 = vmatpush1.msra.mxu0 0.0
        %5509 = vmatprep.subr.mxu0 0.0
        %5510 = vmatpush1.msra.mxu0 0.0
        %5511 = vmatprep.subr.mxu0 0.0
        %5512 = vmatpush1.msra.mxu0 0.0
        %5513 = vmatprep.subr.mxu0 0.0
        %5514 = vmatpush1.msra.mxu0 0.0
        %5515 = vmatprep.subr.mxu0 0.0
        %5516 = vmatpush1.msra.mxu0 0.0
        %5517 = vmatprep.subr.mxu0 0.0
        %5518 = vmatpush1.msra.mxu0 0.0
        %5519 = vmatprep.subr.mxu0 0.0
        %5520 = vmatpush1.msra.mxu0 0.0
        %5521 = vmatprep.subr.mxu0 0.0
        %5522 = vmatpush1.msra.mxu0 0.0
        %5523 = vmatprep.subr.mxu0 0.0
        %5524 = vmatpush1.msra.mxu0 0.0
        %5525 = vmatprep.mubr.f32.mxu0 0.0
        %5526 = vmatmul.mubr.f32.gmra.mrb[0].mxu0 %v5302
        %v5527 = vpop.f32.mrb[0].mxu0
        %v5528 = vadd.f32 0.0, %v5527
        %v5529 = vpop.f32.mrb[0].mxu0
        %v5530 = vadd.f32 0.0, %v5529
        %5531 = vmatprep.mubr.f32.mxu0 0.0
        %5532 = vmatmul.mubr.f32.gmra.mrb[0].mxu0 %v5305
        %v5533 = vpop.f32.mrb[0].mxu0
        %v5534 = vadd.f32 0.0, %v5533
        %v5535 = vpop.f32.mrb[0].mxu0
        %v5536 = vadd.f32 0.0, %v5535
        %5537 = vdwg.mxu0
        %5538 = vmatprep.subr.mxu0 %v4743
        %5539 = vmatpush1.msra.mxu0 %v4741
        %5540 = vmatprep.subr.mxu0 0.0
        %5541 = vmatpush1.msra.mxu0 0.0
        %5542 = vmatprep.subr.mxu0 0.0
        %5543 = vmatpush1.msra.mxu0 0.0
        %5544 = vmatprep.subr.mxu0 0.0
        %5545 = vmatpush1.msra.mxu0 0.0
        %5546 = vmatprep.subr.mxu0 0.0
        %5547 = vmatpush1.msra.mxu0 0.0
        %5548 = vmatprep.subr.mxu0 0.0
        %5549 = vmatpush1.msra.mxu0 0.0
        %5550 = vmatprep.subr.mxu0 0.0
        %5551 = vmatpush1.msra.mxu0 0.0
        %5552 = vmatprep.subr.mxu0 0.0
        %5553 = vmatpush1.msra.mxu0 0.0
        %5554 = vmatprep.subr.mxu0 0.0
        %5555 = vmatpush1.msra.mxu0 0.0
        %5556 = vmatprep.subr.mxu0 0.0
        %5557 = vmatpush1.msra.mxu0 0.0
        %5558 = vmatprep.subr.mxu0 0.0
        %5559 = vmatpush1.msra.mxu0 0.0
        %5560 = vmatprep.subr.mxu0 0.0
        %5561 = vmatpush1.msra.mxu0 0.0
        %5562 = vmatprep.subr.mxu0 0.0
        %5563 = vmatpush1.msra.mxu0 0.0
        %5564 = vmatprep.subr.mxu0 0.0
        %5565 = vmatpush1.msra.mxu0 0.0
        %5566 = vmatprep.subr.mxu0 0.0
        %5567 = vmatpush1.msra.mxu0 0.0
        %5568 = vmatprep.subr.mxu0 0.0
        %5569 = vmatpush1.msra.mxu0 0.0
        %5570 = vmatprep.subr.mxu0 0.0
        %5571 = vmatpush1.msra.mxu0 0.0
        %5572 = vmatprep.subr.mxu0 0.0
        %5573 = vmatpush1.msra.mxu0 0.0
        %5574 = vmatprep.subr.mxu0 0.0
        %5575 = vmatpush1.msra.mxu0 0.0
        %5576 = vmatprep.subr.mxu0 0.0
        %5577 = vmatpush1.msra.mxu0 0.0
        %5578 = vmatprep.subr.mxu0 0.0
        %5579 = vmatpush1.msra.mxu0 0.0
        %5580 = vmatprep.subr.mxu0 0.0
        %5581 = vmatpush1.msra.mxu0 0.0
        %5582 = vmatprep.subr.mxu0 0.0
        %5583 = vmatpush1.msra.mxu0 0.0
        %5584 = vmatprep.subr.mxu0 0.0
        %5585 = vmatpush1.msra.mxu0 0.0
        %5586 = vmatprep.subr.mxu0 0.0
        %5587 = vmatpush1.msra.mxu0 0.0
        %5588 = vmatprep.subr.mxu0 0.0
        %5589 = vmatpush1.msra.mxu0 0.0
        %5590 = vmatprep.subr.mxu0 0.0
        %5591 = vmatpush1.msra.mxu0 0.0
        %5592 = vmatprep.subr.mxu0 0.0
        %5593 = vmatpush1.msra.mxu0 0.0
        %5594 = vmatprep.subr.mxu0 0.0
        %5595 = vmatpush1.msra.mxu0 0.0
        %5596 = vmatprep.subr.mxu0 0.0
        %5597 = vmatpush1.msra.mxu0 0.0
        %5598 = vmatprep.subr.mxu0 0.0
        %5599 = vmatpush1.msra.mxu0 0.0
        %5600 = vmatprep.subr.mxu0 0.0
        %5601 = vmatpush1.msra.mxu0 0.0
        %5602 = vmatprep.mubr.f32.mxu0 0.0
        %5603 = vmatmul.mubr.f32.gmra.mrb[0].mxu0 %v5302
        %v5604 = vpop.f32.mrb[0].mxu0
        %v5605 = vadd.f32 0.0, %v5604
        %v5606 = vpop.f32.mrb[0].mxu0
        %v5607 = vadd.f32 0.0, %v5606
        %5608 = vmatprep.mubr.f32.mxu0 0.0
        %5609 = vmatmul.mubr.f32.gmra.mrb[0].mxu0 %v5305
        %v5610 = vpop.f32.mrb[0].mxu0
        %v5611 = vadd.f32 0.0, %v5610
        %v5612 = vpop.f32.mrb[0].mxu0
        %v5613 = vadd.f32 0.0, %v5612
        %5614 = vdwg.mxu0
        %vm5615 = vcmask 261120
        %v5617 = vsel %vm5615, %v5297, 0
        %v5620 = vsel %vm5615, %v5298, 0
        %5622 = vmatprep.subr.mxu0 %v5266
        %5623 = vmatpush1.msra.mxu0 %v5265
        %5624 = vmatprep.subr.mxu0 %v5274
        %5625 = vmatpush1.msra.mxu0 %v5273
        %5626 = vmatprep.subr.mxu0 %v5282
        %5627 = vmatpush1.msra.mxu0 %v5281
        %5628 = vmatprep.subr.mxu0 %v5290
        %5629 = vmatpush1.msra.mxu0 %v5289
        %5630 = vmatprep.subr.mxu0 0.0
        %5631 = vmatpush1.msra.mxu0 0.0
        %5632 = vmatprep.subr.mxu0 0.0
        %5633 = vmatpush1.msra.mxu0 0.0
        %5634 = vmatprep.subr.mxu0 0.0
        %5635 = vmatpush1.msra.mxu0 0.0
        %5636 = vmatprep.subr.mxu0 0.0
        %5637 = vmatpush1.msra.mxu0 0.0
        %5638 = vmatprep.subr.mxu0 0.0
        %5639 = vmatpush1.msra.mxu0 0.0
        %5640 = vmatprep.subr.mxu0 0.0
        %5641 = vmatpush1.msra.mxu0 0.0
        %5642 = vmatprep.subr.mxu0 0.0
        %5643 = vmatpush1.msra.mxu0 0.0
        %5644 = vmatprep.subr.mxu0 0.0
        %5645 = vmatpush1.msra.mxu0 0.0
        %5646 = vmatprep.subr.mxu0 0.0
        %5647 = vmatpush1.msra.mxu0 0.0
        %5648 = vmatprep.subr.mxu0 0.0
        %5649 = vmatpush1.msra.mxu0 0.0
        %5650 = vmatprep.subr.mxu0 0.0
        %5651 = vmatpush1.msra.mxu0 0.0
        %5652 = vmatprep.subr.mxu0 0.0
        %5653 = vmatpush1.msra.mxu0 0.0
        %5654 = vmatprep.subr.mxu0 0.0
        %5655 = vmatpush1.msra.mxu0 0.0
        %5656 = vmatprep.subr.mxu0 0.0
        %5657 = vmatpush1.msra.mxu0 0.0
        %5658 = vmatprep.subr.mxu0 0.0
        %5659 = vmatpush1.msra.mxu0 0.0
        %5660 = vmatprep.subr.mxu0 0.0
        %5661 = vmatpush1.msra.mxu0 0.0
        %5662 = vmatprep.subr.mxu0 0.0
        %5663 = vmatpush1.msra.mxu0 0.0
        %5664 = vmatprep.subr.mxu0 0.0
        %5665 = vmatpush1.msra.mxu0 0.0
        %5666 = vmatprep.subr.mxu0 0.0
        %5667 = vmatpush1.msra.mxu0 0.0
        %5668 = vmatprep.subr.mxu0 0.0
        %5669 = vmatpush1.msra.mxu0 0.0
        %5670 = vmatprep.subr.mxu0 0.0
        %5671 = vmatpush1.msra.mxu0 0.0
        %5672 = vmatprep.subr.mxu0 0.0
        %5673 = vmatpush1.msra.mxu0 0.0
        %5674 = vmatprep.subr.mxu0 0.0
        %5675 = vmatpush1.msra.mxu0 0.0
        %5676 = vmatprep.subr.mxu0 0.0
        %5677 = vmatpush1.msra.mxu0 0.0
        %5678 = vmatprep.subr.mxu0 0.0
        %5679 = vmatpush1.msra.mxu0 0.0
        %5680 = vmatprep.subr.mxu0 0.0
        %5681 = vmatpush1.msra.mxu0 0.0
        %5682 = vmatprep.subr.mxu0 0.0
        %5683 = vmatpush1.msra.mxu0 0.0
        %5684 = vmatprep.subr.mxu0 0.0
        %5685 = vmatpush1.msra.mxu0 0.0
        %5686 = vmatprep.mubr.f32.mxu0 0.0
        %5687 = vmatmul.mubr.f32.gmra.mrb[0].mxu0 %v5617
        %v5688 = vpop.f32.mrb[0].mxu0
        %v5689 = vadd.f32 %v5374, %v5688
        %v5690 = vpop.f32.mrb[0].mxu0
        %v5691 = vadd.f32 %v5376, %v5690
        %5692 = vmatprep.mubr.f32.mxu0 0.0
        %5693 = vmatmul.mubr.f32.gmra.mrb[0].mxu0 %v5620
        %v5694 = vpop.f32.mrb[0].mxu0
        %v5695 = vadd.f32 %v5380, %v5694
        %v5696 = vpop.f32.mrb[0].mxu0
        %v5697 = vadd.f32 %v5382, %v5696
        %5698 = vdwg.mxu0
        %5699 = vmatprep.subr.mxu0 %v5268
        %5700 = vmatpush1.msra.mxu0 %v5267
        %5701 = vmatprep.subr.mxu0 %v5276
        %5702 = vmatpush1.msra.mxu0 %v5275
        %5703 = vmatprep.subr.mxu0 %v5284
        %5704 = vmatpush1.msra.mxu0 %v5283
        %5705 = vmatprep.subr.mxu0 %v5292
        %5706 = vmatpush1.msra.mxu0 %v5291
        %5707 = vmatprep.subr.mxu0 0.0
        %5708 = vmatpush1.msra.mxu0 0.0
        %5709 = vmatprep.subr.mxu0 0.0
        %5710 = vmatpush1.msra.mxu0 0.0
        %5711 = vmatprep.subr.mxu0 0.0
        %5712 = vmatpush1.msra.mxu0 0.0
        %5713 = vmatprep.subr.mxu0 0.0
        %5714 = vmatpush1.msra.mxu0 0.0
        %5715 = vmatprep.subr.mxu0 0.0
        %5716 = vmatpush1.msra.mxu0 0.0
        %5717 = vmatprep.subr.mxu0 0.0
        %5718 = vmatpush1.msra.mxu0 0.0
        %5719 = vmatprep.subr.mxu0 0.0
        %5720 = vmatpush1.msra.mxu0 0.0
        %5721 = vmatprep.subr.mxu0 0.0
        %5722 = vmatpush1.msra.mxu0 0.0
        %5723 = vmatprep.subr.mxu0 0.0
        %5724 = vmatpush1.msra.mxu0 0.0
        %5725 = vmatprep.subr.mxu0 0.0
        %5726 = vmatpush1.msra.mxu0 0.0
        %5727 = vmatprep.subr.mxu0 0.0
        %5728 = vmatpush1.msra.mxu0 0.0
        %5729 = vmatprep.subr.mxu0 0.0
        %5730 = vmatpush1.msra.mxu0 0.0
        %5731 = vmatprep.subr.mxu0 0.0
        %5732 = vmatpush1.msra.mxu0 0.0
        %5733 = vmatprep.subr.mxu0 0.0
        %5734 = vmatpush1.msra.mxu0 0.0
        %5735 = vmatprep.subr.mxu0 0.0
        %5736 = vmatpush1.msra.mxu0 0.0
        %5737 = vmatprep.subr.mxu0 0.0
        %5738 = vmatpush1.msra.mxu0 0.0
        %5739 = vmatprep.subr.mxu0 0.0
        %5740 = vmatpush1.msra.mxu0 0.0
        %5741 = vmatprep.subr.mxu0 0.0
        %5742 = vmatpush1.msra.mxu0 0.0
        %5743 = vmatprep.subr.mxu0 0.0
        %5744 = vmatpush1.msra.mxu0 0.0
        %5745 = vmatprep.subr.mxu0 0.0
        %5746 = vmatpush1.msra.mxu0 0.0
        %5747 = vmatprep.subr.mxu0 0.0
        %5748 = vmatpush1.msra.mxu0 0.0
        %5749 = vmatprep.subr.mxu0 0.0
        %5750 = vmatpush1.msra.mxu0 0.0
        %5751 = vmatprep.subr.mxu0 0.0
        %5752 = vmatpush1.msra.mxu0 0.0
        %5753 = vmatprep.subr.mxu0 0.0
        %5754 = vmatpush1.msra.mxu0 0.0
        %5755 = vmatprep.subr.mxu0 0.0
        %5756 = vmatpush1.msra.mxu0 0.0
        %5757 = vmatprep.subr.mxu0 0.0
        %5758 = vmatpush1.msra.mxu0 0.0
        %5759 = vmatprep.subr.mxu0 0.0
        %5760 = vmatpush1.msra.mxu0 0.0
        %5761 = vmatprep.subr.mxu0 0.0
        %5762 = vmatpush1.msra.mxu0 0.0
        %5763 = vmatprep.mubr.f32.mxu0 0.0
        %5764 = vmatmul.mubr.f32.gmra.mrb[0].mxu0 %v5617
        %v5765 = vpop.f32.mrb[0].mxu0
        %v5766 = vadd.f32 %v5451, %v5765
        %v5767 = vpop.f32.mrb[0].mxu0
        %v5768 = vadd.f32 %v5453, %v5767
        %5769 = vmatprep.mubr.f32.mxu0 0.0
        %5770 = vmatmul.mubr.f32.gmra.mrb[0].mxu0 %v5620
        %v5771 = vpop.f32.mrb[0].mxu0
        %v5772 = vadd.f32 %v5457, %v5771
        %v5773 = vpop.f32.mrb[0].mxu0
        %v5774 = vadd.f32 %v5459, %v5773
        %5775 = vdwg.mxu0
        %5776 = vmatprep.subr.mxu0 %v5270
        %5777 = vmatpush1.msra.mxu0 %v5269
        %5778 = vmatprep.subr.mxu0 %v5278
        %5779 = vmatpush1.msra.mxu0 %v5277
        %5780 = vmatprep.subr.mxu0 %v5286
        %5781 = vmatpush1.msra.mxu0 %v5285
        %5782 = vmatprep.subr.mxu0 %v5294
        %5783 = vmatpush1.msra.mxu0 %v5293
        %5784 = vmatprep.subr.mxu0 0.0
        %5785 = vmatpush1.msra.mxu0 0.0
        %5786 = vmatprep.subr.mxu0 0.0
        %5787 = vmatpush1.msra.mxu0 0.0
        %5788 = vmatprep.subr.mxu0 0.0
        %5789 = vmatpush1.msra.mxu0 0.0
        %5790 = vmatprep.subr.mxu0 0.0
        %5791 = vmatpush1.msra.mxu0 0.0
        %5792 = vmatprep.subr.mxu0 0.0
        %5793 = vmatpush1.msra.mxu0 0.0
        %5794 = vmatprep.subr.mxu0 0.0
        %5795 = vmatpush1.msra.mxu0 0.0
        %5796 = vmatprep.subr.mxu0 0.0
        %5797 = vmatpush1.msra.mxu0 0.0
        %5798 = vmatprep.subr.mxu0 0.0
        %5799 = vmatpush1.msra.mxu0 0.0
        %5800 = vmatprep.subr.mxu0 0.0
        %5801 = vmatpush1.msra.mxu0 0.0
        %5802 = vmatprep.subr.mxu0 0.0
        %5803 = vmatpush1.msra.mxu0 0.0
        %5804 = vmatprep.subr.mxu0 0.0
        %5805 = vmatpush1.msra.mxu0 0.0
        %5806 = vmatprep.subr.mxu0 0.0
        %5807 = vmatpush1.msra.mxu0 0.0
        %5808 = vmatprep.subr.mxu0 0.0
        %5809 = vmatpush1.msra.mxu0 0.0
        %5810 = vmatprep.subr.mxu0 0.0
        %5811 = vmatpush1.msra.mxu0 0.0
        %5812 = vmatprep.subr.mxu0 0.0
        %5813 = vmatpush1.msra.mxu0 0.0
        %5814 = vmatprep.subr.mxu0 0.0
        %5815 = vmatpush1.msra.mxu0 0.0
        %5816 = vmatprep.subr.mxu0 0.0
        %5817 = vmatpush1.msra.mxu0 0.0
        %5818 = vmatprep.subr.mxu0 0.0
        %5819 = vmatpush1.msra.mxu0 0.0
        %5820 = vmatprep.subr.mxu0 0.0
        %5821 = vmatpush1.msra.mxu0 0.0
        %5822 = vmatprep.subr.mxu0 0.0
        %5823 = vmatpush1.msra.mxu0 0.0
        %5824 = vmatprep.subr.mxu0 0.0
        %5825 = vmatpush1.msra.mxu0 0.0
        %5826 = vmatprep.subr.mxu0 0.0
        %5827 = vmatpush1.msra.mxu0 0.0
        %5828 = vmatprep.subr.mxu0 0.0
        %5829 = vmatpush1.msra.mxu0 0.0
        %5830 = vmatprep.subr.mxu0 0.0
        %5831 = vmatpush1.msra.mxu0 0.0
        %5832 = vmatprep.subr.mxu0 0.0
        %5833 = vmatpush1.msra.mxu0 0.0
        %5834 = vmatprep.subr.mxu0 0.0
        %5835 = vmatpush1.msra.mxu0 0.0
        %5836 = vmatprep.subr.mxu0 0.0
        %5837 = vmatpush1.msra.mxu0 0.0
        %5838 = vmatprep.subr.mxu0 0.0
        %5839 = vmatpush1.msra.mxu0 0.0
        %5840 = vmatprep.mubr.f32.mxu0 0.0
        %5841 = vmatmul.mubr.f32.gmra.mrb[0].mxu0 %v5617
        %v5842 = vpop.f32.mrb[0].mxu0
        %v5843 = vadd.f32 %v5528, %v5842
        %v5844 = vpop.f32.mrb[0].mxu0
        %v5845 = vadd.f32 %v5530, %v5844
        %5846 = vmatprep.mubr.f32.mxu0 0.0
        %5847 = vmatmul.mubr.f32.gmra.mrb[0].mxu0 %v5620
        %v5848 = vpop.f32.mrb[0].mxu0
        %v5849 = vadd.f32 %v5534, %v5848
        %v5850 = vpop.f32.mrb[0].mxu0
        %v5851 = vadd.f32 %v5536, %v5850
        %5852 = vdwg.mxu0
        %5853 = vmatprep.subr.mxu0 %v5272
        %5854 = vmatpush1.msra.mxu0 %v5271
        %5855 = vmatprep.subr.mxu0 %v5280
        %5856 = vmatpush1.msra.mxu0 %v5279
        %5857 = vmatprep.subr.mxu0 %v5288
        %5858 = vmatpush1.msra.mxu0 %v5287
        %5859 = vmatprep.subr.mxu0 %v5296
        %5860 = vmatpush1.msra.mxu0 %v5295
        %5861 = vmatprep.subr.mxu0 0.0
        %5862 = vmatpush1.msra.mxu0 0.0
        %5863 = vmatprep.subr.mxu0 0.0
        %5864 = vmatpush1.msra.mxu0 0.0
        %5865 = vmatprep.subr.mxu0 0.0
        %5866 = vmatpush1.msra.mxu0 0.0
        %5867 = vmatprep.subr.mxu0 0.0
        %5868 = vmatpush1.msra.mxu0 0.0
        %5869 = vmatprep.subr.mxu0 0.0
        %5870 = vmatpush1.msra.mxu0 0.0
        %5871 = vmatprep.subr.mxu0 0.0
        %5872 = vmatpush1.msra.mxu0 0.0
        %5873 = vmatprep.subr.mxu0 0.0
        %5874 = vmatpush1.msra.mxu0 0.0
        %5875 = vmatprep.subr.mxu0 0.0
        %5876 = vmatpush1.msra.mxu0 0.0
        %5877 = vmatprep.subr.mxu0 0.0
        %5878 = vmatpush1.msra.mxu0 0.0
        %5879 = vmatprep.subr.mxu0 0.0
        %5880 = vmatpush1.msra.mxu0 0.0
        %5881 = vmatprep.subr.mxu0 0.0
        %5882 = vmatpush1.msra.mxu0 0.0
        %5883 = vmatprep.subr.mxu0 0.0
        %5884 = vmatpush1.msra.mxu0 0.0
        %5885 = vmatprep.subr.mxu0 0.0
        %5886 = vmatpush1.msra.mxu0 0.0
        %5887 = vmatprep.subr.mxu0 0.0
        %5888 = vmatpush1.msra.mxu0 0.0
        %5889 = vmatprep.subr.mxu0 0.0
        %5890 = vmatpush1.msra.mxu0 0.0
        %5891 = vmatprep.subr.mxu0 0.0
        %5892 = vmatpush1.msra.mxu0 0.0
        %5893 = vmatprep.subr.mxu0 0.0
        %5894 = vmatpush1.msra.mxu0 0.0
        %5895 = vmatprep.subr.mxu0 0.0
        %5896 = vmatpush1.msra.mxu0 0.0
        %5897 = vmatprep.subr.mxu0 0.0
        %5898 = vmatpush1.msra.mxu0 0.0
        %5899 = vmatprep.subr.mxu0 0.0
        %5900 = vmatpush1.msra.mxu0 0.0
        %5901 = vmatprep.subr.mxu0 0.0
        %5902 = vmatpush1.msra.mxu0 0.0
        %5903 = vmatprep.subr.mxu0 0.0
        %5904 = vmatpush1.msra.mxu0 0.0
        %5905 = vmatprep.subr.mxu0 0.0
        %5906 = vmatpush1.msra.mxu0 0.0
        %5907 = vmatprep.subr.mxu0 0.0
        %5908 = vmatpush1.msra.mxu0 0.0
        %5909 = vmatprep.subr.mxu0 0.0
        %5910 = vmatpush1.msra.mxu0 0.0
        %5911 = vmatprep.subr.mxu0 0.0
        %5912 = vmatpush1.msra.mxu0 0.0
        %5913 = vmatprep.subr.mxu0 0.0
        %5914 = vmatpush1.msra.mxu0 0.0
        %5915 = vmatprep.subr.mxu0 0.0
        %5916 = vmatpush1.msra.mxu0 0.0
        %5917 = vmatprep.mubr.f32.mxu0 0.0
        %5918 = vmatmul.mubr.f32.gmra.mrb[0].mxu0 %v5617
        %v5919 = vpop.f32.mrb[0].mxu0
        %v5920 = vadd.f32 %v5605, %v5919
        %v5921 = vpop.f32.mrb[0].mxu0
        %v5922 = vadd.f32 %v5607, %v5921
        %5923 = vmatprep.mubr.f32.mxu0 0.0
        %5924 = vmatmul.mubr.f32.gmra.mrb[0].mxu0 %v5620
        %v5925 = vpop.f32.mrb[0].mxu0
        %v5926 = vadd.f32 %v5611, %v5925
        %v5927 = vpop.f32.mrb[0].mxu0
        %v5928 = vadd.f32 %v5613, %v5927
        %5929 = vdwg.mxu0
        %v5930 = vld [vmem:[%s7] sm:$0xff]
        %v5931 = vld [vmem:[%s7 + $0x8] sm:$0xff]
        %5933 = vset.pattern.permute.xlu0 0
        %5934 = vperm.xlu0 %5933, %v5930
        %v5935 = vpop.permute.xlu0 %5934
        %5938 = vset.pattern.permute.xlu0 0
        %5939 = vperm.xlu0 %5938, %v5931
        %v5940 = vpop.permute.xlu0 %5939
        %v5942 = vadd.f32 %v5689, %v5935
        %v5943 = vadd.f32 %v5691, %v5935
        %v5944 = vadd.f32 %v5766, %v5935
        %v5945 = vadd.f32 %v5768, %v5935
        %v5946 = vadd.f32 %v5843, %v5935
        %v5947 = vadd.f32 %v5845, %v5935
        %v5948 = vadd.f32 %v5920, %v5935
        %v5949 = vadd.f32 %v5922, %v5935
        %v5950 = vadd.f32 %v5695, %v5940
        %v5951 = vadd.f32 %v5697, %v5940
        %v5952 = vadd.f32 %v5772, %v5940
        %v5953 = vadd.f32 %v5774, %v5940
        %v5954 = vadd.f32 %v5849, %v5940
        %v5955 = vadd.f32 %v5851, %v5940
        %v5956 = vadd.f32 %v5926, %v5940
        %v5957 = vadd.f32 %v5928, %v5940
        %v5958 = vld [vmem:[#allocation10] sm:$0xff]
        %v5959 = vld [vmem:[#allocation10 + $0x8] sm:$0xff]
        %5961 = vset.pattern.permute.xlu0 0
        %5962 = vperm.xlu0 %5961, %v5958
        %v5963 = vpop.permute.xlu0 %5962
        %5966 = vset.pattern.permute.xlu0 0
        %5967 = vperm.xlu0 %5966, %v5959
        %v5968 = vpop.permute.xlu0 %5967
        %v5970 = vmul.f32 %v5942, %v5963
        %v5971 = vmul.f32 %v5943, %v5963
        %v5972 = vmul.f32 %v5944, %v5963
        %v5973 = vmul.f32 %v5945, %v5963
        %v5974 = vmul.f32 %v5946, %v5963
        %v5975 = vmul.f32 %v5947, %v5963
        %v5976 = vmul.f32 %v5948, %v5963
        %v5977 = vmul.f32 %v5949, %v5963
        %v5978 = vmul.f32 %v5950, %v5968
        %v5979 = vmul.f32 %v5951, %v5968
        %v5980 = vmul.f32 %v5952, %v5968
        %v5981 = vmul.f32 %v5953, %v5968
        %v5982 = vmul.f32 %v5954, %v5968
        %v5983 = vmul.f32 %v5955, %v5968
        %v5984 = vmul.f32 %v5956, %v5968
        %v5985 = vmul.f32 %v5957, %v5968
        %v5986 = vld [vmem:[#allocation11] sm:$0xff]
        %v5987 = vld [vmem:[#allocation11 + $0x8] sm:$0xff]
        %5989 = vset.pattern.permute.xlu0 0
        %5990 = vperm.xlu0 %5989, %v5986
        %v5991 = vpop.permute.xlu0 %5990
        %5994 = vset.pattern.permute.xlu0 0
        %5995 = vperm.xlu0 %5994, %v5987
        %v5996 = vpop.permute.xlu0 %5995
        %v5998 = vadd.f32 %v5970, %v5991
        %v5999 = vadd.f32 %v5971, %v5991
        %v6000 = vadd.f32 %v5972, %v5991
        %v6001 = vadd.f32 %v5973, %v5991
        %v6002 = vadd.f32 %v5974, %v5991
        %v6003 = vadd.f32 %v5975, %v5991
        %v6004 = vadd.f32 %v5976, %v5991
        %v6005 = vadd.f32 %v5977, %v5991
        %v6006 = vadd.f32 %v5978, %v5996
        %v6007 = vadd.f32 %v5979, %v5996
        %v6008 = vadd.f32 %v5980, %v5996
        %v6009 = vadd.f32 %v5981, %v5996
        %v6010 = vadd.f32 %v5982, %v5996
        %v6011 = vadd.f32 %v5983, %v5996
        %v6012 = vadd.f32 %v5984, %v5996
        %v6013 = vadd.f32 %v5985, %v5996
        %v6014 = vmax.f32 %v5998, 0.0
        %v6015 = vmax.f32 %v5999, 0.0
        %v6016 = vmax.f32 %v6000, 0.0
        %v6017 = vmax.f32 %v6001, 0.0
        %v6018 = vmax.f32 %v6002, 0.0
        %v6019 = vmax.f32 %v6003, 0.0
        %v6020 = vmax.f32 %v6004, 0.0
        %v6021 = vmax.f32 %v6005, 0.0
        %v6022 = vmax.f32 %v6006, 0.0
        %v6023 = vmax.f32 %v6007, 0.0
        %v6024 = vmax.f32 %v6008, 0.0
        %v6025 = vmax.f32 %v6009, 0.0
        %v6026 = vmax.f32 %v6010, 0.0
        %v6027 = vmax.f32 %v6011, 0.0
        %v6028 = vmax.f32 %v6012, 0.0
        %v6029 = vmax.f32 %v6013, 0.0
        %v6030 = vld [vmem:[%s10] sm:$0xff]
        %v6031 = vld [vmem:[%s11] sm:$0xff]
        %v6033 = vsel %vm4715, %v6031, 0
        %6035 = vmatprep.subr.mxu0 %v4731
        %6036 = vmatpush1.msra.mxu0 %v4729
        %6037 = vmatprep.subr.mxu0 0.0
        %6038 = vmatpush1.msra.mxu0 0.0
        %6039 = vmatprep.subr.mxu0 0.0
        %6040 = vmatpush1.msra.mxu0 0.0
        %6041 = vmatprep.subr.mxu0 0.0
        %6042 = vmatpush1.msra.mxu0 0.0
        %6043 = vmatprep.subr.mxu0 0.0
        %6044 = vmatpush1.msra.mxu0 0.0
        %6045 = vmatprep.subr.mxu0 0.0
        %6046 = vmatpush1.msra.mxu0 0.0
        %6047 = vmatprep.subr.mxu0 0.0
        %6048 = vmatpush1.msra.mxu0 0.0
        %6049 = vmatprep.subr.mxu0 0.0
        %6050 = vmatpush1.msra.mxu0 0.0
        %6051 = vmatprep.subr.mxu0 0.0
        %6052 = vmatpush1.msra.mxu0 0.0
        %6053 = vmatprep.subr.mxu0 0.0
        %6054 = vmatpush1.msra.mxu0 0.0
        %6055 = vmatprep.subr.mxu0 0.0
        %6056 = vmatpush1.msra.mxu0 0.0
        %6057 = vmatprep.subr.mxu0 0.0
        %6058 = vmatpush1.msra.mxu0 0.0
        %6059 = vmatprep.subr.mxu0 0.0
        %6060 = vmatpush1.msra.mxu0 0.0
        %6061 = vmatprep.subr.mxu0 0.0
        %6062 = vmatpush1.msra.mxu0 0.0
        %6063 = vmatprep.subr.mxu0 0.0
        %6064 = vmatpush1.msra.mxu0 0.0
        %6065 = vmatprep.subr.mxu0 0.0
        %6066 = vmatpush1.msra.mxu0 0.0
        %6067 = vmatprep.subr.mxu0 0.0
        %6068 = vmatpush1.msra.mxu0 0.0
        %6069 = vmatprep.subr.mxu0 0.0
        %6070 = vmatpush1.msra.mxu0 0.0
        %6071 = vmatprep.subr.mxu0 0.0
        %6072 = vmatpush1.msra.mxu0 0.0
        %6073 = vmatprep.subr.mxu0 0.0
        %6074 = vmatpush1.msra.mxu0 0.0
        %6075 = vmatprep.subr.mxu0 0.0
        %6076 = vmatpush1.msra.mxu0 0.0
        %6077 = vmatprep.subr.mxu0 0.0
        %6078 = vmatpush1.msra.mxu0 0.0
        %6079 = vmatprep.subr.mxu0 0.0
        %6080 = vmatpush1.msra.mxu0 0.0
        %6081 = vmatprep.subr.mxu0 0.0
        %6082 = vmatpush1.msra.mxu0 0.0
        %6083 = vmatprep.subr.mxu0 0.0
        %6084 = vmatpush1.msra.mxu0 0.0
        %6085 = vmatprep.subr.mxu0 0.0
        %6086 = vmatpush1.msra.mxu0 0.0
        %6087 = vmatprep.subr.mxu0 0.0
        %6088 = vmatpush1.msra.mxu0 0.0
        %6089 = vmatprep.subr.mxu0 0.0
        %6090 = vmatpush1.msra.mxu0 0.0
        %6091 = vmatprep.subr.mxu0 0.0
        %6092 = vmatpush1.msra.mxu0 0.0
        %6093 = vmatprep.subr.mxu0 0.0
        %6094 = vmatpush1.msra.mxu0 0.0
        %6095 = vmatprep.subr.mxu0 0.0
        %6096 = vmatpush1.msra.mxu0 0.0
        %6097 = vmatprep.subr.mxu0 0.0
        %6098 = vmatpush1.msra.mxu0 0.0
        %6099 = vmatprep.mubr.f32.mxu0 0.0
        %6100 = vmatmul.mubr.f32.gmra.mrb[0].mxu0 %v6033
        %v6101 = vpop.f32.mrb[0].mxu0
        %v6102 = vadd.f32 0.0, %v6101
        %v6103 = vpop.f32.mrb[0].mxu0
        %v6104 = vadd.f32 0.0, %v6103
        %6105 = vdwg.mxu0
        %6106 = vmatprep.subr.mxu0 %v4735
        %6107 = vmatpush1.msra.mxu0 %v4733
        %6108 = vmatprep.subr.mxu0 0.0
        %6109 = vmatpush1.msra.mxu0 0.0
        %6110 = vmatprep.subr.mxu0 0.0
        %6111 = vmatpush1.msra.mxu0 0.0
        %6112 = vmatprep.subr.mxu0 0.0
        %6113 = vmatpush1.msra.mxu0 0.0
        %6114 = vmatprep.subr.mxu0 0.0
        %6115 = vmatpush1.msra.mxu0 0.0
        %6116 = vmatprep.subr.mxu0 0.0
        %6117 = vmatpush1.msra.mxu0 0.0
        %6118 = vmatprep.subr.mxu0 0.0
        %6119 = vmatpush1.msra.mxu0 0.0
        %6120 = vmatprep.subr.mxu0 0.0
        %6121 = vmatpush1.msra.mxu0 0.0
        %6122 = vmatprep.subr.mxu0 0.0
        %6123 = vmatpush1.msra.mxu0 0.0
        %6124 = vmatprep.subr.mxu0 0.0
        %6125 = vmatpush1.msra.mxu0 0.0
        %6126 = vmatprep.subr.mxu0 0.0
        %6127 = vmatpush1.msra.mxu0 0.0
        %6128 = vmatprep.subr.mxu0 0.0
        %6129 = vmatpush1.msra.mxu0 0.0
        %6130 = vmatprep.subr.mxu0 0.0
        %6131 = vmatpush1.msra.mxu0 0.0
        %6132 = vmatprep.subr.mxu0 0.0
        %6133 = vmatpush1.msra.mxu0 0.0
        %6134 = vmatprep.subr.mxu0 0.0
        %6135 = vmatpush1.msra.mxu0 0.0
        %6136 = vmatprep.subr.mxu0 0.0
        %6137 = vmatpush1.msra.mxu0 0.0
        %6138 = vmatprep.subr.mxu0 0.0
        %6139 = vmatpush1.msra.mxu0 0.0
        %6140 = vmatprep.subr.mxu0 0.0
        %6141 = vmatpush1.msra.mxu0 0.0
        %6142 = vmatprep.subr.mxu0 0.0
        %6143 = vmatpush1.msra.mxu0 0.0
        %6144 = vmatprep.subr.mxu0 0.0
        %6145 = vmatpush1.msra.mxu0 0.0
        %6146 = vmatprep.subr.mxu0 0.0
        %6147 = vmatpush1.msra.mxu0 0.0
        %6148 = vmatprep.subr.mxu0 0.0
        %6149 = vmatpush1.msra.mxu0 0.0
        %6150 = vmatprep.subr.mxu0 0.0
        %6151 = vmatpush1.msra.mxu0 0.0
        %6152 = vmatprep.subr.mxu0 0.0
        %6153 = vmatpush1.msra.mxu0 0.0
        %6154 = vmatprep.subr.mxu0 0.0
        %6155 = vmatpush1.msra.mxu0 0.0
        %6156 = vmatprep.subr.mxu0 0.0
        %6157 = vmatpush1.msra.mxu0 0.0
        %6158 = vmatprep.subr.mxu0 0.0
        %6159 = vmatpush1.msra.mxu0 0.0
        %6160 = vmatprep.subr.mxu0 0.0
        %6161 = vmatpush1.msra.mxu0 0.0
        %6162 = vmatprep.subr.mxu0 0.0
        %6163 = vmatpush1.msra.mxu0 0.0
        %6164 = vmatprep.subr.mxu0 0.0
        %6165 = vmatpush1.msra.mxu0 0.0
        %6166 = vmatprep.subr.mxu0 0.0
        %6167 = vmatpush1.msra.mxu0 0.0
        %6168 = vmatprep.subr.mxu0 0.0
        %6169 = vmatpush1.msra.mxu0 0.0
        %6170 = vmatprep.mubr.f32.mxu0 0.0
        %6171 = vmatmul.mubr.f32.gmra.mrb[0].mxu0 %v6033
        %v6172 = vpop.f32.mrb[0].mxu0
        %v6173 = vadd.f32 0.0, %v6172
        %v6174 = vpop.f32.mrb[0].mxu0
        %v6175 = vadd.f32 0.0, %v6174
        %6176 = vdwg.mxu0
        %6177 = vmatprep.subr.mxu0 %v4739
        %6178 = vmatpush1.msra.mxu0 %v4737
        %6179 = vmatprep.subr.mxu0 0.0
        %6180 = vmatpush1.msra.mxu0 0.0
        %6181 = vmatprep.subr.mxu0 0.0
        %6182 = vmatpush1.msra.mxu0 0.0
        %6183 = vmatprep.subr.mxu0 0.0
        %6184 = vmatpush1.msra.mxu0 0.0
        %6185 = vmatprep.subr.mxu0 0.0
        %6186 = vmatpush1.msra.mxu0 0.0
        %6187 = vmatprep.subr.mxu0 0.0
        %6188 = vmatpush1.msra.mxu0 0.0
        %6189 = vmatprep.subr.mxu0 0.0
        %6190 = vmatpush1.msra.mxu0 0.0
        %6191 = vmatprep.subr.mxu0 0.0
        %6192 = vmatpush1.msra.mxu0 0.0
        %6193 = vmatprep.subr.mxu0 0.0
        %6194 = vmatpush1.msra.mxu0 0.0
        %6195 = vmatprep.subr.mxu0 0.0
        %6196 = vmatpush1.msra.mxu0 0.0
        %6197 = vmatprep.subr.mxu0 0.0
        %6198 = vmatpush1.msra.mxu0 0.0
        %6199 = vmatprep.subr.mxu0 0.0
        %6200 = vmatpush1.msra.mxu0 0.0
        %6201 = vmatprep.subr.mxu0 0.0
        %6202 = vmatpush1.msra.mxu0 0.0
        %6203 = vmatprep.subr.mxu0 0.0
        %6204 = vmatpush1.msra.mxu0 0.0
        %6205 = vmatprep.subr.mxu0 0.0
        %6206 = vmatpush1.msra.mxu0 0.0
        %6207 = vmatprep.subr.mxu0 0.0
        %6208 = vmatpush1.msra.mxu0 0.0
        %6209 = vmatprep.subr.mxu0 0.0
        %6210 = vmatpush1.msra.mxu0 0.0
        %6211 = vmatprep.subr.mxu0 0.0
        %6212 = vmatpush1.msra.mxu0 0.0
        %6213 = vmatprep.subr.mxu0 0.0
        %6214 = vmatpush1.msra.mxu0 0.0
        %6215 = vmatprep.subr.mxu0 0.0
        %6216 = vmatpush1.msra.mxu0 0.0
        %6217 = vmatprep.subr.mxu0 0.0
        %6218 = vmatpush1.msra.mxu0 0.0
        %6219 = vmatprep.subr.mxu0 0.0
        %6220 = vmatpush1.msra.mxu0 0.0
        %6221 = vmatprep.subr.mxu0 0.0
        %6222 = vmatpush1.msra.mxu0 0.0
        %6223 = vmatprep.subr.mxu0 0.0
        %6224 = vmatpush1.msra.mxu0 0.0
        %6225 = vmatprep.subr.mxu0 0.0
        %6226 = vmatpush1.msra.mxu0 0.0
        %6227 = vmatprep.subr.mxu0 0.0
        %6228 = vmatpush1.msra.mxu0 0.0
        %6229 = vmatprep.subr.mxu0 0.0
        %6230 = vmatpush1.msra.mxu0 0.0
        %6231 = vmatprep.subr.mxu0 0.0
        %6232 = vmatpush1.msra.mxu0 0.0
        %6233 = vmatprep.subr.mxu0 0.0
        %6234 = vmatpush1.msra.mxu0 0.0
        %6235 = vmatprep.subr.mxu0 0.0
        %6236 = vmatpush1.msra.mxu0 0.0
        %6237 = vmatprep.subr.mxu0 0.0
        %6238 = vmatpush1.msra.mxu0 0.0
        %6239 = vmatprep.subr.mxu0 0.0
        %6240 = vmatpush1.msra.mxu0 0.0
        %6241 = vmatprep.mubr.f32.mxu0 0.0
        %6242 = vmatmul.mubr.f32.gmra.mrb[0].mxu0 %v6033
        %v6243 = vpop.f32.mrb[0].mxu0
        %v6244 = vadd.f32 0.0, %v6243
        %v6245 = vpop.f32.mrb[0].mxu0
        %v6246 = vadd.f32 0.0, %v6245
        %6247 = vdwg.mxu0
        %6248 = vmatprep.subr.mxu0 %v4743
        %6249 = vmatpush1.msra.mxu0 %v4741
        %6250 = vmatprep.subr.mxu0 0.0
        %6251 = vmatpush1.msra.mxu0 0.0
        %6252 = vmatprep.subr.mxu0 0.0
        %6253 = vmatpush1.msra.mxu0 0.0
        %6254 = vmatprep.subr.mxu0 0.0
        %6255 = vmatpush1.msra.mxu0 0.0
        %6256 = vmatprep.subr.mxu0 0.0
        %6257 = vmatpush1.msra.mxu0 0.0
        %6258 = vmatprep.subr.mxu0 0.0
        %6259 = vmatpush1.msra.mxu0 0.0
        %6260 = vmatprep.subr.mxu0 0.0
        %6261 = vmatpush1.msra.mxu0 0.0
        %6262 = vmatprep.subr.mxu0 0.0
        %6263 = vmatpush1.msra.mxu0 0.0
        %6264 = vmatprep.subr.mxu0 0.0
        %6265 = vmatpush1.msra.mxu0 0.0
        %6266 = vmatprep.subr.mxu0 0.0
        %6267 = vmatpush1.msra.mxu0 0.0
        %6268 = vmatprep.subr.mxu0 0.0
        %6269 = vmatpush1.msra.mxu0 0.0
        %6270 = vmatprep.subr.mxu0 0.0
        %6271 = vmatpush1.msra.mxu0 0.0
        %6272 = vmatprep.subr.mxu0 0.0
        %6273 = vmatpush1.msra.mxu0 0.0
        %6274 = vmatprep.subr.mxu0 0.0
        %6275 = vmatpush1.msra.mxu0 0.0
        %6276 = vmatprep.subr.mxu0 0.0
        %6277 = vmatpush1.msra.mxu0 0.0
        %6278 = vmatprep.subr.mxu0 0.0
        %6279 = vmatpush1.msra.mxu0 0.0
        %6280 = vmatprep.subr.mxu0 0.0
        %6281 = vmatpush1.msra.mxu0 0.0
        %6282 = vmatprep.subr.mxu0 0.0
        %6283 = vmatpush1.msra.mxu0 0.0
        %6284 = vmatprep.subr.mxu0 0.0
        %6285 = vmatpush1.msra.mxu0 0.0
        %6286 = vmatprep.subr.mxu0 0.0
        %6287 = vmatpush1.msra.mxu0 0.0
        %6288 = vmatprep.subr.mxu0 0.0
        %6289 = vmatpush1.msra.mxu0 0.0
        %6290 = vmatprep.subr.mxu0 0.0
        %6291 = vmatpush1.msra.mxu0 0.0
        %6292 = vmatprep.subr.mxu0 0.0
        %6293 = vmatpush1.msra.mxu0 0.0
        %6294 = vmatprep.subr.mxu0 0.0
        %6295 = vmatpush1.msra.mxu0 0.0
        %6296 = vmatprep.subr.mxu0 0.0
        %6297 = vmatpush1.msra.mxu0 0.0
        %6298 = vmatprep.subr.mxu0 0.0
        %6299 = vmatpush1.msra.mxu0 0.0
        %6300 = vmatprep.subr.mxu0 0.0
        %6301 = vmatpush1.msra.mxu0 0.0
        %6302 = vmatprep.subr.mxu0 0.0
        %6303 = vmatpush1.msra.mxu0 0.0
        %6304 = vmatprep.subr.mxu0 0.0
        %6305 = vmatpush1.msra.mxu0 0.0
        %6306 = vmatprep.subr.mxu0 0.0
        %6307 = vmatpush1.msra.mxu0 0.0
        %6308 = vmatprep.subr.mxu0 0.0
        %6309 = vmatpush1.msra.mxu0 0.0
        %6310 = vmatprep.subr.mxu0 0.0
        %6311 = vmatpush1.msra.mxu0 0.0
        %6312 = vmatprep.mubr.f32.mxu0 0.0
        %6313 = vmatmul.mubr.f32.gmra.mrb[0].mxu0 %v6033
        %v6314 = vpop.f32.mrb[0].mxu0
        %v6315 = vadd.f32 0.0, %v6314
        %v6316 = vpop.f32.mrb[0].mxu0
        %v6317 = vadd.f32 0.0, %v6316
        %6318 = vdwg.mxu0
        %vm6319 = vcmask 130048
        %v6321 = vsel %vm6319, %v6030, 0
        %6323 = vmatprep.subr.mxu0 %v6015
        %6324 = vmatpush1.msra.mxu0 %v6014
        %6325 = vmatprep.subr.mxu0 %v6023
        %6326 = vmatpush1.msra.mxu0 %v6022
        %6327 = vmatprep.subr.mxu0 0.0
        %6328 = vmatpush1.msra.mxu0 0.0
        %6329 = vmatprep.subr.mxu0 0.0
        %6330 = vmatpush1.msra.mxu0 0.0
        %6331 = vmatprep.subr.mxu0 0.0
        %6332 = vmatpush1.msra.mxu0 0.0
        %6333 = vmatprep.subr.mxu0 0.0
        %6334 = vmatpush1.msra.mxu0 0.0
        %6335 = vmatprep.subr.mxu0 0.0
        %6336 = vmatpush1.msra.mxu0 0.0
        %6337 = vmatprep.subr.mxu0 0.0
        %6338 = vmatpush1.msra.mxu0 0.0
        %6339 = vmatprep.subr.mxu0 0.0
        %6340 = vmatpush1.msra.mxu0 0.0
        %6341 = vmatprep.subr.mxu0 0.0
        %6342 = vmatpush1.msra.mxu0 0.0
        %6343 = vmatprep.subr.mxu0 0.0
        %6344 = vmatpush1.msra.mxu0 0.0
        %6345 = vmatprep.subr.mxu0 0.0
        %6346 = vmatpush1.msra.mxu0 0.0
        %6347 = vmatprep.subr.mxu0 0.0
        %6348 = vmatpush1.msra.mxu0 0.0
        %6349 = vmatprep.subr.mxu0 0.0
        %6350 = vmatpush1.msra.mxu0 0.0
        %6351 = vmatprep.subr.mxu0 0.0
        %6352 = vmatpush1.msra.mxu0 0.0
        %6353 = vmatprep.subr.mxu0 0.0
        %6354 = vmatpush1.msra.mxu0 0.0
        %6355 = vmatprep.subr.mxu0 0.0
        %6356 = vmatpush1.msra.mxu0 0.0
        %6357 = vmatprep.subr.mxu0 0.0
        %6358 = vmatpush1.msra.mxu0 0.0
        %6359 = vmatprep.subr.mxu0 0.0
        %6360 = vmatpush1.msra.mxu0 0.0
        %6361 = vmatprep.subr.mxu0 0.0
        %6362 = vmatpush1.msra.mxu0 0.0
        %6363 = vmatprep.subr.mxu0 0.0
        %6364 = vmatpush1.msra.mxu0 0.0
        %6365 = vmatprep.subr.mxu0 0.0
        %6366 = vmatpush1.msra.mxu0 0.0
        %6367 = vmatprep.subr.mxu0 0.0
        %6368 = vmatpush1.msra.mxu0 0.0
        %6369 = vmatprep.subr.mxu0 0.0
        %6370 = vmatpush1.msra.mxu0 0.0
        %6371 = vmatprep.subr.mxu0 0.0
        %6372 = vmatpush1.msra.mxu0 0.0
        %6373 = vmatprep.subr.mxu0 0.0
        %6374 = vmatpush1.msra.mxu0 0.0
        %6375 = vmatprep.subr.mxu0 0.0
        %6376 = vmatpush1.msra.mxu0 0.0
        %6377 = vmatprep.subr.mxu0 0.0
        %6378 = vmatpush1.msra.mxu0 0.0
        %6379 = vmatprep.subr.mxu0 0.0
        %6380 = vmatpush1.msra.mxu0 0.0
        %6381 = vmatprep.subr.mxu0 0.0
        %6382 = vmatpush1.msra.mxu0 0.0
        %6383 = vmatprep.subr.mxu0 0.0
        %6384 = vmatpush1.msra.mxu0 0.0
        %6385 = vmatprep.subr.mxu0 0.0
        %6386 = vmatpush1.msra.mxu0 0.0
        %6387 = vmatprep.mubr.f32.mxu0 0.0
        %6388 = vmatmul.mubr.f32.gmra.mrb[0].mxu0 %v6321
        %v6389 = vpop.f32.mrb[0].mxu0
        %v6390 = vadd.f32 %v6102, %v6389
        %v6391 = vpop.f32.mrb[0].mxu0
        %v6392 = vadd.f32 %v6104, %v6391
        %6393 = vdwg.mxu0
        %6394 = vmatprep.subr.mxu0 %v6017
        %6395 = vmatpush1.msra.mxu0 %v6016
        %6396 = vmatprep.subr.mxu0 %v6025
        %6397 = vmatpush1.msra.mxu0 %v6024
        %6398 = vmatprep.subr.mxu0 0.0
        %6399 = vmatpush1.msra.mxu0 0.0
        %6400 = vmatprep.subr.mxu0 0.0
        %6401 = vmatpush1.msra.mxu0 0.0
        %6402 = vmatprep.subr.mxu0 0.0
        %6403 = vmatpush1.msra.mxu0 0.0
        %6404 = vmatprep.subr.mxu0 0.0
        %6405 = vmatpush1.msra.mxu0 0.0
        %6406 = vmatprep.subr.mxu0 0.0
        %6407 = vmatpush1.msra.mxu0 0.0
        %6408 = vmatprep.subr.mxu0 0.0
        %6409 = vmatpush1.msra.mxu0 0.0
        %6410 = vmatprep.subr.mxu0 0.0
        %6411 = vmatpush1.msra.mxu0 0.0
        %6412 = vmatprep.subr.mxu0 0.0
        %6413 = vmatpush1.msra.mxu0 0.0
        %6414 = vmatprep.subr.mxu0 0.0
        %6415 = vmatpush1.msra.mxu0 0.0
        %6416 = vmatprep.subr.mxu0 0.0
        %6417 = vmatpush1.msra.mxu0 0.0
        %6418 = vmatprep.subr.mxu0 0.0
        %6419 = vmatpush1.msra.mxu0 0.0
        %6420 = vmatprep.subr.mxu0 0.0
        %6421 = vmatpush1.msra.mxu0 0.0
        %6422 = vmatprep.subr.mxu0 0.0
        %6423 = vmatpush1.msra.mxu0 0.0
        %6424 = vmatprep.subr.mxu0 0.0
        %6425 = vmatpush1.msra.mxu0 0.0
        %6426 = vmatprep.subr.mxu0 0.0
        %6427 = vmatpush1.msra.mxu0 0.0
        %6428 = vmatprep.subr.mxu0 0.0
        %6429 = vmatpush1.msra.mxu0 0.0
        %6430 = vmatprep.subr.mxu0 0.0
        %6431 = vmatpush1.msra.mxu0 0.0
        %6432 = vmatprep.subr.mxu0 0.0
        %6433 = vmatpush1.msra.mxu0 0.0
        %6434 = vmatprep.subr.mxu0 0.0
        %6435 = vmatpush1.msra.mxu0 0.0
        %6436 = vmatprep.subr.mxu0 0.0
        %6437 = vmatpush1.msra.mxu0 0.0
        %6438 = vmatprep.subr.mxu0 0.0
        %6439 = vmatpush1.msra.mxu0 0.0
        %6440 = vmatprep.subr.mxu0 0.0
        %6441 = vmatpush1.msra.mxu0 0.0
        %6442 = vmatprep.subr.mxu0 0.0
        %6443 = vmatpush1.msra.mxu0 0.0
        %6444 = vmatprep.subr.mxu0 0.0
        %6445 = vmatpush1.msra.mxu0 0.0
        %6446 = vmatprep.subr.mxu0 0.0
        %6447 = vmatpush1.msra.mxu0 0.0
        %6448 = vmatprep.subr.mxu0 0.0
        %6449 = vmatpush1.msra.mxu0 0.0
        %6450 = vmatprep.subr.mxu0 0.0
        %6451 = vmatpush1.msra.mxu0 0.0
        %6452 = vmatprep.subr.mxu0 0.0
        %6453 = vmatpush1.msra.mxu0 0.0
        %6454 = vmatprep.subr.mxu0 0.0
        %6455 = vmatpush1.msra.mxu0 0.0
        %6456 = vmatprep.subr.mxu0 0.0
        %6457 = vmatpush1.msra.mxu0 0.0
        %6458 = vmatprep.mubr.f32.mxu0 0.0
        %6459 = vmatmul.mubr.f32.gmra.mrb[0].mxu0 %v6321
        %v6460 = vpop.f32.mrb[0].mxu0
        %v6461 = vadd.f32 %v6173, %v6460
        %v6462 = vpop.f32.mrb[0].mxu0
        %v6463 = vadd.f32 %v6175, %v6462
        %6464 = vdwg.mxu0
        %6465 = vmatprep.subr.mxu0 %v6019
        %6466 = vmatpush1.msra.mxu0 %v6018
        %6467 = vmatprep.subr.mxu0 %v6027
        %6468 = vmatpush1.msra.mxu0 %v6026
        %6469 = vmatprep.subr.mxu0 0.0
        %6470 = vmatpush1.msra.mxu0 0.0
        %6471 = vmatprep.subr.mxu0 0.0
        %6472 = vmatpush1.msra.mxu0 0.0
        %6473 = vmatprep.subr.mxu0 0.0
        %6474 = vmatpush1.msra.mxu0 0.0
        %6475 = vmatprep.subr.mxu0 0.0
        %6476 = vmatpush1.msra.mxu0 0.0
        %6477 = vmatprep.subr.mxu0 0.0
        %6478 = vmatpush1.msra.mxu0 0.0
        %6479 = vmatprep.subr.mxu0 0.0
        %6480 = vmatpush1.msra.mxu0 0.0
        %6481 = vmatprep.subr.mxu0 0.0
        %6482 = vmatpush1.msra.mxu0 0.0
        %6483 = vmatprep.subr.mxu0 0.0
        %6484 = vmatpush1.msra.mxu0 0.0
        %6485 = vmatprep.subr.mxu0 0.0
        %6486 = vmatpush1.msra.mxu0 0.0
        %6487 = vmatprep.subr.mxu0 0.0
        %6488 = vmatpush1.msra.mxu0 0.0
        %6489 = vmatprep.subr.mxu0 0.0
        %6490 = vmatpush1.msra.mxu0 0.0
        %6491 = vmatprep.subr.mxu0 0.0
        %6492 = vmatpush1.msra.mxu0 0.0
        %6493 = vmatprep.subr.mxu0 0.0
        %6494 = vmatpush1.msra.mxu0 0.0
        %6495 = vmatprep.subr.mxu0 0.0
        %6496 = vmatpush1.msra.mxu0 0.0
        %6497 = vmatprep.subr.mxu0 0.0
        %6498 = vmatpush1.msra.mxu0 0.0
        %6499 = vmatprep.subr.mxu0 0.0
        %6500 = vmatpush1.msra.mxu0 0.0
        %6501 = vmatprep.subr.mxu0 0.0
        %6502 = vmatpush1.msra.mxu0 0.0
        %6503 = vmatprep.subr.mxu0 0.0
        %6504 = vmatpush1.msra.mxu0 0.0
        %6505 = vmatprep.subr.mxu0 0.0
        %6506 = vmatpush1.msra.mxu0 0.0
        %6507 = vmatprep.subr.mxu0 0.0
        %6508 = vmatpush1.msra.mxu0 0.0
        %6509 = vmatprep.subr.mxu0 0.0
        %6510 = vmatpush1.msra.mxu0 0.0
        %6511 = vmatprep.subr.mxu0 0.0
        %6512 = vmatpush1.msra.mxu0 0.0
        %6513 = vmatprep.subr.mxu0 0.0
        %6514 = vmatpush1.msra.mxu0 0.0
        %6515 = vmatprep.subr.mxu0 0.0
        %6516 = vmatpush1.msra.mxu0 0.0
        %6517 = vmatprep.subr.mxu0 0.0
        %6518 = vmatpush1.msra.mxu0 0.0
        %6519 = vmatprep.subr.mxu0 0.0
        %6520 = vmatpush1.msra.mxu0 0.0
        %6521 = vmatprep.subr.mxu0 0.0
        %6522 = vmatpush1.msra.mxu0 0.0
        %6523 = vmatprep.subr.mxu0 0.0
        %6524 = vmatpush1.msra.mxu0 0.0
        %6525 = vmatprep.subr.mxu0 0.0
        %6526 = vmatpush1.msra.mxu0 0.0
        %6527 = vmatprep.subr.mxu0 0.0
        %6528 = vmatpush1.msra.mxu0 0.0
        %6529 = vmatprep.mubr.f32.mxu0 0.0
        %6530 = vmatmul.mubr.f32.gmra.mrb[0].mxu0 %v6321
        %v6531 = vpop.f32.mrb[0].mxu0
        %v6532 = vadd.f32 %v6244, %v6531
        %v6533 = vpop.f32.mrb[0].mxu0
        %v6534 = vadd.f32 %v6246, %v6533
        %6535 = vdwg.mxu0
        %6536 = vmatprep.subr.mxu0 %v6021
        %6537 = vmatpush1.msra.mxu0 %v6020
        %6538 = vmatprep.subr.mxu0 %v6029
        %6539 = vmatpush1.msra.mxu0 %v6028
        %6540 = vmatprep.subr.mxu0 0.0
        %6541 = vmatpush1.msra.mxu0 0.0
        %6542 = vmatprep.subr.mxu0 0.0
        %6543 = vmatpush1.msra.mxu0 0.0
        %6544 = vmatprep.subr.mxu0 0.0
        %6545 = vmatpush1.msra.mxu0 0.0
        %6546 = vmatprep.subr.mxu0 0.0
        %6547 = vmatpush1.msra.mxu0 0.0
        %6548 = vmatprep.subr.mxu0 0.0
        %6549 = vmatpush1.msra.mxu0 0.0
        %6550 = vmatprep.subr.mxu0 0.0
        %6551 = vmatpush1.msra.mxu0 0.0
        %6552 = vmatprep.subr.mxu0 0.0
        %6553 = vmatpush1.msra.mxu0 0.0
        %6554 = vmatprep.subr.mxu0 0.0
        %6555 = vmatpush1.msra.mxu0 0.0
        %6556 = vmatprep.subr.mxu0 0.0
        %6557 = vmatpush1.msra.mxu0 0.0
        %6558 = vmatprep.subr.mxu0 0.0
        %6559 = vmatpush1.msra.mxu0 0.0
        %6560 = vmatprep.subr.mxu0 0.0
        %6561 = vmatpush1.msra.mxu0 0.0
        %6562 = vmatprep.subr.mxu0 0.0
        %6563 = vmatpush1.msra.mxu0 0.0
        %6564 = vmatprep.subr.mxu0 0.0
        %6565 = vmatpush1.msra.mxu0 0.0
        %6566 = vmatprep.subr.mxu0 0.0
        %6567 = vmatpush1.msra.mxu0 0.0
        %6568 = vmatprep.subr.mxu0 0.0
        %6569 = vmatpush1.msra.mxu0 0.0
        %6570 = vmatprep.subr.mxu0 0.0
        %6571 = vmatpush1.msra.mxu0 0.0
        %6572 = vmatprep.subr.mxu0 0.0
        %6573 = vmatpush1.msra.mxu0 0.0
        %6574 = vmatprep.subr.mxu0 0.0
        %6575 = vmatpush1.msra.mxu0 0.0
        %6576 = vmatprep.subr.mxu0 0.0
        %6577 = vmatpush1.msra.mxu0 0.0
        %6578 = vmatprep.subr.mxu0 0.0
        %6579 = vmatpush1.msra.mxu0 0.0
        %6580 = vmatprep.subr.mxu0 0.0
        %6581 = vmatpush1.msra.mxu0 0.0
        %6582 = vmatprep.subr.mxu0 0.0
        %6583 = vmatpush1.msra.mxu0 0.0
        %6584 = vmatprep.subr.mxu0 0.0
        %6585 = vmatpush1.msra.mxu0 0.0
        %6586 = vmatprep.subr.mxu0 0.0
        %6587 = vmatpush1.msra.mxu0 0.0
        %6588 = vmatprep.subr.mxu0 0.0
        %6589 = vmatpush1.msra.mxu0 0.0
        %6590 = vmatprep.subr.mxu0 0.0
        %6591 = vmatpush1.msra.mxu0 0.0
        %6592 = vmatprep.subr.mxu0 0.0
        %6593 = vmatpush1.msra.mxu0 0.0
        %6594 = vmatprep.subr.mxu0 0.0
        %6595 = vmatpush1.msra.mxu0 0.0
        %6596 = vmatprep.subr.mxu0 0.0
        %6597 = vmatpush1.msra.mxu0 0.0
        %6598 = vmatprep.subr.mxu0 0.0
        %6599 = vmatpush1.msra.mxu0 0.0
        %6600 = vmatprep.mubr.f32.mxu0 0.0
        %6601 = vmatmul.mubr.f32.gmra.mrb[0].mxu0 %v6321
        %v6602 = vpop.f32.mrb[0].mxu0
        %v6603 = vadd.f32 %v6315, %v6602
        %v6604 = vpop.f32.mrb[0].mxu0
        %v6605 = vadd.f32 %v6317, %v6604
        %6606 = vdwg.mxu0
        %v6607 = vld [vmem:[%s12] sm:$0xff]
        %6609 = vset.pattern.permute.xlu0 0
        %6610 = vperm.xlu0 %6609, %v6607
        %v6611 = vpop.permute.xlu0 %6610
        %v6613 = vadd.f32 %v6390, %v6611
        %v6614 = vadd.f32 %v6392, %v6611
        %v6615 = vadd.f32 %v6461, %v6611
        %v6616 = vadd.f32 %v6463, %v6611
        %v6617 = vadd.f32 %v6532, %v6611
        %v6618 = vadd.f32 %v6534, %v6611
        %v6619 = vadd.f32 %v6603, %v6611
        %v6620 = vadd.f32 %v6605, %v6611
        %v6621 = vld [vmem:[#allocation12] sm:$0xff]
        %6623 = vset.pattern.permute.xlu0 0
        %6624 = vperm.xlu0 %6623, %v6621
        %v6625 = vpop.permute.xlu0 %6624
        %v6627 = vmul.f32 %v6613, %v6625
        %v6628 = vmul.f32 %v6614, %v6625
        %v6629 = vmul.f32 %v6615, %v6625
        %v6630 = vmul.f32 %v6616, %v6625
        %v6631 = vmul.f32 %v6617, %v6625
        %v6632 = vmul.f32 %v6618, %v6625
        %v6633 = vmul.f32 %v6619, %v6625
        %v6634 = vmul.f32 %v6620, %v6625
        %v6635 = vld [vmem:[#allocation13] sm:$0xff]
        %6637 = vset.pattern.permute.xlu0 0
        %6638 = vperm.xlu0 %6637, %v6635
        %v6639 = vpop.permute.xlu0 %6638
        %v6641 = vadd.f32 %v6627, %v6639
        %v6642 = vadd.f32 %v6628, %v6639
        %v6643 = vadd.f32 %v6629, %v6639
        %v6644 = vadd.f32 %v6630, %v6639
        %v6645 = vadd.f32 %v6631, %v6639
        %v6646 = vadd.f32 %v6632, %v6639
        %v6647 = vadd.f32 %v6633, %v6639
        %v6648 = vadd.f32 %v6634, %v6639
        %v6649 = vmax.f32 %v6641, 0.0
        %v6650 = vmax.f32 %v6642, 0.0
        %v6651 = vmax.f32 %v6643, 0.0
        %v6652 = vmax.f32 %v6644, 0.0
        %v6653 = vmax.f32 %v6645, 0.0
        %v6654 = vmax.f32 %v6646, 0.0
        %v6655 = vmax.f32 %v6647, 0.0
        %v6656 = vmax.f32 %v6648, 0.0
        %v6657 = vld [vmem:[%s15] sm:$0x7]
        %v6658 = vld [vmem:[%s16] sm:$0x7]
        %v6660 = vsel %vm4715, %v6658, 0
        %6662 = vmatprep.subr.mxu0 %v4731
        %6663 = vmatpush1.msra.mxu0 %v4729
        %6664 = vmatprep.subr.mxu0 0.0
        %6665 = vmatpush1.msra.mxu0 0.0
        %6666 = vmatprep.subr.mxu0 0.0
        %6667 = vmatpush1.msra.mxu0 0.0
        %6668 = vmatprep.subr.mxu0 0.0
        %6669 = vmatpush1.msra.mxu0 0.0
        %6670 = vmatprep.subr.mxu0 0.0
        %6671 = vmatpush1.msra.mxu0 0.0
        %6672 = vmatprep.subr.mxu0 0.0
        %6673 = vmatpush1.msra.mxu0 0.0
        %6674 = vmatprep.subr.mxu0 0.0
        %6675 = vmatpush1.msra.mxu0 0.0
        %6676 = vmatprep.subr.mxu0 0.0
        %6677 = vmatpush1.msra.mxu0 0.0
        %6678 = vmatprep.subr.mxu0 0.0
        %6679 = vmatpush1.msra.mxu0 0.0
        %6680 = vmatprep.subr.mxu0 0.0
        %6681 = vmatpush1.msra.mxu0 0.0
        %6682 = vmatprep.subr.mxu0 0.0
        %6683 = vmatpush1.msra.mxu0 0.0
        %6684 = vmatprep.subr.mxu0 0.0
        %6685 = vmatpush1.msra.mxu0 0.0
        %6686 = vmatprep.subr.mxu0 0.0
        %6687 = vmatpush1.msra.mxu0 0.0
        %6688 = vmatprep.subr.mxu0 0.0
        %6689 = vmatpush1.msra.mxu0 0.0
        %6690 = vmatprep.subr.mxu0 0.0
        %6691 = vmatpush1.msra.mxu0 0.0
        %6692 = vmatprep.subr.mxu0 0.0
        %6693 = vmatpush1.msra.mxu0 0.0
        %6694 = vmatprep.subr.mxu0 0.0
        %6695 = vmatpush1.msra.mxu0 0.0
        %6696 = vmatprep.subr.mxu0 0.0
        %6697 = vmatpush1.msra.mxu0 0.0
        %6698 = vmatprep.subr.mxu0 0.0
        %6699 = vmatpush1.msra.mxu0 0.0
        %6700 = vmatprep.subr.mxu0 0.0
        %6701 = vmatpush1.msra.mxu0 0.0
        %6702 = vmatprep.subr.mxu0 0.0
        %6703 = vmatpush1.msra.mxu0 0.0
        %6704 = vmatprep.subr.mxu0 0.0
        %6705 = vmatpush1.msra.mxu0 0.0
        %6706 = vmatprep.subr.mxu0 0.0
        %6707 = vmatpush1.msra.mxu0 0.0
        %6708 = vmatprep.subr.mxu0 0.0
        %6709 = vmatpush1.msra.mxu0 0.0
        %6710 = vmatprep.subr.mxu0 0.0
        %6711 = vmatpush1.msra.mxu0 0.0
        %6712 = vmatprep.subr.mxu0 0.0
        %6713 = vmatpush1.msra.mxu0 0.0
        %6714 = vmatprep.subr.mxu0 0.0
        %6715 = vmatpush1.msra.mxu0 0.0
        %6716 = vmatprep.subr.mxu0 0.0
        %6717 = vmatpush1.msra.mxu0 0.0
        %6718 = vmatprep.subr.mxu0 0.0
        %6719 = vmatpush1.msra.mxu0 0.0
        %6720 = vmatprep.subr.mxu0 0.0
        %6721 = vmatpush1.msra.mxu0 0.0
        %6722 = vmatprep.subr.mxu0 0.0
        %6723 = vmatpush1.msra.mxu0 0.0
        %6724 = vmatprep.subr.mxu0 0.0
        %6725 = vmatpush1.msra.mxu0 0.0
        %6726 = vmatprep.mubr.f32.mxu0 0.0
        %6727 = vmatmul.mubr.f32.gmra.mrb[0].mxu0 %v6660
        %v6728 = vpop.f32.mrb[0].mxu0
        %v6729 = vadd.f32 0.0, %v6728
        %v6730 = vpop.f32.mrb[0].mxu0
        %v6731 = vadd.f32 0.0, %v6730
        %6732 = vdwg.mxu0
        %6733 = vmatprep.subr.mxu0 %v4735
        %6734 = vmatpush1.msra.mxu0 %v4733
        %6735 = vmatprep.subr.mxu0 0.0
        %6736 = vmatpush1.msra.mxu0 0.0
        %6737 = vmatprep.subr.mxu0 0.0
        %6738 = vmatpush1.msra.mxu0 0.0
        %6739 = vmatprep.subr.mxu0 0.0
        %6740 = vmatpush1.msra.mxu0 0.0
        %6741 = vmatprep.subr.mxu0 0.0
        %6742 = vmatpush1.msra.mxu0 0.0
        %6743 = vmatprep.subr.mxu0 0.0
        %6744 = vmatpush1.msra.mxu0 0.0
        %6745 = vmatprep.subr.mxu0 0.0
        %6746 = vmatpush1.msra.mxu0 0.0
        %6747 = vmatprep.subr.mxu0 0.0
        %6748 = vmatpush1.msra.mxu0 0.0
        %6749 = vmatprep.subr.mxu0 0.0
        %6750 = vmatpush1.msra.mxu0 0.0
        %6751 = vmatprep.subr.mxu0 0.0
        %6752 = vmatpush1.msra.mxu0 0.0
        %6753 = vmatprep.subr.mxu0 0.0
        %6754 = vmatpush1.msra.mxu0 0.0
        %6755 = vmatprep.subr.mxu0 0.0
        %6756 = vmatpush1.msra.mxu0 0.0
        %6757 = vmatprep.subr.mxu0 0.0
        %6758 = vmatpush1.msra.mxu0 0.0
        %6759 = vmatprep.subr.mxu0 0.0
        %6760 = vmatpush1.msra.mxu0 0.0
        %6761 = vmatprep.subr.mxu0 0.0
        %6762 = vmatpush1.msra.mxu0 0.0
        %6763 = vmatprep.subr.mxu0 0.0
        %6764 = vmatpush1.msra.mxu0 0.0
        %6765 = vmatprep.subr.mxu0 0.0
        %6766 = vmatpush1.msra.mxu0 0.0
        %6767 = vmatprep.subr.mxu0 0.0
        %6768 = vmatpush1.msra.mxu0 0.0
        %6769 = vmatprep.subr.mxu0 0.0
        %6770 = vmatpush1.msra.mxu0 0.0
        %6771 = vmatprep.subr.mxu0 0.0
        %6772 = vmatpush1.msra.mxu0 0.0
        %6773 = vmatprep.subr.mxu0 0.0
        %6774 = vmatpush1.msra.mxu0 0.0
        %6775 = vmatprep.subr.mxu0 0.0
        %6776 = vmatpush1.msra.mxu0 0.0
        %6777 = vmatprep.subr.mxu0 0.0
        %6778 = vmatpush1.msra.mxu0 0.0
        %6779 = vmatprep.subr.mxu0 0.0
        %6780 = vmatpush1.msra.mxu0 0.0
        %6781 = vmatprep.subr.mxu0 0.0
        %6782 = vmatpush1.msra.mxu0 0.0
        %6783 = vmatprep.subr.mxu0 0.0
        %6784 = vmatpush1.msra.mxu0 0.0
        %6785 = vmatprep.subr.mxu0 0.0
        %6786 = vmatpush1.msra.mxu0 0.0
        %6787 = vmatprep.subr.mxu0 0.0
        %6788 = vmatpush1.msra.mxu0 0.0
        %6789 = vmatprep.subr.mxu0 0.0
        %6790 = vmatpush1.msra.mxu0 0.0
        %6791 = vmatprep.subr.mxu0 0.0
        %6792 = vmatpush1.msra.mxu0 0.0
        %6793 = vmatprep.subr.mxu0 0.0
        %6794 = vmatpush1.msra.mxu0 0.0
        %6795 = vmatprep.subr.mxu0 0.0
        %6796 = vmatpush1.msra.mxu0 0.0
        %6797 = vmatprep.mubr.f32.mxu0 0.0
        %6798 = vmatmul.mubr.f32.gmra.mrb[0].mxu0 %v6660
        %v6799 = vpop.f32.mrb[0].mxu0
        %v6800 = vadd.f32 0.0, %v6799
        %v6801 = vpop.f32.mrb[0].mxu0
        %v6802 = vadd.f32 0.0, %v6801
        %6803 = vdwg.mxu0
        %6804 = vmatprep.subr.mxu0 %v4739
        %6805 = vmatpush1.msra.mxu0 %v4737
        %6806 = vmatprep.subr.mxu0 0.0
        %6807 = vmatpush1.msra.mxu0 0.0
        %6808 = vmatprep.subr.mxu0 0.0
        %6809 = vmatpush1.msra.mxu0 0.0
        %6810 = vmatprep.subr.mxu0 0.0
        %6811 = vmatpush1.msra.mxu0 0.0
        %6812 = vmatprep.subr.mxu0 0.0
        %6813 = vmatpush1.msra.mxu0 0.0
        %6814 = vmatprep.subr.mxu0 0.0
        %6815 = vmatpush1.msra.mxu0 0.0
        %6816 = vmatprep.subr.mxu0 0.0
        %6817 = vmatpush1.msra.mxu0 0.0
        %6818 = vmatprep.subr.mxu0 0.0
        %6819 = vmatpush1.msra.mxu0 0.0
        %6820 = vmatprep.subr.mxu0 0.0
        %6821 = vmatpush1.msra.mxu0 0.0
        %6822 = vmatprep.subr.mxu0 0.0
        %6823 = vmatpush1.msra.mxu0 0.0
        %6824 = vmatprep.subr.mxu0 0.0
        %6825 = vmatpush1.msra.mxu0 0.0
        %6826 = vmatprep.subr.mxu0 0.0
        %6827 = vmatpush1.msra.mxu0 0.0
        %6828 = vmatprep.subr.mxu0 0.0
        %6829 = vmatpush1.msra.mxu0 0.0
        %6830 = vmatprep.subr.mxu0 0.0
        %6831 = vmatpush1.msra.mxu0 0.0
        %6832 = vmatprep.subr.mxu0 0.0
        %6833 = vmatpush1.msra.mxu0 0.0
        %6834 = vmatprep.subr.mxu0 0.0
        %6835 = vmatpush1.msra.mxu0 0.0
        %6836 = vmatprep.subr.mxu0 0.0
        %6837 = vmatpush1.msra.mxu0 0.0
        %6838 = vmatprep.subr.mxu0 0.0
        %6839 = vmatpush1.msra.mxu0 0.0
        %6840 = vmatprep.subr.mxu0 0.0
        %6841 = vmatpush1.msra.mxu0 0.0
        %6842 = vmatprep.subr.mxu0 0.0
        %6843 = vmatpush1.msra.mxu0 0.0
        %6844 = vmatprep.subr.mxu0 0.0
        %6845 = vmatpush1.msra.mxu0 0.0
        %6846 = vmatprep.subr.mxu0 0.0
        %6847 = vmatpush1.msra.mxu0 0.0
        %6848 = vmatprep.subr.mxu0 0.0
        %6849 = vmatpush1.msra.mxu0 0.0
        %6850 = vmatprep.subr.mxu0 0.0
        %6851 = vmatpush1.msra.mxu0 0.0
        %6852 = vmatprep.subr.mxu0 0.0
        %6853 = vmatpush1.msra.mxu0 0.0
        %6854 = vmatprep.subr.mxu0 0.0
        %6855 = vmatpush1.msra.mxu0 0.0
        %6856 = vmatprep.subr.mxu0 0.0
        %6857 = vmatpush1.msra.mxu0 0.0
        %6858 = vmatprep.subr.mxu0 0.0
        %6859 = vmatpush1.msra.mxu0 0.0
        %6860 = vmatprep.subr.mxu0 0.0
        %6861 = vmatpush1.msra.mxu0 0.0
        %6862 = vmatprep.subr.mxu0 0.0
        %6863 = vmatpush1.msra.mxu0 0.0
        %6864 = vmatprep.subr.mxu0 0.0
        %6865 = vmatpush1.msra.mxu0 0.0
        %6866 = vmatprep.subr.mxu0 0.0
        %6867 = vmatpush1.msra.mxu0 0.0
        %6868 = vmatprep.mubr.f32.mxu0 0.0
        %6869 = vmatmul.mubr.f32.gmra.mrb[0].mxu0 %v6660
        %v6870 = vpop.f32.mrb[0].mxu0
        %v6871 = vadd.f32 0.0, %v6870
        %v6872 = vpop.f32.mrb[0].mxu0
        %v6873 = vadd.f32 0.0, %v6872
        %6874 = vdwg.mxu0
        %6875 = vmatprep.subr.mxu0 %v4743
        %6876 = vmatpush1.msra.mxu0 %v4741
        %6877 = vmatprep.subr.mxu0 0.0
        %6878 = vmatpush1.msra.mxu0 0.0
        %6879 = vmatprep.subr.mxu0 0.0
        %6880 = vmatpush1.msra.mxu0 0.0
        %6881 = vmatprep.subr.mxu0 0.0
        %6882 = vmatpush1.msra.mxu0 0.0
        %6883 = vmatprep.subr.mxu0 0.0
        %6884 = vmatpush1.msra.mxu0 0.0
        %6885 = vmatprep.subr.mxu0 0.0
        %6886 = vmatpush1.msra.mxu0 0.0
        %6887 = vmatprep.subr.mxu0 0.0
        %6888 = vmatpush1.msra.mxu0 0.0
        %6889 = vmatprep.subr.mxu0 0.0
        %6890 = vmatpush1.msra.mxu0 0.0
        %6891 = vmatprep.subr.mxu0 0.0
        %6892 = vmatpush1.msra.mxu0 0.0
        %6893 = vmatprep.subr.mxu0 0.0
        %6894 = vmatpush1.msra.mxu0 0.0
        %6895 = vmatprep.subr.mxu0 0.0
        %6896 = vmatpush1.msra.mxu0 0.0
        %6897 = vmatprep.subr.mxu0 0.0
        %6898 = vmatpush1.msra.mxu0 0.0
        %6899 = vmatprep.subr.mxu0 0.0
        %6900 = vmatpush1.msra.mxu0 0.0
        %6901 = vmatprep.subr.mxu0 0.0
        %6902 = vmatpush1.msra.mxu0 0.0
        %6903 = vmatprep.subr.mxu0 0.0
        %6904 = vmatpush1.msra.mxu0 0.0
        %6905 = vmatprep.subr.mxu0 0.0
        %6906 = vmatpush1.msra.mxu0 0.0
        %6907 = vmatprep.subr.mxu0 0.0
        %6908 = vmatpush1.msra.mxu0 0.0
        %6909 = vmatprep.subr.mxu0 0.0
        %6910 = vmatpush1.msra.mxu0 0.0
        %6911 = vmatprep.subr.mxu0 0.0
        %6912 = vmatpush1.msra.mxu0 0.0
        %6913 = vmatprep.subr.mxu0 0.0
        %6914 = vmatpush1.msra.mxu0 0.0
        %6915 = vmatprep.subr.mxu0 0.0
        %6916 = vmatpush1.msra.mxu0 0.0
        %6917 = vmatprep.subr.mxu0 0.0
        %6918 = vmatpush1.msra.mxu0 0.0
        %6919 = vmatprep.subr.mxu0 0.0
        %6920 = vmatpush1.msra.mxu0 0.0
        %6921 = vmatprep.subr.mxu0 0.0
        %6922 = vmatpush1.msra.mxu0 0.0
        %6923 = vmatprep.subr.mxu0 0.0
        %6924 = vmatpush1.msra.mxu0 0.0
        %6925 = vmatprep.subr.mxu0 0.0
        %6926 = vmatpush1.msra.mxu0 0.0
        %6927 = vmatprep.subr.mxu0 0.0
        %6928 = vmatpush1.msra.mxu0 0.0
        %6929 = vmatprep.subr.mxu0 0.0
        %6930 = vmatpush1.msra.mxu0 0.0
        %6931 = vmatprep.subr.mxu0 0.0
        %6932 = vmatpush1.msra.mxu0 0.0
        %6933 = vmatprep.subr.mxu0 0.0
        %6934 = vmatpush1.msra.mxu0 0.0
        %6935 = vmatprep.subr.mxu0 0.0
        %6936 = vmatpush1.msra.mxu0 0.0
        %6937 = vmatprep.subr.mxu0 0.0
        %6938 = vmatpush1.msra.mxu0 0.0
        %6939 = vmatprep.mubr.f32.mxu0 0.0
        %6940 = vmatmul.mubr.f32.gmra.mrb[0].mxu0 %v6660
        %v6941 = vpop.f32.mrb[0].mxu0
        %v6942 = vadd.f32 0.0, %v6941
        %v6943 = vpop.f32.mrb[0].mxu0
        %v6944 = vadd.f32 0.0, %v6943
        %6945 = vdwg.mxu0
        %vm6946 = vcmask 64512
        %v6948 = vsel %vm6946, %v6657, 0
        %6950 = vmatprep.subr.mxu0 %v6650
        %6951 = vmatpush1.msra.mxu0 %v6649
        %6952 = vmatprep.subr.mxu0 0.0
        %6953 = vmatpush1.msra.mxu0 0.0
        %6954 = vmatprep.subr.mxu0 0.0
        %6955 = vmatpush1.msra.mxu0 0.0
        %6956 = vmatprep.subr.mxu0 0.0
        %6957 = vmatpush1.msra.mxu0 0.0
        %6958 = vmatprep.subr.mxu0 0.0
        %6959 = vmatpush1.msra.mxu0 0.0
        %6960 = vmatprep.subr.mxu0 0.0
        %6961 = vmatpush1.msra.mxu0 0.0
        %6962 = vmatprep.subr.mxu0 0.0
        %6963 = vmatpush1.msra.mxu0 0.0
        %6964 = vmatprep.subr.mxu0 0.0
        %6965 = vmatpush1.msra.mxu0 0.0
        %6966 = vmatprep.subr.mxu0 0.0
        %6967 = vmatpush1.msra.mxu0 0.0
        %6968 = vmatprep.subr.mxu0 0.0
        %6969 = vmatpush1.msra.mxu0 0.0
        %6970 = vmatprep.subr.mxu0 0.0
        %6971 = vmatpush1.msra.mxu0 0.0
        %6972 = vmatprep.subr.mxu0 0.0
        %6973 = vmatpush1.msra.mxu0 0.0
        %6974 = vmatprep.subr.mxu0 0.0
        %6975 = vmatpush1.msra.mxu0 0.0
        %6976 = vmatprep.subr.mxu0 0.0
        %6977 = vmatpush1.msra.mxu0 0.0
        %6978 = vmatprep.subr.mxu0 0.0
        %6979 = vmatpush1.msra.mxu0 0.0
        %6980 = vmatprep.subr.mxu0 0.0
        %6981 = vmatpush1.msra.mxu0 0.0
        %6982 = vmatprep.subr.mxu0 0.0
        %6983 = vmatpush1.msra.mxu0 0.0
        %6984 = vmatprep.subr.mxu0 0.0
        %6985 = vmatpush1.msra.mxu0 0.0
        %6986 = vmatprep.subr.mxu0 0.0
        %6987 = vmatpush1.msra.mxu0 0.0
        %6988 = vmatprep.subr.mxu0 0.0
        %6989 = vmatpush1.msra.mxu0 0.0
        %6990 = vmatprep.subr.mxu0 0.0
        %6991 = vmatpush1.msra.mxu0 0.0
        %6992 = vmatprep.subr.mxu0 0.0
        %6993 = vmatpush1.msra.mxu0 0.0
        %6994 = vmatprep.subr.mxu0 0.0
        %6995 = vmatpush1.msra.mxu0 0.0
        %6996 = vmatprep.subr.mxu0 0.0
        %6997 = vmatpush1.msra.mxu0 0.0
        %6998 = vmatprep.subr.mxu0 0.0
        %6999 = vmatpush1.msra.mxu0 0.0
        %7000 = vmatprep.subr.mxu0 0.0
        %7001 = vmatpush1.msra.mxu0 0.0
        %7002 = vmatprep.subr.mxu0 0.0
        %7003 = vmatpush1.msra.mxu0 0.0
        %7004 = vmatprep.subr.mxu0 0.0
        %7005 = vmatpush1.msra.mxu0 0.0
        %7006 = vmatprep.subr.mxu0 0.0
        %7007 = vmatpush1.msra.mxu0 0.0
        %7008 = vmatprep.subr.mxu0 0.0
        %7009 = vmatpush1.msra.mxu0 0.0
        %7010 = vmatprep.subr.mxu0 0.0
        %7011 = vmatpush1.msra.mxu0 0.0
        %7012 = vmatprep.subr.mxu0 0.0
        %7013 = vmatpush1.msra.mxu0 0.0
        %7014 = vmatprep.mubr.f32.mxu0 0.0
        %7015 = vmatmul.mubr.f32.gmra.mrb[0].mxu0 %v6948
        %v7016 = vpop.f32.mrb[0].mxu0
        %v7017 = vadd.f32 %v6729, %v7016
        %v7018 = vpop.f32.mrb[0].mxu0
        %v7019 = vadd.f32 %v6731, %v7018
        %7020 = vdwg.mxu0
        %7021 = vmatprep.subr.mxu0 %v6652
        %7022 = vmatpush1.msra.mxu0 %v6651
        %7023 = vmatprep.subr.mxu0 0.0
        %7024 = vmatpush1.msra.mxu0 0.0
        %7025 = vmatprep.subr.mxu0 0.0
        %7026 = vmatpush1.msra.mxu0 0.0
        %7027 = vmatprep.subr.mxu0 0.0
        %7028 = vmatpush1.msra.mxu0 0.0
        %7029 = vmatprep.subr.mxu0 0.0
        %7030 = vmatpush1.msra.mxu0 0.0
        %7031 = vmatprep.subr.mxu0 0.0
        %7032 = vmatpush1.msra.mxu0 0.0
        %7033 = vmatprep.subr.mxu0 0.0
        %7034 = vmatpush1.msra.mxu0 0.0
        %7035 = vmatprep.subr.mxu0 0.0
        %7036 = vmatpush1.msra.mxu0 0.0
        %7037 = vmatprep.subr.mxu0 0.0
        %7038 = vmatpush1.msra.mxu0 0.0
        %7039 = vmatprep.subr.mxu0 0.0
        %7040 = vmatpush1.msra.mxu0 0.0
        %7041 = vmatprep.subr.mxu0 0.0
        %7042 = vmatpush1.msra.mxu0 0.0
        %7043 = vmatprep.subr.mxu0 0.0
        %7044 = vmatpush1.msra.mxu0 0.0
        %7045 = vmatprep.subr.mxu0 0.0
        %7046 = vmatpush1.msra.mxu0 0.0
        %7047 = vmatprep.subr.mxu0 0.0
        %7048 = vmatpush1.msra.mxu0 0.0
        %7049 = vmatprep.subr.mxu0 0.0
        %7050 = vmatpush1.msra.mxu0 0.0
        %7051 = vmatprep.subr.mxu0 0.0
        %7052 = vmatpush1.msra.mxu0 0.0
        %7053 = vmatprep.subr.mxu0 0.0
        %7054 = vmatpush1.msra.mxu0 0.0
        %7055 = vmatprep.subr.mxu0 0.0
        %7056 = vmatpush1.msra.mxu0 0.0
        %7057 = vmatprep.subr.mxu0 0.0
        %7058 = vmatpush1.msra.mxu0 0.0
        %7059 = vmatprep.subr.mxu0 0.0
        %7060 = vmatpush1.msra.mxu0 0.0
        %7061 = vmatprep.subr.mxu0 0.0
        %7062 = vmatpush1.msra.mxu0 0.0
        %7063 = vmatprep.subr.mxu0 0.0
        %7064 = vmatpush1.msra.mxu0 0.0
        %7065 = vmatprep.subr.mxu0 0.0
        %7066 = vmatpush1.msra.mxu0 0.0
        %7067 = vmatprep.subr.mxu0 0.0
        %7068 = vmatpush1.msra.mxu0 0.0
        %7069 = vmatprep.subr.mxu0 0.0
        %7070 = vmatpush1.msra.mxu0 0.0
        %7071 = vmatprep.subr.mxu0 0.0
        %7072 = vmatpush1.msra.mxu0 0.0
        %7073 = vmatprep.subr.mxu0 0.0
        %7074 = vmatpush1.msra.mxu0 0.0
        %7075 = vmatprep.subr.mxu0 0.0
        %7076 = vmatpush1.msra.mxu0 0.0
        %7077 = vmatprep.subr.mxu0 0.0
        %7078 = vmatpush1.msra.mxu0 0.0
        %7079 = vmatprep.subr.mxu0 0.0
        %7080 = vmatpush1.msra.mxu0 0.0
        %7081 = vmatprep.subr.mxu0 0.0
        %7082 = vmatpush1.msra.mxu0 0.0
        %7083 = vmatprep.subr.mxu0 0.0
        %7084 = vmatpush1.msra.mxu0 0.0
        %7085 = vmatprep.mubr.f32.mxu0 0.0
        %7086 = vmatmul.mubr.f32.gmra.mrb[0].mxu0 %v6948
        %v7087 = vpop.f32.mrb[0].mxu0
        %v7088 = vadd.f32 %v6800, %v7087
        %v7089 = vpop.f32.mrb[0].mxu0
        %v7090 = vadd.f32 %v6802, %v7089
        %7091 = vdwg.mxu0
        %7092 = vmatprep.subr.mxu0 %v6654
        %7093 = vmatpush1.msra.mxu0 %v6653
        %7094 = vmatprep.subr.mxu0 0.0
        %7095 = vmatpush1.msra.mxu0 0.0
        %7096 = vmatprep.subr.mxu0 0.0
        %7097 = vmatpush1.msra.mxu0 0.0
        %7098 = vmatprep.subr.mxu0 0.0
        %7099 = vmatpush1.msra.mxu0 0.0
        %7100 = vmatprep.subr.mxu0 0.0
        %7101 = vmatpush1.msra.mxu0 0.0
        %7102 = vmatprep.subr.mxu0 0.0
        %7103 = vmatpush1.msra.mxu0 0.0
        %7104 = vmatprep.subr.mxu0 0.0
        %7105 = vmatpush1.msra.mxu0 0.0
        %7106 = vmatprep.subr.mxu0 0.0
        %7107 = vmatpush1.msra.mxu0 0.0
        %7108 = vmatprep.subr.mxu0 0.0
        %7109 = vmatpush1.msra.mxu0 0.0
        %7110 = vmatprep.subr.mxu0 0.0
        %7111 = vmatpush1.msra.mxu0 0.0
        %7112 = vmatprep.subr.mxu0 0.0
        %7113 = vmatpush1.msra.mxu0 0.0
        %7114 = vmatprep.subr.mxu0 0.0
        %7115 = vmatpush1.msra.mxu0 0.0
        %7116 = vmatprep.subr.mxu0 0.0
        %7117 = vmatpush1.msra.mxu0 0.0
        %7118 = vmatprep.subr.mxu0 0.0
        %7119 = vmatpush1.msra.mxu0 0.0
        %7120 = vmatprep.subr.mxu0 0.0
        %7121 = vmatpush1.msra.mxu0 0.0
        %7122 = vmatprep.subr.mxu0 0.0
        %7123 = vmatpush1.msra.mxu0 0.0
        %7124 = vmatprep.subr.mxu0 0.0
        %7125 = vmatpush1.msra.mxu0 0.0
        %7126 = vmatprep.subr.mxu0 0.0
        %7127 = vmatpush1.msra.mxu0 0.0
        %7128 = vmatprep.subr.mxu0 0.0
        %7129 = vmatpush1.msra.mxu0 0.0
        %7130 = vmatprep.subr.mxu0 0.0
        %7131 = vmatpush1.msra.mxu0 0.0
        %7132 = vmatprep.subr.mxu0 0.0
        %7133 = vmatpush1.msra.mxu0 0.0
        %7134 = vmatprep.subr.mxu0 0.0
        %7135 = vmatpush1.msra.mxu0 0.0
        %7136 = vmatprep.subr.mxu0 0.0
        %7137 = vmatpush1.msra.mxu0 0.0
        %7138 = vmatprep.subr.mxu0 0.0
        %7139 = vmatpush1.msra.mxu0 0.0
        %7140 = vmatprep.subr.mxu0 0.0
        %7141 = vmatpush1.msra.mxu0 0.0
        %7142 = vmatprep.subr.mxu0 0.0
        %7143 = vmatpush1.msra.mxu0 0.0
        %7144 = vmatprep.subr.mxu0 0.0
        %7145 = vmatpush1.msra.mxu0 0.0
        %7146 = vmatprep.subr.mxu0 0.0
        %7147 = vmatpush1.msra.mxu0 0.0
        %7148 = vmatprep.subr.mxu0 0.0
        %7149 = vmatpush1.msra.mxu0 0.0
        %7150 = vmatprep.subr.mxu0 0.0
        %7151 = vmatpush1.msra.mxu0 0.0
        %7152 = vmatprep.subr.mxu0 0.0
        %7153 = vmatpush1.msra.mxu0 0.0
        %7154 = vmatprep.subr.mxu0 0.0
        %7155 = vmatpush1.msra.mxu0 0.0
        %7156 = vmatprep.mubr.f32.mxu0 0.0
        %7157 = vmatmul.mubr.f32.gmra.mrb[0].mxu0 %v6948
        %v7158 = vpop.f32.mrb[0].mxu0
        %v7159 = vadd.f32 %v6871, %v7158
        %v7160 = vpop.f32.mrb[0].mxu0
        %v7161 = vadd.f32 %v6873, %v7160
        %7162 = vdwg.mxu0
        %7163 = vmatprep.subr.mxu0 %v6656
        %7164 = vmatpush1.msra.mxu0 %v6655
        %7165 = vmatprep.subr.mxu0 0.0
        %7166 = vmatpush1.msra.mxu0 0.0
        %7167 = vmatprep.subr.mxu0 0.0
        %7168 = vmatpush1.msra.mxu0 0.0
        %7169 = vmatprep.subr.mxu0 0.0
        %7170 = vmatpush1.msra.mxu0 0.0
        %7171 = vmatprep.subr.mxu0 0.0
        %7172 = vmatpush1.msra.mxu0 0.0
        %7173 = vmatprep.subr.mxu0 0.0
        %7174 = vmatpush1.msra.mxu0 0.0
        %7175 = vmatprep.subr.mxu0 0.0
        %7176 = vmatpush1.msra.mxu0 0.0
        %7177 = vmatprep.subr.mxu0 0.0
        %7178 = vmatpush1.msra.mxu0 0.0
        %7179 = vmatprep.subr.mxu0 0.0
        %7180 = vmatpush1.msra.mxu0 0.0
        %7181 = vmatprep.subr.mxu0 0.0
        %7182 = vmatpush1.msra.mxu0 0.0
        %7183 = vmatprep.subr.mxu0 0.0
        %7184 = vmatpush1.msra.mxu0 0.0
        %7185 = vmatprep.subr.mxu0 0.0
        %7186 = vmatpush1.msra.mxu0 0.0
        %7187 = vmatprep.subr.mxu0 0.0
        %7188 = vmatpush1.msra.mxu0 0.0
        %7189 = vmatprep.subr.mxu0 0.0
        %7190 = vmatpush1.msra.mxu0 0.0
        %7191 = vmatprep.subr.mxu0 0.0
        %7192 = vmatpush1.msra.mxu0 0.0
        %7193 = vmatprep.subr.mxu0 0.0
        %7194 = vmatpush1.msra.mxu0 0.0
        %7195 = vmatprep.subr.mxu0 0.0
        %7196 = vmatpush1.msra.mxu0 0.0
        %7197 = vmatprep.subr.mxu0 0.0
        %7198 = vmatpush1.msra.mxu0 0.0
        %7199 = vmatprep.subr.mxu0 0.0
        %7200 = vmatpush1.msra.mxu0 0.0
        %7201 = vmatprep.subr.mxu0 0.0
        %7202 = vmatpush1.msra.mxu0 0.0
        %7203 = vmatprep.subr.mxu0 0.0
        %7204 = vmatpush1.msra.mxu0 0.0
        %7205 = vmatprep.subr.mxu0 0.0
        %7206 = vmatpush1.msra.mxu0 0.0
        %7207 = vmatprep.subr.mxu0 0.0
        %7208 = vmatpush1.msra.mxu0 0.0
        %7209 = vmatprep.subr.mxu0 0.0
        %7210 = vmatpush1.msra.mxu0 0.0
        %7211 = vmatprep.subr.mxu0 0.0
        %7212 = vmatpush1.msra.mxu0 0.0
        %7213 = vmatprep.subr.mxu0 0.0
        %7214 = vmatpush1.msra.mxu0 0.0
        %7215 = vmatprep.subr.mxu0 0.0
        %7216 = vmatpush1.msra.mxu0 0.0
        %7217 = vmatprep.subr.mxu0 0.0
        %7218 = vmatpush1.msra.mxu0 0.0
        %7219 = vmatprep.subr.mxu0 0.0
        %7220 = vmatpush1.msra.mxu0 0.0
        %7221 = vmatprep.subr.mxu0 0.0
        %7222 = vmatpush1.msra.mxu0 0.0
        %7223 = vmatprep.subr.mxu0 0.0
        %7224 = vmatpush1.msra.mxu0 0.0
        %7225 = vmatprep.subr.mxu0 0.0
        %7226 = vmatpush1.msra.mxu0 0.0
        %7227 = vmatprep.mubr.f32.mxu0 0.0
        %7228 = vmatmul.mubr.f32.gmra.mrb[0].mxu0 %v6948
        %v7229 = vpop.f32.mrb[0].mxu0
        %v7230 = vadd.f32 %v6942, %v7229
        %v7231 = vpop.f32.mrb[0].mxu0
        %v7232 = vadd.f32 %v6944, %v7231
        %7233 = vdwg.mxu0
        %v7234 = vld [vmem:[%s17] sm:$0x7]
        %7236 = vset.pattern.permute.xlu0 0
        %7237 = vperm.xlu0 %7236, %v7234
        %v7238 = vpop.permute.xlu0 %7237
        %v7240 = vadd.f32 %v7017, %v7238
        %v7241 = vadd.f32 %v7019, %v7238
        %v7242 = vadd.f32 %v7088, %v7238
        %v7243 = vadd.f32 %v7090, %v7238
        %v7244 = vadd.f32 %v7159, %v7238
        %v7245 = vadd.f32 %v7161, %v7238
        %v7246 = vadd.f32 %v7230, %v7238
        %v7247 = vadd.f32 %v7232, %v7238
        %v7248 = vtanh.pop %v7240
        %v7249 = vtanh.pop %v7241
        %v7250 = vtanh.pop %v7242
        %v7251 = vtanh.pop %v7243
        %v7252 = vtanh.pop %v7244
        %v7253 = vtanh.pop %v7245
        %v7254 = vtanh.pop %v7246
        %v7255 = vtanh.pop %v7247
        %v7264 = vcombine.low %v7248, %v7249
        %v7265 = vcombine.low %v7250, %v7251
        %v7266 = vcombine.low %v7252, %v7253
        %v7267 = vcombine.low %v7254, %v7255
        %7272 = vst [vmem:[%s652] sm:$0x77] %v7264
        %7273 = vst [vmem:[%s652 + $0x8] sm:$0x77] %v7265
        %7274 = vst [vmem:[%s652 + $0x10] sm:$0x77] %v7266
        %7275 = vst [vmem:[%s652 + $0x18] sm:$0x77] %v7267
      $region124: #{tpu_custom_call.1} parent=91 // pred_fallthru
        _
      %p7276 = scmp.eq.s32.totalorder %s34, 3
      %s7277 = scalar_select %p7276, %s35, 0
      %s7278 = scalar_select %p7276, %s36, 0
      %s7279 = smul.u32 8, %s7278
      %p7280 = scmp.lt.s32.totalorder %s7277, 1
      %s7281 = scalar_select %p7280, %s7277, 1
      %p7282 = scmp.lt.s32.totalorder %s7279, 7
      %s7283 = scalar_select %p7282, %s7279, 7
      %s7284 = smul.addr %s7281, 8
      %s7285 = sadd.s32 %s7283, %s7284
      %s7286 = smul.addr %s7285, 4
      %s7287 = scalar_lea.vmem %s18, %s7286
      // Predicated region
      $region125: #{tpu_custom_call.1} parent=91 // pred_check
        %p7288 = pneg %p464
      $region126: #{tpu_custom_call.1} parent=91 // pred_check_branch
        %7290 = sbr.rel (%p7288) target = $region128
      $region127: #{tpu_custom_call.1} parent=91 // pred_region
        %p7291 = scmp.eq.s32.totalorder %s34, 3
        %s7292 = scalar_select %p7291, %s35, 0
        %s7293 = scalar_select %p7291, %s36, 0
        %s7294 = smul.u32 8, %s7293
      $region128: #{tpu_custom_call.1} parent=91 // pred_fallthru
        _
    $region92: #{tpu_custom_call.1} parent=5 // pred_fallthru
      _
    %p7295 = scmp.le.s32.totalorder 2, %s24
    // Predicated region
    $region129: #{tpu_custom_call.1} parent=5 // pred_check
      %p7296 = pneg %p7295
    $region130: #{tpu_custom_call.1} parent=5 // pred_check_branch
      %7298 = sbr.rel (%p7296) target = $region132
    $region131: #{tpu_custom_call.1} parent=5 // pred_region
      %s7299 = ssub.s32 %s24, 2
      // Predicated region
      $region133: #{tpu_custom_call.1} parent=131 // pred_check
        %p7300 = pneg %p470
      $region134: #{tpu_custom_call.1} parent=131 // pred_check_branch
        %7302 = sbr.rel (%p7300) target = $region136
      $region135: #{tpu_custom_call.1} parent=131 // pred_region
        %p7303 = scmp.eq.s32.totalorder %s37, 3
        %s7304 = scalar_select %p7303, %s38, 0
        %s7305 = scalar_select %p7303, %s39, 0
        %s7306 = smul.u32 8, %s7305
        %p7307 = scmp.lt.s32.totalorder %s7304, 1
        %s7308 = scalar_select %p7307, %s7304, 1
        %p7309 = scmp.lt.s32.totalorder %s7306, 7
        %s7310 = scalar_select %p7309, %s7306, 7
        %s7311 = smul.addr %s7308, 8
        %s7312 = sadd.s32 %s7310, %s7311
        %s7313 = smul.addr %s7312, 4
        %s7314 = scalar_lea.vmem %s18, %s7313
      $region136: #{tpu_custom_call.1} parent=131 // pred_fallthru
        _
    $region132: #{tpu_custom_call.1} parent=5 // pred_fallthru
      _
  $region6: #{tpu_custom_call.1} parent=0 // loop_footer
    %s28 = sadd.s32 1, %s24
  $region7: #{tpu_custom_call.1} parent=0 // loop_footer_branch
    %23 = sbr.rel target = $region3
  $region8: #{tpu_custom_call.1} parent=0 // loop_exit
    _

</llo_original>
